<compile_context>
chip_gen: v5e
topology: v5e:2x2
jax: 0.10.0
libtpu: 0.0.40
codegen_flags: <defaults>
</compile_context>

<pallas_src>
import functools

import numpy as np

import jax
import jax.numpy as jnp
from jax.experimental import pallas as pl
from jax.experimental.pallas import tpu as pltpu


# ---------------------------------------------------------------------------
# geometry fixed by the module (view.view(-1, 10, 10, 5); 3x3 / stride 1 / pad 2)
# ---------------------------------------------------------------------------
_C1_IN, _C1_OUT = 10, 32
_H_IN, _W_IN = 10, 5
_H1, _W1 = 12, 7            # conv1 output spatial (10+4-3+1, 5+4-3+1)
_H2, _W2 = 14, 9            # conv2 output spatial == conv1 padded-input spatial
_C2_IN, _C2_OUT = 32, 32
_IN_ROW = 128               # lanes per padded-view row   (9*10 = 90 -> padded to 128)
_Y1_ROW = 256               # lanes per conv1-output row  (7*32 = 224 -> padded to 256)
_N2 = _W2 * _C2_OUT         # 288 lanes per conv2-output row
_FLAT = _C2_OUT * _H2 * _W2 # 4032


def _round_up(x, m):
    return ((x + m - 1) // m) * m


# ---------------------------------------------------------------------------
# fused kernel: conv1+BN1+ReLU -> conv2+BN2+ReLU -> fc1+ReLU -> GRUCell -> fc2
# ---------------------------------------------------------------------------
def _fused_kernel(view_ref, feat_ref, hin_ref,
                  w1_ref, b1_ref, w2_ref, b2_ref, wfc1_ref, bfc1_ref,
                  wihx_ref, wihf_ref, bih_ref, whh_ref, bhh_ref,
                  wfc2_ref, bfc2_ref,
                  q_ref, hout_ref,
                  y1s_ref):
    bb = view_ref.shape[0]
    DP = hin_ref.shape[1]                      # padded GRU width (multiple of 128)

    # --- conv2's H zero-padding: rows 0,1 and 14,15 of the y1 scratch ---
    zpad = jnp.zeros((bb, 2 * _Y1_ROW), jnp.bfloat16)
    y1s_ref[:, 0:2 * _Y1_ROW] = zpad
    y1s_ref[:, _H2 * _Y1_ROW:(_H2 + 2) * _Y1_ROW] = zpad

    # --- conv1 + BN1 + ReLU : one banded matmul per output row (12 rows) ---
    # input row slice is 3 consecutive padded view rows (3*128 lanes, 128-aligned);
    # width padding / kernel band structure is folded into w1 (zero rows/cols).
    for oh in range(_H1):
        p = view_ref[:, oh * _IN_ROW: oh * _IN_ROW + 3 * _IN_ROW]          # (bb,384) bf16
        y = jnp.dot(p, w1_ref[...], preferred_element_type=jnp.float32) + b1_ref[...]
        y1s_ref[:, (oh + 2) * _Y1_ROW:(oh + 3) * _Y1_ROW] = (
            jnp.maximum(y, 0.0).astype(jnp.bfloat16))                      # (bb,256)

    # --- conv2 + BN2 + ReLU + fc1 accumulation : 14 output rows ---
    x_acc = jnp.zeros((bb, bfc1_ref.shape[1]), jnp.float32)
    for oh in range(_H2):
        p = y1s_ref[:, oh * _Y1_ROW: oh * _Y1_ROW + 3 * _Y1_ROW]           # (bb,768) bf16
        y = jnp.dot(p, w2_ref[...], preferred_element_type=jnp.float32) + b2_ref[...]
        y = jnp.maximum(y, 0.0).astype(jnp.bfloat16)                       # (bb,288)
        x_acc = x_acc + jnp.dot(y, wfc1_ref[oh],
                                preferred_element_type=jnp.float32)        # (bb,H)
    x = jnp.maximum(x_acc + bfc1_ref[...], 0.0)                            # f32

    # --- GRUCell: cat(x, feature) matmul fused as a split matmul; gates padded ---
    h_in = hin_ref[...]                                                    # (bb,DP) f32
    gi = (jnp.dot(x.astype(jnp.bfloat16), wihx_ref[...],
                  preferred_element_type=jnp.float32)
          + jnp.dot(feat_ref[...].astype(jnp.bfloat16), wihf_ref[...],
                    preferred_element_type=jnp.float32)
          + bih_ref[...])
    gh = (jnp.dot(h_in.astype(jnp.bfloat16), whh_ref[...],
                  preferred_element_type=jnp.float32) + bhh_ref[...])

    r = jax.nn.sigmoid(gi[:, 0:DP] + gh[:, 0:DP])
    z = jax.nn.sigmoid(gi[:, DP:2 * DP] + gh[:, DP:2 * DP])
    n = jnp.tanh(gi[:, 2 * DP:3 * DP] + r * gh[:, 2 * DP:3 * DP])
    h_new = (1.0 - z) * n + z * h_in            # pad lanes provably stay exactly 0

    hout_ref[...] = h_new                                                  # lane-dense
    q_ref[...] = (jnp.dot(h_new.astype(jnp.bfloat16), wfc2_ref[...],
                          preferred_element_type=jnp.float32) + bfc2_ref[...])


# ---------------------------------------------------------------------------
# one-time parameter preparation (BN folding, banded conv weights, padding, bf16)
# ---------------------------------------------------------------------------
def prepare_params(raw, rnn_hidden, feat_dim, n_actions, eps=1e-5):
    f32 = np.float32
    H = rnn_hidden
    F = feat_dim
    D = H + F
    DP = _round_up(D, 128)
    AP = _round_up(max(n_actions, 1), 128)

    def np_(x):
        return np.asarray(x, dtype=f32)

    def fold(w, b, g, beta, mean, var):
        w, b = np_(w), np_(b)
        scale = np_(g) / np.sqrt(np_(var) + eps)
        return w * scale[:, None, None, None], (b - np_(mean)) * scale + np_(beta)

    w1f, b1f = fold(raw["conv1_w"], raw["conv1_b"], raw["bn1_gamma"],
                    raw["bn1_beta"], raw["bn1_mean"], raw["bn1_var"])
    w2f, b2f = fold(raw["conv2_w"], raw["conv2_b"], raw["bn2_gamma"],
                    raw["bn2_beta"], raw["bn2_mean"], raw["bn2_var"])

    # conv1 banded weight: K = 3 padded-view rows (128 lanes each, content jw*10+ci),
    # N = one conv1 output row (256 lanes, content ow*32+co, lanes >=224 zero).
    w1b = np.zeros((3 * _IN_ROW, _Y1_ROW), f32)
    for kh in range(3):
        for kw in range(3):
            blk = w1f[:, :, kh, kw].T                           # (ci=10, co=32)
            for ow in range(_W1):                               # 0..6
                jw = ow + kw                                    # padded width idx 0..8
                r0 = kh * _IN_ROW + jw * _C1_IN
                w1b[r0:r0 + _C1_IN, ow * _C1_OUT:(ow + 1) * _C1_OUT] = blk
    b1b = np.zeros((1, _Y1_ROW), f32)
    for ow in range(_W1):
        b1b[0, ow * _C1_OUT:(ow + 1) * _C1_OUT] = b1f

    # conv2 banded weight: K = 3 y1 rows (256 lanes each, content iw*32+ci, iw<7),
    # N = one conv2 output row (288 lanes, content ow*32+co). Width padding is
    # absorbed as zero rows; H padding comes from the zero rows of the y1 scratch.
    w2b = np.zeros((3 * _Y1_ROW, _N2), f32)
    for kh in range(3):
        for kw in range(3):
            blk = w2f[:, :, kh, kw].T                           # (ci=32, co=32)
            for ow in range(_W2):                               # 0..8
                iw = ow + kw - 2                                # unpadded conv1 width
                if 0 <= iw < _W1:
                    r0 = kh * _Y1_ROW + iw * _C2_IN
                    w2b[r0:r0 + _C2_IN, ow * _C2_OUT:(ow + 1) * _C2_OUT] = blk
    b2b = np.tile(b2f, _W2)[None, :]                            # (1, 288)

    # fc1: torch flatten order of (B,32,14,9) is co*126 + oh*9 + ow; re-order to a
    # (14, 288, H) tensor indexed [oh, ow*32+co, n] so it can be consumed row-by-row.
    fc1_w = np_(raw["fc1_w"]).reshape(H, _C2_OUT, _H2, _W2)
    wfc1 = np.transpose(fc1_w, (2, 3, 1, 0)).reshape(_H2, _N2, H)
    bfc1 = np_(raw["fc1_b"]).reshape(1, H)

    # GRU weights (3D, D), rows = [r; z; n]; split x/feature columns, transpose and
    # pad each gate's output lanes D -> DP (128-aligned gate slices in-kernel).
    w_ih, w_hh = np_(raw["gru_w_ih"]), np_(raw["gru_w_hh"])
    b_ih, b_hh = np_(raw["gru_b_ih"]), np_(raw["gru_b_hh"])
    w_ih_x = np.zeros((H, 3 * DP), f32)
    w_ih_f = np.zeros((F, 3 * DP), f32)
    w_hh_p = np.zeros((DP, 3 * DP), f32)
    b_ih_p = np.zeros((1, 3 * DP), f32)
    b_hh_p = np.zeros((1, 3 * DP), f32)
    for g in range(3):
        w_ih_x[:, g * DP:g * DP + D] = w_ih[g * D:(g + 1) * D, :H].T
        w_ih_f[:, g * DP:g * DP + D] = w_ih[g * D:(g + 1) * D, H:].T
        w_hh_p[:D, g * DP:g * DP + D] = w_hh[g * D:(g + 1) * D, :].T
        b_ih_p[0, g * DP:g * DP + D] = b_ih[g * D:(g + 1) * D]
        b_hh_p[0, g * DP:g * DP + D] = b_hh[g * D:(g + 1) * D]

    # fc2: transpose + pad rows D->DP and output lanes n_actions->AP (lane-dense q).
    w_fc2 = np.zeros((DP, AP), f32)
    w_fc2[:D, :n_actions] = np_(raw["fc2_w"]).T
    b_fc2 = np.zeros((1, AP), f32)
    b_fc2[0, :n_actions] = np_(raw["fc2_b"])

    bf16 = jnp.bfloat16
    return dict(
        w1=jnp.asarray(w1b, bf16), b1=jnp.asarray(b1b),
        w2=jnp.asarray(w2b, bf16), b2=jnp.asarray(b2b),
        wfc1=jnp.asarray(wfc1, bf16), bfc1=jnp.asarray(bfc1),
        w_ih_x=jnp.asarray(w_ih_x, bf16), w_ih_f=jnp.asarray(w_ih_f, bf16),
        b_ih=jnp.asarray(b_ih_p),
        w_hh=jnp.asarray(w_hh_p, bf16), b_hh=jnp.asarray(b_hh_p),
        w_fc2=jnp.asarray(w_fc2, bf16), b_fc2=jnp.asarray(b_fc2),
    )


# ---------------------------------------------------------------------------
# forward pass
# ---------------------------------------------------------------------------
def convnet_rnn_forward(obs, hidden_state, prep, *, input_shape_view,
                        input_shape_feature, rnn_hidden_dim, n_actions,
                        block_b=None):
    assert input_shape_view == _H_IN * _W_IN * _C1_IN, \
        "view must reshape to (-1, 10, 10, 5)"
    B = obs.shape[0]
    F = input_shape_feature
    H = rnn_hidden_dim
    D = H + F
    DP = prep["w_hh"].shape[0]
    AP = prep["w_fc2"].shape[1]

    if block_b is None:
        # >=2 grid steps for B>=16 (v7x megacore), multiple of 8, capped so per-step
        # VMEM stays a few MB on every generation (v5e/v6e/v7x scoped defaults).
        block_b = min(128, max(8, _round_up(-(-B // 2), 8)))
    block_b = max(8, _round_up(block_b, 8))
    Bp = _round_up(max(B, block_b), block_b)
    nb = Bp // block_b
    pad = Bp - B

    # ---- layout glue (zero FLOPs): slice, NCHW->NHWC, spatial+lane pad, bf16 ----
    view = obs[:, :input_shape_view].reshape(B, _C1_IN, _H_IN, _W_IN)   # NCHW
    view = jnp.transpose(view, (0, 2, 3, 1))                            # NHWC
    view = jnp.pad(view, ((0, pad), (2, 2), (2, 2), (0, 0)))            # (Bp,14,9,10)
    view = view.reshape(Bp, _H2, _W2 * _C1_IN)
    view = jnp.pad(view, ((0, 0), (0, 0), (0, _IN_ROW - _W2 * _C1_IN))) # (Bp,14,128)
    view_flat = view.reshape(Bp, _H2 * _IN_ROW).astype(jnp.bfloat16)

    feature = jnp.pad(obs[:, -F:], ((0, pad), (0, 0)))                  # (Bp, F) f32
    h_in = jnp.pad(hidden_state.reshape(-1, D), ((0, pad), (0, DP - D)))

    # ---- advisory cost estimate for the XLA scheduler ----
    flops = 2 * Bp * (_H1 * 3 * _IN_ROW * _Y1_ROW
                      + _H2 * 3 * _Y1_ROW * _N2
                      + _H2 * _N2 * H
                      + (H + F + DP) * 3 * DP
                      + DP * AP)
    transcendentals = Bp * 3 * DP
    w_bytes = sum(int(v.size) * v.dtype.itemsize for v in prep.values())
    bytes_accessed = (int(view_flat.size) * view_flat.dtype.itemsize
                      + int(feature.size) * 4 + int(h_in.size) * 4
                      + w_bytes + Bp * (AP + DP) * 4)

    def row_spec(cols):
        return pl.BlockSpec((block_b, cols), lambda i: (i, 0))

    def const2(a):
        return pl.BlockSpec(a.shape, lambda i: (0, 0))

    q_pad, h_pad = pl.pallas_call(
        _fused_kernel,
        out_shape=(jax.ShapeDtypeStruct((Bp, AP), jnp.float32),
                   jax.ShapeDtypeStruct((Bp, DP), jnp.float32)),
        grid=(nb,),
        in_specs=[
            row_spec(_H2 * _IN_ROW),                    # padded view rows (bf16)
            row_spec(F),                                # feature
            row_spec(DP),                               # h_in (padded)
            const2(prep["w1"]), const2(prep["b1"]),     # resident weights
            const2(prep["w2"]), const2(prep["b2"]),
            pl.BlockSpec(prep["wfc1"].shape, lambda i: (0, 0, 0)),
            const2(prep["bfc1"]),
            const2(prep["w_ih_x"]), const2(prep["w_ih_f"]), const2(prep["b_ih"]),
            const2(prep["w_hh"]), const2(prep["b_hh"]),
            const2(prep["w_fc2"]), const2(prep["b_fc2"]),
        ],
        out_specs=(pl.BlockSpec((block_b, AP), lambda i: (i, 0)),
                   pl.BlockSpec((block_b, DP), lambda i: (i, 0))),
        scratch_shapes=[pltpu.VMEM((block_b, (_H2 + 2) * _Y1_ROW), jnp.bfloat16)],
        compiler_params=pltpu.CompilerParams(
            dimension_semantics=("parallel",)),
        cost_estimate=pl.CostEstimate(flops=int(flops),
                                      transcendentals=int(transcendentals),
                                      bytes_accessed=int(bytes_accessed)),
    )(view_flat, feature, h_in,
      prep["w1"], prep["b1"], prep["w2"], prep["b2"], prep["wfc1"], prep["bfc1"],
      prep["w_ih_x"], prep["w_ih_f"], prep["b_ih"], prep["w_hh"], prep["b_hh"],
      prep["w_fc2"], prep["b_fc2"])

    return q_pad[:B, :n_actions], h_pad[:B, :D]


# ---------------------------------------------------------------------------
# raw (torch-layout) parameters and pure-XLA reference
# ---------------------------------------------------------------------------
def init_raw_params(key, rnn_hidden, feat_dim, n_actions):
    D = rnn_hidden + feat_dim
    it = iter(jax.random.split(key, 20))

    def unif(k, shape, fan_in):
        bound = 1.0 / (fan_in ** 0.5)
        return jax.random.uniform(k, shape, jnp.float32, -bound, bound)

    raw = {}
    raw["conv1_w"] = unif(next(it), (32, 10, 3, 3), 10 * 9)
    raw["conv1_b"] = unif(next(it), (32,), 10 * 9)
    raw["bn1_gamma"] = jax.random.uniform(next(it), (32,), jnp.float32, 0.5, 1.5)
    raw["bn1_beta"] = 0.1 * jax.random.normal(next(it), (32,), jnp.float32)
    raw["bn1_mean"] = 0.1 * jax.random.normal(next(it), (32,), jnp.float32)
    raw["bn1_var"] = jax.random.uniform(next(it), (32,), jnp.float32, 0.5, 1.5)
    raw["conv2_w"] = unif(next(it), (32, 32, 3, 3), 32 * 9)
    raw["conv2_b"] = unif(next(it), (32,), 32 * 9)
    raw["bn2_gamma"] = jax.random.uniform(next(it), (32,), jnp.float32, 0.5, 1.5)
    raw["bn2_beta"] = 0.1 * jax.random.normal(next(it), (32,), jnp.float32)
    raw["bn2_mean"] = 0.1 * jax.random.normal(next(it), (32,), jnp.float32)
    raw["bn2_var"] = jax.random.uniform(next(it), (32,), jnp.float32, 0.5, 1.5)
    raw["fc1_w"] = unif(next(it), (rnn_hidden, _FLAT), _FLAT)
    raw["fc1_b"] = unif(next(it), (rnn_hidden,), _FLAT)
    raw["gru_w_ih"] = unif(next(it), (3 * D, D), D)
    raw["gru_w_hh"] = unif(next(it), (3 * D, D), D)
    raw["gru_b_ih"] = unif(next(it), (3 * D,), D)
    raw["gru_b_hh"] = unif(next(it), (3 * D,), D)
    raw["fc2_w"] = unif(next(it), (n_actions, D), D)
    raw["fc2_b"] = unif(next(it), (n_actions,), D)
    return raw


def reference_forward(obs, hidden_state, raw, *, input_shape_view,
                      input_shape_feature, rnn_hidden_dim, n_actions, eps=1e-5):
    hp = jax.lax.Precision.HIGHEST
    B = obs.shape[0]
    D = rnn_hidden_dim + input_shape_feature
    view = obs[:, :input_shape_view].reshape(B, 10, 10, 5)
    feature = obs[:, -input_shape_feature:]

    def conv_bn_relu(x, w, b, g, bt, mean, var):
        y = jax.lax.conv_general_dilated(
            x, w, window_strides=(1, 1), padding=((2, 2), (2, 2)),
            dimension_numbers=("NCHW", "OIHW", "NCHW"), precision=hp)
        y = y + b[None, :, None, None]
        y = (g[None, :, None, None] * (y - mean[None, :, None, None])
             / jnp.sqrt(var[None, :, None, None] + eps) + bt[None, :, None, None])
        return jnp.maximum(y, 0.0)

    out = conv_bn_relu(view, raw["conv1_w"], raw["conv1_b"], raw["bn1_gamma"],
                       raw["bn1_beta"], raw["bn1_mean"], raw["bn1_var"])
    out = conv_bn_relu(out, raw["conv2_w"], raw["conv2_b"], raw["bn2_gamma"],
                       raw["bn2_beta"], raw["bn2_mean"], raw["bn2_var"])
    out = out.reshape(B, -1)
    x = jnp.maximum(jnp.dot(out, raw["fc1_w"].T, precision=hp) + raw["fc1_b"], 0.0)
    h_cat = jnp.concatenate([x, feature], axis=1)
    h_in = hidden_state.reshape(B, D)
    gi = jnp.dot(h_cat, raw["gru_w_ih"].T, precision=hp) + raw["gru_b_ih"]
    gh = jnp.dot(h_in, raw["gru_w_hh"].T, precision=hp) + raw["gru_b_hh"]
    i_r, i_z, i_n = jnp.split(gi, 3, axis=1)
    h_r, h_z, h_n = jnp.split(gh, 3, axis=1)
    r = jax.nn.sigmoid(i_r + h_r)
    z = jax.nn.sigmoid(i_z + h_z)
    n = jnp.tanh(i_n + r * h_n)
    h_new = (1.0 - z) * n + z * h_in
    q = jnp.dot(h_new, raw["fc2_w"].T, precision=hp) + raw["fc2_b"]
    return q, h_new


# ---------------------------------------------------------------------------
if __name__ == "__main__":
    IN_VIEW = 10 * 10 * 5        # 500, fixed by view.view(-1, 10, 10, 5)
    IN_FEAT = 16
    OBS_DIM = IN_VIEW + IN_FEAT  # 516
    RNN_HIDDEN = 64
    N_ACTIONS = 8
    B = 8

    key = jax.random.PRNGKey(0)
    k_par, k_obs, k_hid = jax.random.split(key, 3)

    raw = init_raw_params(k_par, RNN_HIDDEN, IN_FEAT, N_ACTIONS)
    prep = prepare_params(raw, RNN_HIDDEN, IN_FEAT, N_ACTIONS)

    obs = jax.random.normal(k_obs, (B, OBS_DIM), jnp.float32)
    hidden = 0.5 * jax.random.normal(k_hid, (B, RNN_HIDDEN + IN_FEAT), jnp.float32)

    fwd = jax.jit(functools.partial(
        convnet_rnn_forward,
        input_shape_view=IN_VIEW, input_shape_feature=IN_FEAT,
        rnn_hidden_dim=RNN_HIDDEN, n_actions=N_ACTIONS))

    q, h_new = fwd(obs, hidden, prep)
    q, h_new = jax.block_until_ready((q, h_new))

    q_ref, h_ref = reference_forward(
        obs, hidden, raw,
        input_shape_view=IN_VIEW, input_shape_feature=IN_FEAT,
        rnn_hidden_dim=RNN_HIDDEN, n_actions=N_ACTIONS)

    assert q.shape == (B, N_ACTIONS) and h_new.shape == (B, RNN_HIDDEN + IN_FEAT)
    # tolerance accounts for bf16 MXU operands vs. the f32 HIGHEST-precision reference
    assert jnp.allclose(q, q_ref, atol=3e-2, rtol=3e-2), \
        ("q mismatch", float(jnp.max(jnp.abs(q - q_ref))))
    assert jnp.allclose(h_new, h_ref, atol=3e-2, rtol=3e-2), \
        ("h mismatch", float(jnp.max(jnp.abs(h_new - h_ref))))

    print("KERNEL_OK")
</pallas_src>

<mosaic_0001>
module attributes {stable_mosaic.version = 11 : i64} {
  func.func @_fused_kernel(%arg0: i32, %arg1: memref<8x1792xbf16, #tpu.memory_space<vmem>>, %arg2: memref<8x16xf32, #tpu.memory_space<vmem>>, %arg3: memref<8x128xf32, #tpu.memory_space<vmem>>, %arg4: memref<384x256xbf16, #tpu.memory_space<vmem>>, %arg5: memref<1x256xf32, #tpu.memory_space<vmem>>, %arg6: memref<768x288xbf16, #tpu.memory_space<vmem>>, %arg7: memref<1x288xf32, #tpu.memory_space<vmem>>, %arg8: memref<14x288x64xbf16, #tpu.memory_space<vmem>>, %arg9: memref<1x64xf32, #tpu.memory_space<vmem>>, %arg10: memref<64x384xbf16, #tpu.memory_space<vmem>>, %arg11: memref<16x384xbf16, #tpu.memory_space<vmem>>, %arg12: memref<1x384xf32, #tpu.memory_space<vmem>>, %arg13: memref<128x384xbf16, #tpu.memory_space<vmem>>, %arg14: memref<1x384xf32, #tpu.memory_space<vmem>>, %arg15: memref<128x128xbf16, #tpu.memory_space<vmem>>, %arg16: memref<1x128xf32, #tpu.memory_space<vmem>>, %arg17: memref<8x128xf32, #tpu.memory_space<vmem>>, %arg18: memref<8x128xf32, #tpu.memory_space<vmem>>, %arg19: memref<8x4096xbf16, #tpu.memory_space<vmem>>) attributes {dimension_semantics = [#tpu.dimension_semantics<parallel>], iteration_bounds = array<i64: 1>, scalar_prefetch = 0 : i64, scratch_operands = 1 : i64, tpu.core_type = #tpu.core_type<tc>, window_params = [{transform_indices = @transform_0, window_bounds = array<i64: 8, 1792>}, {transform_indices = @transform_1, window_bounds = array<i64: 8, 16>}, {transform_indices = @transform_2, window_bounds = array<i64: 8, 128>}, {pipeline_mode = #tpu.pipeline_mode<synchronous>, transform_indices = @transform_3, window_bounds = array<i64: 384, 256>}, {pipeline_mode = #tpu.pipeline_mode<synchronous>, transform_indices = @transform_4, window_bounds = array<i64: 1, 256>}, {pipeline_mode = #tpu.pipeline_mode<synchronous>, transform_indices = @transform_5, window_bounds = array<i64: 768, 288>}, {pipeline_mode = #tpu.pipeline_mode<synchronous>, transform_indices = @transform_6, window_bounds = array<i64: 1, 288>}, {pipeline_mode = #tpu.pipeline_mode<synchronous>, transform_indices = @transform_7, window_bounds = array<i64: 14, 288, 64>}, {pipeline_mode = #tpu.pipeline_mode<synchronous>, transform_indices = @transform_8, window_bounds = array<i64: 1, 64>}, {pipeline_mode = #tpu.pipeline_mode<synchronous>, transform_indices = @transform_9, window_bounds = array<i64: 64, 384>}, {pipeline_mode = #tpu.pipeline_mode<synchronous>, transform_indices = @transform_10, window_bounds = array<i64: 16, 384>}, {pipeline_mode = #tpu.pipeline_mode<synchronous>, transform_indices = @transform_11, window_bounds = array<i64: 1, 384>}, {pipeline_mode = #tpu.pipeline_mode<synchronous>, transform_indices = @transform_12, window_bounds = array<i64: 128, 384>}, {pipeline_mode = #tpu.pipeline_mode<synchronous>, transform_indices = @transform_13, window_bounds = array<i64: 1, 384>}, {pipeline_mode = #tpu.pipeline_mode<synchronous>, transform_indices = @transform_14, window_bounds = array<i64: 128, 128>}, {pipeline_mode = #tpu.pipeline_mode<synchronous>, transform_indices = @transform_15, window_bounds = array<i64: 1, 128>}, {transform_indices = @transform_16, window_bounds = array<i64: 8, 128>}, {transform_indices = @transform_17, window_bounds = array<i64: 8, 128>}]} {
    %cst = arith.constant 0.000000e+00 : bf16
    %0 = vector.broadcast %cst : bf16 to vector<8x512xbf16>
    %c0 = arith.constant 0 : index
    %c0_0 = arith.constant 0 : index
    %1 = vector.load %arg19[%c0, %c0_0] : memref<8x4096xbf16, #tpu.memory_space<vmem>>, vector<8x512xbf16>
    tpu.vector_store %arg19[%c0, %c0_0], %0 {strides = array<i32>} : memref<8x4096xbf16, #tpu.memory_space<vmem>>, vector<8x512xbf16>,
    %c0_1 = arith.constant 0 : index
    %c3584 = arith.constant 3584 : index
    %2 = vector.load %arg19[%c0_1, %c3584] : memref<8x4096xbf16, #tpu.memory_space<vmem>>, vector<8x512xbf16>
    tpu.vector_store %arg19[%c0_1, %c3584], %0 {strides = array<i32>} : memref<8x4096xbf16, #tpu.memory_space<vmem>>, vector<8x512xbf16>,
    %c0_2 = arith.constant 0 : index
    %c0_3 = arith.constant 0 : index
    %3 = vector.load %arg1[%c0_2, %c0_3] : memref<8x1792xbf16, #tpu.memory_space<vmem>>, vector<8x384xbf16>
    %c0_4 = arith.constant 0 : index
    %c0_5 = arith.constant 0 : index
    %4 = vector.load %arg4[%c0_4, %c0_5] : memref<384x256xbf16, #tpu.memory_space<vmem>>, vector<384x256xbf16>
    %cst_6 = arith.constant dense<0.000000e+00> : vector<8x256xf32>
    %5 = tpu.matmul %3, %4, %cst_6 {dimension_numbers = #tpu.dot_dimension_numbers<[1], [0], [0], [1], [0, 0, 1, 1], [], []>} : vector<8x384xbf16>, vector<384x256xbf16>, vector<8x256xf32> -> vector<8x256xf32>
    %c0_7 = arith.constant 0 : index
    %c0_8 = arith.constant 0 : index
    %6 = vector.load %arg5[%c0_7, %c0_8] : memref<1x256xf32, #tpu.memory_space<vmem>>, vector<1x256xf32>
    %7 = vector.broadcast %6 : vector<1x256xf32> to vector<8x256xf32>
    %8 = arith.addf %5, %7 : vector<8x256xf32>
    %cst_9 = arith.constant 0.000000e+00 : f32
    %9 = vector.broadcast %cst_9 : f32 to vector<8x256xf32>
    %10 = arith.maximumf %8, %9 : vector<8x256xf32>
    %11 = arith.truncf %10 : vector<8x256xf32> to vector<8x256xbf16>
    %c0_10 = arith.constant 0 : index
    %c512 = arith.constant 512 : index
    %12 = vector.load %arg19[%c0_10, %c512] : memref<8x4096xbf16, #tpu.memory_space<vmem>>, vector<8x256xbf16>
    tpu.vector_store %arg19[%c0_10, %c512], %11 {strides = array<i32>} : memref<8x4096xbf16, #tpu.memory_space<vmem>>, vector<8x256xbf16>,
    %c0_11 = arith.constant 0 : index
    %c128 = arith.constant 128 : index
    %13 = vector.load %arg1[%c0_11, %c128] : memref<8x1792xbf16, #tpu.memory_space<vmem>>, vector<8x384xbf16>
    %c0_12 = arith.constant 0 : index
    %c0_13 = arith.constant 0 : index
    %14 = vector.load %arg4[%c0_12, %c0_13] : memref<384x256xbf16, #tpu.memory_space<vmem>>, vector<384x256xbf16>
    %cst_14 = arith.constant dense<0.000000e+00> : vector<8x256xf32>
    %15 = tpu.matmul %13, %14, %cst_14 {dimension_numbers = #tpu.dot_dimension_numbers<[1], [0], [0], [1], [0, 0, 1, 1], [], []>} : vector<8x384xbf16>, vector<384x256xbf16>, vector<8x256xf32> -> vector<8x256xf32>
    %c0_15 = arith.constant 0 : index
    %c0_16 = arith.constant 0 : index
    %16 = vector.load %arg5[%c0_15, %c0_16] : memref<1x256xf32, #tpu.memory_space<vmem>>, vector<1x256xf32>
    %17 = vector.broadcast %16 : vector<1x256xf32> to vector<8x256xf32>
    %18 = arith.addf %15, %17 : vector<8x256xf32>
    %cst_17 = arith.constant 0.000000e+00 : f32
    %19 = vector.broadcast %cst_17 : f32 to vector<8x256xf32>
    %20 = arith.maximumf %18, %19 : vector<8x256xf32>
    %21 = arith.truncf %20 : vector<8x256xf32> to vector<8x256xbf16>
    %c0_18 = arith.constant 0 : index
    %c768 = arith.constant 768 : index
    %22 = vector.load %arg19[%c0_18, %c768] : memref<8x4096xbf16, #tpu.memory_space<vmem>>, vector<8x256xbf16>
    tpu.vector_store %arg19[%c0_18, %c768], %21 {strides = array<i32>} : memref<8x4096xbf16, #tpu.memory_space<vmem>>, vector<8x256xbf16>,
    %c0_19 = arith.constant 0 : index
    %c256 = arith.constant 256 : index
    %23 = vector.load %arg1[%c0_19, %c256] : memref<8x1792xbf16, #tpu.memory_space<vmem>>, vector<8x384xbf16>
    %c0_20 = arith.constant 0 : index
    %c0_21 = arith.constant 0 : index
    %24 = vector.load %arg4[%c0_20, %c0_21] : memref<384x256xbf16, #tpu.memory_space<vmem>>, vector<384x256xbf16>
    %cst_22 = arith.constant dense<0.000000e+00> : vector<8x256xf32>
    %25 = tpu.matmul %23, %24, %cst_22 {dimension_numbers = #tpu.dot_dimension_numbers<[1], [0], [0], [1], [0, 0, 1, 1], [], []>} : vector<8x384xbf16>, vector<384x256xbf16>, vector<8x256xf32> -> vector<8x256xf32>
    %c0_23 = arith.constant 0 : index
    %c0_24 = arith.constant 0 : index
    %26 = vector.load %arg5[%c0_23, %c0_24] : memref<1x256xf32, #tpu.memory_space<vmem>>, vector<1x256xf32>
    %27 = vector.broadcast %26 : vector<1x256xf32> to vector<8x256xf32>
    %28 = arith.addf %25, %27 : vector<8x256xf32>
    %cst_25 = arith.constant 0.000000e+00 : f32
    %29 = vector.broadcast %cst_25 : f32 to vector<8x256xf32>
    %30 = arith.maximumf %28, %29 : vector<8x256xf32>
    %31 = arith.truncf %30 : vector<8x256xf32> to vector<8x256xbf16>
    %c0_26 = arith.constant 0 : index
    %c1024 = arith.constant 1024 : index
    %32 = vector.load %arg19[%c0_26, %c1024] : memref<8x4096xbf16, #tpu.memory_space<vmem>>, vector<8x256xbf16>
    tpu.vector_store %arg19[%c0_26, %c1024], %31 {strides = array<i32>} : memref<8x4096xbf16, #tpu.memory_space<vmem>>, vector<8x256xbf16>,
    %c0_27 = arith.constant 0 : index
    %c384 = arith.constant 384 : index
    %33 = vector.load %arg1[%c0_27, %c384] : memref<8x1792xbf16, #tpu.memory_space<vmem>>, vector<8x384xbf16>
    %c0_28 = arith.constant 0 : index
    %c0_29 = arith.constant 0 : index
    %34 = vector.load %arg4[%c0_28, %c0_29] : memref<384x256xbf16, #tpu.memory_space<vmem>>, vector<384x256xbf16>
    %cst_30 = arith.constant dense<0.000000e+00> : vector<8x256xf32>
    %35 = tpu.matmul %33, %34, %cst_30 {dimension_numbers = #tpu.dot_dimension_numbers<[1], [0], [0], [1], [0, 0, 1, 1], [], []>} : vector<8x384xbf16>, vector<384x256xbf16>, vector<8x256xf32> -> vector<8x256xf32>
    %c0_31 = arith.constant 0 : index
    %c0_32 = arith.constant 0 : index
    %36 = vector.load %arg5[%c0_31, %c0_32] : memref<1x256xf32, #tpu.memory_space<vmem>>, vector<1x256xf32>
    %37 = vector.broadcast %36 : vector<1x256xf32> to vector<8x256xf32>
    %38 = arith.addf %35, %37 : vector<8x256xf32>
    %cst_33 = arith.constant 0.000000e+00 : f32
    %39 = vector.broadcast %cst_33 : f32 to vector<8x256xf32>
    %40 = arith.maximumf %38, %39 : vector<8x256xf32>
    %41 = arith.truncf %40 : vector<8x256xf32> to vector<8x256xbf16>
    %c0_34 = arith.constant 0 : index
    %c1280 = arith.constant 1280 : index
    %42 = vector.load %arg19[%c0_34, %c1280] : memref<8x4096xbf16, #tpu.memory_space<vmem>>, vector<8x256xbf16>
    tpu.vector_store %arg19[%c0_34, %c1280], %41 {strides = array<i32>} : memref<8x4096xbf16, #tpu.memory_space<vmem>>, vector<8x256xbf16>,
    %c0_35 = arith.constant 0 : index
    %c512_36 = arith.constant 512 : index
    %43 = vector.load %arg1[%c0_35, %c512_36] : memref<8x1792xbf16, #tpu.memory_space<vmem>>, vector<8x384xbf16>
    %c0_37 = arith.constant 0 : index
    %c0_38 = arith.constant 0 : index
    %44 = vector.load %arg4[%c0_37, %c0_38] : memref<384x256xbf16, #tpu.memory_space<vmem>>, vector<384x256xbf16>
    %cst_39 = arith.constant dense<0.000000e+00> : vector<8x256xf32>
    %45 = tpu.matmul %43, %44, %cst_39 {dimension_numbers = #tpu.dot_dimension_numbers<[1], [0], [0], [1], [0, 0, 1, 1], [], []>} : vector<8x384xbf16>, vector<384x256xbf16>, vector<8x256xf32> -> vector<8x256xf32>
    %c0_40 = arith.constant 0 : index
    %c0_41 = arith.constant 0 : index
    %46 = vector.load %arg5[%c0_40, %c0_41] : memref<1x256xf32, #tpu.memory_space<vmem>>, vector<1x256xf32>
    %47 = vector.broadcast %46 : vector<1x256xf32> to vector<8x256xf32>
    %48 = arith.addf %45, %47 : vector<8x256xf32>
    %cst_42 = arith.constant 0.000000e+00 : f32
    %49 = vector.broadcast %cst_42 : f32 to vector<8x256xf32>
    %50 = arith.maximumf %48, %49 : vector<8x256xf32>
    %51 = arith.truncf %50 : vector<8x256xf32> to vector<8x256xbf16>
    %c0_43 = arith.constant 0 : index
    %c1536 = arith.constant 1536 : index
    %52 = vector.load %arg19[%c0_43, %c1536] : memref<8x4096xbf16, #tpu.memory_space<vmem>>, vector<8x256xbf16>
    tpu.vector_store %arg19[%c0_43, %c1536], %51 {strides = array<i32>} : memref<8x4096xbf16, #tpu.memory_space<vmem>>, vector<8x256xbf16>,
    %c0_44 = arith.constant 0 : index
    %c640 = arith.constant 640 : index
    %53 = vector.load %arg1[%c0_44, %c640] : memref<8x1792xbf16, #tpu.memory_space<vmem>>, vector<8x384xbf16>
    %c0_45 = arith.constant 0 : index
    %c0_46 = arith.constant 0 : index
    %54 = vector.load %arg4[%c0_45, %c0_46] : memref<384x256xbf16, #tpu.memory_space<vmem>>, vector<384x256xbf16>
    %cst_47 = arith.constant dense<0.000000e+00> : vector<8x256xf32>
    %55 = tpu.matmul %53, %54, %cst_47 {dimension_numbers = #tpu.dot_dimension_numbers<[1], [0], [0], [1], [0, 0, 1, 1], [], []>} : vector<8x384xbf16>, vector<384x256xbf16>, vector<8x256xf32> -> vector<8x256xf32>
    %c0_48 = arith.constant 0 : index
    %c0_49 = arith.constant 0 : index
    %56 = vector.load %arg5[%c0_48, %c0_49] : memref<1x256xf32, #tpu.memory_space<vmem>>, vector<1x256xf32>
    %57 = vector.broadcast %56 : vector<1x256xf32> to vector<8x256xf32>
    %58 = arith.addf %55, %57 : vector<8x256xf32>
    %cst_50 = arith.constant 0.000000e+00 : f32
    %59 = vector.broadcast %cst_50 : f32 to vector<8x256xf32>
    %60 = arith.maximumf %58, %59 : vector<8x256xf32>
    %61 = arith.truncf %60 : vector<8x256xf32> to vector<8x256xbf16>
    %c0_51 = arith.constant 0 : index
    %c1792 = arith.constant 1792 : index
    %62 = vector.load %arg19[%c0_51, %c1792] : memref<8x4096xbf16, #tpu.memory_space<vmem>>, vector<8x256xbf16>
    tpu.vector_store %arg19[%c0_51, %c1792], %61 {strides = array<i32>} : memref<8x4096xbf16, #tpu.memory_space<vmem>>, vector<8x256xbf16>,
    %c0_52 = arith.constant 0 : index
    %c768_53 = arith.constant 768 : index
    %63 = vector.load %arg1[%c0_52, %c768_53] : memref<8x1792xbf16, #tpu.memory_space<vmem>>, vector<8x384xbf16>
    %c0_54 = arith.constant 0 : index
    %c0_55 = arith.constant 0 : index
    %64 = vector.load %arg4[%c0_54, %c0_55] : memref<384x256xbf16, #tpu.memory_space<vmem>>, vector<384x256xbf16>
    %cst_56 = arith.constant dense<0.000000e+00> : vector<8x256xf32>
    %65 = tpu.matmul %63, %64, %cst_56 {dimension_numbers = #tpu.dot_dimension_numbers<[1], [0], [0], [1], [0, 0, 1, 1], [], []>} : vector<8x384xbf16>, vector<384x256xbf16>, vector<8x256xf32> -> vector<8x256xf32>
    %c0_57 = arith.constant 0 : index
    %c0_58 = arith.constant 0 : index
    %66 = vector.load %arg5[%c0_57, %c0_58] : memref<1x256xf32, #tpu.memory_space<vmem>>, vector<1x256xf32>
    %67 = vector.broadcast %66 : vector<1x256xf32> to vector<8x256xf32>
    %68 = arith.addf %65, %67 : vector<8x256xf32>
    %cst_59 = arith.constant 0.000000e+00 : f32
    %69 = vector.broadcast %cst_59 : f32 to vector<8x256xf32>
    %70 = arith.maximumf %68, %69 : vector<8x256xf32>
    %71 = arith.truncf %70 : vector<8x256xf32> to vector<8x256xbf16>
    %c0_60 = arith.constant 0 : index
    %c2048 = arith.constant 2048 : index
    %72 = vector.load %arg19[%c0_60, %c2048] : memref<8x4096xbf16, #tpu.memory_space<vmem>>, vector<8x256xbf16>
    tpu.vector_store %arg19[%c0_60, %c2048], %71 {strides = array<i32>} : memref<8x4096xbf16, #tpu.memory_space<vmem>>, vector<8x256xbf16>,
    %c0_61 = arith.constant 0 : index
    %c896 = arith.constant 896 : index
    %73 = vector.load %arg1[%c0_61, %c896] : memref<8x1792xbf16, #tpu.memory_space<vmem>>, vector<8x384xbf16>
    %c0_62 = arith.constant 0 : index
    %c0_63 = arith.constant 0 : index
    %74 = vector.load %arg4[%c0_62, %c0_63] : memref<384x256xbf16, #tpu.memory_space<vmem>>, vector<384x256xbf16>
    %cst_64 = arith.constant dense<0.000000e+00> : vector<8x256xf32>
    %75 = tpu.matmul %73, %74, %cst_64 {dimension_numbers = #tpu.dot_dimension_numbers<[1], [0], [0], [1], [0, 0, 1, 1], [], []>} : vector<8x384xbf16>, vector<384x256xbf16>, vector<8x256xf32> -> vector<8x256xf32>
    %c0_65 = arith.constant 0 : index
    %c0_66 = arith.constant 0 : index
    %76 = vector.load %arg5[%c0_65, %c0_66] : memref<1x256xf32, #tpu.memory_space<vmem>>, vector<1x256xf32>
    %77 = vector.broadcast %76 : vector<1x256xf32> to vector<8x256xf32>
    %78 = arith.addf %75, %77 : vector<8x256xf32>
    %cst_67 = arith.constant 0.000000e+00 : f32
    %79 = vector.broadcast %cst_67 : f32 to vector<8x256xf32>
    %80 = arith.maximumf %78, %79 : vector<8x256xf32>
    %81 = arith.truncf %80 : vector<8x256xf32> to vector<8x256xbf16>
    %c0_68 = arith.constant 0 : index
    %c2304 = arith.constant 2304 : index
    %82 = vector.load %arg19[%c0_68, %c2304] : memref<8x4096xbf16, #tpu.memory_space<vmem>>, vector<8x256xbf16>
    tpu.vector_store %arg19[%c0_68, %c2304], %81 {strides = array<i32>} : memref<8x4096xbf16, #tpu.memory_space<vmem>>, vector<8x256xbf16>,
    %c0_69 = arith.constant 0 : index
    %c1024_70 = arith.constant 1024 : index
    %83 = vector.load %arg1[%c0_69, %c1024_70] : memref<8x1792xbf16, #tpu.memory_space<vmem>>, vector<8x384xbf16>
    %c0_71 = arith.constant 0 : index
    %c0_72 = arith.constant 0 : index
    %84 = vector.load %arg4[%c0_71, %c0_72] : memref<384x256xbf16, #tpu.memory_space<vmem>>, vector<384x256xbf16>
    %cst_73 = arith.constant dense<0.000000e+00> : vector<8x256xf32>
    %85 = tpu.matmul %83, %84, %cst_73 {dimension_numbers = #tpu.dot_dimension_numbers<[1], [0], [0], [1], [0, 0, 1, 1], [], []>} : vector<8x384xbf16>, vector<384x256xbf16>, vector<8x256xf32> -> vector<8x256xf32>
    %c0_74 = arith.constant 0 : index
    %c0_75 = arith.constant 0 : index
    %86 = vector.load %arg5[%c0_74, %c0_75] : memref<1x256xf32, #tpu.memory_space<vmem>>, vector<1x256xf32>
    %87 = vector.broadcast %86 : vector<1x256xf32> to vector<8x256xf32>
    %88 = arith.addf %85, %87 : vector<8x256xf32>
    %cst_76 = arith.constant 0.000000e+00 : f32
    %89 = vector.broadcast %cst_76 : f32 to vector<8x256xf32>
    %90 = arith.maximumf %88, %89 : vector<8x256xf32>
    %91 = arith.truncf %90 : vector<8x256xf32> to vector<8x256xbf16>
    %c0_77 = arith.constant 0 : index
    %c2560 = arith.constant 2560 : index
    %92 = vector.load %arg19[%c0_77, %c2560] : memref<8x4096xbf16, #tpu.memory_space<vmem>>, vector<8x256xbf16>
    tpu.vector_store %arg19[%c0_77, %c2560], %91 {strides = array<i32>} : memref<8x4096xbf16, #tpu.memory_space<vmem>>, vector<8x256xbf16>,
    %c0_78 = arith.constant 0 : index
    %c1152 = arith.constant 1152 : index
    %93 = vector.load %arg1[%c0_78, %c1152] : memref<8x1792xbf16, #tpu.memory_space<vmem>>, vector<8x384xbf16>
    %c0_79 = arith.constant 0 : index
    %c0_80 = arith.constant 0 : index
    %94 = vector.load %arg4[%c0_79, %c0_80] : memref<384x256xbf16, #tpu.memory_space<vmem>>, vector<384x256xbf16>
    %cst_81 = arith.constant dense<0.000000e+00> : vector<8x256xf32>
    %95 = tpu.matmul %93, %94, %cst_81 {dimension_numbers = #tpu.dot_dimension_numbers<[1], [0], [0], [1], [0, 0, 1, 1], [], []>} : vector<8x384xbf16>, vector<384x256xbf16>, vector<8x256xf32> -> vector<8x256xf32>
    %c0_82 = arith.constant 0 : index
    %c0_83 = arith.constant 0 : index
    %96 = vector.load %arg5[%c0_82, %c0_83] : memref<1x256xf32, #tpu.memory_space<vmem>>, vector<1x256xf32>
    %97 = vector.broadcast %96 : vector<1x256xf32> to vector<8x256xf32>
    %98 = arith.addf %95, %97 : vector<8x256xf32>
    %cst_84 = arith.constant 0.000000e+00 : f32
    %99 = vector.broadcast %cst_84 : f32 to vector<8x256xf32>
    %100 = arith.maximumf %98, %99 : vector<8x256xf32>
    %101 = arith.truncf %100 : vector<8x256xf32> to vector<8x256xbf16>
    %c0_85 = arith.constant 0 : index
    %c2816 = arith.constant 2816 : index
    %102 = vector.load %arg19[%c0_85, %c2816] : memref<8x4096xbf16, #tpu.memory_space<vmem>>, vector<8x256xbf16>
    tpu.vector_store %arg19[%c0_85, %c2816], %101 {strides = array<i32>} : memref<8x4096xbf16, #tpu.memory_space<vmem>>, vector<8x256xbf16>,
    %c0_86 = arith.constant 0 : index
    %c1280_87 = arith.constant 1280 : index
    %103 = vector.load %arg1[%c0_86, %c1280_87] : memref<8x1792xbf16, #tpu.memory_space<vmem>>, vector<8x384xbf16>
    %c0_88 = arith.constant 0 : index
    %c0_89 = arith.constant 0 : index
    %104 = vector.load %arg4[%c0_88, %c0_89] : memref<384x256xbf16, #tpu.memory_space<vmem>>, vector<384x256xbf16>
    %cst_90 = arith.constant dense<0.000000e+00> : vector<8x256xf32>
    %105 = tpu.matmul %103, %104, %cst_90 {dimension_numbers = #tpu.dot_dimension_numbers<[1], [0], [0], [1], [0, 0, 1, 1], [], []>} : vector<8x384xbf16>, vector<384x256xbf16>, vector<8x256xf32> -> vector<8x256xf32>
    %c0_91 = arith.constant 0 : index
    %c0_92 = arith.constant 0 : index
    %106 = vector.load %arg5[%c0_91, %c0_92] : memref<1x256xf32, #tpu.memory_space<vmem>>, vector<1x256xf32>
    %107 = vector.broadcast %106 : vector<1x256xf32> to vector<8x256xf32>
    %108 = arith.addf %105, %107 : vector<8x256xf32>
    %cst_93 = arith.constant 0.000000e+00 : f32
    %109 = vector.broadcast %cst_93 : f32 to vector<8x256xf32>
    %110 = arith.maximumf %108, %109 : vector<8x256xf32>
    %111 = arith.truncf %110 : vector<8x256xf32> to vector<8x256xbf16>
    %c0_94 = arith.constant 0 : index
    %c3072 = arith.constant 3072 : index
    %112 = vector.load %arg19[%c0_94, %c3072] : memref<8x4096xbf16, #tpu.memory_space<vmem>>, vector<8x256xbf16>
    tpu.vector_store %arg19[%c0_94, %c3072], %111 {strides = array<i32>} : memref<8x4096xbf16, #tpu.memory_space<vmem>>, vector<8x256xbf16>,
    %c0_95 = arith.constant 0 : index
    %c1408 = arith.constant 1408 : index
    %113 = vector.load %arg1[%c0_95, %c1408] : memref<8x1792xbf16, #tpu.memory_space<vmem>>, vector<8x384xbf16>
    %c0_96 = arith.constant 0 : index
    %c0_97 = arith.constant 0 : index
    %114 = vector.load %arg4[%c0_96, %c0_97] : memref<384x256xbf16, #tpu.memory_space<vmem>>, vector<384x256xbf16>
    %cst_98 = arith.constant dense<0.000000e+00> : vector<8x256xf32>
    %115 = tpu.matmul %113, %114, %cst_98 {dimension_numbers = #tpu.dot_dimension_numbers<[1], [0], [0], [1], [0, 0, 1, 1], [], []>} : vector<8x384xbf16>, vector<384x256xbf16>, vector<8x256xf32> -> vector<8x256xf32>
    %c0_99 = arith.constant 0 : index
    %c0_100 = arith.constant 0 : index
    %116 = vector.load %arg5[%c0_99, %c0_100] : memref<1x256xf32, #tpu.memory_space<vmem>>, vector<1x256xf32>
    %117 = vector.broadcast %116 : vector<1x256xf32> to vector<8x256xf32>
    %118 = arith.addf %115, %117 : vector<8x256xf32>
    %cst_101 = arith.constant 0.000000e+00 : f32
    %119 = vector.broadcast %cst_101 : f32 to vector<8x256xf32>
    %120 = arith.maximumf %118, %119 : vector<8x256xf32>
    %121 = arith.truncf %120 : vector<8x256xf32> to vector<8x256xbf16>
    %c0_102 = arith.constant 0 : index
    %c3328 = arith.constant 3328 : index
    %122 = vector.load %arg19[%c0_102, %c3328] : memref<8x4096xbf16, #tpu.memory_space<vmem>>, vector<8x256xbf16>
    tpu.vector_store %arg19[%c0_102, %c3328], %121 {strides = array<i32>} : memref<8x4096xbf16, #tpu.memory_space<vmem>>, vector<8x256xbf16>,
    %cst_103 = arith.constant 0.000000e+00 : f32
    %123 = vector.broadcast %cst_103 : f32 to vector<8x64xf32>
    %c0_104 = arith.constant 0 : index
    %c0_105 = arith.constant 0 : index
    %124 = vector.load %arg19[%c0_104, %c0_105] : memref<8x4096xbf16, #tpu.memory_space<vmem>>, vector<8x768xbf16>
    %c0_106 = arith.constant 0 : index
    %c0_107 = arith.constant 0 : index
    %125 = vector.load %arg6[%c0_106, %c0_107] : memref<768x288xbf16, #tpu.memory_space<vmem>>, vector<768x288xbf16>
    %cst_108 = arith.constant dense<0.000000e+00> : vector<8x288xf32>
    %126 = tpu.matmul %124, %125, %cst_108 {dimension_numbers = #tpu.dot_dimension_numbers<[1], [0], [0], [1], [0, 0, 1, 1], [], []>} : vector<8x768xbf16>, vector<768x288xbf16>, vector<8x288xf32> -> vector<8x288xf32>
    %c0_109 = arith.constant 0 : index
    %c0_110 = arith.constant 0 : index
    %127 = vector.load %arg7[%c0_109, %c0_110] : memref<1x288xf32, #tpu.memory_space<vmem>>, vector<1x288xf32>
    %128 = vector.broadcast %127 : vector<1x288xf32> to vector<8x288xf32>
    %129 = arith.addf %126, %128 : vector<8x288xf32>
    %cst_111 = arith.constant 0.000000e+00 : f32
    %130 = vector.broadcast %cst_111 : f32 to vector<8x288xf32>
    %131 = arith.maximumf %129, %130 : vector<8x288xf32>
    %132 = arith.truncf %131 : vector<8x288xf32> to vector<8x288xbf16>
    %c0_112 = arith.constant 0 : index
    %c0_113 = arith.constant 0 : index
    %c0_114 = arith.constant 0 : index
    %133 = vector.load %arg8[%c0_112, %c0_113, %c0_114] : memref<14x288x64xbf16, #tpu.memory_space<vmem>>, vector<1x288x64xbf16>
    %134 = vector.shape_cast %133 : vector<1x288x64xbf16> to vector<288x64xbf16>
    %cst_115 = arith.constant dense<0.000000e+00> : vector<8x64xf32>
    %135 = tpu.matmul %132, %134, %cst_115 {dimension_numbers = #tpu.dot_dimension_numbers<[1], [0], [0], [1], [0, 0, 1, 1], [], []>} : vector<8x288xbf16>, vector<288x64xbf16>, vector<8x64xf32> -> vector<8x64xf32>
    %136 = arith.addf %123, %135 : vector<8x64xf32>
    %c0_116 = arith.constant 0 : index
    %c256_117 = arith.constant 256 : index
    %137 = vector.load %arg19[%c0_116, %c256_117] : memref<8x4096xbf16, #tpu.memory_space<vmem>>, vector<8x768xbf16>
    %c0_118 = arith.constant 0 : index
    %c0_119 = arith.constant 0 : index
    %138 = vector.load %arg6[%c0_118, %c0_119] : memref<768x288xbf16, #tpu.memory_space<vmem>>, vector<768x288xbf16>
    %cst_120 = arith.constant dense<0.000000e+00> : vector<8x288xf32>
    %139 = tpu.matmul %137, %138, %cst_120 {dimension_numbers = #tpu.dot_dimension_numbers<[1], [0], [0], [1], [0, 0, 1, 1], [], []>} : vector<8x768xbf16>, vector<768x288xbf16>, vector<8x288xf32> -> vector<8x288xf32>
    %c0_121 = arith.constant 0 : index
    %c0_122 = arith.constant 0 : index
    %140 = vector.load %arg7[%c0_121, %c0_122] : memref<1x288xf32, #tpu.memory_space<vmem>>, vector<1x288xf32>
    %141 = vector.broadcast %140 : vector<1x288xf32> to vector<8x288xf32>
    %142 = arith.addf %139, %141 : vector<8x288xf32>
    %cst_123 = arith.constant 0.000000e+00 : f32
    %143 = vector.broadcast %cst_123 : f32 to vector<8x288xf32>
    %144 = arith.maximumf %142, %143 : vector<8x288xf32>
    %145 = arith.truncf %144 : vector<8x288xf32> to vector<8x288xbf16>
    %c1 = arith.constant 1 : index
    %c0_124 = arith.constant 0 : index
    %c0_125 = arith.constant 0 : index
    %146 = vector.load %arg8[%c1, %c0_124, %c0_125] : memref<14x288x64xbf16, #tpu.memory_space<vmem>>, vector<1x288x64xbf16>
    %147 = vector.shape_cast %146 : vector<1x288x64xbf16> to vector<288x64xbf16>
    %cst_126 = arith.constant dense<0.000000e+00> : vector<8x64xf32>
    %148 = tpu.matmul %145, %147, %cst_126 {dimension_numbers = #tpu.dot_dimension_numbers<[1], [0], [0], [1], [0, 0, 1, 1], [], []>} : vector<8x288xbf16>, vector<288x64xbf16>, vector<8x64xf32> -> vector<8x64xf32>
    %149 = arith.addf %136, %148 : vector<8x64xf32>
    %c0_127 = arith.constant 0 : index
    %c512_128 = arith.constant 512 : index
    %150 = vector.load %arg19[%c0_127, %c512_128] : memref<8x4096xbf16, #tpu.memory_space<vmem>>, vector<8x768xbf16>
    %c0_129 = arith.constant 0 : index
    %c0_130 = arith.constant 0 : index
    %151 = vector.load %arg6[%c0_129, %c0_130] : memref<768x288xbf16, #tpu.memory_space<vmem>>, vector<768x288xbf16>
    %cst_131 = arith.constant dense<0.000000e+00> : vector<8x288xf32>
    %152 = tpu.matmul %150, %151, %cst_131 {dimension_numbers = #tpu.dot_dimension_numbers<[1], [0], [0], [1], [0, 0, 1, 1], [], []>} : vector<8x768xbf16>, vector<768x288xbf16>, vector<8x288xf32> -> vector<8x288xf32>
    %c0_132 = arith.constant 0 : index
    %c0_133 = arith.constant 0 : index
    %153 = vector.load %arg7[%c0_132, %c0_133] : memref<1x288xf32, #tpu.memory_space<vmem>>, vector<1x288xf32>
    %154 = vector.broadcast %153 : vector<1x288xf32> to vector<8x288xf32>
    %155 = arith.addf %152, %154 : vector<8x288xf32>
    %cst_134 = arith.constant 0.000000e+00 : f32
    %156 = vector.broadcast %cst_134 : f32 to vector<8x288xf32>
    %157 = arith.maximumf %155, %156 : vector<8x288xf32>
    %158 = arith.truncf %157 : vector<8x288xf32> to vector<8x288xbf16>
    %c2 = arith.constant 2 : index
    %c0_135 = arith.constant 0 : index
    %c0_136 = arith.constant 0 : index
    %159 = vector.load %arg8[%c2, %c0_135, %c0_136] : memref<14x288x64xbf16, #tpu.memory_space<vmem>>, vector<1x288x64xbf16>
    %160 = vector.shape_cast %159 : vector<1x288x64xbf16> to vector<288x64xbf16>
    %cst_137 = arith.constant dense<0.000000e+00> : vector<8x64xf32>
    %161 = tpu.matmul %158, %160, %cst_137 {dimension_numbers = #tpu.dot_dimension_numbers<[1], [0], [0], [1], [0, 0, 1, 1], [], []>} : vector<8x288xbf16>, vector<288x64xbf16>, vector<8x64xf32> -> vector<8x64xf32>
    %162 = arith.addf %149, %161 : vector<8x64xf32>
    %c0_138 = arith.constant 0 : index
    %c768_139 = arith.constant 768 : index
    %163 = vector.load %arg19[%c0_138, %c768_139] : memref<8x4096xbf16, #tpu.memory_space<vmem>>, vector<8x768xbf16>
    %c0_140 = arith.constant 0 : index
    %c0_141 = arith.constant 0 : index
    %164 = vector.load %arg6[%c0_140, %c0_141] : memref<768x288xbf16, #tpu.memory_space<vmem>>, vector<768x288xbf16>
    %cst_142 = arith.constant dense<0.000000e+00> : vector<8x288xf32>
    %165 = tpu.matmul %163, %164, %cst_142 {dimension_numbers = #tpu.dot_dimension_numbers<[1], [0], [0], [1], [0, 0, 1, 1], [], []>} : vector<8x768xbf16>, vector<768x288xbf16>, vector<8x288xf32> -> vector<8x288xf32>
    %c0_143 = arith.constant 0 : index
    %c0_144 = arith.constant 0 : index
    %166 = vector.load %arg7[%c0_143, %c0_144] : memref<1x288xf32, #tpu.memory_space<vmem>>, vector<1x288xf32>
    %167 = vector.broadcast %166 : vector<1x288xf32> to vector<8x288xf32>
    %168 = arith.addf %165, %167 : vector<8x288xf32>
    %cst_145 = arith.constant 0.000000e+00 : f32
    %169 = vector.broadcast %cst_145 : f32 to vector<8x288xf32>
    %170 = arith.maximumf %168, %169 : vector<8x288xf32>
    %171 = arith.truncf %170 : vector<8x288xf32> to vector<8x288xbf16>
    %c3 = arith.constant 3 : index
    %c0_146 = arith.constant 0 : index
    %c0_147 = arith.constant 0 : index
    %172 = vector.load %arg8[%c3, %c0_146, %c0_147] : memref<14x288x64xbf16, #tpu.memory_space<vmem>>, vector<1x288x64xbf16>
    %173 = vector.shape_cast %172 : vector<1x288x64xbf16> to vector<288x64xbf16>
    %cst_148 = arith.constant dense<0.000000e+00> : vector<8x64xf32>
    %174 = tpu.matmul %171, %173, %cst_148 {dimension_numbers = #tpu.dot_dimension_numbers<[1], [0], [0], [1], [0, 0, 1, 1], [], []>} : vector<8x288xbf16>, vector<288x64xbf16>, vector<8x64xf32> -> vector<8x64xf32>
    %175 = arith.addf %162, %174 : vector<8x64xf32>
    %c0_149 = arith.constant 0 : index
    %c1024_150 = arith.constant 1024 : index
    %176 = vector.load %arg19[%c0_149, %c1024_150] : memref<8x4096xbf16, #tpu.memory_space<vmem>>, vector<8x768xbf16>
    %c0_151 = arith.constant 0 : index
    %c0_152 = arith.constant 0 : index
    %177 = vector.load %arg6[%c0_151, %c0_152] : memref<768x288xbf16, #tpu.memory_space<vmem>>, vector<768x288xbf16>
    %cst_153 = arith.constant dense<0.000000e+00> : vector<8x288xf32>
    %178 = tpu.matmul %176, %177, %cst_153 {dimension_numbers = #tpu.dot_dimension_numbers<[1], [0], [0], [1], [0, 0, 1, 1], [], []>} : vector<8x768xbf16>, vector<768x288xbf16>, vector<8x288xf32> -> vector<8x288xf32>
    %c0_154 = arith.constant 0 : index
    %c0_155 = arith.constant 0 : index
    %179 = vector.load %arg7[%c0_154, %c0_155] : memref<1x288xf32, #tpu.memory_space<vmem>>, vector<1x288xf32>
    %180 = vector.broadcast %179 : vector<1x288xf32> to vector<8x288xf32>
    %181 = arith.addf %178, %180 : vector<8x288xf32>
    %cst_156 = arith.constant 0.000000e+00 : f32
    %182 = vector.broadcast %cst_156 : f32 to vector<8x288xf32>
    %183 = arith.maximumf %181, %182 : vector<8x288xf32>
    %184 = arith.truncf %183 : vector<8x288xf32> to vector<8x288xbf16>
    %c4 = arith.constant 4 : index
    %c0_157 = arith.constant 0 : index
    %c0_158 = arith.constant 0 : index
    %185 = vector.load %arg8[%c4, %c0_157, %c0_158] : memref<14x288x64xbf16, #tpu.memory_space<vmem>>, vector<1x288x64xbf16>
    %186 = vector.shape_cast %185 : vector<1x288x64xbf16> to vector<288x64xbf16>
    %cst_159 = arith.constant dense<0.000000e+00> : vector<8x64xf32>
    %187 = tpu.matmul %184, %186, %cst_159 {dimension_numbers = #tpu.dot_dimension_numbers<[1], [0], [0], [1], [0, 0, 1, 1], [], []>} : vector<8x288xbf16>, vector<288x64xbf16>, vector<8x64xf32> -> vector<8x64xf32>
    %188 = arith.addf %175, %187 : vector<8x64xf32>
    %c0_160 = arith.constant 0 : index
    %c1280_161 = arith.constant 1280 : index
    %189 = vector.load %arg19[%c0_160, %c1280_161] : memref<8x4096xbf16, #tpu.memory_space<vmem>>, vector<8x768xbf16>
    %c0_162 = arith.constant 0 : index
    %c0_163 = arith.constant 0 : index
    %190 = vector.load %arg6[%c0_162, %c0_163] : memref<768x288xbf16, #tpu.memory_space<vmem>>, vector<768x288xbf16>
    %cst_164 = arith.constant dense<0.000000e+00> : vector<8x288xf32>
    %191 = tpu.matmul %189, %190, %cst_164 {dimension_numbers = #tpu.dot_dimension_numbers<[1], [0], [0], [1], [0, 0, 1, 1], [], []>} : vector<8x768xbf16>, vector<768x288xbf16>, vector<8x288xf32> -> vector<8x288xf32>
    %c0_165 = arith.constant 0 : index
    %c0_166 = arith.constant 0 : index
    %192 = vector.load %arg7[%c0_165, %c0_166] : memref<1x288xf32, #tpu.memory_space<vmem>>, vector<1x288xf32>
    %193 = vector.broadcast %192 : vector<1x288xf32> to vector<8x288xf32>
    %194 = arith.addf %191, %193 : vector<8x288xf32>
    %cst_167 = arith.constant 0.000000e+00 : f32
    %195 = vector.broadcast %cst_167 : f32 to vector<8x288xf32>
    %196 = arith.maximumf %194, %195 : vector<8x288xf32>
    %197 = arith.truncf %196 : vector<8x288xf32> to vector<8x288xbf16>
    %c5 = arith.constant 5 : index
    %c0_168 = arith.constant 0 : index
    %c0_169 = arith.constant 0 : index
    %198 = vector.load %arg8[%c5, %c0_168, %c0_169] : memref<14x288x64xbf16, #tpu.memory_space<vmem>>, vector<1x288x64xbf16>
    %199 = vector.shape_cast %198 : vector<1x288x64xbf16> to vector<288x64xbf16>
    %cst_170 = arith.constant dense<0.000000e+00> : vector<8x64xf32>
    %200 = tpu.matmul %197, %199, %cst_170 {dimension_numbers = #tpu.dot_dimension_numbers<[1], [0], [0], [1], [0, 0, 1, 1], [], []>} : vector<8x288xbf16>, vector<288x64xbf16>, vector<8x64xf32> -> vector<8x64xf32>
    %201 = arith.addf %188, %200 : vector<8x64xf32>
    %c0_171 = arith.constant 0 : index
    %c1536_172 = arith.constant 1536 : index
    %202 = vector.load %arg19[%c0_171, %c1536_172] : memref<8x4096xbf16, #tpu.memory_space<vmem>>, vector<8x768xbf16>
    %c0_173 = arith.constant 0 : index
    %c0_174 = arith.constant 0 : index
    %203 = vector.load %arg6[%c0_173, %c0_174] : memref<768x288xbf16, #tpu.memory_space<vmem>>, vector<768x288xbf16>
    %cst_175 = arith.constant dense<0.000000e+00> : vector<8x288xf32>
    %204 = tpu.matmul %202, %203, %cst_175 {dimension_numbers = #tpu.dot_dimension_numbers<[1], [0], [0], [1], [0, 0, 1, 1], [], []>} : vector<8x768xbf16>, vector<768x288xbf16>, vector<8x288xf32> -> vector<8x288xf32>
    %c0_176 = arith.constant 0 : index
    %c0_177 = arith.constant 0 : index
    %205 = vector.load %arg7[%c0_176, %c0_177] : memref<1x288xf32, #tpu.memory_space<vmem>>, vector<1x288xf32>
    %206 = vector.broadcast %205 : vector<1x288xf32> to vector<8x288xf32>
    %207 = arith.addf %204, %206 : vector<8x288xf32>
    %cst_178 = arith.constant 0.000000e+00 : f32
    %208 = vector.broadcast %cst_178 : f32 to vector<8x288xf32>
    %209 = arith.maximumf %207, %208 : vector<8x288xf32>
    %210 = arith.truncf %209 : vector<8x288xf32> to vector<8x288xbf16>
    %c6 = arith.constant 6 : index
    %c0_179 = arith.constant 0 : index
    %c0_180 = arith.constant 0 : index
    %211 = vector.load %arg8[%c6, %c0_179, %c0_180] : memref<14x288x64xbf16, #tpu.memory_space<vmem>>, vector<1x288x64xbf16>
    %212 = vector.shape_cast %211 : vector<1x288x64xbf16> to vector<288x64xbf16>
    %cst_181 = arith.constant dense<0.000000e+00> : vector<8x64xf32>
    %213 = tpu.matmul %210, %212, %cst_181 {dimension_numbers = #tpu.dot_dimension_numbers<[1], [0], [0], [1], [0, 0, 1, 1], [], []>} : vector<8x288xbf16>, vector<288x64xbf16>, vector<8x64xf32> -> vector<8x64xf32>
    %214 = arith.addf %201, %213 : vector<8x64xf32>
    %c0_182 = arith.constant 0 : index
    %c1792_183 = arith.constant 1792 : index
    %215 = vector.load %arg19[%c0_182, %c1792_183] : memref<8x4096xbf16, #tpu.memory_space<vmem>>, vector<8x768xbf16>
    %c0_184 = arith.constant 0 : index
    %c0_185 = arith.constant 0 : index
    %216 = vector.load %arg6[%c0_184, %c0_185] : memref<768x288xbf16, #tpu.memory_space<vmem>>, vector<768x288xbf16>
    %cst_186 = arith.constant dense<0.000000e+00> : vector<8x288xf32>
    %217 = tpu.matmul %215, %216, %cst_186 {dimension_numbers = #tpu.dot_dimension_numbers<[1], [0], [0], [1], [0, 0, 1, 1], [], []>} : vector<8x768xbf16>, vector<768x288xbf16>, vector<8x288xf32> -> vector<8x288xf32>
    %c0_187 = arith.constant 0 : index
    %c0_188 = arith.constant 0 : index
    %218 = vector.load %arg7[%c0_187, %c0_188] : memref<1x288xf32, #tpu.memory_space<vmem>>, vector<1x288xf32>
    %219 = vector.broadcast %218 : vector<1x288xf32> to vector<8x288xf32>
    %220 = arith.addf %217, %219 : vector<8x288xf32>
    %cst_189 = arith.constant 0.000000e+00 : f32
    %221 = vector.broadcast %cst_189 : f32 to vector<8x288xf32>
    %222 = arith.maximumf %220, %221 : vector<8x288xf32>
    %223 = arith.truncf %222 : vector<8x288xf32> to vector<8x288xbf16>
    %c7 = arith.constant 7 : index
    %c0_190 = arith.constant 0 : index
    %c0_191 = arith.constant 0 : index
    %224 = vector.load %arg8[%c7, %c0_190, %c0_191] : memref<14x288x64xbf16, #tpu.memory_space<vmem>>, vector<1x288x64xbf16>
    %225 = vector.shape_cast %224 : vector<1x288x64xbf16> to vector<288x64xbf16>
    %cst_192 = arith.constant dense<0.000000e+00> : vector<8x64xf32>
    %226 = tpu.matmul %223, %225, %cst_192 {dimension_numbers = #tpu.dot_dimension_numbers<[1], [0], [0], [1], [0, 0, 1, 1], [], []>} : vector<8x288xbf16>, vector<288x64xbf16>, vector<8x64xf32> -> vector<8x64xf32>
    %227 = arith.addf %214, %226 : vector<8x64xf32>
    %c0_193 = arith.constant 0 : index
    %c2048_194 = arith.constant 2048 : index
    %228 = vector.load %arg19[%c0_193, %c2048_194] : memref<8x4096xbf16, #tpu.memory_space<vmem>>, vector<8x768xbf16>
    %c0_195 = arith.constant 0 : index
    %c0_196 = arith.constant 0 : index
    %229 = vector.load %arg6[%c0_195, %c0_196] : memref<768x288xbf16, #tpu.memory_space<vmem>>, vector<768x288xbf16>
    %cst_197 = arith.constant dense<0.000000e+00> : vector<8x288xf32>
    %230 = tpu.matmul %228, %229, %cst_197 {dimension_numbers = #tpu.dot_dimension_numbers<[1], [0], [0], [1], [0, 0, 1, 1], [], []>} : vector<8x768xbf16>, vector<768x288xbf16>, vector<8x288xf32> -> vector<8x288xf32>
    %c0_198 = arith.constant 0 : index
    %c0_199 = arith.constant 0 : index
    %231 = vector.load %arg7[%c0_198, %c0_199] : memref<1x288xf32, #tpu.memory_space<vmem>>, vector<1x288xf32>
    %232 = vector.broadcast %231 : vector<1x288xf32> to vector<8x288xf32>
    %233 = arith.addf %230, %232 : vector<8x288xf32>
    %cst_200 = arith.constant 0.000000e+00 : f32
    %234 = vector.broadcast %cst_200 : f32 to vector<8x288xf32>
    %235 = arith.maximumf %233, %234 : vector<8x288xf32>
    %236 = arith.truncf %235 : vector<8x288xf32> to vector<8x288xbf16>
    %c8 = arith.constant 8 : index
    %c0_201 = arith.constant 0 : index
    %c0_202 = arith.constant 0 : index
    %237 = vector.load %arg8[%c8, %c0_201, %c0_202] : memref<14x288x64xbf16, #tpu.memory_space<vmem>>, vector<1x288x64xbf16>
    %238 = vector.shape_cast %237 : vector<1x288x64xbf16> to vector<288x64xbf16>
    %cst_203 = arith.constant dense<0.000000e+00> : vector<8x64xf32>
    %239 = tpu.matmul %236, %238, %cst_203 {dimension_numbers = #tpu.dot_dimension_numbers<[1], [0], [0], [1], [0, 0, 1, 1], [], []>} : vector<8x288xbf16>, vector<288x64xbf16>, vector<8x64xf32> -> vector<8x64xf32>
    %240 = arith.addf %227, %239 : vector<8x64xf32>
    %c0_204 = arith.constant 0 : index
    %c2304_205 = arith.constant 2304 : index
    %241 = vector.load %arg19[%c0_204, %c2304_205] : memref<8x4096xbf16, #tpu.memory_space<vmem>>, vector<8x768xbf16>
    %c0_206 = arith.constant 0 : index
    %c0_207 = arith.constant 0 : index
    %242 = vector.load %arg6[%c0_206, %c0_207] : memref<768x288xbf16, #tpu.memory_space<vmem>>, vector<768x288xbf16>
    %cst_208 = arith.constant dense<0.000000e+00> : vector<8x288xf32>
    %243 = tpu.matmul %241, %242, %cst_208 {dimension_numbers = #tpu.dot_dimension_numbers<[1], [0], [0], [1], [0, 0, 1, 1], [], []>} : vector<8x768xbf16>, vector<768x288xbf16>, vector<8x288xf32> -> vector<8x288xf32>
    %c0_209 = arith.constant 0 : index
    %c0_210 = arith.constant 0 : index
    %244 = vector.load %arg7[%c0_209, %c0_210] : memref<1x288xf32, #tpu.memory_space<vmem>>, vector<1x288xf32>
    %245 = vector.broadcast %244 : vector<1x288xf32> to vector<8x288xf32>
    %246 = arith.addf %243, %245 : vector<8x288xf32>
    %cst_211 = arith.constant 0.000000e+00 : f32
    %247 = vector.broadcast %cst_211 : f32 to vector<8x288xf32>
    %248 = arith.maximumf %246, %247 : vector<8x288xf32>
    %249 = arith.truncf %248 : vector<8x288xf32> to vector<8x288xbf16>
    %c9 = arith.constant 9 : index
    %c0_212 = arith.constant 0 : index
    %c0_213 = arith.constant 0 : index
    %250 = vector.load %arg8[%c9, %c0_212, %c0_213] : memref<14x288x64xbf16, #tpu.memory_space<vmem>>, vector<1x288x64xbf16>
    %251 = vector.shape_cast %250 : vector<1x288x64xbf16> to vector<288x64xbf16>
    %cst_214 = arith.constant dense<0.000000e+00> : vector<8x64xf32>
    %252 = tpu.matmul %249, %251, %cst_214 {dimension_numbers = #tpu.dot_dimension_numbers<[1], [0], [0], [1], [0, 0, 1, 1], [], []>} : vector<8x288xbf16>, vector<288x64xbf16>, vector<8x64xf32> -> vector<8x64xf32>
    %253 = arith.addf %240, %252 : vector<8x64xf32>
    %c0_215 = arith.constant 0 : index
    %c2560_216 = arith.constant 2560 : index
    %254 = vector.load %arg19[%c0_215, %c2560_216] : memref<8x4096xbf16, #tpu.memory_space<vmem>>, vector<8x768xbf16>
    %c0_217 = arith.constant 0 : index
    %c0_218 = arith.constant 0 : index
    %255 = vector.load %arg6[%c0_217, %c0_218] : memref<768x288xbf16, #tpu.memory_space<vmem>>, vector<768x288xbf16>
    %cst_219 = arith.constant dense<0.000000e+00> : vector<8x288xf32>
    %256 = tpu.matmul %254, %255, %cst_219 {dimension_numbers = #tpu.dot_dimension_numbers<[1], [0], [0], [1], [0, 0, 1, 1], [], []>} : vector<8x768xbf16>, vector<768x288xbf16>, vector<8x288xf32> -> vector<8x288xf32>
    %c0_220 = arith.constant 0 : index
    %c0_221 = arith.constant 0 : index
    %257 = vector.load %arg7[%c0_220, %c0_221] : memref<1x288xf32, #tpu.memory_space<vmem>>, vector<1x288xf32>
    %258 = vector.broadcast %257 : vector<1x288xf32> to vector<8x288xf32>
    %259 = arith.addf %256, %258 : vector<8x288xf32>
    %cst_222 = arith.constant 0.000000e+00 : f32
    %260 = vector.broadcast %cst_222 : f32 to vector<8x288xf32>
    %261 = arith.maximumf %259, %260 : vector<8x288xf32>
    %262 = arith.truncf %261 : vector<8x288xf32> to vector<8x288xbf16>
    %c10 = arith.constant 10 : index
    %c0_223 = arith.constant 0 : index
    %c0_224 = arith.constant 0 : index
    %263 = vector.load %arg8[%c10, %c0_223, %c0_224] : memref<14x288x64xbf16, #tpu.memory_space<vmem>>, vector<1x288x64xbf16>
    %264 = vector.shape_cast %263 : vector<1x288x64xbf16> to vector<288x64xbf16>
    %cst_225 = arith.constant dense<0.000000e+00> : vector<8x64xf32>
    %265 = tpu.matmul %262, %264, %cst_225 {dimension_numbers = #tpu.dot_dimension_numbers<[1], [0], [0], [1], [0, 0, 1, 1], [], []>} : vector<8x288xbf16>, vector<288x64xbf16>, vector<8x64xf32> -> vector<8x64xf32>
    %266 = arith.addf %253, %265 : vector<8x64xf32>
    %c0_226 = arith.constant 0 : index
    %c2816_227 = arith.constant 2816 : index
    %267 = vector.load %arg19[%c0_226, %c2816_227] : memref<8x4096xbf16, #tpu.memory_space<vmem>>, vector<8x768xbf16>
    %c0_228 = arith.constant 0 : index
    %c0_229 = arith.constant 0 : index
    %268 = vector.load %arg6[%c0_228, %c0_229] : memref<768x288xbf16, #tpu.memory_space<vmem>>, vector<768x288xbf16>
    %cst_230 = arith.constant dense<0.000000e+00> : vector<8x288xf32>
    %269 = tpu.matmul %267, %268, %cst_230 {dimension_numbers = #tpu.dot_dimension_numbers<[1], [0], [0], [1], [0, 0, 1, 1], [], []>} : vector<8x768xbf16>, vector<768x288xbf16>, vector<8x288xf32> -> vector<8x288xf32>
    %c0_231 = arith.constant 0 : index
    %c0_232 = arith.constant 0 : index
    %270 = vector.load %arg7[%c0_231, %c0_232] : memref<1x288xf32, #tpu.memory_space<vmem>>, vector<1x288xf32>
    %271 = vector.broadcast %270 : vector<1x288xf32> to vector<8x288xf32>
    %272 = arith.addf %269, %271 : vector<8x288xf32>
    %cst_233 = arith.constant 0.000000e+00 : f32
    %273 = vector.broadcast %cst_233 : f32 to vector<8x288xf32>
    %274 = arith.maximumf %272, %273 : vector<8x288xf32>
    %275 = arith.truncf %274 : vector<8x288xf32> to vector<8x288xbf16>
    %c11 = arith.constant 11 : index
    %c0_234 = arith.constant 0 : index
    %c0_235 = arith.constant 0 : index
    %276 = vector.load %arg8[%c11, %c0_234, %c0_235] : memref<14x288x64xbf16, #tpu.memory_space<vmem>>, vector<1x288x64xbf16>
    %277 = vector.shape_cast %276 : vector<1x288x64xbf16> to vector<288x64xbf16>
    %cst_236 = arith.constant dense<0.000000e+00> : vector<8x64xf32>
    %278 = tpu.matmul %275, %277, %cst_236 {dimension_numbers = #tpu.dot_dimension_numbers<[1], [0], [0], [1], [0, 0, 1, 1], [], []>} : vector<8x288xbf16>, vector<288x64xbf16>, vector<8x64xf32> -> vector<8x64xf32>
    %279 = arith.addf %266, %278 : vector<8x64xf32>
    %c0_237 = arith.constant 0 : index
    %c3072_238 = arith.constant 3072 : index
    %280 = vector.load %arg19[%c0_237, %c3072_238] : memref<8x4096xbf16, #tpu.memory_space<vmem>>, vector<8x768xbf16>
    %c0_239 = arith.constant 0 : index
    %c0_240 = arith.constant 0 : index
    %281 = vector.load %arg6[%c0_239, %c0_240] : memref<768x288xbf16, #tpu.memory_space<vmem>>, vector<768x288xbf16>
    %cst_241 = arith.constant dense<0.000000e+00> : vector<8x288xf32>
    %282 = tpu.matmul %280, %281, %cst_241 {dimension_numbers = #tpu.dot_dimension_numbers<[1], [0], [0], [1], [0, 0, 1, 1], [], []>} : vector<8x768xbf16>, vector<768x288xbf16>, vector<8x288xf32> -> vector<8x288xf32>
    %c0_242 = arith.constant 0 : index
    %c0_243 = arith.constant 0 : index
    %283 = vector.load %arg7[%c0_242, %c0_243] : memref<1x288xf32, #tpu.memory_space<vmem>>, vector<1x288xf32>
    %284 = vector.broadcast %283 : vector<1x288xf32> to vector<8x288xf32>
    %285 = arith.addf %282, %284 : vector<8x288xf32>
    %cst_244 = arith.constant 0.000000e+00 : f32
    %286 = vector.broadcast %cst_244 : f32 to vector<8x288xf32>
    %287 = arith.maximumf %285, %286 : vector<8x288xf32>
    %288 = arith.truncf %287 : vector<8x288xf32> to vector<8x288xbf16>
    %c12 = arith.constant 12 : index
    %c0_245 = arith.constant 0 : index
    %c0_246 = arith.constant 0 : index
    %289 = vector.load %arg8[%c12, %c0_245, %c0_246] : memref<14x288x64xbf16, #tpu.memory_space<vmem>>, vector<1x288x64xbf16>
    %290 = vector.shape_cast %289 : vector<1x288x64xbf16> to vector<288x64xbf16>
    %cst_247 = arith.constant dense<0.000000e+00> : vector<8x64xf32>
    %291 = tpu.matmul %288, %290, %cst_247 {dimension_numbers = #tpu.dot_dimension_numbers<[1], [0], [0], [1], [0, 0, 1, 1], [], []>} : vector<8x288xbf16>, vector<288x64xbf16>, vector<8x64xf32> -> vector<8x64xf32>
    %292 = arith.addf %279, %291 : vector<8x64xf32>
    %c0_248 = arith.constant 0 : index
    %c3328_249 = arith.constant 3328 : index
    %293 = vector.load %arg19[%c0_248, %c3328_249] : memref<8x4096xbf16, #tpu.memory_space<vmem>>, vector<8x768xbf16>
    %c0_250 = arith.constant 0 : index
    %c0_251 = arith.constant 0 : index
    %294 = vector.load %arg6[%c0_250, %c0_251] : memref<768x288xbf16, #tpu.memory_space<vmem>>, vector<768x288xbf16>
    %cst_252 = arith.constant dense<0.000000e+00> : vector<8x288xf32>
    %295 = tpu.matmul %293, %294, %cst_252 {dimension_numbers = #tpu.dot_dimension_numbers<[1], [0], [0], [1], [0, 0, 1, 1], [], []>} : vector<8x768xbf16>, vector<768x288xbf16>, vector<8x288xf32> -> vector<8x288xf32>
    %c0_253 = arith.constant 0 : index
    %c0_254 = arith.constant 0 : index
    %296 = vector.load %arg7[%c0_253, %c0_254] : memref<1x288xf32, #tpu.memory_space<vmem>>, vector<1x288xf32>
    %297 = vector.broadcast %296 : vector<1x288xf32> to vector<8x288xf32>
    %298 = arith.addf %295, %297 : vector<8x288xf32>
    %cst_255 = arith.constant 0.000000e+00 : f32
    %299 = vector.broadcast %cst_255 : f32 to vector<8x288xf32>
    %300 = arith.maximumf %298, %299 : vector<8x288xf32>
    %301 = arith.truncf %300 : vector<8x288xf32> to vector<8x288xbf16>
    %c13 = arith.constant 13 : index
    %c0_256 = arith.constant 0 : index
    %c0_257 = arith.constant 0 : index
    %302 = vector.load %arg8[%c13, %c0_256, %c0_257] : memref<14x288x64xbf16, #tpu.memory_space<vmem>>, vector<1x288x64xbf16>
    %303 = vector.shape_cast %302 : vector<1x288x64xbf16> to vector<288x64xbf16>
    %cst_258 = arith.constant dense<0.000000e+00> : vector<8x64xf32>
    %304 = tpu.matmul %301, %303, %cst_258 {dimension_numbers = #tpu.dot_dimension_numbers<[1], [0], [0], [1], [0, 0, 1, 1], [], []>} : vector<8x288xbf16>, vector<288x64xbf16>, vector<8x64xf32> -> vector<8x64xf32>
    %305 = arith.addf %292, %304 : vector<8x64xf32>
    %c0_259 = arith.constant 0 : index
    %c0_260 = arith.constant 0 : index
    %306 = vector.load %arg9[%c0_259, %c0_260] : memref<1x64xf32, #tpu.memory_space<vmem>>, vector<1x64xf32>
    %307 = vector.broadcast %306 : vector<1x64xf32> to vector<8x64xf32>
    %308 = arith.addf %305, %307 : vector<8x64xf32>
    %cst_261 = arith.constant 0.000000e+00 : f32
    %309 = vector.broadcast %cst_261 : f32 to vector<8x64xf32>
    %310 = arith.maximumf %308, %309 : vector<8x64xf32>
    %c0_262 = arith.constant 0 : index
    %c0_263 = arith.constant 0 : index
    %311 = vector.load %arg3[%c0_262, %c0_263] : memref<8x128xf32, #tpu.memory_space<vmem>>, vector<8x128xf32>
    %312 = arith.truncf %310 : vector<8x64xf32> to vector<8x64xbf16>
    %c0_264 = arith.constant 0 : index
    %c0_265 = arith.constant 0 : index
    %313 = vector.load %arg10[%c0_264, %c0_265] : memref<64x384xbf16, #tpu.memory_space<vmem>>, vector<64x384xbf16>
    %cst_266 = arith.constant dense<0.000000e+00> : vector<8x384xf32>
    %314 = tpu.matmul %312, %313, %cst_266 {dimension_numbers = #tpu.dot_dimension_numbers<[1], [0], [0], [1], [0, 0, 1, 1], [], []>} : vector<8x64xbf16>, vector<64x384xbf16>, vector<8x384xf32> -> vector<8x384xf32>
    %c0_267 = arith.constant 0 : index
    %c0_268 = arith.constant 0 : index
    %315 = vector.load %arg2[%c0_267, %c0_268] : memref<8x16xf32, #tpu.memory_space<vmem>>, vector<8x16xf32>
    %316 = arith.truncf %315 : vector<8x16xf32> to vector<8x16xbf16>
    %c0_269 = arith.constant 0 : index
    %c0_270 = arith.constant 0 : index
    %317 = vector.load %arg11[%c0_269, %c0_270] : memref<16x384xbf16, #tpu.memory_space<vmem>>, vector<16x384xbf16>
    %cst_271 = arith.constant dense<0.000000e+00> : vector<8x384xf32>
    %318 = tpu.matmul %316, %317, %cst_271 {dimension_numbers = #tpu.dot_dimension_numbers<[1], [0], [0], [1], [0, 0, 1, 1], [], []>} : vector<8x16xbf16>, vector<16x384xbf16>, vector<8x384xf32> -> vector<8x384xf32>
    %319 = arith.addf %314, %318 : vector<8x384xf32>
    %c0_272 = arith.constant 0 : index
    %c0_273 = arith.constant 0 : index
    %320 = vector.load %arg12[%c0_272, %c0_273] : memref<1x384xf32, #tpu.memory_space<vmem>>, vector<1x384xf32>
    %321 = vector.broadcast %320 : vector<1x384xf32> to vector<8x384xf32>
    %322 = arith.addf %319, %321 : vector<8x384xf32>
    %323 = arith.truncf %311 : vector<8x128xf32> to vector<8x128xbf16>
    %c0_274 = arith.constant 0 : index
    %c0_275 = arith.constant 0 : index
    %324 = vector.load %arg13[%c0_274, %c0_275] : memref<128x384xbf16, #tpu.memory_space<vmem>>, vector<128x384xbf16>
    %cst_276 = arith.constant dense<0.000000e+00> : vector<8x384xf32>
    %325 = tpu.matmul %323, %324, %cst_276 {dimension_numbers = #tpu.dot_dimension_numbers<[1], [0], [0], [1], [0, 0, 1, 1], [], []>} : vector<8x128xbf16>, vector<128x384xbf16>, vector<8x384xf32> -> vector<8x384xf32>
    %c0_277 = arith.constant 0 : index
    %c0_278 = arith.constant 0 : index
    %326 = vector.load %arg14[%c0_277, %c0_278] : memref<1x384xf32, #tpu.memory_space<vmem>>, vector<1x384xf32>
    %327 = vector.broadcast %326 : vector<1x384xf32> to vector<8x384xf32>
    %328 = arith.addf %325, %327 : vector<8x384xf32>
    %329 = vector.extract_strided_slice %322 {offsets = [0, 0], sizes = [8, 128], strides = [1, 1]} : vector<8x384xf32> to vector<8x128xf32>
    %330 = vector.extract_strided_slice %328 {offsets = [0, 0], sizes = [8, 128], strides = [1, 1]} : vector<8x384xf32> to vector<8x128xf32>
    %331 = arith.addf %329, %330 : vector<8x128xf32>
    %332 = arith.negf %331 : vector<8x128xf32>
    %333 = math.exp %332 : vector<8x128xf32>
    %cst_279 = arith.constant 1.000000e+00 : f32
    %334 = vector.broadcast %cst_279 : f32 to vector<8x128xf32>
    %335 = arith.addf %334, %333 : vector<8x128xf32>
    %336 = arith.divf %334, %335 : vector<8x128xf32>
    %337 = vector.extract_strided_slice %322 {offsets = [0, 128], sizes = [8, 128], strides = [1, 1]} : vector<8x384xf32> to vector<8x128xf32>
    %338 = vector.extract_strided_slice %328 {offsets = [0, 128], sizes = [8, 128], strides = [1, 1]} : vector<8x384xf32> to vector<8x128xf32>
    %339 = arith.addf %337, %338 : vector<8x128xf32>
    %340 = arith.negf %339 : vector<8x128xf32>
    %341 = math.exp %340 : vector<8x128xf32>
    %cst_280 = arith.constant 1.000000e+00 : f32
    %342 = vector.broadcast %cst_280 : f32 to vector<8x128xf32>
    %343 = arith.addf %342, %341 : vector<8x128xf32>
    %344 = arith.divf %342, %343 : vector<8x128xf32>
    %345 = vector.extract_strided_slice %322 {offsets = [0, 256], sizes = [8, 128], strides = [1, 1]} : vector<8x384xf32> to vector<8x128xf32>
    %346 = vector.extract_strided_slice %328 {offsets = [0, 256], sizes = [8, 128], strides = [1, 1]} : vector<8x384xf32> to vector<8x128xf32>
    %347 = arith.mulf %336, %346 : vector<8x128xf32>
    %348 = arith.addf %345, %347 : vector<8x128xf32>
    %349 = math.tanh %348 : vector<8x128xf32>
    %cst_281 = arith.constant 1.000000e+00 : f32
    %350 = vector.broadcast %cst_281 : f32 to vector<8x128xf32>
    %351 = arith.subf %350, %344 : vector<8x128xf32>
    %352 = arith.mulf %351, %349 : vector<8x128xf32>
    %353 = arith.mulf %344, %311 : vector<8x128xf32>
    %354 = arith.addf %352, %353 : vector<8x128xf32>
    %c0_282 = arith.constant 0 : index
    %c0_283 = arith.constant 0 : index
    %355 = vector.load %arg18[%c0_282, %c0_283] : memref<8x128xf32, #tpu.memory_space<vmem>>, vector<8x128xf32>
    tpu.vector_store %arg18[%c0_282, %c0_283], %354 {strides = array<i32>} : memref<8x128xf32, #tpu.memory_space<vmem>>, vector<8x128xf32>,
    %356 = arith.truncf %354 : vector<8x128xf32> to vector<8x128xbf16>
    %c0_284 = arith.constant 0 : index
    %c0_285 = arith.constant 0 : index
    %357 = vector.load %arg15[%c0_284, %c0_285] : memref<128x128xbf16, #tpu.memory_space<vmem>>, vector<128x128xbf16>
    %cst_286 = arith.constant dense<0.000000e+00> : vector<8x128xf32>
    %358 = tpu.matmul %356, %357, %cst_286 {dimension_numbers = #tpu.dot_dimension_numbers<[1], [0], [0], [1], [0, 0, 1, 1], [], []>} : vector<8x128xbf16>, vector<128x128xbf16>, vector<8x128xf32> -> vector<8x128xf32>
    %c0_287 = arith.constant 0 : index
    %c0_288 = arith.constant 0 : index
    %359 = vector.load %arg16[%c0_287, %c0_288] : memref<1x128xf32, #tpu.memory_space<vmem>>, vector<1x128xf32>
    %360 = vector.broadcast %359 : vector<1x128xf32> to vector<8x128xf32>
    %361 = arith.addf %358, %360 : vector<8x128xf32>
    %c0_289 = arith.constant 0 : index
    %c0_290 = arith.constant 0 : index
    %362 = vector.load %arg17[%c0_289, %c0_290] : memref<8x128xf32, #tpu.memory_space<vmem>>, vector<8x128xf32>
    tpu.vector_store %arg17[%c0_289, %c0_290], %361 {strides = array<i32>} : memref<8x128xf32, #tpu.memory_space<vmem>>, vector<8x128xf32>,
    return
  }
  func.func @transform_0(%arg0: i32) -> (i32, i32) {
    %c0_i32 = arith.constant 0 : i32
    %c0_i32_0 = arith.constant 0 : i32
    return %arg0, %c0_i32 : i32, i32
  }
  func.func @transform_1(%arg0: i32) -> (i32, i32) {
    %c0_i32 = arith.constant 0 : i32
    %c0_i32_0 = arith.constant 0 : i32
    return %arg0, %c0_i32 : i32, i32
  }
  func.func @transform_2(%arg0: i32) -> (i32, i32) {
    %c0_i32 = arith.constant 0 : i32
    %c0_i32_0 = arith.constant 0 : i32
    return %arg0, %c0_i32 : i32, i32
  }
  func.func @transform_3(%arg0: i32) -> (i32, i32) {
    %c0_i32 = arith.constant 0 : i32
    %c0_i32_0 = arith.constant 0 : i32
    %c0_i32_1 = arith.constant 0 : i32
    return %c0_i32, %c0_i32_0 : i32, i32
  }
  func.func @transform_4(%arg0: i32) -> (i32, i32) {
    %c0_i32 = arith.constant 0 : i32
    %c0_i32_0 = arith.constant 0 : i32
    %c0_i32_1 = arith.constant 0 : i32
    return %c0_i32, %c0_i32_0 : i32, i32
  }
  func.func @transform_5(%arg0: i32) -> (i32, i32) {
    %c0_i32 = arith.constant 0 : i32
    %c0_i32_0 = arith.constant 0 : i32
    %c0_i32_1 = arith.constant 0 : i32
    return %c0_i32, %c0_i32_0 : i32, i32
  }
  func.func @transform_6(%arg0: i32) -> (i32, i32) {
    %c0_i32 = arith.constant 0 : i32
    %c0_i32_0 = arith.constant 0 : i32
    %c0_i32_1 = arith.constant 0 : i32
    return %c0_i32, %c0_i32_0 : i32, i32
  }
  func.func @transform_7(%arg0: i32) -> (i32, i32, i32) {
    %c0_i32 = arith.constant 0 : i32
    %c0_i32_0 = arith.constant 0 : i32
    %c0_i32_1 = arith.constant 0 : i32
    %c0_i32_2 = arith.constant 0 : i32
    return %c0_i32, %c0_i32_0, %c0_i32_1 : i32, i32, i32
  }
  func.func @transform_8(%arg0: i32) -> (i32, i32) {
    %c0_i32 = arith.constant 0 : i32
    %c0_i32_0 = arith.constant 0 : i32
    %c0_i32_1 = arith.constant 0 : i32
    return %c0_i32, %c0_i32_0 : i32, i32
  }
  func.func @transform_9(%arg0: i32) -> (i32, i32) {
    %c0_i32 = arith.constant 0 : i32
    %c0_i32_0 = arith.constant 0 : i32
    %c0_i32_1 = arith.constant 0 : i32
    return %c0_i32, %c0_i32_0 : i32, i32
  }
  func.func @transform_10(%arg0: i32) -> (i32, i32) {
    %c0_i32 = arith.constant 0 : i32
    %c0_i32_0 = arith.constant 0 : i32
    %c0_i32_1 = arith.constant 0 : i32
    return %c0_i32, %c0_i32_0 : i32, i32
  }
  func.func @transform_11(%arg0: i32) -> (i32, i32) {
    %c0_i32 = arith.constant 0 : i32
    %c0_i32_0 = arith.constant 0 : i32
    %c0_i32_1 = arith.constant 0 : i32
    return %c0_i32, %c0_i32_0 : i32, i32
  }
  func.func @transform_12(%arg0: i32) -> (i32, i32) {
    %c0_i32 = arith.constant 0 : i32
    %c0_i32_0 = arith.constant 0 : i32
    %c0_i32_1 = arith.constant 0 : i32
    return %c0_i32, %c0_i32_0 : i32, i32
  }
  func.func @transform_13(%arg0: i32) -> (i32, i32) {
    %c0_i32 = arith.constant 0 : i32
    %c0_i32_0 = arith.constant 0 : i32
    %c0_i32_1 = arith.constant 0 : i32
    return %c0_i32, %c0_i32_0 : i32, i32
  }
  func.func @transform_14(%arg0: i32) -> (i32, i32) {
    %c0_i32 = arith.constant 0 : i32
    %c0_i32_0 = arith.constant 0 : i32
    %c0_i32_1 = arith.constant 0 : i32
    return %c0_i32, %c0_i32_0 : i32, i32
  }
  func.func @transform_15(%arg0: i32) -> (i32, i32) {
    %c0_i32 = arith.constant 0 : i32
    %c0_i32_0 = arith.constant 0 : i32
    %c0_i32_1 = arith.constant 0 : i32
    return %c0_i32, %c0_i32_0 : i32, i32
  }
  func.func @transform_16(%arg0: i32) -> (i32, i32) {
    %c0_i32 = arith.constant 0 : i32
    %c0_i32_0 = arith.constant 0 : i32
    return %arg0, %c0_i32 : i32, i32
  }
  func.func @transform_17(%arg0: i32) -> (i32, i32) {
    %c0_i32 = arith.constant 0 : i32
    %c0_i32_0 = arith.constant 0 : i32
    return %arg0, %c0_i32 : i32, i32
  }
}

</mosaic_0001>

<llo_original>
// kernel: convnet_rnn_forward.1
$region0: #{convnet_rnn_forward.1}
  #allocation0 [shape = 'u32[]', space=smem, size = 0x4, offset = 0x4, fixed_abs, tag = 'smem constant byte address 0x4 - core index']
  #allocation1 [shape = 'u32[72,128]{1,0:T(1,128)}', space=vmem, size = 0x9000, scoped, tag = 'internal scratch']
  #allocation2 [shape = 'bf16[8,4096]{1,0:T(8,128)(2,1)}', space=vmem, size = 0x10000, scoped, tag = 'scratch operand']
  %s0 = inlined_call_operand.vmem [shape: bf16[8,1792], index: 0, kind: input, shape index: {}]
  %s1 = inlined_call_operand.vmem [shape: f32[8,16], index: 1, kind: input, shape index: {}]
  %s2 = inlined_call_operand.vmem [shape: f32[8,128], index: 2, kind: input, shape index: {}]
  %s3 = inlined_call_operand.vmem [shape: bf16[384,256], index: 3, kind: input, shape index: {}]
  %s4 = inlined_call_operand.vmem [shape: f32[1,256], index: 4, kind: input, shape index: {}]
  %s5 = inlined_call_operand.vmem [shape: bf16[768,288], index: 5, kind: input, shape index: {}]
  %s6 = inlined_call_operand.vmem [shape: f32[1,288], index: 6, kind: input, shape index: {}]
  %s7 = inlined_call_operand.vmem [shape: bf16[14,288,64], index: 7, kind: input, shape index: {}]
  %s8 = inlined_call_operand.vmem [shape: f32[1,64], index: 8, kind: input, shape index: {}]
  %s9 = inlined_call_operand.vmem [shape: bf16[64,384], index: 9, kind: input, shape index: {}]
  %s10 = inlined_call_operand.vmem [shape: bf16[16,384], index: 10, kind: input, shape index: {}]
  %s11 = inlined_call_operand.vmem [shape: f32[1,384], index: 11, kind: input, shape index: {}]
  %s12 = inlined_call_operand.vmem [shape: bf16[128,384], index: 12, kind: input, shape index: {}]
  %s13 = inlined_call_operand.vmem [shape: f32[1,384], index: 13, kind: input, shape index: {}]
  %s14 = inlined_call_operand.vmem [shape: bf16[128,128], index: 14, kind: input, shape index: {}]
  %s15 = inlined_call_operand.vmem [shape: f32[1,128], index: 15, kind: input, shape index: {}]
  %s16 = inlined_call_operand.hbm [shape: f32[8,128], index: 16, kind: output, shape index: {0}]
  %s17 = inlined_call_operand.hbm [shape: f32[8,128], index: 17, kind: output, shape index: {1}]
  %18 = xla_tuple %s16, %s17
  %s19 = sld [smem:[#allocation0]]
  $region82: #{convnet_rnn_forward.1} parent=0
    _
  %s21 = ssub.s32 1, %s19
  %s22 = scalar_select 0, %s21, %s19
  $region1: #{convnet_rnn_forward.1} parent=0
    #allocation3 [shape = 'u8[4096]{0}', space=vmem, size = 0x1000, scoped, tag = 'output window, operand 0, single buffered']
    #allocation4 [shape = 's32[1]{0}', space=sflag, size = 0x4, scoped, tag = 'scoped memory for convnet_rnn_forward.1']
    #allocation5 [shape = 'u8[4096]{0}', space=vmem, size = 0x1000, scoped, tag = 'output window, operand 1, single buffered']
    #allocation6 [shape = 's32[1]{0}', space=sflag, size = 0x4, scoped, tag = 'scoped memory for convnet_rnn_forward.1']
    %23 = vsyncpa [#allocation4], 0
    %24 = vsyncpa [#allocation6], 0
    // Predicated region
    $region2: #{convnet_rnn_forward.1} parent=1 // pred_check
      _
    $region3: #{convnet_rnn_forward.1} parent=1 // pred_check_branch
      %26 = sbr.rel (0) target = $region5
    $region4: #{convnet_rnn_forward.1} parent=1 // pred_region
      _
    $region5: #{convnet_rnn_forward.1} parent=1 // pred_fallthru
      _
    // Predicated region
    $region6: #{convnet_rnn_forward.1} parent=1 // pred_check
      _
    $region7: #{convnet_rnn_forward.1} parent=1 // pred_check_branch
      %28 = sbr.rel (0) target = $region9
    $region8: #{convnet_rnn_forward.1} parent=1 // pred_region
      _
    $region9: #{convnet_rnn_forward.1} parent=1 // pred_fallthru
      _
    // Predicated region
    $region10: #{convnet_rnn_forward.1} parent=1 // pred_check
      _
    $region11: #{convnet_rnn_forward.1} parent=1 // pred_check_branch
      %30 = sbr.rel (0) target = $region13
    $region12: #{convnet_rnn_forward.1} parent=1 // pred_region
      _
    $region13: #{convnet_rnn_forward.1} parent=1 // pred_fallthru
      _
    // Predicated region
    $region14: #{convnet_rnn_forward.1} parent=1 // pred_check
      _
    $region15: #{convnet_rnn_forward.1} parent=1 // pred_check_branch
      %32 = sbr.rel (0) target = $region17
    $region16: #{convnet_rnn_forward.1} parent=1 // pred_region
      _
    $region17: #{convnet_rnn_forward.1} parent=1 // pred_fallthru
      _
    // Predicated region
    $region18: #{convnet_rnn_forward.1} parent=1 // pred_check
      _
    $region19: #{convnet_rnn_forward.1} parent=1 // pred_check_branch
      %34 = sbr.rel (0) target = $region21
    $region20: #{convnet_rnn_forward.1} parent=1 // pred_region
      _
    $region21: #{convnet_rnn_forward.1} parent=1 // pred_fallthru
      _
    // Predicated region
    $region22: #{convnet_rnn_forward.1} parent=1 // pred_check
      _
    $region23: #{convnet_rnn_forward.1} parent=1 // pred_check_branch
      %36 = sbr.rel (0) target = $region25
    $region24: #{convnet_rnn_forward.1} parent=1 // pred_region
      _
    $region25: #{convnet_rnn_forward.1} parent=1 // pred_fallthru
      _
    // Predicated region
    $region26: #{convnet_rnn_forward.1} parent=1 // pred_check
      _
    $region27: #{convnet_rnn_forward.1} parent=1 // pred_check_branch
      %38 = sbr.rel (0) target = $region29
    $region28: #{convnet_rnn_forward.1} parent=1 // pred_region
      _
    $region29: #{convnet_rnn_forward.1} parent=1 // pred_fallthru
      _
    // Predicated region
    $region30: #{convnet_rnn_forward.1} parent=1 // pred_check
      _
    $region31: #{convnet_rnn_forward.1} parent=1 // pred_check_branch
      %40 = sbr.rel (0) target = $region33
    $region32: #{convnet_rnn_forward.1} parent=1 // pred_region
      _
    $region33: #{convnet_rnn_forward.1} parent=1 // pred_fallthru
      _
    // Predicated region
    $region34: #{convnet_rnn_forward.1} parent=1 // pred_check
      _
    $region35: #{convnet_rnn_forward.1} parent=1 // pred_check_branch
      %42 = sbr.rel (0) target = $region37
    $region36: #{convnet_rnn_forward.1} parent=1 // pred_region
      _
    $region37: #{convnet_rnn_forward.1} parent=1 // pred_fallthru
      _
    // Predicated region
    $region38: #{convnet_rnn_forward.1} parent=1 // pred_check
      _
    $region39: #{convnet_rnn_forward.1} parent=1 // pred_check_branch
      %44 = sbr.rel (0) target = $region41
    $region40: #{convnet_rnn_forward.1} parent=1 // pred_region
      _
    $region41: #{convnet_rnn_forward.1} parent=1 // pred_fallthru
      _
    // Predicated region
    $region42: #{convnet_rnn_forward.1} parent=1 // pred_check
      _
    $region43: #{convnet_rnn_forward.1} parent=1 // pred_check_branch
      %46 = sbr.rel (0) target = $region45
    $region44: #{convnet_rnn_forward.1} parent=1 // pred_region
      _
    $region45: #{convnet_rnn_forward.1} parent=1 // pred_fallthru
      _
    // Predicated region
    $region46: #{convnet_rnn_forward.1} parent=1 // pred_check
      _
    $region47: #{convnet_rnn_forward.1} parent=1 // pred_check_branch
      %48 = sbr.rel (0) target = $region49
    $region48: #{convnet_rnn_forward.1} parent=1 // pred_region
      _
    $region49: #{convnet_rnn_forward.1} parent=1 // pred_fallthru
      _
    // Predicated region
    $region50: #{convnet_rnn_forward.1} parent=1 // pred_check
      _
    $region51: #{convnet_rnn_forward.1} parent=1 // pred_check_branch
      %50 = sbr.rel (0) target = $region53
    $region52: #{convnet_rnn_forward.1} parent=1 // pred_region
      _
    $region53: #{convnet_rnn_forward.1} parent=1 // pred_fallthru
      _
    // Predicated region
    $region54: #{convnet_rnn_forward.1} parent=1 // pred_check
      _
    $region55: #{convnet_rnn_forward.1} parent=1 // pred_check_branch
      %52 = sbr.rel (0) target = $region57
    $region56: #{convnet_rnn_forward.1} parent=1 // pred_region
      _
    $region57: #{convnet_rnn_forward.1} parent=1 // pred_fallthru
      _
    // Predicated region
    $region58: #{convnet_rnn_forward.1} parent=1 // pred_check
      _
    $region59: #{convnet_rnn_forward.1} parent=1 // pred_check_branch
      %54 = sbr.rel (0) target = $region61
    $region60: #{convnet_rnn_forward.1} parent=1 // pred_region
      _
    $region61: #{convnet_rnn_forward.1} parent=1 // pred_fallthru
      _
    // Predicated region
    $region62: #{convnet_rnn_forward.1} parent=1 // pred_check
      _
    $region63: #{convnet_rnn_forward.1} parent=1 // pred_check_branch
      %56 = sbr.rel (0) target = $region65
    $region64: #{convnet_rnn_forward.1} parent=1 // pred_region
      _
    $region65: #{convnet_rnn_forward.1} parent=1 // pred_fallthru
      _
    %58 = vst [vmem:[#allocation2] sm:$0xff] 0
    %59 = vst [vmem:[#allocation2 + $0x8] sm:$0xff] 0
    %60 = vst [vmem:[#allocation2 + $0x70] sm:$0xff] 0
    %61 = vst [vmem:[#allocation2 + $0x78] sm:$0xff] 0
    %v62 = vld [vmem:[%s0] sm:$0xff]
    %v63 = vld [vmem:[%s0 + $0x8] sm:$0xf]
    %v64 = vld [vmem:[%s3] sm:$0xff]
    %v65 = vld [vmem:[%s3 + $0x8] sm:$0xff]
    %v66 = vld [vmem:[%s3 + $0x10] sm:$0xff]
    %v67 = vld [vmem:[%s3 + $0x18] sm:$0xff]
    %v68 = vld [vmem:[%s3 + $0x20] sm:$0xff]
    %v69 = vld [vmem:[%s3 + $0x28] sm:$0xff]
    %v70 = vld [vmem:[%s3 + $0x30] sm:$0xff]
    %v71 = vld [vmem:[%s3 + $0x38] sm:$0xff]
    %v72 = vld [vmem:[%s3 + $0x40] sm:$0xff]
    %v73 = vld [vmem:[%s3 + $0x48] sm:$0xff]
    %v74 = vld [vmem:[%s3 + $0x50] sm:$0xff]
    %v75 = vld [vmem:[%s3 + $0x58] sm:$0xff]
    %v76 = vld [vmem:[%s3 + $0x60] sm:$0xff]
    %v77 = vld [vmem:[%s3 + $0x68] sm:$0xff]
    %v78 = vld [vmem:[%s3 + $0x70] sm:$0xff]
    %v79 = vld [vmem:[%s3 + $0x78] sm:$0xff]
    %v80 = vld [vmem:[%s3 + $0x80] sm:$0xff]
    %v81 = vld [vmem:[%s3 + $0x88] sm:$0xff]
    %v82 = vld [vmem:[%s3 + $0x90] sm:$0xff]
    %v83 = vld [vmem:[%s3 + $0x98] sm:$0xff]
    %v84 = vld [vmem:[%s3 + $0xa0] sm:$0xff]
    %v85 = vld [vmem:[%s3 + $0xa8] sm:$0xff]
    %v86 = vld [vmem:[%s3 + $0xb0] sm:$0xff]
    %v87 = vld [vmem:[%s3 + $0xb8] sm:$0xff]
    %v88 = vld [vmem:[%s3 + $0xc0] sm:$0xff]
    %v89 = vld [vmem:[%s3 + $0xc8] sm:$0xff]
    %v90 = vld [vmem:[%s3 + $0xd0] sm:$0xff]
    %v91 = vld [vmem:[%s3 + $0xd8] sm:$0xff]
    %v92 = vld [vmem:[%s3 + $0xe0] sm:$0xff]
    %v93 = vld [vmem:[%s3 + $0xe8] sm:$0xff]
    %v94 = vld [vmem:[%s3 + $0xf0] sm:$0xff]
    %v95 = vld [vmem:[%s3 + $0xf8] sm:$0xff]
    %v96 = vld [vmem:[%s3 + $0x100] sm:$0xff]
    %v97 = vld [vmem:[%s3 + $0x108] sm:$0xff]
    %v98 = vld [vmem:[%s3 + $0x110] sm:$0xff]
    %v99 = vld [vmem:[%s3 + $0x118] sm:$0xff]
    %v100 = vld [vmem:[%s3 + $0x120] sm:$0xff]
    %v101 = vld [vmem:[%s3 + $0x128] sm:$0xff]
    %v102 = vld [vmem:[%s3 + $0x130] sm:$0xff]
    %v103 = vld [vmem:[%s3 + $0x138] sm:$0xff]
    %v104 = vld [vmem:[%s3 + $0x140] sm:$0xff]
    %v105 = vld [vmem:[%s3 + $0x148] sm:$0xff]
    %v106 = vld [vmem:[%s3 + $0x150] sm:$0xff]
    %v107 = vld [vmem:[%s3 + $0x158] sm:$0xff]
    %v108 = vld [vmem:[%s3 + $0x160] sm:$0xff]
    %v109 = vld [vmem:[%s3 + $0x168] sm:$0xff]
    %v110 = vld [vmem:[%s3 + $0x170] sm:$0xff]
    %v111 = vld [vmem:[%s3 + $0x178] sm:$0xff]
    %v112 = vld [vmem:[%s4] sm:$0x3]
    %v114 = vperm.slane %v112, 0
    %v115 = vperm.slane %v112, 1
    %v120 = vunpack.c.l.b16 %v62
    %v121 = vunpack.c.h.b16 %v62
    %v122 = vunpack.c.l.b16 %v63
    %v123 = vpack.c.b16 %v120, %v120
    %v124 = vpack.c.b16 %v121, %v121
    %v125 = vpack.c.b16 %v122, %v122
    %v177 = vunpack.c.l.b16 %v64
    %v178 = vunpack.c.h.b16 %v64
    %v179 = vunpack.c.l.b16 %v65
    %v180 = vunpack.c.h.b16 %v65
    %v181 = vunpack.c.l.b16 %v66
    %v182 = vunpack.c.h.b16 %v66
    %v183 = vunpack.c.l.b16 %v67
    %v184 = vunpack.c.h.b16 %v67
    %v185 = vunpack.c.l.b16 %v68
    %v186 = vunpack.c.h.b16 %v68
    %v187 = vunpack.c.l.b16 %v69
    %v188 = vunpack.c.h.b16 %v69
    %v189 = vunpack.c.l.b16 %v70
    %v190 = vunpack.c.h.b16 %v70
    %v191 = vunpack.c.l.b16 %v71
    %v192 = vunpack.c.h.b16 %v71
    %v193 = vunpack.c.l.b16 %v72
    %v194 = vunpack.c.h.b16 %v72
    %v195 = vunpack.c.l.b16 %v73
    %v196 = vunpack.c.h.b16 %v73
    %v197 = vunpack.c.l.b16 %v74
    %v198 = vunpack.c.h.b16 %v74
    %v199 = vunpack.c.l.b16 %v75
    %v200 = vunpack.c.h.b16 %v75
    %v201 = vunpack.c.l.b16 %v76
    %v202 = vunpack.c.h.b16 %v76
    %v203 = vunpack.c.l.b16 %v77
    %v204 = vunpack.c.h.b16 %v77
    %v205 = vunpack.c.l.b16 %v78
    %v206 = vunpack.c.h.b16 %v78
    %v207 = vunpack.c.l.b16 %v79
    %v208 = vunpack.c.h.b16 %v79
    %v209 = vunpack.c.l.b16 %v80
    %v210 = vunpack.c.h.b16 %v80
    %v211 = vunpack.c.l.b16 %v81
    %v212 = vunpack.c.h.b16 %v81
    %v213 = vunpack.c.l.b16 %v82
    %v214 = vunpack.c.h.b16 %v82
    %v215 = vunpack.c.l.b16 %v83
    %v216 = vunpack.c.h.b16 %v83
    %v217 = vunpack.c.l.b16 %v84
    %v218 = vunpack.c.h.b16 %v84
    %v219 = vunpack.c.l.b16 %v85
    %v220 = vunpack.c.h.b16 %v85
    %v221 = vunpack.c.l.b16 %v86
    %v222 = vunpack.c.h.b16 %v86
    %v223 = vunpack.c.l.b16 %v87
    %v224 = vunpack.c.h.b16 %v87
    %v225 = vunpack.c.l.b16 %v88
    %v226 = vunpack.c.h.b16 %v88
    %v227 = vunpack.c.l.b16 %v89
    %v228 = vunpack.c.h.b16 %v89
    %v229 = vunpack.c.l.b16 %v90
    %v230 = vunpack.c.h.b16 %v90
    %v231 = vunpack.c.l.b16 %v91
    %v232 = vunpack.c.h.b16 %v91
    %v233 = vunpack.c.l.b16 %v92
    %v234 = vunpack.c.h.b16 %v92
    %v235 = vunpack.c.l.b16 %v93
    %v236 = vunpack.c.h.b16 %v93
    %v237 = vunpack.c.l.b16 %v94
    %v238 = vunpack.c.h.b16 %v94
    %v239 = vunpack.c.l.b16 %v95
    %v240 = vunpack.c.h.b16 %v95
    %v241 = vunpack.c.l.b16 %v96
    %v242 = vunpack.c.h.b16 %v96
    %v243 = vunpack.c.l.b16 %v97
    %v244 = vunpack.c.h.b16 %v97
    %v245 = vunpack.c.l.b16 %v98
    %v246 = vunpack.c.h.b16 %v98
    %v247 = vunpack.c.l.b16 %v99
    %v248 = vunpack.c.h.b16 %v99
    %v249 = vunpack.c.l.b16 %v100
    %v250 = vunpack.c.h.b16 %v100
    %v251 = vunpack.c.l.b16 %v101
    %v252 = vunpack.c.h.b16 %v101
    %v253 = vunpack.c.l.b16 %v102
    %v254 = vunpack.c.h.b16 %v102
    %v255 = vunpack.c.l.b16 %v103
    %v256 = vunpack.c.h.b16 %v103
    %v257 = vunpack.c.l.b16 %v104
    %v258 = vunpack.c.h.b16 %v104
    %v259 = vunpack.c.l.b16 %v105
    %v260 = vunpack.c.h.b16 %v105
    %v261 = vunpack.c.l.b16 %v106
    %v262 = vunpack.c.h.b16 %v106
    %v263 = vunpack.c.l.b16 %v107
    %v264 = vunpack.c.h.b16 %v107
    %v265 = vunpack.c.l.b16 %v108
    %v266 = vunpack.c.h.b16 %v108
    %v267 = vunpack.c.l.b16 %v109
    %v268 = vunpack.c.h.b16 %v109
    %v269 = vunpack.c.l.b16 %v110
    %v270 = vunpack.c.h.b16 %v110
    %v271 = vunpack.c.l.b16 %v111
    %v272 = vunpack.c.h.b16 %v111
    %v273 = vpack.c.b16 %v179, %v177
    %v274 = vpack.c.b16 %v180, %v178
    %v275 = vpack.c.b16 %v183, %v181
    %v276 = vpack.c.b16 %v184, %v182
    %v277 = vpack.c.b16 %v187, %v185
    %v278 = vpack.c.b16 %v188, %v186
    %v279 = vpack.c.b16 %v191, %v189
    %v280 = vpack.c.b16 %v192, %v190
    %v281 = vpack.c.b16 %v195, %v193
    %v282 = vpack.c.b16 %v196, %v194
    %v283 = vpack.c.b16 %v199, %v197
    %v284 = vpack.c.b16 %v200, %v198
    %v285 = vpack.c.b16 %v203, %v201
    %v286 = vpack.c.b16 %v204, %v202
    %v287 = vpack.c.b16 %v207, %v205
    %v288 = vpack.c.b16 %v208, %v206
    %v289 = vpack.c.b16 %v211, %v209
    %v290 = vpack.c.b16 %v212, %v210
    %v291 = vpack.c.b16 %v215, %v213
    %v292 = vpack.c.b16 %v216, %v214
    %v293 = vpack.c.b16 %v219, %v217
    %v294 = vpack.c.b16 %v220, %v218
    %v295 = vpack.c.b16 %v223, %v221
    %v296 = vpack.c.b16 %v224, %v222
    %v297 = vpack.c.b16 %v227, %v225
    %v298 = vpack.c.b16 %v228, %v226
    %v299 = vpack.c.b16 %v231, %v229
    %v300 = vpack.c.b16 %v232, %v230
    %v301 = vpack.c.b16 %v235, %v233
    %v302 = vpack.c.b16 %v236, %v234
    %v303 = vpack.c.b16 %v239, %v237
    %v304 = vpack.c.b16 %v240, %v238
    %v305 = vpack.c.b16 %v243, %v241
    %v306 = vpack.c.b16 %v244, %v242
    %v307 = vpack.c.b16 %v247, %v245
    %v308 = vpack.c.b16 %v248, %v246
    %v309 = vpack.c.b16 %v251, %v249
    %v310 = vpack.c.b16 %v252, %v250
    %v311 = vpack.c.b16 %v255, %v253
    %v312 = vpack.c.b16 %v256, %v254
    %v313 = vpack.c.b16 %v259, %v257
    %v314 = vpack.c.b16 %v260, %v258
    %v315 = vpack.c.b16 %v263, %v261
    %v316 = vpack.c.b16 %v264, %v262
    %v317 = vpack.c.b16 %v267, %v265
    %v318 = vpack.c.b16 %v268, %v266
    %v319 = vpack.c.b16 %v271, %v269
    %v320 = vpack.c.b16 %v272, %v270
    %369 = vmatpush.bf16.msra.mxu0 %v287
    %370 = vmatpush.bf16.msra.mxu0 %v285
    %371 = vmatpush.bf16.msra.mxu0 %v283
    %372 = vmatpush.bf16.msra.mxu0 %v281
    %373 = vmatpush.bf16.msra.mxu0 %v279
    %374 = vmatpush.bf16.msra.mxu0 %v277
    %375 = vmatpush.bf16.msra.mxu0 %v275
    %376 = vmatpush.bf16.msra.mxu0 %v273
    %377 = vmatmul.bf16.gmra.mxu0 %v123
    %v378 = vpop.f32.mrf.mxu0
    %v379 = vadd.f32 %v114, %v378
    %v380 = vpop.f32.mrf.mxu0
    %381 = vdwg.mxu0
    %382 = vmatpush.bf16.msra.mxu0 %v303
    %383 = vmatpush.bf16.msra.mxu0 %v301
    %384 = vmatpush.bf16.msra.mxu0 %v299
    %385 = vmatpush.bf16.msra.mxu0 %v297
    %386 = vmatpush.bf16.msra.mxu0 %v295
    %387 = vmatpush.bf16.msra.mxu0 %v293
    %388 = vmatpush.bf16.msra.mxu0 %v291
    %389 = vmatpush.bf16.msra.mxu0 %v289
    %390 = vmatmul.bf16.gmra.mxu0 %v124
    %v391 = vpop.f32.mrf.mxu0
    %v392 = vadd.f32 %v379, %v391
    %v393 = vpop.f32.mrf.mxu0
    %394 = vdwg.mxu0
    %395 = vmatpush.bf16.msra.mxu0 %v319
    %396 = vmatpush.bf16.msra.mxu0 %v317
    %397 = vmatpush.bf16.msra.mxu0 %v315
    %398 = vmatpush.bf16.msra.mxu0 %v313
    %399 = vmatpush.bf16.msra.mxu0 %v311
    %400 = vmatpush.bf16.msra.mxu0 %v309
    %401 = vmatpush.bf16.msra.mxu0 %v307
    %402 = vmatpush.bf16.msra.mxu0 %v305
    %403 = vmatmul.bf16.gmra.mxu0 %v125
    %v404 = vpop.f32.mrf.mxu0
    %v405 = vadd.f32 %v392, %v404
    %v406 = vpop.f32.mrf.mxu0
    %407 = vdwg.mxu0
    %408 = vmatpush.bf16.msra.mxu0 %v288
    %409 = vmatpush.bf16.msra.mxu0 %v286
    %410 = vmatpush.bf16.msra.mxu0 %v284
    %411 = vmatpush.bf16.msra.mxu0 %v282
    %412 = vmatpush.bf16.msra.mxu0 %v280
    %413 = vmatpush.bf16.msra.mxu0 %v278
    %414 = vmatpush.bf16.msra.mxu0 %v276
    %415 = vmatpush.bf16.msra.mxu0 %v274
    %416 = vmatmul.bf16.gmra.mxu0 %v123
    %v417 = vpop.f32.mrf.mxu0
    %v418 = vadd.f32 %v115, %v417
    %v419 = vpop.f32.mrf.mxu0
    %420 = vdwg.mxu0
    %421 = vmatpush.bf16.msra.mxu0 %v304
    %422 = vmatpush.bf16.msra.mxu0 %v302
    %423 = vmatpush.bf16.msra.mxu0 %v300
    %424 = vmatpush.bf16.msra.mxu0 %v298
    %425 = vmatpush.bf16.msra.mxu0 %v296
    %426 = vmatpush.bf16.msra.mxu0 %v294
    %427 = vmatpush.bf16.msra.mxu0 %v292
    %428 = vmatpush.bf16.msra.mxu0 %v290
    %429 = vmatmul.bf16.gmra.mxu0 %v124
    %v430 = vpop.f32.mrf.mxu0
    %v431 = vadd.f32 %v418, %v430
    %v432 = vpop.f32.mrf.mxu0
    %433 = vdwg.mxu0
    %434 = vmatpush.bf16.msra.mxu0 %v320
    %435 = vmatpush.bf16.msra.mxu0 %v318
    %436 = vmatpush.bf16.msra.mxu0 %v316
    %437 = vmatpush.bf16.msra.mxu0 %v314
    %438 = vmatpush.bf16.msra.mxu0 %v312
    %439 = vmatpush.bf16.msra.mxu0 %v310
    %440 = vmatpush.bf16.msra.mxu0 %v308
    %441 = vmatpush.bf16.msra.mxu0 %v306
    %442 = vmatmul.bf16.gmra.mxu0 %v125
    %v443 = vpop.f32.mrf.mxu0
    %v444 = vadd.f32 %v431, %v443
    %v445 = vpop.f32.mrf.mxu0
    %446 = vdwg.mxu0
    %v447 = vmax.f32 %v405, 0.0
    %v448 = vmax.f32 %v444, 0.0
    %v449 = vpack.c.bf16 %v448, %v447
    %450 = vst [vmem:[#allocation2 + $0x10] sm:$0xff] %v449
    %v451 = vld [vmem:[%s0 + $0x4] sm:$0xff]
    %v452 = vld [vmem:[%s0 + $0xc] sm:$0xf]
    %v453 = vld [vmem:[%s3] sm:$0xff]
    %v454 = vld [vmem:[%s3 + $0x8] sm:$0xff]
    %v455 = vld [vmem:[%s3 + $0x10] sm:$0xff]
    %v456 = vld [vmem:[%s3 + $0x18] sm:$0xff]
    %v457 = vld [vmem:[%s3 + $0x20] sm:$0xff]
    %v458 = vld [vmem:[%s3 + $0x28] sm:$0xff]
    %v459 = vld [vmem:[%s3 + $0x30] sm:$0xff]
    %v460 = vld [vmem:[%s3 + $0x38] sm:$0xff]
    %v461 = vld [vmem:[%s3 + $0x40] sm:$0xff]
    %v462 = vld [vmem:[%s3 + $0x48] sm:$0xff]
    %v463 = vld [vmem:[%s3 + $0x50] sm:$0xff]
    %v464 = vld [vmem:[%s3 + $0x58] sm:$0xff]
    %v465 = vld [vmem:[%s3 + $0x60] sm:$0xff]
    %v466 = vld [vmem:[%s3 + $0x68] sm:$0xff]
    %v467 = vld [vmem:[%s3 + $0x70] sm:$0xff]
    %v468 = vld [vmem:[%s3 + $0x78] sm:$0xff]
    %v469 = vld [vmem:[%s3 + $0x80] sm:$0xff]
    %v470 = vld [vmem:[%s3 + $0x88] sm:$0xff]
    %v471 = vld [vmem:[%s3 + $0x90] sm:$0xff]
    %v472 = vld [vmem:[%s3 + $0x98] sm:$0xff]
    %v473 = vld [vmem:[%s3 + $0xa0] sm:$0xff]
    %v474 = vld [vmem:[%s3 + $0xa8] sm:$0xff]
    %v475 = vld [vmem:[%s3 + $0xb0] sm:$0xff]
    %v476 = vld [vmem:[%s3 + $0xb8] sm:$0xff]
    %v477 = vld [vmem:[%s3 + $0xc0] sm:$0xff]
    %v478 = vld [vmem:[%s3 + $0xc8] sm:$0xff]
    %v479 = vld [vmem:[%s3 + $0xd0] sm:$0xff]
    %v480 = vld [vmem:[%s3 + $0xd8] sm:$0xff]
    %v481 = vld [vmem:[%s3 + $0xe0] sm:$0xff]
    %v482 = vld [vmem:[%s3 + $0xe8] sm:$0xff]
    %v483 = vld [vmem:[%s3 + $0xf0] sm:$0xff]
    %v484 = vld [vmem:[%s3 + $0xf8] sm:$0xff]
    %v485 = vld [vmem:[%s3 + $0x100] sm:$0xff]
    %v486 = vld [vmem:[%s3 + $0x108] sm:$0xff]
    %v487 = vld [vmem:[%s3 + $0x110] sm:$0xff]
    %v488 = vld [vmem:[%s3 + $0x118] sm:$0xff]
    %v489 = vld [vmem:[%s3 + $0x120] sm:$0xff]
    %v490 = vld [vmem:[%s3 + $0x128] sm:$0xff]
    %v491 = vld [vmem:[%s3 + $0x130] sm:$0xff]
    %v492 = vld [vmem:[%s3 + $0x138] sm:$0xff]
    %v493 = vld [vmem:[%s3 + $0x140] sm:$0xff]
    %v494 = vld [vmem:[%s3 + $0x148] sm:$0xff]
    %v495 = vld [vmem:[%s3 + $0x150] sm:$0xff]
    %v496 = vld [vmem:[%s3 + $0x158] sm:$0xff]
    %v497 = vld [vmem:[%s3 + $0x160] sm:$0xff]
    %v498 = vld [vmem:[%s3 + $0x168] sm:$0xff]
    %v499 = vld [vmem:[%s3 + $0x170] sm:$0xff]
    %v500 = vld [vmem:[%s3 + $0x178] sm:$0xff]
    %v501 = vld [vmem:[%s4] sm:$0x3]
    %v503 = vperm.slane %v501, 0
    %v504 = vperm.slane %v501, 1
    %v509 = vunpack.c.l.b16 %v451
    %v510 = vunpack.c.h.b16 %v451
    %v511 = vunpack.c.l.b16 %v452
    %v512 = vpack.c.b16 %v509, %v509
    %v513 = vpack.c.b16 %v510, %v510
    %v514 = vpack.c.b16 %v511, %v511
    %v566 = vunpack.c.l.b16 %v453
    %v567 = vunpack.c.h.b16 %v453
    %v568 = vunpack.c.l.b16 %v454
    %v569 = vunpack.c.h.b16 %v454
    %v570 = vunpack.c.l.b16 %v455
    %v571 = vunpack.c.h.b16 %v455
    %v572 = vunpack.c.l.b16 %v456
    %v573 = vunpack.c.h.b16 %v456
    %v574 = vunpack.c.l.b16 %v457
    %v575 = vunpack.c.h.b16 %v457
    %v576 = vunpack.c.l.b16 %v458
    %v577 = vunpack.c.h.b16 %v458
    %v578 = vunpack.c.l.b16 %v459
    %v579 = vunpack.c.h.b16 %v459
    %v580 = vunpack.c.l.b16 %v460
    %v581 = vunpack.c.h.b16 %v460
    %v582 = vunpack.c.l.b16 %v461
    %v583 = vunpack.c.h.b16 %v461
    %v584 = vunpack.c.l.b16 %v462
    %v585 = vunpack.c.h.b16 %v462
    %v586 = vunpack.c.l.b16 %v463
    %v587 = vunpack.c.h.b16 %v463
    %v588 = vunpack.c.l.b16 %v464
    %v589 = vunpack.c.h.b16 %v464
    %v590 = vunpack.c.l.b16 %v465
    %v591 = vunpack.c.h.b16 %v465
    %v592 = vunpack.c.l.b16 %v466
    %v593 = vunpack.c.h.b16 %v466
    %v594 = vunpack.c.l.b16 %v467
    %v595 = vunpack.c.h.b16 %v467
    %v596 = vunpack.c.l.b16 %v468
    %v597 = vunpack.c.h.b16 %v468
    %v598 = vunpack.c.l.b16 %v469
    %v599 = vunpack.c.h.b16 %v469
    %v600 = vunpack.c.l.b16 %v470
    %v601 = vunpack.c.h.b16 %v470
    %v602 = vunpack.c.l.b16 %v471
    %v603 = vunpack.c.h.b16 %v471
    %v604 = vunpack.c.l.b16 %v472
    %v605 = vunpack.c.h.b16 %v472
    %v606 = vunpack.c.l.b16 %v473
    %v607 = vunpack.c.h.b16 %v473
    %v608 = vunpack.c.l.b16 %v474
    %v609 = vunpack.c.h.b16 %v474
    %v610 = vunpack.c.l.b16 %v475
    %v611 = vunpack.c.h.b16 %v475
    %v612 = vunpack.c.l.b16 %v476
    %v613 = vunpack.c.h.b16 %v476
    %v614 = vunpack.c.l.b16 %v477
    %v615 = vunpack.c.h.b16 %v477
    %v616 = vunpack.c.l.b16 %v478
    %v617 = vunpack.c.h.b16 %v478
    %v618 = vunpack.c.l.b16 %v479
    %v619 = vunpack.c.h.b16 %v479
    %v620 = vunpack.c.l.b16 %v480
    %v621 = vunpack.c.h.b16 %v480
    %v622 = vunpack.c.l.b16 %v481
    %v623 = vunpack.c.h.b16 %v481
    %v624 = vunpack.c.l.b16 %v482
    %v625 = vunpack.c.h.b16 %v482
    %v626 = vunpack.c.l.b16 %v483
    %v627 = vunpack.c.h.b16 %v483
    %v628 = vunpack.c.l.b16 %v484
    %v629 = vunpack.c.h.b16 %v484
    %v630 = vunpack.c.l.b16 %v485
    %v631 = vunpack.c.h.b16 %v485
    %v632 = vunpack.c.l.b16 %v486
    %v633 = vunpack.c.h.b16 %v486
    %v634 = vunpack.c.l.b16 %v487
    %v635 = vunpack.c.h.b16 %v487
    %v636 = vunpack.c.l.b16 %v488
    %v637 = vunpack.c.h.b16 %v488
    %v638 = vunpack.c.l.b16 %v489
    %v639 = vunpack.c.h.b16 %v489
    %v640 = vunpack.c.l.b16 %v490
    %v641 = vunpack.c.h.b16 %v490
    %v642 = vunpack.c.l.b16 %v491
    %v643 = vunpack.c.h.b16 %v491
    %v644 = vunpack.c.l.b16 %v492
    %v645 = vunpack.c.h.b16 %v492
    %v646 = vunpack.c.l.b16 %v493
    %v647 = vunpack.c.h.b16 %v493
    %v648 = vunpack.c.l.b16 %v494
    %v649 = vunpack.c.h.b16 %v494
    %v650 = vunpack.c.l.b16 %v495
    %v651 = vunpack.c.h.b16 %v495
    %v652 = vunpack.c.l.b16 %v496
    %v653 = vunpack.c.h.b16 %v496
    %v654 = vunpack.c.l.b16 %v497
    %v655 = vunpack.c.h.b16 %v497
    %v656 = vunpack.c.l.b16 %v498
    %v657 = vunpack.c.h.b16 %v498
    %v658 = vunpack.c.l.b16 %v499
    %v659 = vunpack.c.h.b16 %v499
    %v660 = vunpack.c.l.b16 %v500
    %v661 = vunpack.c.h.b16 %v500
    %v662 = vpack.c.b16 %v568, %v566
    %v663 = vpack.c.b16 %v569, %v567
    %v664 = vpack.c.b16 %v572, %v570
    %v665 = vpack.c.b16 %v573, %v571
    %v666 = vpack.c.b16 %v576, %v574
    %v667 = vpack.c.b16 %v577, %v575
    %v668 = vpack.c.b16 %v580, %v578
    %v669 = vpack.c.b16 %v581, %v579
    %v670 = vpack.c.b16 %v584, %v582
    %v671 = vpack.c.b16 %v585, %v583
    %v672 = vpack.c.b16 %v588, %v586
    %v673 = vpack.c.b16 %v589, %v587
    %v674 = vpack.c.b16 %v592, %v590
    %v675 = vpack.c.b16 %v593, %v591
    %v676 = vpack.c.b16 %v596, %v594
    %v677 = vpack.c.b16 %v597, %v595
    %v678 = vpack.c.b16 %v600, %v598
    %v679 = vpack.c.b16 %v601, %v599
    %v680 = vpack.c.b16 %v604, %v602
    %v681 = vpack.c.b16 %v605, %v603
    %v682 = vpack.c.b16 %v608, %v606
    %v683 = vpack.c.b16 %v609, %v607
    %v684 = vpack.c.b16 %v612, %v610
    %v685 = vpack.c.b16 %v613, %v611
    %v686 = vpack.c.b16 %v616, %v614
    %v687 = vpack.c.b16 %v617, %v615
    %v688 = vpack.c.b16 %v620, %v618
    %v689 = vpack.c.b16 %v621, %v619
    %v690 = vpack.c.b16 %v624, %v622
    %v691 = vpack.c.b16 %v625, %v623
    %v692 = vpack.c.b16 %v628, %v626
    %v693 = vpack.c.b16 %v629, %v627
    %v694 = vpack.c.b16 %v632, %v630
    %v695 = vpack.c.b16 %v633, %v631
    %v696 = vpack.c.b16 %v636, %v634
    %v697 = vpack.c.b16 %v637, %v635
    %v698 = vpack.c.b16 %v640, %v638
    %v699 = vpack.c.b16 %v641, %v639
    %v700 = vpack.c.b16 %v644, %v642
    %v701 = vpack.c.b16 %v645, %v643
    %v702 = vpack.c.b16 %v648, %v646
    %v703 = vpack.c.b16 %v649, %v647
    %v704 = vpack.c.b16 %v652, %v650
    %v705 = vpack.c.b16 %v653, %v651
    %v706 = vpack.c.b16 %v656, %v654
    %v707 = vpack.c.b16 %v657, %v655
    %v708 = vpack.c.b16 %v660, %v658
    %v709 = vpack.c.b16 %v661, %v659
    %758 = vmatpush.bf16.msra.mxu0 %v676
    %759 = vmatpush.bf16.msra.mxu0 %v674
    %760 = vmatpush.bf16.msra.mxu0 %v672
    %761 = vmatpush.bf16.msra.mxu0 %v670
    %762 = vmatpush.bf16.msra.mxu0 %v668
    %763 = vmatpush.bf16.msra.mxu0 %v666
    %764 = vmatpush.bf16.msra.mxu0 %v664
    %765 = vmatpush.bf16.msra.mxu0 %v662
    %766 = vmatmul.bf16.gmra.mxu0 %v512
    %v767 = vpop.f32.mrf.mxu0
    %v768 = vadd.f32 %v503, %v767
    %v769 = vpop.f32.mrf.mxu0
    %770 = vdwg.mxu0
    %771 = vmatpush.bf16.msra.mxu0 %v692
    %772 = vmatpush.bf16.msra.mxu0 %v690
    %773 = vmatpush.bf16.msra.mxu0 %v688
    %774 = vmatpush.bf16.msra.mxu0 %v686
    %775 = vmatpush.bf16.msra.mxu0 %v684
    %776 = vmatpush.bf16.msra.mxu0 %v682
    %777 = vmatpush.bf16.msra.mxu0 %v680
    %778 = vmatpush.bf16.msra.mxu0 %v678
    %779 = vmatmul.bf16.gmra.mxu0 %v513
    %v780 = vpop.f32.mrf.mxu0
    %v781 = vadd.f32 %v768, %v780
    %v782 = vpop.f32.mrf.mxu0
    %783 = vdwg.mxu0
    %784 = vmatpush.bf16.msra.mxu0 %v708
    %785 = vmatpush.bf16.msra.mxu0 %v706
    %786 = vmatpush.bf16.msra.mxu0 %v704
    %787 = vmatpush.bf16.msra.mxu0 %v702
    %788 = vmatpush.bf16.msra.mxu0 %v700
    %789 = vmatpush.bf16.msra.mxu0 %v698
    %790 = vmatpush.bf16.msra.mxu0 %v696
    %791 = vmatpush.bf16.msra.mxu0 %v694
    %792 = vmatmul.bf16.gmra.mxu0 %v514
    %v793 = vpop.f32.mrf.mxu0
    %v794 = vadd.f32 %v781, %v793
    %v795 = vpop.f32.mrf.mxu0
    %796 = vdwg.mxu0
    %797 = vmatpush.bf16.msra.mxu0 %v677
    %798 = vmatpush.bf16.msra.mxu0 %v675
    %799 = vmatpush.bf16.msra.mxu0 %v673
    %800 = vmatpush.bf16.msra.mxu0 %v671
    %801 = vmatpush.bf16.msra.mxu0 %v669
    %802 = vmatpush.bf16.msra.mxu0 %v667
    %803 = vmatpush.bf16.msra.mxu0 %v665
    %804 = vmatpush.bf16.msra.mxu0 %v663
    %805 = vmatmul.bf16.gmra.mxu0 %v512
    %v806 = vpop.f32.mrf.mxu0
    %v807 = vadd.f32 %v504, %v806
    %v808 = vpop.f32.mrf.mxu0
    %809 = vdwg.mxu0
    %810 = vmatpush.bf16.msra.mxu0 %v693
    %811 = vmatpush.bf16.msra.mxu0 %v691
    %812 = vmatpush.bf16.msra.mxu0 %v689
    %813 = vmatpush.bf16.msra.mxu0 %v687
    %814 = vmatpush.bf16.msra.mxu0 %v685
    %815 = vmatpush.bf16.msra.mxu0 %v683
    %816 = vmatpush.bf16.msra.mxu0 %v681
    %817 = vmatpush.bf16.msra.mxu0 %v679
    %818 = vmatmul.bf16.gmra.mxu0 %v513
    %v819 = vpop.f32.mrf.mxu0
    %v820 = vadd.f32 %v807, %v819
    %v821 = vpop.f32.mrf.mxu0
    %822 = vdwg.mxu0
    %823 = vmatpush.bf16.msra.mxu0 %v709
    %824 = vmatpush.bf16.msra.mxu0 %v707
    %825 = vmatpush.bf16.msra.mxu0 %v705
    %826 = vmatpush.bf16.msra.mxu0 %v703
    %827 = vmatpush.bf16.msra.mxu0 %v701
    %828 = vmatpush.bf16.msra.mxu0 %v699
    %829 = vmatpush.bf16.msra.mxu0 %v697
    %830 = vmatpush.bf16.msra.mxu0 %v695
    %831 = vmatmul.bf16.gmra.mxu0 %v514
    %v832 = vpop.f32.mrf.mxu0
    %v833 = vadd.f32 %v820, %v832
    %v834 = vpop.f32.mrf.mxu0
    %835 = vdwg.mxu0
    %v836 = vmax.f32 %v794, 0.0
    %v837 = vmax.f32 %v833, 0.0
    %v838 = vpack.c.bf16 %v837, %v836
    %839 = vst [vmem:[#allocation2 + $0x18] sm:$0xff] %v838
    %v840 = vld [vmem:[%s0 + $0x8] sm:$0xff]
    %v841 = vld [vmem:[%s0 + $0x10] sm:$0xf]
    %v842 = vld [vmem:[%s3] sm:$0xff]
    %v843 = vld [vmem:[%s3 + $0x8] sm:$0xff]
    %v844 = vld [vmem:[%s3 + $0x10] sm:$0xff]
    %v845 = vld [vmem:[%s3 + $0x18] sm:$0xff]
    %v846 = vld [vmem:[%s3 + $0x20] sm:$0xff]
    %v847 = vld [vmem:[%s3 + $0x28] sm:$0xff]
    %v848 = vld [vmem:[%s3 + $0x30] sm:$0xff]
    %v849 = vld [vmem:[%s3 + $0x38] sm:$0xff]
    %v850 = vld [vmem:[%s3 + $0x40] sm:$0xff]
    %v851 = vld [vmem:[%s3 + $0x48] sm:$0xff]
    %v852 = vld [vmem:[%s3 + $0x50] sm:$0xff]
    %v853 = vld [vmem:[%s3 + $0x58] sm:$0xff]
    %v854 = vld [vmem:[%s3 + $0x60] sm:$0xff]
    %v855 = vld [vmem:[%s3 + $0x68] sm:$0xff]
    %v856 = vld [vmem:[%s3 + $0x70] sm:$0xff]
    %v857 = vld [vmem:[%s3 + $0x78] sm:$0xff]
    %v858 = vld [vmem:[%s3 + $0x80] sm:$0xff]
    %v859 = vld [vmem:[%s3 + $0x88] sm:$0xff]
    %v860 = vld [vmem:[%s3 + $0x90] sm:$0xff]
    %v861 = vld [vmem:[%s3 + $0x98] sm:$0xff]
    %v862 = vld [vmem:[%s3 + $0xa0] sm:$0xff]
    %v863 = vld [vmem:[%s3 + $0xa8] sm:$0xff]
    %v864 = vld [vmem:[%s3 + $0xb0] sm:$0xff]
    %v865 = vld [vmem:[%s3 + $0xb8] sm:$0xff]
    %v866 = vld [vmem:[%s3 + $0xc0] sm:$0xff]
    %v867 = vld [vmem:[%s3 + $0xc8] sm:$0xff]
    %v868 = vld [vmem:[%s3 + $0xd0] sm:$0xff]
    %v869 = vld [vmem:[%s3 + $0xd8] sm:$0xff]
    %v870 = vld [vmem:[%s3 + $0xe0] sm:$0xff]
    %v871 = vld [vmem:[%s3 + $0xe8] sm:$0xff]
    %v872 = vld [vmem:[%s3 + $0xf0] sm:$0xff]
    %v873 = vld [vmem:[%s3 + $0xf8] sm:$0xff]
    %v874 = vld [vmem:[%s3 + $0x100] sm:$0xff]
    %v875 = vld [vmem:[%s3 + $0x108] sm:$0xff]
    %v876 = vld [vmem:[%s3 + $0x110] sm:$0xff]
    %v877 = vld [vmem:[%s3 + $0x118] sm:$0xff]
    %v878 = vld [vmem:[%s3 + $0x120] sm:$0xff]
    %v879 = vld [vmem:[%s3 + $0x128] sm:$0xff]
    %v880 = vld [vmem:[%s3 + $0x130] sm:$0xff]
    %v881 = vld [vmem:[%s3 + $0x138] sm:$0xff]
    %v882 = vld [vmem:[%s3 + $0x140] sm:$0xff]
    %v883 = vld [vmem:[%s3 + $0x148] sm:$0xff]
    %v884 = vld [vmem:[%s3 + $0x150] sm:$0xff]
    %v885 = vld [vmem:[%s3 + $0x158] sm:$0xff]
    %v886 = vld [vmem:[%s3 + $0x160] sm:$0xff]
    %v887 = vld [vmem:[%s3 + $0x168] sm:$0xff]
    %v888 = vld [vmem:[%s3 + $0x170] sm:$0xff]
    %v889 = vld [vmem:[%s3 + $0x178] sm:$0xff]
    %v890 = vld [vmem:[%s4] sm:$0x3]
    %v892 = vperm.slane %v890, 0
    %v893 = vperm.slane %v890, 1
    %v898 = vunpack.c.l.b16 %v840
    %v899 = vunpack.c.h.b16 %v840
    %v900 = vunpack.c.l.b16 %v841
    %v901 = vpack.c.b16 %v898, %v898
    %v902 = vpack.c.b16 %v899, %v899
    %v903 = vpack.c.b16 %v900, %v900
    %v955 = vunpack.c.l.b16 %v842
    %v956 = vunpack.c.h.b16 %v842
    %v957 = vunpack.c.l.b16 %v843
    %v958 = vunpack.c.h.b16 %v843
    %v959 = vunpack.c.l.b16 %v844
    %v960 = vunpack.c.h.b16 %v844
    %v961 = vunpack.c.l.b16 %v845
    %v962 = vunpack.c.h.b16 %v845
    %v963 = vunpack.c.l.b16 %v846
    %v964 = vunpack.c.h.b16 %v846
    %v965 = vunpack.c.l.b16 %v847
    %v966 = vunpack.c.h.b16 %v847
    %v967 = vunpack.c.l.b16 %v848
    %v968 = vunpack.c.h.b16 %v848
    %v969 = vunpack.c.l.b16 %v849
    %v970 = vunpack.c.h.b16 %v849
    %v971 = vunpack.c.l.b16 %v850
    %v972 = vunpack.c.h.b16 %v850
    %v973 = vunpack.c.l.b16 %v851
    %v974 = vunpack.c.h.b16 %v851
    %v975 = vunpack.c.l.b16 %v852
    %v976 = vunpack.c.h.b16 %v852
    %v977 = vunpack.c.l.b16 %v853
    %v978 = vunpack.c.h.b16 %v853
    %v979 = vunpack.c.l.b16 %v854
    %v980 = vunpack.c.h.b16 %v854
    %v981 = vunpack.c.l.b16 %v855
    %v982 = vunpack.c.h.b16 %v855
    %v983 = vunpack.c.l.b16 %v856
    %v984 = vunpack.c.h.b16 %v856
    %v985 = vunpack.c.l.b16 %v857
    %v986 = vunpack.c.h.b16 %v857
    %v987 = vunpack.c.l.b16 %v858
    %v988 = vunpack.c.h.b16 %v858
    %v989 = vunpack.c.l.b16 %v859
    %v990 = vunpack.c.h.b16 %v859
    %v991 = vunpack.c.l.b16 %v860
    %v992 = vunpack.c.h.b16 %v860
    %v993 = vunpack.c.l.b16 %v861
    %v994 = vunpack.c.h.b16 %v861
    %v995 = vunpack.c.l.b16 %v862
    %v996 = vunpack.c.h.b16 %v862
    %v997 = vunpack.c.l.b16 %v863
    %v998 = vunpack.c.h.b16 %v863
    %v999 = vunpack.c.l.b16 %v864
    %v1000 = vunpack.c.h.b16 %v864
    %v1001 = vunpack.c.l.b16 %v865
    %v1002 = vunpack.c.h.b16 %v865
    %v1003 = vunpack.c.l.b16 %v866
    %v1004 = vunpack.c.h.b16 %v866
    %v1005 = vunpack.c.l.b16 %v867
    %v1006 = vunpack.c.h.b16 %v867
    %v1007 = vunpack.c.l.b16 %v868
    %v1008 = vunpack.c.h.b16 %v868
    %v1009 = vunpack.c.l.b16 %v869
    %v1010 = vunpack.c.h.b16 %v869
    %v1011 = vunpack.c.l.b16 %v870
    %v1012 = vunpack.c.h.b16 %v870
    %v1013 = vunpack.c.l.b16 %v871
    %v1014 = vunpack.c.h.b16 %v871
    %v1015 = vunpack.c.l.b16 %v872
    %v1016 = vunpack.c.h.b16 %v872
    %v1017 = vunpack.c.l.b16 %v873
    %v1018 = vunpack.c.h.b16 %v873
    %v1019 = vunpack.c.l.b16 %v874
    %v1020 = vunpack.c.h.b16 %v874
    %v1021 = vunpack.c.l.b16 %v875
    %v1022 = vunpack.c.h.b16 %v875
    %v1023 = vunpack.c.l.b16 %v876
    %v1024 = vunpack.c.h.b16 %v876
    %v1025 = vunpack.c.l.b16 %v877
    %v1026 = vunpack.c.h.b16 %v877
    %v1027 = vunpack.c.l.b16 %v878
    %v1028 = vunpack.c.h.b16 %v878
    %v1029 = vunpack.c.l.b16 %v879
    %v1030 = vunpack.c.h.b16 %v879
    %v1031 = vunpack.c.l.b16 %v880
    %v1032 = vunpack.c.h.b16 %v880
    %v1033 = vunpack.c.l.b16 %v881
    %v1034 = vunpack.c.h.b16 %v881
    %v1035 = vunpack.c.l.b16 %v882
    %v1036 = vunpack.c.h.b16 %v882
    %v1037 = vunpack.c.l.b16 %v883
    %v1038 = vunpack.c.h.b16 %v883
    %v1039 = vunpack.c.l.b16 %v884
    %v1040 = vunpack.c.h.b16 %v884
    %v1041 = vunpack.c.l.b16 %v885
    %v1042 = vunpack.c.h.b16 %v885
    %v1043 = vunpack.c.l.b16 %v886
    %v1044 = vunpack.c.h.b16 %v886
    %v1045 = vunpack.c.l.b16 %v887
    %v1046 = vunpack.c.h.b16 %v887
    %v1047 = vunpack.c.l.b16 %v888
    %v1048 = vunpack.c.h.b16 %v888
    %v1049 = vunpack.c.l.b16 %v889
    %v1050 = vunpack.c.h.b16 %v889
    %v1051 = vpack.c.b16 %v957, %v955
    %v1052 = vpack.c.b16 %v958, %v956
    %v1053 = vpack.c.b16 %v961, %v959
    %v1054 = vpack.c.b16 %v962, %v960
    %v1055 = vpack.c.b16 %v965, %v963
    %v1056 = vpack.c.b16 %v966, %v964
    %v1057 = vpack.c.b16 %v969, %v967
    %v1058 = vpack.c.b16 %v970, %v968
    %v1059 = vpack.c.b16 %v973, %v971
    %v1060 = vpack.c.b16 %v974, %v972
    %v1061 = vpack.c.b16 %v977, %v975
    %v1062 = vpack.c.b16 %v978, %v976
    %v1063 = vpack.c.b16 %v981, %v979
    %v1064 = vpack.c.b16 %v982, %v980
    %v1065 = vpack.c.b16 %v985, %v983
    %v1066 = vpack.c.b16 %v986, %v984
    %v1067 = vpack.c.b16 %v989, %v987
    %v1068 = vpack.c.b16 %v990, %v988
    %v1069 = vpack.c.b16 %v993, %v991
    %v1070 = vpack.c.b16 %v994, %v992
    %v1071 = vpack.c.b16 %v997, %v995
    %v1072 = vpack.c.b16 %v998, %v996
    %v1073 = vpack.c.b16 %v1001, %v999
    %v1074 = vpack.c.b16 %v1002, %v1000
    %v1075 = vpack.c.b16 %v1005, %v1003
    %v1076 = vpack.c.b16 %v1006, %v1004
    %v1077 = vpack.c.b16 %v1009, %v1007
    %v1078 = vpack.c.b16 %v1010, %v1008
    %v1079 = vpack.c.b16 %v1013, %v1011
    %v1080 = vpack.c.b16 %v1014, %v1012
    %v1081 = vpack.c.b16 %v1017, %v1015
    %v1082 = vpack.c.b16 %v1018, %v1016
    %v1083 = vpack.c.b16 %v1021, %v1019
    %v1084 = vpack.c.b16 %v1022, %v1020
    %v1085 = vpack.c.b16 %v1025, %v1023
    %v1086 = vpack.c.b16 %v1026, %v1024
    %v1087 = vpack.c.b16 %v1029, %v1027
    %v1088 = vpack.c.b16 %v1030, %v1028
    %v1089 = vpack.c.b16 %v1033, %v1031
    %v1090 = vpack.c.b16 %v1034, %v1032
    %v1091 = vpack.c.b16 %v1037, %v1035
    %v1092 = vpack.c.b16 %v1038, %v1036
    %v1093 = vpack.c.b16 %v1041, %v1039
    %v1094 = vpack.c.b16 %v1042, %v1040
    %v1095 = vpack.c.b16 %v1045, %v1043
    %v1096 = vpack.c.b16 %v1046, %v1044
    %v1097 = vpack.c.b16 %v1049, %v1047
    %v1098 = vpack.c.b16 %v1050, %v1048
    %1147 = vmatpush.bf16.msra.mxu0 %v1065
    %1148 = vmatpush.bf16.msra.mxu0 %v1063
    %1149 = vmatpush.bf16.msra.mxu0 %v1061
    %1150 = vmatpush.bf16.msra.mxu0 %v1059
    %1151 = vmatpush.bf16.msra.mxu0 %v1057
    %1152 = vmatpush.bf16.msra.mxu0 %v1055
    %1153 = vmatpush.bf16.msra.mxu0 %v1053
    %1154 = vmatpush.bf16.msra.mxu0 %v1051
    %1155 = vmatmul.bf16.gmra.mxu0 %v901
    %v1156 = vpop.f32.mrf.mxu0
    %v1157 = vadd.f32 %v892, %v1156
    %v1158 = vpop.f32.mrf.mxu0
    %1159 = vdwg.mxu0
    %1160 = vmatpush.bf16.msra.mxu0 %v1081
    %1161 = vmatpush.bf16.msra.mxu0 %v1079
    %1162 = vmatpush.bf16.msra.mxu0 %v1077
    %1163 = vmatpush.bf16.msra.mxu0 %v1075
    %1164 = vmatpush.bf16.msra.mxu0 %v1073
    %1165 = vmatpush.bf16.msra.mxu0 %v1071
    %1166 = vmatpush.bf16.msra.mxu0 %v1069
    %1167 = vmatpush.bf16.msra.mxu0 %v1067
    %1168 = vmatmul.bf16.gmra.mxu0 %v902
    %v1169 = vpop.f32.mrf.mxu0
    %v1170 = vadd.f32 %v1157, %v1169
    %v1171 = vpop.f32.mrf.mxu0
    %1172 = vdwg.mxu0
    %1173 = vmatpush.bf16.msra.mxu0 %v1097
    %1174 = vmatpush.bf16.msra.mxu0 %v1095
    %1175 = vmatpush.bf16.msra.mxu0 %v1093
    %1176 = vmatpush.bf16.msra.mxu0 %v1091
    %1177 = vmatpush.bf16.msra.mxu0 %v1089
    %1178 = vmatpush.bf16.msra.mxu0 %v1087
    %1179 = vmatpush.bf16.msra.mxu0 %v1085
    %1180 = vmatpush.bf16.msra.mxu0 %v1083
    %1181 = vmatmul.bf16.gmra.mxu0 %v903
    %v1182 = vpop.f32.mrf.mxu0
    %v1183 = vadd.f32 %v1170, %v1182
    %v1184 = vpop.f32.mrf.mxu0
    %1185 = vdwg.mxu0
    %1186 = vmatpush.bf16.msra.mxu0 %v1066
    %1187 = vmatpush.bf16.msra.mxu0 %v1064
    %1188 = vmatpush.bf16.msra.mxu0 %v1062
    %1189 = vmatpush.bf16.msra.mxu0 %v1060
    %1190 = vmatpush.bf16.msra.mxu0 %v1058
    %1191 = vmatpush.bf16.msra.mxu0 %v1056
    %1192 = vmatpush.bf16.msra.mxu0 %v1054
    %1193 = vmatpush.bf16.msra.mxu0 %v1052
    %1194 = vmatmul.bf16.gmra.mxu0 %v901
    %v1195 = vpop.f32.mrf.mxu0
    %v1196 = vadd.f32 %v893, %v1195
    %v1197 = vpop.f32.mrf.mxu0
    %1198 = vdwg.mxu0
    %1199 = vmatpush.bf16.msra.mxu0 %v1082
    %1200 = vmatpush.bf16.msra.mxu0 %v1080
    %1201 = vmatpush.bf16.msra.mxu0 %v1078
    %1202 = vmatpush.bf16.msra.mxu0 %v1076
    %1203 = vmatpush.bf16.msra.mxu0 %v1074
    %1204 = vmatpush.bf16.msra.mxu0 %v1072
    %1205 = vmatpush.bf16.msra.mxu0 %v1070
    %1206 = vmatpush.bf16.msra.mxu0 %v1068
    %1207 = vmatmul.bf16.gmra.mxu0 %v902
    %v1208 = vpop.f32.mrf.mxu0
    %v1209 = vadd.f32 %v1196, %v1208
    %v1210 = vpop.f32.mrf.mxu0
    %1211 = vdwg.mxu0
    %1212 = vmatpush.bf16.msra.mxu0 %v1098
    %1213 = vmatpush.bf16.msra.mxu0 %v1096
    %1214 = vmatpush.bf16.msra.mxu0 %v1094
    %1215 = vmatpush.bf16.msra.mxu0 %v1092
    %1216 = vmatpush.bf16.msra.mxu0 %v1090
    %1217 = vmatpush.bf16.msra.mxu0 %v1088
    %1218 = vmatpush.bf16.msra.mxu0 %v1086
    %1219 = vmatpush.bf16.msra.mxu0 %v1084
    %1220 = vmatmul.bf16.gmra.mxu0 %v903
    %v1221 = vpop.f32.mrf.mxu0
    %v1222 = vadd.f32 %v1209, %v1221
    %v1223 = vpop.f32.mrf.mxu0
    %1224 = vdwg.mxu0
    %v1225 = vmax.f32 %v1183, 0.0
    %v1226 = vmax.f32 %v1222, 0.0
    %v1227 = vpack.c.bf16 %v1226, %v1225
    %1228 = vst [vmem:[#allocation2 + $0x20] sm:$0xff] %v1227
    %v1229 = vld [vmem:[%s0 + $0xc] sm:$0xff]
    %v1230 = vld [vmem:[%s0 + $0x14] sm:$0xf]
    %v1231 = vld [vmem:[%s3] sm:$0xff]
    %v1232 = vld [vmem:[%s3 + $0x8] sm:$0xff]
    %v1233 = vld [vmem:[%s3 + $0x10] sm:$0xff]
    %v1234 = vld [vmem:[%s3 + $0x18] sm:$0xff]
    %v1235 = vld [vmem:[%s3 + $0x20] sm:$0xff]
    %v1236 = vld [vmem:[%s3 + $0x28] sm:$0xff]
    %v1237 = vld [vmem:[%s3 + $0x30] sm:$0xff]
    %v1238 = vld [vmem:[%s3 + $0x38] sm:$0xff]
    %v1239 = vld [vmem:[%s3 + $0x40] sm:$0xff]
    %v1240 = vld [vmem:[%s3 + $0x48] sm:$0xff]
    %v1241 = vld [vmem:[%s3 + $0x50] sm:$0xff]
    %v1242 = vld [vmem:[%s3 + $0x58] sm:$0xff]
    %v1243 = vld [vmem:[%s3 + $0x60] sm:$0xff]
    %v1244 = vld [vmem:[%s3 + $0x68] sm:$0xff]
    %v1245 = vld [vmem:[%s3 + $0x70] sm:$0xff]
    %v1246 = vld [vmem:[%s3 + $0x78] sm:$0xff]
    %v1247 = vld [vmem:[%s3 + $0x80] sm:$0xff]
    %v1248 = vld [vmem:[%s3 + $0x88] sm:$0xff]
    %v1249 = vld [vmem:[%s3 + $0x90] sm:$0xff]
    %v1250 = vld [vmem:[%s3 + $0x98] sm:$0xff]
    %v1251 = vld [vmem:[%s3 + $0xa0] sm:$0xff]
    %v1252 = vld [vmem:[%s3 + $0xa8] sm:$0xff]
    %v1253 = vld [vmem:[%s3 + $0xb0] sm:$0xff]
    %v1254 = vld [vmem:[%s3 + $0xb8] sm:$0xff]
    %v1255 = vld [vmem:[%s3 + $0xc0] sm:$0xff]
    %v1256 = vld [vmem:[%s3 + $0xc8] sm:$0xff]
    %v1257 = vld [vmem:[%s3 + $0xd0] sm:$0xff]
    %v1258 = vld [vmem:[%s3 + $0xd8] sm:$0xff]
    %v1259 = vld [vmem:[%s3 + $0xe0] sm:$0xff]
    %v1260 = vld [vmem:[%s3 + $0xe8] sm:$0xff]
    %v1261 = vld [vmem:[%s3 + $0xf0] sm:$0xff]
    %v1262 = vld [vmem:[%s3 + $0xf8] sm:$0xff]
    %v1263 = vld [vmem:[%s3 + $0x100] sm:$0xff]
    %v1264 = vld [vmem:[%s3 + $0x108] sm:$0xff]
    %v1265 = vld [vmem:[%s3 + $0x110] sm:$0xff]
    %v1266 = vld [vmem:[%s3 + $0x118] sm:$0xff]
    %v1267 = vld [vmem:[%s3 + $0x120] sm:$0xff]
    %v1268 = vld [vmem:[%s3 + $0x128] sm:$0xff]
    %v1269 = vld [vmem:[%s3 + $0x130] sm:$0xff]
    %v1270 = vld [vmem:[%s3 + $0x138] sm:$0xff]
    %v1271 = vld [vmem:[%s3 + $0x140] sm:$0xff]
    %v1272 = vld [vmem:[%s3 + $0x148] sm:$0xff]
    %v1273 = vld [vmem:[%s3 + $0x150] sm:$0xff]
    %v1274 = vld [vmem:[%s3 + $0x158] sm:$0xff]
    %v1275 = vld [vmem:[%s3 + $0x160] sm:$0xff]
    %v1276 = vld [vmem:[%s3 + $0x168] sm:$0xff]
    %v1277 = vld [vmem:[%s3 + $0x170] sm:$0xff]
    %v1278 = vld [vmem:[%s3 + $0x178] sm:$0xff]
    %v1279 = vld [vmem:[%s4] sm:$0x3]
    %v1281 = vperm.slane %v1279, 0
    %v1282 = vperm.slane %v1279, 1
    %v1287 = vunpack.c.l.b16 %v1229
    %v1288 = vunpack.c.h.b16 %v1229
    %v1289 = vunpack.c.l.b16 %v1230
    %v1290 = vpack.c.b16 %v1287, %v1287
    %v1291 = vpack.c.b16 %v1288, %v1288
    %v1292 = vpack.c.b16 %v1289, %v1289
    %v1344 = vunpack.c.l.b16 %v1231
    %v1345 = vunpack.c.h.b16 %v1231
    %v1346 = vunpack.c.l.b16 %v1232
    %v1347 = vunpack.c.h.b16 %v1232
    %v1348 = vunpack.c.l.b16 %v1233
    %v1349 = vunpack.c.h.b16 %v1233
    %v1350 = vunpack.c.l.b16 %v1234
    %v1351 = vunpack.c.h.b16 %v1234
    %v1352 = vunpack.c.l.b16 %v1235
    %v1353 = vunpack.c.h.b16 %v1235
    %v1354 = vunpack.c.l.b16 %v1236
    %v1355 = vunpack.c.h.b16 %v1236
    %v1356 = vunpack.c.l.b16 %v1237
    %v1357 = vunpack.c.h.b16 %v1237
    %v1358 = vunpack.c.l.b16 %v1238
    %v1359 = vunpack.c.h.b16 %v1238
    %v1360 = vunpack.c.l.b16 %v1239
    %v1361 = vunpack.c.h.b16 %v1239
    %v1362 = vunpack.c.l.b16 %v1240
    %v1363 = vunpack.c.h.b16 %v1240
    %v1364 = vunpack.c.l.b16 %v1241
    %v1365 = vunpack.c.h.b16 %v1241
    %v1366 = vunpack.c.l.b16 %v1242
    %v1367 = vunpack.c.h.b16 %v1242
    %v1368 = vunpack.c.l.b16 %v1243
    %v1369 = vunpack.c.h.b16 %v1243
    %v1370 = vunpack.c.l.b16 %v1244
    %v1371 = vunpack.c.h.b16 %v1244
    %v1372 = vunpack.c.l.b16 %v1245
    %v1373 = vunpack.c.h.b16 %v1245
    %v1374 = vunpack.c.l.b16 %v1246
    %v1375 = vunpack.c.h.b16 %v1246
    %v1376 = vunpack.c.l.b16 %v1247
    %v1377 = vunpack.c.h.b16 %v1247
    %v1378 = vunpack.c.l.b16 %v1248
    %v1379 = vunpack.c.h.b16 %v1248
    %v1380 = vunpack.c.l.b16 %v1249
    %v1381 = vunpack.c.h.b16 %v1249
    %v1382 = vunpack.c.l.b16 %v1250
    %v1383 = vunpack.c.h.b16 %v1250
    %v1384 = vunpack.c.l.b16 %v1251
    %v1385 = vunpack.c.h.b16 %v1251
    %v1386 = vunpack.c.l.b16 %v1252
    %v1387 = vunpack.c.h.b16 %v1252
    %v1388 = vunpack.c.l.b16 %v1253
    %v1389 = vunpack.c.h.b16 %v1253
    %v1390 = vunpack.c.l.b16 %v1254
    %v1391 = vunpack.c.h.b16 %v1254
    %v1392 = vunpack.c.l.b16 %v1255
    %v1393 = vunpack.c.h.b16 %v1255
    %v1394 = vunpack.c.l.b16 %v1256
    %v1395 = vunpack.c.h.b16 %v1256
    %v1396 = vunpack.c.l.b16 %v1257
    %v1397 = vunpack.c.h.b16 %v1257
    %v1398 = vunpack.c.l.b16 %v1258
    %v1399 = vunpack.c.h.b16 %v1258
    %v1400 = vunpack.c.l.b16 %v1259
    %v1401 = vunpack.c.h.b16 %v1259
    %v1402 = vunpack.c.l.b16 %v1260
    %v1403 = vunpack.c.h.b16 %v1260
    %v1404 = vunpack.c.l.b16 %v1261
    %v1405 = vunpack.c.h.b16 %v1261
    %v1406 = vunpack.c.l.b16 %v1262
    %v1407 = vunpack.c.h.b16 %v1262
    %v1408 = vunpack.c.l.b16 %v1263
    %v1409 = vunpack.c.h.b16 %v1263
    %v1410 = vunpack.c.l.b16 %v1264
    %v1411 = vunpack.c.h.b16 %v1264
    %v1412 = vunpack.c.l.b16 %v1265
    %v1413 = vunpack.c.h.b16 %v1265
    %v1414 = vunpack.c.l.b16 %v1266
    %v1415 = vunpack.c.h.b16 %v1266
    %v1416 = vunpack.c.l.b16 %v1267
    %v1417 = vunpack.c.h.b16 %v1267
    %v1418 = vunpack.c.l.b16 %v1268
    %v1419 = vunpack.c.h.b16 %v1268
    %v1420 = vunpack.c.l.b16 %v1269
    %v1421 = vunpack.c.h.b16 %v1269
    %v1422 = vunpack.c.l.b16 %v1270
    %v1423 = vunpack.c.h.b16 %v1270
    %v1424 = vunpack.c.l.b16 %v1271
    %v1425 = vunpack.c.h.b16 %v1271
    %v1426 = vunpack.c.l.b16 %v1272
    %v1427 = vunpack.c.h.b16 %v1272
    %v1428 = vunpack.c.l.b16 %v1273
    %v1429 = vunpack.c.h.b16 %v1273
    %v1430 = vunpack.c.l.b16 %v1274
    %v1431 = vunpack.c.h.b16 %v1274
    %v1432 = vunpack.c.l.b16 %v1275
    %v1433 = vunpack.c.h.b16 %v1275
    %v1434 = vunpack.c.l.b16 %v1276
    %v1435 = vunpack.c.h.b16 %v1276
    %v1436 = vunpack.c.l.b16 %v1277
    %v1437 = vunpack.c.h.b16 %v1277
    %v1438 = vunpack.c.l.b16 %v1278
    %v1439 = vunpack.c.h.b16 %v1278
    %v1440 = vpack.c.b16 %v1346, %v1344
    %v1441 = vpack.c.b16 %v1347, %v1345
    %v1442 = vpack.c.b16 %v1350, %v1348
    %v1443 = vpack.c.b16 %v1351, %v1349
    %v1444 = vpack.c.b16 %v1354, %v1352
    %v1445 = vpack.c.b16 %v1355, %v1353
    %v1446 = vpack.c.b16 %v1358, %v1356
    %v1447 = vpack.c.b16 %v1359, %v1357
    %v1448 = vpack.c.b16 %v1362, %v1360
    %v1449 = vpack.c.b16 %v1363, %v1361
    %v1450 = vpack.c.b16 %v1366, %v1364
    %v1451 = vpack.c.b16 %v1367, %v1365
    %v1452 = vpack.c.b16 %v1370, %v1368
    %v1453 = vpack.c.b16 %v1371, %v1369
    %v1454 = vpack.c.b16 %v1374, %v1372
    %v1455 = vpack.c.b16 %v1375, %v1373
    %v1456 = vpack.c.b16 %v1378, %v1376
    %v1457 = vpack.c.b16 %v1379, %v1377
    %v1458 = vpack.c.b16 %v1382, %v1380
    %v1459 = vpack.c.b16 %v1383, %v1381
    %v1460 = vpack.c.b16 %v1386, %v1384
    %v1461 = vpack.c.b16 %v1387, %v1385
    %v1462 = vpack.c.b16 %v1390, %v1388
    %v1463 = vpack.c.b16 %v1391, %v1389
    %v1464 = vpack.c.b16 %v1394, %v1392
    %v1465 = vpack.c.b16 %v1395, %v1393
    %v1466 = vpack.c.b16 %v1398, %v1396
    %v1467 = vpack.c.b16 %v1399, %v1397
    %v1468 = vpack.c.b16 %v1402, %v1400
    %v1469 = vpack.c.b16 %v1403, %v1401
    %v1470 = vpack.c.b16 %v1406, %v1404
    %v1471 = vpack.c.b16 %v1407, %v1405
    %v1472 = vpack.c.b16 %v1410, %v1408
    %v1473 = vpack.c.b16 %v1411, %v1409
    %v1474 = vpack.c.b16 %v1414, %v1412
    %v1475 = vpack.c.b16 %v1415, %v1413
    %v1476 = vpack.c.b16 %v1418, %v1416
    %v1477 = vpack.c.b16 %v1419, %v1417
    %v1478 = vpack.c.b16 %v1422, %v1420
    %v1479 = vpack.c.b16 %v1423, %v1421
    %v1480 = vpack.c.b16 %v1426, %v1424
    %v1481 = vpack.c.b16 %v1427, %v1425
    %v1482 = vpack.c.b16 %v1430, %v1428
    %v1483 = vpack.c.b16 %v1431, %v1429
    %v1484 = vpack.c.b16 %v1434, %v1432
    %v1485 = vpack.c.b16 %v1435, %v1433
    %v1486 = vpack.c.b16 %v1438, %v1436
    %v1487 = vpack.c.b16 %v1439, %v1437
    %1536 = vmatpush.bf16.msra.mxu0 %v1454
    %1537 = vmatpush.bf16.msra.mxu0 %v1452
    %1538 = vmatpush.bf16.msra.mxu0 %v1450
    %1539 = vmatpush.bf16.msra.mxu0 %v1448
    %1540 = vmatpush.bf16.msra.mxu0 %v1446
    %1541 = vmatpush.bf16.msra.mxu0 %v1444
    %1542 = vmatpush.bf16.msra.mxu0 %v1442
    %1543 = vmatpush.bf16.msra.mxu0 %v1440
    %1544 = vmatmul.bf16.gmra.mxu0 %v1290
    %v1545 = vpop.f32.mrf.mxu0
    %v1546 = vadd.f32 %v1281, %v1545
    %v1547 = vpop.f32.mrf.mxu0
    %1548 = vdwg.mxu0
    %1549 = vmatpush.bf16.msra.mxu0 %v1470
    %1550 = vmatpush.bf16.msra.mxu0 %v1468
    %1551 = vmatpush.bf16.msra.mxu0 %v1466
    %1552 = vmatpush.bf16.msra.mxu0 %v1464
    %1553 = vmatpush.bf16.msra.mxu0 %v1462
    %1554 = vmatpush.bf16.msra.mxu0 %v1460
    %1555 = vmatpush.bf16.msra.mxu0 %v1458
    %1556 = vmatpush.bf16.msra.mxu0 %v1456
    %1557 = vmatmul.bf16.gmra.mxu0 %v1291
    %v1558 = vpop.f32.mrf.mxu0
    %v1559 = vadd.f32 %v1546, %v1558
    %v1560 = vpop.f32.mrf.mxu0
    %1561 = vdwg.mxu0
    %1562 = vmatpush.bf16.msra.mxu0 %v1486
    %1563 = vmatpush.bf16.msra.mxu0 %v1484
    %1564 = vmatpush.bf16.msra.mxu0 %v1482
    %1565 = vmatpush.bf16.msra.mxu0 %v1480
    %1566 = vmatpush.bf16.msra.mxu0 %v1478
    %1567 = vmatpush.bf16.msra.mxu0 %v1476
    %1568 = vmatpush.bf16.msra.mxu0 %v1474
    %1569 = vmatpush.bf16.msra.mxu0 %v1472
    %1570 = vmatmul.bf16.gmra.mxu0 %v1292
    %v1571 = vpop.f32.mrf.mxu0
    %v1572 = vadd.f32 %v1559, %v1571
    %v1573 = vpop.f32.mrf.mxu0
    %1574 = vdwg.mxu0
    %1575 = vmatpush.bf16.msra.mxu0 %v1455
    %1576 = vmatpush.bf16.msra.mxu0 %v1453
    %1577 = vmatpush.bf16.msra.mxu0 %v1451
    %1578 = vmatpush.bf16.msra.mxu0 %v1449
    %1579 = vmatpush.bf16.msra.mxu0 %v1447
    %1580 = vmatpush.bf16.msra.mxu0 %v1445
    %1581 = vmatpush.bf16.msra.mxu0 %v1443
    %1582 = vmatpush.bf16.msra.mxu0 %v1441
    %1583 = vmatmul.bf16.gmra.mxu0 %v1290
    %v1584 = vpop.f32.mrf.mxu0
    %v1585 = vadd.f32 %v1282, %v1584
    %v1586 = vpop.f32.mrf.mxu0
    %1587 = vdwg.mxu0
    %1588 = vmatpush.bf16.msra.mxu0 %v1471
    %1589 = vmatpush.bf16.msra.mxu0 %v1469
    %1590 = vmatpush.bf16.msra.mxu0 %v1467
    %1591 = vmatpush.bf16.msra.mxu0 %v1465
    %1592 = vmatpush.bf16.msra.mxu0 %v1463
    %1593 = vmatpush.bf16.msra.mxu0 %v1461
    %1594 = vmatpush.bf16.msra.mxu0 %v1459
    %1595 = vmatpush.bf16.msra.mxu0 %v1457
    %1596 = vmatmul.bf16.gmra.mxu0 %v1291
    %v1597 = vpop.f32.mrf.mxu0
    %v1598 = vadd.f32 %v1585, %v1597
    %v1599 = vpop.f32.mrf.mxu0
    %1600 = vdwg.mxu0
    %1601 = vmatpush.bf16.msra.mxu0 %v1487
    %1602 = vmatpush.bf16.msra.mxu0 %v1485
    %1603 = vmatpush.bf16.msra.mxu0 %v1483
    %1604 = vmatpush.bf16.msra.mxu0 %v1481
    %1605 = vmatpush.bf16.msra.mxu0 %v1479
    %1606 = vmatpush.bf16.msra.mxu0 %v1477
    %1607 = vmatpush.bf16.msra.mxu0 %v1475
    %1608 = vmatpush.bf16.msra.mxu0 %v1473
    %1609 = vmatmul.bf16.gmra.mxu0 %v1292
    %v1610 = vpop.f32.mrf.mxu0
    %v1611 = vadd.f32 %v1598, %v1610
    %v1612 = vpop.f32.mrf.mxu0
    %1613 = vdwg.mxu0
    %v1614 = vmax.f32 %v1572, 0.0
    %v1615 = vmax.f32 %v1611, 0.0
    %v1616 = vpack.c.bf16 %v1615, %v1614
    %1617 = vst [vmem:[#allocation2 + $0x28] sm:$0xff] %v1616
    %v1618 = vld [vmem:[%s0 + $0x10] sm:$0xff]
    %v1619 = vld [vmem:[%s0 + $0x18] sm:$0xf]
    %v1620 = vld [vmem:[%s3] sm:$0xff]
    %v1621 = vld [vmem:[%s3 + $0x8] sm:$0xff]
    %v1622 = vld [vmem:[%s3 + $0x10] sm:$0xff]
    %v1623 = vld [vmem:[%s3 + $0x18] sm:$0xff]
    %v1624 = vld [vmem:[%s3 + $0x20] sm:$0xff]
    %v1625 = vld [vmem:[%s3 + $0x28] sm:$0xff]
    %v1626 = vld [vmem:[%s3 + $0x30] sm:$0xff]
    %v1627 = vld [vmem:[%s3 + $0x38] sm:$0xff]
    %v1628 = vld [vmem:[%s3 + $0x40] sm:$0xff]
    %v1629 = vld [vmem:[%s3 + $0x48] sm:$0xff]
    %v1630 = vld [vmem:[%s3 + $0x50] sm:$0xff]
    %v1631 = vld [vmem:[%s3 + $0x58] sm:$0xff]
    %v1632 = vld [vmem:[%s3 + $0x60] sm:$0xff]
    %v1633 = vld [vmem:[%s3 + $0x68] sm:$0xff]
    %v1634 = vld [vmem:[%s3 + $0x70] sm:$0xff]
    %v1635 = vld [vmem:[%s3 + $0x78] sm:$0xff]
    %v1636 = vld [vmem:[%s3 + $0x80] sm:$0xff]
    %v1637 = vld [vmem:[%s3 + $0x88] sm:$0xff]
    %v1638 = vld [vmem:[%s3 + $0x90] sm:$0xff]
    %v1639 = vld [vmem:[%s3 + $0x98] sm:$0xff]
    %v1640 = vld [vmem:[%s3 + $0xa0] sm:$0xff]
    %v1641 = vld [vmem:[%s3 + $0xa8] sm:$0xff]
    %v1642 = vld [vmem:[%s3 + $0xb0] sm:$0xff]
    %v1643 = vld [vmem:[%s3 + $0xb8] sm:$0xff]
    %v1644 = vld [vmem:[%s3 + $0xc0] sm:$0xff]
    %v1645 = vld [vmem:[%s3 + $0xc8] sm:$0xff]
    %v1646 = vld [vmem:[%s3 + $0xd0] sm:$0xff]
    %v1647 = vld [vmem:[%s3 + $0xd8] sm:$0xff]
    %v1648 = vld [vmem:[%s3 + $0xe0] sm:$0xff]
    %v1649 = vld [vmem:[%s3 + $0xe8] sm:$0xff]
    %v1650 = vld [vmem:[%s3 + $0xf0] sm:$0xff]
    %v1651 = vld [vmem:[%s3 + $0xf8] sm:$0xff]
    %v1652 = vld [vmem:[%s3 + $0x100] sm:$0xff]
    %v1653 = vld [vmem:[%s3 + $0x108] sm:$0xff]
    %v1654 = vld [vmem:[%s3 + $0x110] sm:$0xff]
    %v1655 = vld [vmem:[%s3 + $0x118] sm:$0xff]
    %v1656 = vld [vmem:[%s3 + $0x120] sm:$0xff]
    %v1657 = vld [vmem:[%s3 + $0x128] sm:$0xff]
    %v1658 = vld [vmem:[%s3 + $0x130] sm:$0xff]
    %v1659 = vld [vmem:[%s3 + $0x138] sm:$0xff]
    %v1660 = vld [vmem:[%s3 + $0x140] sm:$0xff]
    %v1661 = vld [vmem:[%s3 + $0x148] sm:$0xff]
    %v1662 = vld [vmem:[%s3 + $0x150] sm:$0xff]
    %v1663 = vld [vmem:[%s3 + $0x158] sm:$0xff]
    %v1664 = vld [vmem:[%s3 + $0x160] sm:$0xff]
    %v1665 = vld [vmem:[%s3 + $0x168] sm:$0xff]
    %v1666 = vld [vmem:[%s3 + $0x170] sm:$0xff]
    %v1667 = vld [vmem:[%s3 + $0x178] sm:$0xff]
    %v1668 = vld [vmem:[%s4] sm:$0x3]
    %v1670 = vperm.slane %v1668, 0
    %v1671 = vperm.slane %v1668, 1
    %v1676 = vunpack.c.l.b16 %v1618
    %v1677 = vunpack.c.h.b16 %v1618
    %v1678 = vunpack.c.l.b16 %v1619
    %v1679 = vpack.c.b16 %v1676, %v1676
    %v1680 = vpack.c.b16 %v1677, %v1677
    %v1681 = vpack.c.b16 %v1678, %v1678
    %v1733 = vunpack.c.l.b16 %v1620
    %v1734 = vunpack.c.h.b16 %v1620
    %v1735 = vunpack.c.l.b16 %v1621
    %v1736 = vunpack.c.h.b16 %v1621
    %v1737 = vunpack.c.l.b16 %v1622
    %v1738 = vunpack.c.h.b16 %v1622
    %v1739 = vunpack.c.l.b16 %v1623
    %v1740 = vunpack.c.h.b16 %v1623
    %v1741 = vunpack.c.l.b16 %v1624
    %v1742 = vunpack.c.h.b16 %v1624
    %v1743 = vunpack.c.l.b16 %v1625
    %v1744 = vunpack.c.h.b16 %v1625
    %v1745 = vunpack.c.l.b16 %v1626
    %v1746 = vunpack.c.h.b16 %v1626
    %v1747 = vunpack.c.l.b16 %v1627
    %v1748 = vunpack.c.h.b16 %v1627
    %v1749 = vunpack.c.l.b16 %v1628
    %v1750 = vunpack.c.h.b16 %v1628
    %v1751 = vunpack.c.l.b16 %v1629
    %v1752 = vunpack.c.h.b16 %v1629
    %v1753 = vunpack.c.l.b16 %v1630
    %v1754 = vunpack.c.h.b16 %v1630
    %v1755 = vunpack.c.l.b16 %v1631
    %v1756 = vunpack.c.h.b16 %v1631
    %v1757 = vunpack.c.l.b16 %v1632
    %v1758 = vunpack.c.h.b16 %v1632
    %v1759 = vunpack.c.l.b16 %v1633
    %v1760 = vunpack.c.h.b16 %v1633
    %v1761 = vunpack.c.l.b16 %v1634
    %v1762 = vunpack.c.h.b16 %v1634
    %v1763 = vunpack.c.l.b16 %v1635
    %v1764 = vunpack.c.h.b16 %v1635
    %v1765 = vunpack.c.l.b16 %v1636
    %v1766 = vunpack.c.h.b16 %v1636
    %v1767 = vunpack.c.l.b16 %v1637
    %v1768 = vunpack.c.h.b16 %v1637
    %v1769 = vunpack.c.l.b16 %v1638
    %v1770 = vunpack.c.h.b16 %v1638
    %v1771 = vunpack.c.l.b16 %v1639
    %v1772 = vunpack.c.h.b16 %v1639
    %v1773 = vunpack.c.l.b16 %v1640
    %v1774 = vunpack.c.h.b16 %v1640
    %v1775 = vunpack.c.l.b16 %v1641
    %v1776 = vunpack.c.h.b16 %v1641
    %v1777 = vunpack.c.l.b16 %v1642
    %v1778 = vunpack.c.h.b16 %v1642
    %v1779 = vunpack.c.l.b16 %v1643
    %v1780 = vunpack.c.h.b16 %v1643
    %v1781 = vunpack.c.l.b16 %v1644
    %v1782 = vunpack.c.h.b16 %v1644
    %v1783 = vunpack.c.l.b16 %v1645
    %v1784 = vunpack.c.h.b16 %v1645
    %v1785 = vunpack.c.l.b16 %v1646
    %v1786 = vunpack.c.h.b16 %v1646
    %v1787 = vunpack.c.l.b16 %v1647
    %v1788 = vunpack.c.h.b16 %v1647
    %v1789 = vunpack.c.l.b16 %v1648
    %v1790 = vunpack.c.h.b16 %v1648
    %v1791 = vunpack.c.l.b16 %v1649
    %v1792 = vunpack.c.h.b16 %v1649
    %v1793 = vunpack.c.l.b16 %v1650
    %v1794 = vunpack.c.h.b16 %v1650
    %v1795 = vunpack.c.l.b16 %v1651
    %v1796 = vunpack.c.h.b16 %v1651
    %v1797 = vunpack.c.l.b16 %v1652
    %v1798 = vunpack.c.h.b16 %v1652
    %v1799 = vunpack.c.l.b16 %v1653
    %v1800 = vunpack.c.h.b16 %v1653
    %v1801 = vunpack.c.l.b16 %v1654
    %v1802 = vunpack.c.h.b16 %v1654
    %v1803 = vunpack.c.l.b16 %v1655
    %v1804 = vunpack.c.h.b16 %v1655
    %v1805 = vunpack.c.l.b16 %v1656
    %v1806 = vunpack.c.h.b16 %v1656
    %v1807 = vunpack.c.l.b16 %v1657
    %v1808 = vunpack.c.h.b16 %v1657
    %v1809 = vunpack.c.l.b16 %v1658
    %v1810 = vunpack.c.h.b16 %v1658
    %v1811 = vunpack.c.l.b16 %v1659
    %v1812 = vunpack.c.h.b16 %v1659
    %v1813 = vunpack.c.l.b16 %v1660
    %v1814 = vunpack.c.h.b16 %v1660
    %v1815 = vunpack.c.l.b16 %v1661
    %v1816 = vunpack.c.h.b16 %v1661
    %v1817 = vunpack.c.l.b16 %v1662
    %v1818 = vunpack.c.h.b16 %v1662
    %v1819 = vunpack.c.l.b16 %v1663
    %v1820 = vunpack.c.h.b16 %v1663
    %v1821 = vunpack.c.l.b16 %v1664
    %v1822 = vunpack.c.h.b16 %v1664
    %v1823 = vunpack.c.l.b16 %v1665
    %v1824 = vunpack.c.h.b16 %v1665
    %v1825 = vunpack.c.l.b16 %v1666
    %v1826 = vunpack.c.h.b16 %v1666
    %v1827 = vunpack.c.l.b16 %v1667
    %v1828 = vunpack.c.h.b16 %v1667
    %v1829 = vpack.c.b16 %v1735, %v1733
    %v1830 = vpack.c.b16 %v1736, %v1734
    %v1831 = vpack.c.b16 %v1739, %v1737
    %v1832 = vpack.c.b16 %v1740, %v1738
    %v1833 = vpack.c.b16 %v1743, %v1741
    %v1834 = vpack.c.b16 %v1744, %v1742
    %v1835 = vpack.c.b16 %v1747, %v1745
    %v1836 = vpack.c.b16 %v1748, %v1746
    %v1837 = vpack.c.b16 %v1751, %v1749
    %v1838 = vpack.c.b16 %v1752, %v1750
    %v1839 = vpack.c.b16 %v1755, %v1753
    %v1840 = vpack.c.b16 %v1756, %v1754
    %v1841 = vpack.c.b16 %v1759, %v1757
    %v1842 = vpack.c.b16 %v1760, %v1758
    %v1843 = vpack.c.b16 %v1763, %v1761
    %v1844 = vpack.c.b16 %v1764, %v1762
    %v1845 = vpack.c.b16 %v1767, %v1765
    %v1846 = vpack.c.b16 %v1768, %v1766
    %v1847 = vpack.c.b16 %v1771, %v1769
    %v1848 = vpack.c.b16 %v1772, %v1770
    %v1849 = vpack.c.b16 %v1775, %v1773
    %v1850 = vpack.c.b16 %v1776, %v1774
    %v1851 = vpack.c.b16 %v1779, %v1777
    %v1852 = vpack.c.b16 %v1780, %v1778
    %v1853 = vpack.c.b16 %v1783, %v1781
    %v1854 = vpack.c.b16 %v1784, %v1782
    %v1855 = vpack.c.b16 %v1787, %v1785
    %v1856 = vpack.c.b16 %v1788, %v1786
    %v1857 = vpack.c.b16 %v1791, %v1789
    %v1858 = vpack.c.b16 %v1792, %v1790
    %v1859 = vpack.c.b16 %v1795, %v1793
    %v1860 = vpack.c.b16 %v1796, %v1794
    %v1861 = vpack.c.b16 %v1799, %v1797
    %v1862 = vpack.c.b16 %v1800, %v1798
    %v1863 = vpack.c.b16 %v1803, %v1801
    %v1864 = vpack.c.b16 %v1804, %v1802
    %v1865 = vpack.c.b16 %v1807, %v1805
    %v1866 = vpack.c.b16 %v1808, %v1806
    %v1867 = vpack.c.b16 %v1811, %v1809
    %v1868 = vpack.c.b16 %v1812, %v1810
    %v1869 = vpack.c.b16 %v1815, %v1813
    %v1870 = vpack.c.b16 %v1816, %v1814
    %v1871 = vpack.c.b16 %v1819, %v1817
    %v1872 = vpack.c.b16 %v1820, %v1818
    %v1873 = vpack.c.b16 %v1823, %v1821
    %v1874 = vpack.c.b16 %v1824, %v1822
    %v1875 = vpack.c.b16 %v1827, %v1825
    %v1876 = vpack.c.b16 %v1828, %v1826
    %1925 = vmatpush.bf16.msra.mxu0 %v1843
    %1926 = vmatpush.bf16.msra.mxu0 %v1841
    %1927 = vmatpush.bf16.msra.mxu0 %v1839
    %1928 = vmatpush.bf16.msra.mxu0 %v1837
    %1929 = vmatpush.bf16.msra.mxu0 %v1835
    %1930 = vmatpush.bf16.msra.mxu0 %v1833
    %1931 = vmatpush.bf16.msra.mxu0 %v1831
    %1932 = vmatpush.bf16.msra.mxu0 %v1829
    %1933 = vmatmul.bf16.gmra.mxu0 %v1679
    %v1934 = vpop.f32.mrf.mxu0
    %v1935 = vadd.f32 %v1670, %v1934
    %v1936 = vpop.f32.mrf.mxu0
    %1937 = vdwg.mxu0
    %1938 = vmatpush.bf16.msra.mxu0 %v1859
    %1939 = vmatpush.bf16.msra.mxu0 %v1857
    %1940 = vmatpush.bf16.msra.mxu0 %v1855
    %1941 = vmatpush.bf16.msra.mxu0 %v1853
    %1942 = vmatpush.bf16.msra.mxu0 %v1851
    %1943 = vmatpush.bf16.msra.mxu0 %v1849
    %1944 = vmatpush.bf16.msra.mxu0 %v1847
    %1945 = vmatpush.bf16.msra.mxu0 %v1845
    %1946 = vmatmul.bf16.gmra.mxu0 %v1680
    %v1947 = vpop.f32.mrf.mxu0
    %v1948 = vadd.f32 %v1935, %v1947
    %v1949 = vpop.f32.mrf.mxu0
    %1950 = vdwg.mxu0
    %1951 = vmatpush.bf16.msra.mxu0 %v1875
    %1952 = vmatpush.bf16.msra.mxu0 %v1873
    %1953 = vmatpush.bf16.msra.mxu0 %v1871
    %1954 = vmatpush.bf16.msra.mxu0 %v1869
    %1955 = vmatpush.bf16.msra.mxu0 %v1867
    %1956 = vmatpush.bf16.msra.mxu0 %v1865
    %1957 = vmatpush.bf16.msra.mxu0 %v1863
    %1958 = vmatpush.bf16.msra.mxu0 %v1861
    %1959 = vmatmul.bf16.gmra.mxu0 %v1681
    %v1960 = vpop.f32.mrf.mxu0
    %v1961 = vadd.f32 %v1948, %v1960
    %v1962 = vpop.f32.mrf.mxu0
    %1963 = vdwg.mxu0
    %1964 = vmatpush.bf16.msra.mxu0 %v1844
    %1965 = vmatpush.bf16.msra.mxu0 %v1842
    %1966 = vmatpush.bf16.msra.mxu0 %v1840
    %1967 = vmatpush.bf16.msra.mxu0 %v1838
    %1968 = vmatpush.bf16.msra.mxu0 %v1836
    %1969 = vmatpush.bf16.msra.mxu0 %v1834
    %1970 = vmatpush.bf16.msra.mxu0 %v1832
    %1971 = vmatpush.bf16.msra.mxu0 %v1830
    %1972 = vmatmul.bf16.gmra.mxu0 %v1679
    %v1973 = vpop.f32.mrf.mxu0
    %v1974 = vadd.f32 %v1671, %v1973
    %v1975 = vpop.f32.mrf.mxu0
    %1976 = vdwg.mxu0
    %1977 = vmatpush.bf16.msra.mxu0 %v1860
    %1978 = vmatpush.bf16.msra.mxu0 %v1858
    %1979 = vmatpush.bf16.msra.mxu0 %v1856
    %1980 = vmatpush.bf16.msra.mxu0 %v1854
    %1981 = vmatpush.bf16.msra.mxu0 %v1852
    %1982 = vmatpush.bf16.msra.mxu0 %v1850
    %1983 = vmatpush.bf16.msra.mxu0 %v1848
    %1984 = vmatpush.bf16.msra.mxu0 %v1846
    %1985 = vmatmul.bf16.gmra.mxu0 %v1680
    %v1986 = vpop.f32.mrf.mxu0
    %v1987 = vadd.f32 %v1974, %v1986
    %v1988 = vpop.f32.mrf.mxu0
    %1989 = vdwg.mxu0
    %1990 = vmatpush.bf16.msra.mxu0 %v1876
    %1991 = vmatpush.bf16.msra.mxu0 %v1874
    %1992 = vmatpush.bf16.msra.mxu0 %v1872
    %1993 = vmatpush.bf16.msra.mxu0 %v1870
    %1994 = vmatpush.bf16.msra.mxu0 %v1868
    %1995 = vmatpush.bf16.msra.mxu0 %v1866
    %1996 = vmatpush.bf16.msra.mxu0 %v1864
    %1997 = vmatpush.bf16.msra.mxu0 %v1862
    %1998 = vmatmul.bf16.gmra.mxu0 %v1681
    %v1999 = vpop.f32.mrf.mxu0
    %v2000 = vadd.f32 %v1987, %v1999
    %v2001 = vpop.f32.mrf.mxu0
    %2002 = vdwg.mxu0
    %v2003 = vmax.f32 %v1961, 0.0
    %v2004 = vmax.f32 %v2000, 0.0
    %v2005 = vpack.c.bf16 %v2004, %v2003
    %2006 = vst [vmem:[#allocation2 + $0x30] sm:$0xff] %v2005
    %v2007 = vld [vmem:[%s0 + $0x14] sm:$0xff]
    %v2008 = vld [vmem:[%s0 + $0x1c] sm:$0xf]
    %v2009 = vld [vmem:[%s3] sm:$0xff]
    %v2010 = vld [vmem:[%s3 + $0x8] sm:$0xff]
    %v2011 = vld [vmem:[%s3 + $0x10] sm:$0xff]
    %v2012 = vld [vmem:[%s3 + $0x18] sm:$0xff]
    %v2013 = vld [vmem:[%s3 + $0x20] sm:$0xff]
    %v2014 = vld [vmem:[%s3 + $0x28] sm:$0xff]
    %v2015 = vld [vmem:[%s3 + $0x30] sm:$0xff]
    %v2016 = vld [vmem:[%s3 + $0x38] sm:$0xff]
    %v2017 = vld [vmem:[%s3 + $0x40] sm:$0xff]
    %v2018 = vld [vmem:[%s3 + $0x48] sm:$0xff]
    %v2019 = vld [vmem:[%s3 + $0x50] sm:$0xff]
    %v2020 = vld [vmem:[%s3 + $0x58] sm:$0xff]
    %v2021 = vld [vmem:[%s3 + $0x60] sm:$0xff]
    %v2022 = vld [vmem:[%s3 + $0x68] sm:$0xff]
    %v2023 = vld [vmem:[%s3 + $0x70] sm:$0xff]
    %v2024 = vld [vmem:[%s3 + $0x78] sm:$0xff]
    %v2025 = vld [vmem:[%s3 + $0x80] sm:$0xff]
    %v2026 = vld [vmem:[%s3 + $0x88] sm:$0xff]
    %v2027 = vld [vmem:[%s3 + $0x90] sm:$0xff]
    %v2028 = vld [vmem:[%s3 + $0x98] sm:$0xff]
    %v2029 = vld [vmem:[%s3 + $0xa0] sm:$0xff]
    %v2030 = vld [vmem:[%s3 + $0xa8] sm:$0xff]
    %v2031 = vld [vmem:[%s3 + $0xb0] sm:$0xff]
    %v2032 = vld [vmem:[%s3 + $0xb8] sm:$0xff]
    %v2033 = vld [vmem:[%s3 + $0xc0] sm:$0xff]
    %v2034 = vld [vmem:[%s3 + $0xc8] sm:$0xff]
    %v2035 = vld [vmem:[%s3 + $0xd0] sm:$0xff]
    %v2036 = vld [vmem:[%s3 + $0xd8] sm:$0xff]
    %v2037 = vld [vmem:[%s3 + $0xe0] sm:$0xff]
    %v2038 = vld [vmem:[%s3 + $0xe8] sm:$0xff]
    %v2039 = vld [vmem:[%s3 + $0xf0] sm:$0xff]
    %v2040 = vld [vmem:[%s3 + $0xf8] sm:$0xff]
    %v2041 = vld [vmem:[%s3 + $0x100] sm:$0xff]
    %v2042 = vld [vmem:[%s3 + $0x108] sm:$0xff]
    %v2043 = vld [vmem:[%s3 + $0x110] sm:$0xff]
    %v2044 = vld [vmem:[%s3 + $0x118] sm:$0xff]
    %v2045 = vld [vmem:[%s3 + $0x120] sm:$0xff]
    %v2046 = vld [vmem:[%s3 + $0x128] sm:$0xff]
    %v2047 = vld [vmem:[%s3 + $0x130] sm:$0xff]
    %v2048 = vld [vmem:[%s3 + $0x138] sm:$0xff]
    %v2049 = vld [vmem:[%s3 + $0x140] sm:$0xff]
    %v2050 = vld [vmem:[%s3 + $0x148] sm:$0xff]
    %v2051 = vld [vmem:[%s3 + $0x150] sm:$0xff]
    %v2052 = vld [vmem:[%s3 + $0x158] sm:$0xff]
    %v2053 = vld [vmem:[%s3 + $0x160] sm:$0xff]
    %v2054 = vld [vmem:[%s3 + $0x168] sm:$0xff]
    %v2055 = vld [vmem:[%s3 + $0x170] sm:$0xff]
    %v2056 = vld [vmem:[%s3 + $0x178] sm:$0xff]
    %v2057 = vld [vmem:[%s4] sm:$0x3]
    %v2059 = vperm.slane %v2057, 0
    %v2060 = vperm.slane %v2057, 1
    %v2065 = vunpack.c.l.b16 %v2007
    %v2066 = vunpack.c.h.b16 %v2007
    %v2067 = vunpack.c.l.b16 %v2008
    %v2068 = vpack.c.b16 %v2065, %v2065
    %v2069 = vpack.c.b16 %v2066, %v2066
    %v2070 = vpack.c.b16 %v2067, %v2067
    %v2122 = vunpack.c.l.b16 %v2009
    %v2123 = vunpack.c.h.b16 %v2009
    %v2124 = vunpack.c.l.b16 %v2010
    %v2125 = vunpack.c.h.b16 %v2010
    %v2126 = vunpack.c.l.b16 %v2011
    %v2127 = vunpack.c.h.b16 %v2011
    %v2128 = vunpack.c.l.b16 %v2012
    %v2129 = vunpack.c.h.b16 %v2012
    %v2130 = vunpack.c.l.b16 %v2013
    %v2131 = vunpack.c.h.b16 %v2013
    %v2132 = vunpack.c.l.b16 %v2014
    %v2133 = vunpack.c.h.b16 %v2014
    %v2134 = vunpack.c.l.b16 %v2015
    %v2135 = vunpack.c.h.b16 %v2015
    %v2136 = vunpack.c.l.b16 %v2016
    %v2137 = vunpack.c.h.b16 %v2016
    %v2138 = vunpack.c.l.b16 %v2017
    %v2139 = vunpack.c.h.b16 %v2017
    %v2140 = vunpack.c.l.b16 %v2018
    %v2141 = vunpack.c.h.b16 %v2018
    %v2142 = vunpack.c.l.b16 %v2019
    %v2143 = vunpack.c.h.b16 %v2019
    %v2144 = vunpack.c.l.b16 %v2020
    %v2145 = vunpack.c.h.b16 %v2020
    %v2146 = vunpack.c.l.b16 %v2021
    %v2147 = vunpack.c.h.b16 %v2021
    %v2148 = vunpack.c.l.b16 %v2022
    %v2149 = vunpack.c.h.b16 %v2022
    %v2150 = vunpack.c.l.b16 %v2023
    %v2151 = vunpack.c.h.b16 %v2023
    %v2152 = vunpack.c.l.b16 %v2024
    %v2153 = vunpack.c.h.b16 %v2024
    %v2154 = vunpack.c.l.b16 %v2025
    %v2155 = vunpack.c.h.b16 %v2025
    %v2156 = vunpack.c.l.b16 %v2026
    %v2157 = vunpack.c.h.b16 %v2026
    %v2158 = vunpack.c.l.b16 %v2027
    %v2159 = vunpack.c.h.b16 %v2027
    %v2160 = vunpack.c.l.b16 %v2028
    %v2161 = vunpack.c.h.b16 %v2028
    %v2162 = vunpack.c.l.b16 %v2029
    %v2163 = vunpack.c.h.b16 %v2029
    %v2164 = vunpack.c.l.b16 %v2030
    %v2165 = vunpack.c.h.b16 %v2030
    %v2166 = vunpack.c.l.b16 %v2031
    %v2167 = vunpack.c.h.b16 %v2031
    %v2168 = vunpack.c.l.b16 %v2032
    %v2169 = vunpack.c.h.b16 %v2032
    %v2170 = vunpack.c.l.b16 %v2033
    %v2171 = vunpack.c.h.b16 %v2033
    %v2172 = vunpack.c.l.b16 %v2034
    %v2173 = vunpack.c.h.b16 %v2034
    %v2174 = vunpack.c.l.b16 %v2035
    %v2175 = vunpack.c.h.b16 %v2035
    %v2176 = vunpack.c.l.b16 %v2036
    %v2177 = vunpack.c.h.b16 %v2036
    %v2178 = vunpack.c.l.b16 %v2037
    %v2179 = vunpack.c.h.b16 %v2037
    %v2180 = vunpack.c.l.b16 %v2038
    %v2181 = vunpack.c.h.b16 %v2038
    %v2182 = vunpack.c.l.b16 %v2039
    %v2183 = vunpack.c.h.b16 %v2039
    %v2184 = vunpack.c.l.b16 %v2040
    %v2185 = vunpack.c.h.b16 %v2040
    %v2186 = vunpack.c.l.b16 %v2041
    %v2187 = vunpack.c.h.b16 %v2041
    %v2188 = vunpack.c.l.b16 %v2042
    %v2189 = vunpack.c.h.b16 %v2042
    %v2190 = vunpack.c.l.b16 %v2043
    %v2191 = vunpack.c.h.b16 %v2043
    %v2192 = vunpack.c.l.b16 %v2044
    %v2193 = vunpack.c.h.b16 %v2044
    %v2194 = vunpack.c.l.b16 %v2045
    %v2195 = vunpack.c.h.b16 %v2045
    %v2196 = vunpack.c.l.b16 %v2046
    %v2197 = vunpack.c.h.b16 %v2046
    %v2198 = vunpack.c.l.b16 %v2047
    %v2199 = vunpack.c.h.b16 %v2047
    %v2200 = vunpack.c.l.b16 %v2048
    %v2201 = vunpack.c.h.b16 %v2048
    %v2202 = vunpack.c.l.b16 %v2049
    %v2203 = vunpack.c.h.b16 %v2049
    %v2204 = vunpack.c.l.b16 %v2050
    %v2205 = vunpack.c.h.b16 %v2050
    %v2206 = vunpack.c.l.b16 %v2051
    %v2207 = vunpack.c.h.b16 %v2051
    %v2208 = vunpack.c.l.b16 %v2052
    %v2209 = vunpack.c.h.b16 %v2052
    %v2210 = vunpack.c.l.b16 %v2053
    %v2211 = vunpack.c.h.b16 %v2053
    %v2212 = vunpack.c.l.b16 %v2054
    %v2213 = vunpack.c.h.b16 %v2054
    %v2214 = vunpack.c.l.b16 %v2055
    %v2215 = vunpack.c.h.b16 %v2055
    %v2216 = vunpack.c.l.b16 %v2056
    %v2217 = vunpack.c.h.b16 %v2056
    %v2218 = vpack.c.b16 %v2124, %v2122
    %v2219 = vpack.c.b16 %v2125, %v2123
    %v2220 = vpack.c.b16 %v2128, %v2126
    %v2221 = vpack.c.b16 %v2129, %v2127
    %v2222 = vpack.c.b16 %v2132, %v2130
    %v2223 = vpack.c.b16 %v2133, %v2131
    %v2224 = vpack.c.b16 %v2136, %v2134
    %v2225 = vpack.c.b16 %v2137, %v2135
    %v2226 = vpack.c.b16 %v2140, %v2138
    %v2227 = vpack.c.b16 %v2141, %v2139
    %v2228 = vpack.c.b16 %v2144, %v2142
    %v2229 = vpack.c.b16 %v2145, %v2143
    %v2230 = vpack.c.b16 %v2148, %v2146
    %v2231 = vpack.c.b16 %v2149, %v2147
    %v2232 = vpack.c.b16 %v2152, %v2150
    %v2233 = vpack.c.b16 %v2153, %v2151
    %v2234 = vpack.c.b16 %v2156, %v2154
    %v2235 = vpack.c.b16 %v2157, %v2155
    %v2236 = vpack.c.b16 %v2160, %v2158
    %v2237 = vpack.c.b16 %v2161, %v2159
    %v2238 = vpack.c.b16 %v2164, %v2162
    %v2239 = vpack.c.b16 %v2165, %v2163
    %v2240 = vpack.c.b16 %v2168, %v2166
    %v2241 = vpack.c.b16 %v2169, %v2167
    %v2242 = vpack.c.b16 %v2172, %v2170
    %v2243 = vpack.c.b16 %v2173, %v2171
    %v2244 = vpack.c.b16 %v2176, %v2174
    %v2245 = vpack.c.b16 %v2177, %v2175
    %v2246 = vpack.c.b16 %v2180, %v2178
    %v2247 = vpack.c.b16 %v2181, %v2179
    %v2248 = vpack.c.b16 %v2184, %v2182
    %v2249 = vpack.c.b16 %v2185, %v2183
    %v2250 = vpack.c.b16 %v2188, %v2186
    %v2251 = vpack.c.b16 %v2189, %v2187
    %v2252 = vpack.c.b16 %v2192, %v2190
    %v2253 = vpack.c.b16 %v2193, %v2191
    %v2254 = vpack.c.b16 %v2196, %v2194
    %v2255 = vpack.c.b16 %v2197, %v2195
    %v2256 = vpack.c.b16 %v2200, %v2198
    %v2257 = vpack.c.b16 %v2201, %v2199
    %v2258 = vpack.c.b16 %v2204, %v2202
    %v2259 = vpack.c.b16 %v2205, %v2203
    %v2260 = vpack.c.b16 %v2208, %v2206
    %v2261 = vpack.c.b16 %v2209, %v2207
    %v2262 = vpack.c.b16 %v2212, %v2210
    %v2263 = vpack.c.b16 %v2213, %v2211
    %v2264 = vpack.c.b16 %v2216, %v2214
    %v2265 = vpack.c.b16 %v2217, %v2215
    %2314 = vmatpush.bf16.msra.mxu0 %v2232
    %2315 = vmatpush.bf16.msra.mxu0 %v2230
    %2316 = vmatpush.bf16.msra.mxu0 %v2228
    %2317 = vmatpush.bf16.msra.mxu0 %v2226
    %2318 = vmatpush.bf16.msra.mxu0 %v2224
    %2319 = vmatpush.bf16.msra.mxu0 %v2222
    %2320 = vmatpush.bf16.msra.mxu0 %v2220
    %2321 = vmatpush.bf16.msra.mxu0 %v2218
    %2322 = vmatmul.bf16.gmra.mxu0 %v2068
    %v2323 = vpop.f32.mrf.mxu0
    %v2324 = vadd.f32 %v2059, %v2323
    %v2325 = vpop.f32.mrf.mxu0
    %2326 = vdwg.mxu0
    %2327 = vmatpush.bf16.msra.mxu0 %v2248
    %2328 = vmatpush.bf16.msra.mxu0 %v2246
    %2329 = vmatpush.bf16.msra.mxu0 %v2244
    %2330 = vmatpush.bf16.msra.mxu0 %v2242
    %2331 = vmatpush.bf16.msra.mxu0 %v2240
    %2332 = vmatpush.bf16.msra.mxu0 %v2238
    %2333 = vmatpush.bf16.msra.mxu0 %v2236
    %2334 = vmatpush.bf16.msra.mxu0 %v2234
    %2335 = vmatmul.bf16.gmra.mxu0 %v2069
    %v2336 = vpop.f32.mrf.mxu0
    %v2337 = vadd.f32 %v2324, %v2336
    %v2338 = vpop.f32.mrf.mxu0
    %2339 = vdwg.mxu0
    %2340 = vmatpush.bf16.msra.mxu0 %v2264
    %2341 = vmatpush.bf16.msra.mxu0 %v2262
    %2342 = vmatpush.bf16.msra.mxu0 %v2260
    %2343 = vmatpush.bf16.msra.mxu0 %v2258
    %2344 = vmatpush.bf16.msra.mxu0 %v2256
    %2345 = vmatpush.bf16.msra.mxu0 %v2254
    %2346 = vmatpush.bf16.msra.mxu0 %v2252
    %2347 = vmatpush.bf16.msra.mxu0 %v2250
    %2348 = vmatmul.bf16.gmra.mxu0 %v2070
    %v2349 = vpop.f32.mrf.mxu0
    %v2350 = vadd.f32 %v2337, %v2349
    %v2351 = vpop.f32.mrf.mxu0
    %2352 = vdwg.mxu0
    %2353 = vmatpush.bf16.msra.mxu0 %v2233
    %2354 = vmatpush.bf16.msra.mxu0 %v2231
    %2355 = vmatpush.bf16.msra.mxu0 %v2229
    %2356 = vmatpush.bf16.msra.mxu0 %v2227
    %2357 = vmatpush.bf16.msra.mxu0 %v2225
    %2358 = vmatpush.bf16.msra.mxu0 %v2223
    %2359 = vmatpush.bf16.msra.mxu0 %v2221
    %2360 = vmatpush.bf16.msra.mxu0 %v2219
    %2361 = vmatmul.bf16.gmra.mxu0 %v2068
    %v2362 = vpop.f32.mrf.mxu0
    %v2363 = vadd.f32 %v2060, %v2362
    %v2364 = vpop.f32.mrf.mxu0
    %2365 = vdwg.mxu0
    %2366 = vmatpush.bf16.msra.mxu0 %v2249
    %2367 = vmatpush.bf16.msra.mxu0 %v2247
    %2368 = vmatpush.bf16.msra.mxu0 %v2245
    %2369 = vmatpush.bf16.msra.mxu0 %v2243
    %2370 = vmatpush.bf16.msra.mxu0 %v2241
    %2371 = vmatpush.bf16.msra.mxu0 %v2239
    %2372 = vmatpush.bf16.msra.mxu0 %v2237
    %2373 = vmatpush.bf16.msra.mxu0 %v2235
    %2374 = vmatmul.bf16.gmra.mxu0 %v2069
    %v2375 = vpop.f32.mrf.mxu0
    %v2376 = vadd.f32 %v2363, %v2375
    %v2377 = vpop.f32.mrf.mxu0
    %2378 = vdwg.mxu0
    %2379 = vmatpush.bf16.msra.mxu0 %v2265
    %2380 = vmatpush.bf16.msra.mxu0 %v2263
    %2381 = vmatpush.bf16.msra.mxu0 %v2261
    %2382 = vmatpush.bf16.msra.mxu0 %v2259
    %2383 = vmatpush.bf16.msra.mxu0 %v2257
    %2384 = vmatpush.bf16.msra.mxu0 %v2255
    %2385 = vmatpush.bf16.msra.mxu0 %v2253
    %2386 = vmatpush.bf16.msra.mxu0 %v2251
    %2387 = vmatmul.bf16.gmra.mxu0 %v2070
    %v2388 = vpop.f32.mrf.mxu0
    %v2389 = vadd.f32 %v2376, %v2388
    %v2390 = vpop.f32.mrf.mxu0
    %2391 = vdwg.mxu0
    %v2392 = vmax.f32 %v2350, 0.0
    %v2393 = vmax.f32 %v2389, 0.0
    %v2394 = vpack.c.bf16 %v2393, %v2392
    %2395 = vst [vmem:[#allocation2 + $0x38] sm:$0xff] %v2394
    %v2396 = vld [vmem:[%s0 + $0x18] sm:$0xff]
    %v2397 = vld [vmem:[%s0 + $0x20] sm:$0xf]
    %v2398 = vld [vmem:[%s3] sm:$0xff]
    %v2399 = vld [vmem:[%s3 + $0x8] sm:$0xff]
    %v2400 = vld [vmem:[%s3 + $0x10] sm:$0xff]
    %v2401 = vld [vmem:[%s3 + $0x18] sm:$0xff]
    %v2402 = vld [vmem:[%s3 + $0x20] sm:$0xff]
    %v2403 = vld [vmem:[%s3 + $0x28] sm:$0xff]
    %v2404 = vld [vmem:[%s3 + $0x30] sm:$0xff]
    %v2405 = vld [vmem:[%s3 + $0x38] sm:$0xff]
    %v2406 = vld [vmem:[%s3 + $0x40] sm:$0xff]
    %v2407 = vld [vmem:[%s3 + $0x48] sm:$0xff]
    %v2408 = vld [vmem:[%s3 + $0x50] sm:$0xff]
    %v2409 = vld [vmem:[%s3 + $0x58] sm:$0xff]
    %v2410 = vld [vmem:[%s3 + $0x60] sm:$0xff]
    %v2411 = vld [vmem:[%s3 + $0x68] sm:$0xff]
    %v2412 = vld [vmem:[%s3 + $0x70] sm:$0xff]
    %v2413 = vld [vmem:[%s3 + $0x78] sm:$0xff]
    %v2414 = vld [vmem:[%s3 + $0x80] sm:$0xff]
    %v2415 = vld [vmem:[%s3 + $0x88] sm:$0xff]
    %v2416 = vld [vmem:[%s3 + $0x90] sm:$0xff]
    %v2417 = vld [vmem:[%s3 + $0x98] sm:$0xff]
    %v2418 = vld [vmem:[%s3 + $0xa0] sm:$0xff]
    %v2419 = vld [vmem:[%s3 + $0xa8] sm:$0xff]
    %v2420 = vld [vmem:[%s3 + $0xb0] sm:$0xff]
    %v2421 = vld [vmem:[%s3 + $0xb8] sm:$0xff]
    %v2422 = vld [vmem:[%s3 + $0xc0] sm:$0xff]
    %v2423 = vld [vmem:[%s3 + $0xc8] sm:$0xff]
    %v2424 = vld [vmem:[%s3 + $0xd0] sm:$0xff]
    %v2425 = vld [vmem:[%s3 + $0xd8] sm:$0xff]
    %v2426 = vld [vmem:[%s3 + $0xe0] sm:$0xff]
    %v2427 = vld [vmem:[%s3 + $0xe8] sm:$0xff]
    %v2428 = vld [vmem:[%s3 + $0xf0] sm:$0xff]
    %v2429 = vld [vmem:[%s3 + $0xf8] sm:$0xff]
    %v2430 = vld [vmem:[%s3 + $0x100] sm:$0xff]
    %v2431 = vld [vmem:[%s3 + $0x108] sm:$0xff]
    %v2432 = vld [vmem:[%s3 + $0x110] sm:$0xff]
    %v2433 = vld [vmem:[%s3 + $0x118] sm:$0xff]
    %v2434 = vld [vmem:[%s3 + $0x120] sm:$0xff]
    %v2435 = vld [vmem:[%s3 + $0x128] sm:$0xff]
    %v2436 = vld [vmem:[%s3 + $0x130] sm:$0xff]
    %v2437 = vld [vmem:[%s3 + $0x138] sm:$0xff]
    %v2438 = vld [vmem:[%s3 + $0x140] sm:$0xff]
    %v2439 = vld [vmem:[%s3 + $0x148] sm:$0xff]
    %v2440 = vld [vmem:[%s3 + $0x150] sm:$0xff]
    %v2441 = vld [vmem:[%s3 + $0x158] sm:$0xff]
    %v2442 = vld [vmem:[%s3 + $0x160] sm:$0xff]
    %v2443 = vld [vmem:[%s3 + $0x168] sm:$0xff]
    %v2444 = vld [vmem:[%s3 + $0x170] sm:$0xff]
    %v2445 = vld [vmem:[%s3 + $0x178] sm:$0xff]
    %v2446 = vld [vmem:[%s4] sm:$0x3]
    %v2448 = vperm.slane %v2446, 0
    %v2449 = vperm.slane %v2446, 1
    %v2454 = vunpack.c.l.b16 %v2396
    %v2455 = vunpack.c.h.b16 %v2396
    %v2456 = vunpack.c.l.b16 %v2397
    %v2457 = vpack.c.b16 %v2454, %v2454
    %v2458 = vpack.c.b16 %v2455, %v2455
    %v2459 = vpack.c.b16 %v2456, %v2456
    %v2511 = vunpack.c.l.b16 %v2398
    %v2512 = vunpack.c.h.b16 %v2398
    %v2513 = vunpack.c.l.b16 %v2399
    %v2514 = vunpack.c.h.b16 %v2399
    %v2515 = vunpack.c.l.b16 %v2400
    %v2516 = vunpack.c.h.b16 %v2400
    %v2517 = vunpack.c.l.b16 %v2401
    %v2518 = vunpack.c.h.b16 %v2401
    %v2519 = vunpack.c.l.b16 %v2402
    %v2520 = vunpack.c.h.b16 %v2402
    %v2521 = vunpack.c.l.b16 %v2403
    %v2522 = vunpack.c.h.b16 %v2403
    %v2523 = vunpack.c.l.b16 %v2404
    %v2524 = vunpack.c.h.b16 %v2404
    %v2525 = vunpack.c.l.b16 %v2405
    %v2526 = vunpack.c.h.b16 %v2405
    %v2527 = vunpack.c.l.b16 %v2406
    %v2528 = vunpack.c.h.b16 %v2406
    %v2529 = vunpack.c.l.b16 %v2407
    %v2530 = vunpack.c.h.b16 %v2407
    %v2531 = vunpack.c.l.b16 %v2408
    %v2532 = vunpack.c.h.b16 %v2408
    %v2533 = vunpack.c.l.b16 %v2409
    %v2534 = vunpack.c.h.b16 %v2409
    %v2535 = vunpack.c.l.b16 %v2410
    %v2536 = vunpack.c.h.b16 %v2410
    %v2537 = vunpack.c.l.b16 %v2411
    %v2538 = vunpack.c.h.b16 %v2411
    %v2539 = vunpack.c.l.b16 %v2412
    %v2540 = vunpack.c.h.b16 %v2412
    %v2541 = vunpack.c.l.b16 %v2413
    %v2542 = vunpack.c.h.b16 %v2413
    %v2543 = vunpack.c.l.b16 %v2414
    %v2544 = vunpack.c.h.b16 %v2414
    %v2545 = vunpack.c.l.b16 %v2415
    %v2546 = vunpack.c.h.b16 %v2415
    %v2547 = vunpack.c.l.b16 %v2416
    %v2548 = vunpack.c.h.b16 %v2416
    %v2549 = vunpack.c.l.b16 %v2417
    %v2550 = vunpack.c.h.b16 %v2417
    %v2551 = vunpack.c.l.b16 %v2418
    %v2552 = vunpack.c.h.b16 %v2418
    %v2553 = vunpack.c.l.b16 %v2419
    %v2554 = vunpack.c.h.b16 %v2419
    %v2555 = vunpack.c.l.b16 %v2420
    %v2556 = vunpack.c.h.b16 %v2420
    %v2557 = vunpack.c.l.b16 %v2421
    %v2558 = vunpack.c.h.b16 %v2421
    %v2559 = vunpack.c.l.b16 %v2422
    %v2560 = vunpack.c.h.b16 %v2422
    %v2561 = vunpack.c.l.b16 %v2423
    %v2562 = vunpack.c.h.b16 %v2423
    %v2563 = vunpack.c.l.b16 %v2424
    %v2564 = vunpack.c.h.b16 %v2424
    %v2565 = vunpack.c.l.b16 %v2425
    %v2566 = vunpack.c.h.b16 %v2425
    %v2567 = vunpack.c.l.b16 %v2426
    %v2568 = vunpack.c.h.b16 %v2426
    %v2569 = vunpack.c.l.b16 %v2427
    %v2570 = vunpack.c.h.b16 %v2427
    %v2571 = vunpack.c.l.b16 %v2428
    %v2572 = vunpack.c.h.b16 %v2428
    %v2573 = vunpack.c.l.b16 %v2429
    %v2574 = vunpack.c.h.b16 %v2429
    %v2575 = vunpack.c.l.b16 %v2430
    %v2576 = vunpack.c.h.b16 %v2430
    %v2577 = vunpack.c.l.b16 %v2431
    %v2578 = vunpack.c.h.b16 %v2431
    %v2579 = vunpack.c.l.b16 %v2432
    %v2580 = vunpack.c.h.b16 %v2432
    %v2581 = vunpack.c.l.b16 %v2433
    %v2582 = vunpack.c.h.b16 %v2433
    %v2583 = vunpack.c.l.b16 %v2434
    %v2584 = vunpack.c.h.b16 %v2434
    %v2585 = vunpack.c.l.b16 %v2435
    %v2586 = vunpack.c.h.b16 %v2435
    %v2587 = vunpack.c.l.b16 %v2436
    %v2588 = vunpack.c.h.b16 %v2436
    %v2589 = vunpack.c.l.b16 %v2437
    %v2590 = vunpack.c.h.b16 %v2437
    %v2591 = vunpack.c.l.b16 %v2438
    %v2592 = vunpack.c.h.b16 %v2438
    %v2593 = vunpack.c.l.b16 %v2439
    %v2594 = vunpack.c.h.b16 %v2439
    %v2595 = vunpack.c.l.b16 %v2440
    %v2596 = vunpack.c.h.b16 %v2440
    %v2597 = vunpack.c.l.b16 %v2441
    %v2598 = vunpack.c.h.b16 %v2441
    %v2599 = vunpack.c.l.b16 %v2442
    %v2600 = vunpack.c.h.b16 %v2442
    %v2601 = vunpack.c.l.b16 %v2443
    %v2602 = vunpack.c.h.b16 %v2443
    %v2603 = vunpack.c.l.b16 %v2444
    %v2604 = vunpack.c.h.b16 %v2444
    %v2605 = vunpack.c.l.b16 %v2445
    %v2606 = vunpack.c.h.b16 %v2445
    %v2607 = vpack.c.b16 %v2513, %v2511
    %v2608 = vpack.c.b16 %v2514, %v2512
    %v2609 = vpack.c.b16 %v2517, %v2515
    %v2610 = vpack.c.b16 %v2518, %v2516
    %v2611 = vpack.c.b16 %v2521, %v2519
    %v2612 = vpack.c.b16 %v2522, %v2520
    %v2613 = vpack.c.b16 %v2525, %v2523
    %v2614 = vpack.c.b16 %v2526, %v2524
    %v2615 = vpack.c.b16 %v2529, %v2527
    %v2616 = vpack.c.b16 %v2530, %v2528
    %v2617 = vpack.c.b16 %v2533, %v2531
    %v2618 = vpack.c.b16 %v2534, %v2532
    %v2619 = vpack.c.b16 %v2537, %v2535
    %v2620 = vpack.c.b16 %v2538, %v2536
    %v2621 = vpack.c.b16 %v2541, %v2539
    %v2622 = vpack.c.b16 %v2542, %v2540
    %v2623 = vpack.c.b16 %v2545, %v2543
    %v2624 = vpack.c.b16 %v2546, %v2544
    %v2625 = vpack.c.b16 %v2549, %v2547
    %v2626 = vpack.c.b16 %v2550, %v2548
    %v2627 = vpack.c.b16 %v2553, %v2551
    %v2628 = vpack.c.b16 %v2554, %v2552
    %v2629 = vpack.c.b16 %v2557, %v2555
    %v2630 = vpack.c.b16 %v2558, %v2556
    %v2631 = vpack.c.b16 %v2561, %v2559
    %v2632 = vpack.c.b16 %v2562, %v2560
    %v2633 = vpack.c.b16 %v2565, %v2563
    %v2634 = vpack.c.b16 %v2566, %v2564
    %v2635 = vpack.c.b16 %v2569, %v2567
    %v2636 = vpack.c.b16 %v2570, %v2568
    %v2637 = vpack.c.b16 %v2573, %v2571
    %v2638 = vpack.c.b16 %v2574, %v2572
    %v2639 = vpack.c.b16 %v2577, %v2575
    %v2640 = vpack.c.b16 %v2578, %v2576
    %v2641 = vpack.c.b16 %v2581, %v2579
    %v2642 = vpack.c.b16 %v2582, %v2580
    %v2643 = vpack.c.b16 %v2585, %v2583
    %v2644 = vpack.c.b16 %v2586, %v2584
    %v2645 = vpack.c.b16 %v2589, %v2587
    %v2646 = vpack.c.b16 %v2590, %v2588
    %v2647 = vpack.c.b16 %v2593, %v2591
    %v2648 = vpack.c.b16 %v2594, %v2592
    %v2649 = vpack.c.b16 %v2597, %v2595
    %v2650 = vpack.c.b16 %v2598, %v2596
    %v2651 = vpack.c.b16 %v2601, %v2599
    %v2652 = vpack.c.b16 %v2602, %v2600
    %v2653 = vpack.c.b16 %v2605, %v2603
    %v2654 = vpack.c.b16 %v2606, %v2604
    %2703 = vmatpush.bf16.msra.mxu0 %v2621
    %2704 = vmatpush.bf16.msra.mxu0 %v2619
    %2705 = vmatpush.bf16.msra.mxu0 %v2617
    %2706 = vmatpush.bf16.msra.mxu0 %v2615
    %2707 = vmatpush.bf16.msra.mxu0 %v2613
    %2708 = vmatpush.bf16.msra.mxu0 %v2611
    %2709 = vmatpush.bf16.msra.mxu0 %v2609
    %2710 = vmatpush.bf16.msra.mxu0 %v2607
    %2711 = vmatmul.bf16.gmra.mxu0 %v2457
    %v2712 = vpop.f32.mrf.mxu0
    %v2713 = vadd.f32 %v2448, %v2712
    %v2714 = vpop.f32.mrf.mxu0
    %2715 = vdwg.mxu0
    %2716 = vmatpush.bf16.msra.mxu0 %v2637
    %2717 = vmatpush.bf16.msra.mxu0 %v2635
    %2718 = vmatpush.bf16.msra.mxu0 %v2633
    %2719 = vmatpush.bf16.msra.mxu0 %v2631
    %2720 = vmatpush.bf16.msra.mxu0 %v2629
    %2721 = vmatpush.bf16.msra.mxu0 %v2627
    %2722 = vmatpush.bf16.msra.mxu0 %v2625
    %2723 = vmatpush.bf16.msra.mxu0 %v2623
    %2724 = vmatmul.bf16.gmra.mxu0 %v2458
    %v2725 = vpop.f32.mrf.mxu0
    %v2726 = vadd.f32 %v2713, %v2725
    %v2727 = vpop.f32.mrf.mxu0
    %2728 = vdwg.mxu0
    %2729 = vmatpush.bf16.msra.mxu0 %v2653
    %2730 = vmatpush.bf16.msra.mxu0 %v2651
    %2731 = vmatpush.bf16.msra.mxu0 %v2649
    %2732 = vmatpush.bf16.msra.mxu0 %v2647
    %2733 = vmatpush.bf16.msra.mxu0 %v2645
    %2734 = vmatpush.bf16.msra.mxu0 %v2643
    %2735 = vmatpush.bf16.msra.mxu0 %v2641
    %2736 = vmatpush.bf16.msra.mxu0 %v2639
    %2737 = vmatmul.bf16.gmra.mxu0 %v2459
    %v2738 = vpop.f32.mrf.mxu0
    %v2739 = vadd.f32 %v2726, %v2738
    %v2740 = vpop.f32.mrf.mxu0
    %2741 = vdwg.mxu0
    %2742 = vmatpush.bf16.msra.mxu0 %v2622
    %2743 = vmatpush.bf16.msra.mxu0 %v2620
    %2744 = vmatpush.bf16.msra.mxu0 %v2618
    %2745 = vmatpush.bf16.msra.mxu0 %v2616
    %2746 = vmatpush.bf16.msra.mxu0 %v2614
    %2747 = vmatpush.bf16.msra.mxu0 %v2612
    %2748 = vmatpush.bf16.msra.mxu0 %v2610
    %2749 = vmatpush.bf16.msra.mxu0 %v2608
    %2750 = vmatmul.bf16.gmra.mxu0 %v2457
    %v2751 = vpop.f32.mrf.mxu0
    %v2752 = vadd.f32 %v2449, %v2751
    %v2753 = vpop.f32.mrf.mxu0
    %2754 = vdwg.mxu0
    %2755 = vmatpush.bf16.msra.mxu0 %v2638
    %2756 = vmatpush.bf16.msra.mxu0 %v2636
    %2757 = vmatpush.bf16.msra.mxu0 %v2634
    %2758 = vmatpush.bf16.msra.mxu0 %v2632
    %2759 = vmatpush.bf16.msra.mxu0 %v2630
    %2760 = vmatpush.bf16.msra.mxu0 %v2628
    %2761 = vmatpush.bf16.msra.mxu0 %v2626
    %2762 = vmatpush.bf16.msra.mxu0 %v2624
    %2763 = vmatmul.bf16.gmra.mxu0 %v2458
    %v2764 = vpop.f32.mrf.mxu0
    %v2765 = vadd.f32 %v2752, %v2764
    %v2766 = vpop.f32.mrf.mxu0
    %2767 = vdwg.mxu0
    %2768 = vmatpush.bf16.msra.mxu0 %v2654
    %2769 = vmatpush.bf16.msra.mxu0 %v2652
    %2770 = vmatpush.bf16.msra.mxu0 %v2650
    %2771 = vmatpush.bf16.msra.mxu0 %v2648
    %2772 = vmatpush.bf16.msra.mxu0 %v2646
    %2773 = vmatpush.bf16.msra.mxu0 %v2644
    %2774 = vmatpush.bf16.msra.mxu0 %v2642
    %2775 = vmatpush.bf16.msra.mxu0 %v2640
    %2776 = vmatmul.bf16.gmra.mxu0 %v2459
    %v2777 = vpop.f32.mrf.mxu0
    %v2778 = vadd.f32 %v2765, %v2777
    %v2779 = vpop.f32.mrf.mxu0
    %2780 = vdwg.mxu0
    %v2781 = vmax.f32 %v2739, 0.0
    %v2782 = vmax.f32 %v2778, 0.0
    %v2783 = vpack.c.bf16 %v2782, %v2781
    %2784 = vst [vmem:[#allocation2 + $0x40] sm:$0xff] %v2783
    %v2785 = vld [vmem:[%s0 + $0x1c] sm:$0xff]
    %v2786 = vld [vmem:[%s0 + $0x24] sm:$0xf]
    %v2787 = vld [vmem:[%s3] sm:$0xff]
    %v2788 = vld [vmem:[%s3 + $0x8] sm:$0xff]
    %v2789 = vld [vmem:[%s3 + $0x10] sm:$0xff]
    %v2790 = vld [vmem:[%s3 + $0x18] sm:$0xff]
    %v2791 = vld [vmem:[%s3 + $0x20] sm:$0xff]
    %v2792 = vld [vmem:[%s3 + $0x28] sm:$0xff]
    %v2793 = vld [vmem:[%s3 + $0x30] sm:$0xff]
    %v2794 = vld [vmem:[%s3 + $0x38] sm:$0xff]
    %v2795 = vld [vmem:[%s3 + $0x40] sm:$0xff]
    %v2796 = vld [vmem:[%s3 + $0x48] sm:$0xff]
    %v2797 = vld [vmem:[%s3 + $0x50] sm:$0xff]
    %v2798 = vld [vmem:[%s3 + $0x58] sm:$0xff]
    %v2799 = vld [vmem:[%s3 + $0x60] sm:$0xff]
    %v2800 = vld [vmem:[%s3 + $0x68] sm:$0xff]
    %v2801 = vld [vmem:[%s3 + $0x70] sm:$0xff]
    %v2802 = vld [vmem:[%s3 + $0x78] sm:$0xff]
    %v2803 = vld [vmem:[%s3 + $0x80] sm:$0xff]
    %v2804 = vld [vmem:[%s3 + $0x88] sm:$0xff]
    %v2805 = vld [vmem:[%s3 + $0x90] sm:$0xff]
    %v2806 = vld [vmem:[%s3 + $0x98] sm:$0xff]
    %v2807 = vld [vmem:[%s3 + $0xa0] sm:$0xff]
    %v2808 = vld [vmem:[%s3 + $0xa8] sm:$0xff]
    %v2809 = vld [vmem:[%s3 + $0xb0] sm:$0xff]
    %v2810 = vld [vmem:[%s3 + $0xb8] sm:$0xff]
    %v2811 = vld [vmem:[%s3 + $0xc0] sm:$0xff]
    %v2812 = vld [vmem:[%s3 + $0xc8] sm:$0xff]
    %v2813 = vld [vmem:[%s3 + $0xd0] sm:$0xff]
    %v2814 = vld [vmem:[%s3 + $0xd8] sm:$0xff]
    %v2815 = vld [vmem:[%s3 + $0xe0] sm:$0xff]
    %v2816 = vld [vmem:[%s3 + $0xe8] sm:$0xff]
    %v2817 = vld [vmem:[%s3 + $0xf0] sm:$0xff]
    %v2818 = vld [vmem:[%s3 + $0xf8] sm:$0xff]
    %v2819 = vld [vmem:[%s3 + $0x100] sm:$0xff]
    %v2820 = vld [vmem:[%s3 + $0x108] sm:$0xff]
    %v2821 = vld [vmem:[%s3 + $0x110] sm:$0xff]
    %v2822 = vld [vmem:[%s3 + $0x118] sm:$0xff]
    %v2823 = vld [vmem:[%s3 + $0x120] sm:$0xff]
    %v2824 = vld [vmem:[%s3 + $0x128] sm:$0xff]
    %v2825 = vld [vmem:[%s3 + $0x130] sm:$0xff]
    %v2826 = vld [vmem:[%s3 + $0x138] sm:$0xff]
    %v2827 = vld [vmem:[%s3 + $0x140] sm:$0xff]
    %v2828 = vld [vmem:[%s3 + $0x148] sm:$0xff]
    %v2829 = vld [vmem:[%s3 + $0x150] sm:$0xff]
    %v2830 = vld [vmem:[%s3 + $0x158] sm:$0xff]
    %v2831 = vld [vmem:[%s3 + $0x160] sm:$0xff]
    %v2832 = vld [vmem:[%s3 + $0x168] sm:$0xff]
    %v2833 = vld [vmem:[%s3 + $0x170] sm:$0xff]
    %v2834 = vld [vmem:[%s3 + $0x178] sm:$0xff]
    %v2835 = vld [vmem:[%s4] sm:$0x3]
    %v2837 = vperm.slane %v2835, 0
    %v2838 = vperm.slane %v2835, 1
    %v2843 = vunpack.c.l.b16 %v2785
    %v2844 = vunpack.c.h.b16 %v2785
    %v2845 = vunpack.c.l.b16 %v2786
    %v2846 = vpack.c.b16 %v2843, %v2843
    %v2847 = vpack.c.b16 %v2844, %v2844
    %v2848 = vpack.c.b16 %v2845, %v2845
    %v2900 = vunpack.c.l.b16 %v2787
    %v2901 = vunpack.c.h.b16 %v2787
    %v2902 = vunpack.c.l.b16 %v2788
    %v2903 = vunpack.c.h.b16 %v2788
    %v2904 = vunpack.c.l.b16 %v2789
    %v2905 = vunpack.c.h.b16 %v2789
    %v2906 = vunpack.c.l.b16 %v2790
    %v2907 = vunpack.c.h.b16 %v2790
    %v2908 = vunpack.c.l.b16 %v2791
    %v2909 = vunpack.c.h.b16 %v2791
    %v2910 = vunpack.c.l.b16 %v2792
    %v2911 = vunpack.c.h.b16 %v2792
    %v2912 = vunpack.c.l.b16 %v2793
    %v2913 = vunpack.c.h.b16 %v2793
    %v2914 = vunpack.c.l.b16 %v2794
    %v2915 = vunpack.c.h.b16 %v2794
    %v2916 = vunpack.c.l.b16 %v2795
    %v2917 = vunpack.c.h.b16 %v2795
    %v2918 = vunpack.c.l.b16 %v2796
    %v2919 = vunpack.c.h.b16 %v2796
    %v2920 = vunpack.c.l.b16 %v2797
    %v2921 = vunpack.c.h.b16 %v2797
    %v2922 = vunpack.c.l.b16 %v2798
    %v2923 = vunpack.c.h.b16 %v2798
    %v2924 = vunpack.c.l.b16 %v2799
    %v2925 = vunpack.c.h.b16 %v2799
    %v2926 = vunpack.c.l.b16 %v2800
    %v2927 = vunpack.c.h.b16 %v2800
    %v2928 = vunpack.c.l.b16 %v2801
    %v2929 = vunpack.c.h.b16 %v2801
    %v2930 = vunpack.c.l.b16 %v2802
    %v2931 = vunpack.c.h.b16 %v2802
    %v2932 = vunpack.c.l.b16 %v2803
    %v2933 = vunpack.c.h.b16 %v2803
    %v2934 = vunpack.c.l.b16 %v2804
    %v2935 = vunpack.c.h.b16 %v2804
    %v2936 = vunpack.c.l.b16 %v2805
    %v2937 = vunpack.c.h.b16 %v2805
    %v2938 = vunpack.c.l.b16 %v2806
    %v2939 = vunpack.c.h.b16 %v2806
    %v2940 = vunpack.c.l.b16 %v2807
    %v2941 = vunpack.c.h.b16 %v2807
    %v2942 = vunpack.c.l.b16 %v2808
    %v2943 = vunpack.c.h.b16 %v2808
    %v2944 = vunpack.c.l.b16 %v2809
    %v2945 = vunpack.c.h.b16 %v2809
    %v2946 = vunpack.c.l.b16 %v2810
    %v2947 = vunpack.c.h.b16 %v2810
    %v2948 = vunpack.c.l.b16 %v2811
    %v2949 = vunpack.c.h.b16 %v2811
    %v2950 = vunpack.c.l.b16 %v2812
    %v2951 = vunpack.c.h.b16 %v2812
    %v2952 = vunpack.c.l.b16 %v2813
    %v2953 = vunpack.c.h.b16 %v2813
    %v2954 = vunpack.c.l.b16 %v2814
    %v2955 = vunpack.c.h.b16 %v2814
    %v2956 = vunpack.c.l.b16 %v2815
    %v2957 = vunpack.c.h.b16 %v2815
    %v2958 = vunpack.c.l.b16 %v2816
    %v2959 = vunpack.c.h.b16 %v2816
    %v2960 = vunpack.c.l.b16 %v2817
    %v2961 = vunpack.c.h.b16 %v2817
    %v2962 = vunpack.c.l.b16 %v2818
    %v2963 = vunpack.c.h.b16 %v2818
    %v2964 = vunpack.c.l.b16 %v2819
    %v2965 = vunpack.c.h.b16 %v2819
    %v2966 = vunpack.c.l.b16 %v2820
    %v2967 = vunpack.c.h.b16 %v2820
    %v2968 = vunpack.c.l.b16 %v2821
    %v2969 = vunpack.c.h.b16 %v2821
    %v2970 = vunpack.c.l.b16 %v2822
    %v2971 = vunpack.c.h.b16 %v2822
    %v2972 = vunpack.c.l.b16 %v2823
    %v2973 = vunpack.c.h.b16 %v2823
    %v2974 = vunpack.c.l.b16 %v2824
    %v2975 = vunpack.c.h.b16 %v2824
    %v2976 = vunpack.c.l.b16 %v2825
    %v2977 = vunpack.c.h.b16 %v2825
    %v2978 = vunpack.c.l.b16 %v2826
    %v2979 = vunpack.c.h.b16 %v2826
    %v2980 = vunpack.c.l.b16 %v2827
    %v2981 = vunpack.c.h.b16 %v2827
    %v2982 = vunpack.c.l.b16 %v2828
    %v2983 = vunpack.c.h.b16 %v2828
    %v2984 = vunpack.c.l.b16 %v2829
    %v2985 = vunpack.c.h.b16 %v2829
    %v2986 = vunpack.c.l.b16 %v2830
    %v2987 = vunpack.c.h.b16 %v2830
    %v2988 = vunpack.c.l.b16 %v2831
    %v2989 = vunpack.c.h.b16 %v2831
    %v2990 = vunpack.c.l.b16 %v2832
    %v2991 = vunpack.c.h.b16 %v2832
    %v2992 = vunpack.c.l.b16 %v2833
    %v2993 = vunpack.c.h.b16 %v2833
    %v2994 = vunpack.c.l.b16 %v2834
    %v2995 = vunpack.c.h.b16 %v2834
    %v2996 = vpack.c.b16 %v2902, %v2900
    %v2997 = vpack.c.b16 %v2903, %v2901
    %v2998 = vpack.c.b16 %v2906, %v2904
    %v2999 = vpack.c.b16 %v2907, %v2905
    %v3000 = vpack.c.b16 %v2910, %v2908
    %v3001 = vpack.c.b16 %v2911, %v2909
    %v3002 = vpack.c.b16 %v2914, %v2912
    %v3003 = vpack.c.b16 %v2915, %v2913
    %v3004 = vpack.c.b16 %v2918, %v2916
    %v3005 = vpack.c.b16 %v2919, %v2917
    %v3006 = vpack.c.b16 %v2922, %v2920
    %v3007 = vpack.c.b16 %v2923, %v2921
    %v3008 = vpack.c.b16 %v2926, %v2924
    %v3009 = vpack.c.b16 %v2927, %v2925
    %v3010 = vpack.c.b16 %v2930, %v2928
    %v3011 = vpack.c.b16 %v2931, %v2929
    %v3012 = vpack.c.b16 %v2934, %v2932
    %v3013 = vpack.c.b16 %v2935, %v2933
    %v3014 = vpack.c.b16 %v2938, %v2936
    %v3015 = vpack.c.b16 %v2939, %v2937
    %v3016 = vpack.c.b16 %v2942, %v2940
    %v3017 = vpack.c.b16 %v2943, %v2941
    %v3018 = vpack.c.b16 %v2946, %v2944
    %v3019 = vpack.c.b16 %v2947, %v2945
    %v3020 = vpack.c.b16 %v2950, %v2948
    %v3021 = vpack.c.b16 %v2951, %v2949
    %v3022 = vpack.c.b16 %v2954, %v2952
    %v3023 = vpack.c.b16 %v2955, %v2953
    %v3024 = vpack.c.b16 %v2958, %v2956
    %v3025 = vpack.c.b16 %v2959, %v2957
    %v3026 = vpack.c.b16 %v2962, %v2960
    %v3027 = vpack.c.b16 %v2963, %v2961
    %v3028 = vpack.c.b16 %v2966, %v2964
    %v3029 = vpack.c.b16 %v2967, %v2965
    %v3030 = vpack.c.b16 %v2970, %v2968
    %v3031 = vpack.c.b16 %v2971, %v2969
    %v3032 = vpack.c.b16 %v2974, %v2972
    %v3033 = vpack.c.b16 %v2975, %v2973
    %v3034 = vpack.c.b16 %v2978, %v2976
    %v3035 = vpack.c.b16 %v2979, %v2977
    %v3036 = vpack.c.b16 %v2982, %v2980
    %v3037 = vpack.c.b16 %v2983, %v2981
    %v3038 = vpack.c.b16 %v2986, %v2984
    %v3039 = vpack.c.b16 %v2987, %v2985
    %v3040 = vpack.c.b16 %v2990, %v2988
    %v3041 = vpack.c.b16 %v2991, %v2989
    %v3042 = vpack.c.b16 %v2994, %v2992
    %v3043 = vpack.c.b16 %v2995, %v2993
    %3092 = vmatpush.bf16.msra.mxu0 %v3010
    %3093 = vmatpush.bf16.msra.mxu0 %v3008
    %3094 = vmatpush.bf16.msra.mxu0 %v3006
    %3095 = vmatpush.bf16.msra.mxu0 %v3004
    %3096 = vmatpush.bf16.msra.mxu0 %v3002
    %3097 = vmatpush.bf16.msra.mxu0 %v3000
    %3098 = vmatpush.bf16.msra.mxu0 %v2998
    %3099 = vmatpush.bf16.msra.mxu0 %v2996
    %3100 = vmatmul.bf16.gmra.mxu0 %v2846
    %v3101 = vpop.f32.mrf.mxu0
    %v3102 = vadd.f32 %v2837, %v3101
    %v3103 = vpop.f32.mrf.mxu0
    %3104 = vdwg.mxu0
    %3105 = vmatpush.bf16.msra.mxu0 %v3026
    %3106 = vmatpush.bf16.msra.mxu0 %v3024
    %3107 = vmatpush.bf16.msra.mxu0 %v3022
    %3108 = vmatpush.bf16.msra.mxu0 %v3020
    %3109 = vmatpush.bf16.msra.mxu0 %v3018
    %3110 = vmatpush.bf16.msra.mxu0 %v3016
    %3111 = vmatpush.bf16.msra.mxu0 %v3014
    %3112 = vmatpush.bf16.msra.mxu0 %v3012
    %3113 = vmatmul.bf16.gmra.mxu0 %v2847
    %v3114 = vpop.f32.mrf.mxu0
    %v3115 = vadd.f32 %v3102, %v3114
    %v3116 = vpop.f32.mrf.mxu0
    %3117 = vdwg.mxu0
    %3118 = vmatpush.bf16.msra.mxu0 %v3042
    %3119 = vmatpush.bf16.msra.mxu0 %v3040
    %3120 = vmatpush.bf16.msra.mxu0 %v3038
    %3121 = vmatpush.bf16.msra.mxu0 %v3036
    %3122 = vmatpush.bf16.msra.mxu0 %v3034
    %3123 = vmatpush.bf16.msra.mxu0 %v3032
    %3124 = vmatpush.bf16.msra.mxu0 %v3030
    %3125 = vmatpush.bf16.msra.mxu0 %v3028
    %3126 = vmatmul.bf16.gmra.mxu0 %v2848
    %v3127 = vpop.f32.mrf.mxu0
    %v3128 = vadd.f32 %v3115, %v3127
    %v3129 = vpop.f32.mrf.mxu0
    %3130 = vdwg.mxu0
    %3131 = vmatpush.bf16.msra.mxu0 %v3011
    %3132 = vmatpush.bf16.msra.mxu0 %v3009
    %3133 = vmatpush.bf16.msra.mxu0 %v3007
    %3134 = vmatpush.bf16.msra.mxu0 %v3005
    %3135 = vmatpush.bf16.msra.mxu0 %v3003
    %3136 = vmatpush.bf16.msra.mxu0 %v3001
    %3137 = vmatpush.bf16.msra.mxu0 %v2999
    %3138 = vmatpush.bf16.msra.mxu0 %v2997
    %3139 = vmatmul.bf16.gmra.mxu0 %v2846
    %v3140 = vpop.f32.mrf.mxu0
    %v3141 = vadd.f32 %v2838, %v3140
    %v3142 = vpop.f32.mrf.mxu0
    %3143 = vdwg.mxu0
    %3144 = vmatpush.bf16.msra.mxu0 %v3027
    %3145 = vmatpush.bf16.msra.mxu0 %v3025
    %3146 = vmatpush.bf16.msra.mxu0 %v3023
    %3147 = vmatpush.bf16.msra.mxu0 %v3021
    %3148 = vmatpush.bf16.msra.mxu0 %v3019
    %3149 = vmatpush.bf16.msra.mxu0 %v3017
    %3150 = vmatpush.bf16.msra.mxu0 %v3015
    %3151 = vmatpush.bf16.msra.mxu0 %v3013
    %3152 = vmatmul.bf16.gmra.mxu0 %v2847
    %v3153 = vpop.f32.mrf.mxu0
    %v3154 = vadd.f32 %v3141, %v3153
    %v3155 = vpop.f32.mrf.mxu0
    %3156 = vdwg.mxu0
    %3157 = vmatpush.bf16.msra.mxu0 %v3043
    %3158 = vmatpush.bf16.msra.mxu0 %v3041
    %3159 = vmatpush.bf16.msra.mxu0 %v3039
    %3160 = vmatpush.bf16.msra.mxu0 %v3037
    %3161 = vmatpush.bf16.msra.mxu0 %v3035
    %3162 = vmatpush.bf16.msra.mxu0 %v3033
    %3163 = vmatpush.bf16.msra.mxu0 %v3031
    %3164 = vmatpush.bf16.msra.mxu0 %v3029
    %3165 = vmatmul.bf16.gmra.mxu0 %v2848
    %v3166 = vpop.f32.mrf.mxu0
    %v3167 = vadd.f32 %v3154, %v3166
    %v3168 = vpop.f32.mrf.mxu0
    %3169 = vdwg.mxu0
    %v3170 = vmax.f32 %v3128, 0.0
    %v3171 = vmax.f32 %v3167, 0.0
    %v3172 = vpack.c.bf16 %v3171, %v3170
    %3173 = vst [vmem:[#allocation2 + $0x48] sm:$0xff] %v3172
    %v3174 = vld [vmem:[%s0 + $0x20] sm:$0xff]
    %v3175 = vld [vmem:[%s0 + $0x28] sm:$0xf]
    %v3176 = vld [vmem:[%s3] sm:$0xff]
    %v3177 = vld [vmem:[%s3 + $0x8] sm:$0xff]
    %v3178 = vld [vmem:[%s3 + $0x10] sm:$0xff]
    %v3179 = vld [vmem:[%s3 + $0x18] sm:$0xff]
    %v3180 = vld [vmem:[%s3 + $0x20] sm:$0xff]
    %v3181 = vld [vmem:[%s3 + $0x28] sm:$0xff]
    %v3182 = vld [vmem:[%s3 + $0x30] sm:$0xff]
    %v3183 = vld [vmem:[%s3 + $0x38] sm:$0xff]
    %v3184 = vld [vmem:[%s3 + $0x40] sm:$0xff]
    %v3185 = vld [vmem:[%s3 + $0x48] sm:$0xff]
    %v3186 = vld [vmem:[%s3 + $0x50] sm:$0xff]
    %v3187 = vld [vmem:[%s3 + $0x58] sm:$0xff]
    %v3188 = vld [vmem:[%s3 + $0x60] sm:$0xff]
    %v3189 = vld [vmem:[%s3 + $0x68] sm:$0xff]
    %v3190 = vld [vmem:[%s3 + $0x70] sm:$0xff]
    %v3191 = vld [vmem:[%s3 + $0x78] sm:$0xff]
    %v3192 = vld [vmem:[%s3 + $0x80] sm:$0xff]
    %v3193 = vld [vmem:[%s3 + $0x88] sm:$0xff]
    %v3194 = vld [vmem:[%s3 + $0x90] sm:$0xff]
    %v3195 = vld [vmem:[%s3 + $0x98] sm:$0xff]
    %v3196 = vld [vmem:[%s3 + $0xa0] sm:$0xff]
    %v3197 = vld [vmem:[%s3 + $0xa8] sm:$0xff]
    %v3198 = vld [vmem:[%s3 + $0xb0] sm:$0xff]
    %v3199 = vld [vmem:[%s3 + $0xb8] sm:$0xff]
    %v3200 = vld [vmem:[%s3 + $0xc0] sm:$0xff]
    %v3201 = vld [vmem:[%s3 + $0xc8] sm:$0xff]
    %v3202 = vld [vmem:[%s3 + $0xd0] sm:$0xff]
    %v3203 = vld [vmem:[%s3 + $0xd8] sm:$0xff]
    %v3204 = vld [vmem:[%s3 + $0xe0] sm:$0xff]
    %v3205 = vld [vmem:[%s3 + $0xe8] sm:$0xff]
    %v3206 = vld [vmem:[%s3 + $0xf0] sm:$0xff]
    %v3207 = vld [vmem:[%s3 + $0xf8] sm:$0xff]
    %v3208 = vld [vmem:[%s3 + $0x100] sm:$0xff]
    %v3209 = vld [vmem:[%s3 + $0x108] sm:$0xff]
    %v3210 = vld [vmem:[%s3 + $0x110] sm:$0xff]
    %v3211 = vld [vmem:[%s3 + $0x118] sm:$0xff]
    %v3212 = vld [vmem:[%s3 + $0x120] sm:$0xff]
    %v3213 = vld [vmem:[%s3 + $0x128] sm:$0xff]
    %v3214 = vld [vmem:[%s3 + $0x130] sm:$0xff]
    %v3215 = vld [vmem:[%s3 + $0x138] sm:$0xff]
    %v3216 = vld [vmem:[%s3 + $0x140] sm:$0xff]
    %v3217 = vld [vmem:[%s3 + $0x148] sm:$0xff]
    %v3218 = vld [vmem:[%s3 + $0x150] sm:$0xff]
    %v3219 = vld [vmem:[%s3 + $0x158] sm:$0xff]
    %v3220 = vld [vmem:[%s3 + $0x160] sm:$0xff]
    %v3221 = vld [vmem:[%s3 + $0x168] sm:$0xff]
    %v3222 = vld [vmem:[%s3 + $0x170] sm:$0xff]
    %v3223 = vld [vmem:[%s3 + $0x178] sm:$0xff]
    %v3224 = vld [vmem:[%s4] sm:$0x3]
    %v3226 = vperm.slane %v3224, 0
    %v3227 = vperm.slane %v3224, 1
    %v3232 = vunpack.c.l.b16 %v3174
    %v3233 = vunpack.c.h.b16 %v3174
    %v3234 = vunpack.c.l.b16 %v3175
    %v3235 = vpack.c.b16 %v3232, %v3232
    %v3236 = vpack.c.b16 %v3233, %v3233
    %v3237 = vpack.c.b16 %v3234, %v3234
    %v3289 = vunpack.c.l.b16 %v3176
    %v3290 = vunpack.c.h.b16 %v3176
    %v3291 = vunpack.c.l.b16 %v3177
    %v3292 = vunpack.c.h.b16 %v3177
    %v3293 = vunpack.c.l.b16 %v3178
    %v3294 = vunpack.c.h.b16 %v3178
    %v3295 = vunpack.c.l.b16 %v3179
    %v3296 = vunpack.c.h.b16 %v3179
    %v3297 = vunpack.c.l.b16 %v3180
    %v3298 = vunpack.c.h.b16 %v3180
    %v3299 = vunpack.c.l.b16 %v3181
    %v3300 = vunpack.c.h.b16 %v3181
    %v3301 = vunpack.c.l.b16 %v3182
    %v3302 = vunpack.c.h.b16 %v3182
    %v3303 = vunpack.c.l.b16 %v3183
    %v3304 = vunpack.c.h.b16 %v3183
    %v3305 = vunpack.c.l.b16 %v3184
    %v3306 = vunpack.c.h.b16 %v3184
    %v3307 = vunpack.c.l.b16 %v3185
    %v3308 = vunpack.c.h.b16 %v3185
    %v3309 = vunpack.c.l.b16 %v3186
    %v3310 = vunpack.c.h.b16 %v3186
    %v3311 = vunpack.c.l.b16 %v3187
    %v3312 = vunpack.c.h.b16 %v3187
    %v3313 = vunpack.c.l.b16 %v3188
    %v3314 = vunpack.c.h.b16 %v3188
    %v3315 = vunpack.c.l.b16 %v3189
    %v3316 = vunpack.c.h.b16 %v3189
    %v3317 = vunpack.c.l.b16 %v3190
    %v3318 = vunpack.c.h.b16 %v3190
    %v3319 = vunpack.c.l.b16 %v3191
    %v3320 = vunpack.c.h.b16 %v3191
    %v3321 = vunpack.c.l.b16 %v3192
    %v3322 = vunpack.c.h.b16 %v3192
    %v3323 = vunpack.c.l.b16 %v3193
    %v3324 = vunpack.c.h.b16 %v3193
    %v3325 = vunpack.c.l.b16 %v3194
    %v3326 = vunpack.c.h.b16 %v3194
    %v3327 = vunpack.c.l.b16 %v3195
    %v3328 = vunpack.c.h.b16 %v3195
    %v3329 = vunpack.c.l.b16 %v3196
    %v3330 = vunpack.c.h.b16 %v3196
    %v3331 = vunpack.c.l.b16 %v3197
    %v3332 = vunpack.c.h.b16 %v3197
    %v3333 = vunpack.c.l.b16 %v3198
    %v3334 = vunpack.c.h.b16 %v3198
    %v3335 = vunpack.c.l.b16 %v3199
    %v3336 = vunpack.c.h.b16 %v3199
    %v3337 = vunpack.c.l.b16 %v3200
    %v3338 = vunpack.c.h.b16 %v3200
    %v3339 = vunpack.c.l.b16 %v3201
    %v3340 = vunpack.c.h.b16 %v3201
    %v3341 = vunpack.c.l.b16 %v3202
    %v3342 = vunpack.c.h.b16 %v3202
    %v3343 = vunpack.c.l.b16 %v3203
    %v3344 = vunpack.c.h.b16 %v3203
    %v3345 = vunpack.c.l.b16 %v3204
    %v3346 = vunpack.c.h.b16 %v3204
    %v3347 = vunpack.c.l.b16 %v3205
    %v3348 = vunpack.c.h.b16 %v3205
    %v3349 = vunpack.c.l.b16 %v3206
    %v3350 = vunpack.c.h.b16 %v3206
    %v3351 = vunpack.c.l.b16 %v3207
    %v3352 = vunpack.c.h.b16 %v3207
    %v3353 = vunpack.c.l.b16 %v3208
    %v3354 = vunpack.c.h.b16 %v3208
    %v3355 = vunpack.c.l.b16 %v3209
    %v3356 = vunpack.c.h.b16 %v3209
    %v3357 = vunpack.c.l.b16 %v3210
    %v3358 = vunpack.c.h.b16 %v3210
    %v3359 = vunpack.c.l.b16 %v3211
    %v3360 = vunpack.c.h.b16 %v3211
    %v3361 = vunpack.c.l.b16 %v3212
    %v3362 = vunpack.c.h.b16 %v3212
    %v3363 = vunpack.c.l.b16 %v3213
    %v3364 = vunpack.c.h.b16 %v3213
    %v3365 = vunpack.c.l.b16 %v3214
    %v3366 = vunpack.c.h.b16 %v3214
    %v3367 = vunpack.c.l.b16 %v3215
    %v3368 = vunpack.c.h.b16 %v3215
    %v3369 = vunpack.c.l.b16 %v3216
    %v3370 = vunpack.c.h.b16 %v3216
    %v3371 = vunpack.c.l.b16 %v3217
    %v3372 = vunpack.c.h.b16 %v3217
    %v3373 = vunpack.c.l.b16 %v3218
    %v3374 = vunpack.c.h.b16 %v3218
    %v3375 = vunpack.c.l.b16 %v3219
    %v3376 = vunpack.c.h.b16 %v3219
    %v3377 = vunpack.c.l.b16 %v3220
    %v3378 = vunpack.c.h.b16 %v3220
    %v3379 = vunpack.c.l.b16 %v3221
    %v3380 = vunpack.c.h.b16 %v3221
    %v3381 = vunpack.c.l.b16 %v3222
    %v3382 = vunpack.c.h.b16 %v3222
    %v3383 = vunpack.c.l.b16 %v3223
    %v3384 = vunpack.c.h.b16 %v3223
    %v3385 = vpack.c.b16 %v3291, %v3289
    %v3386 = vpack.c.b16 %v3292, %v3290
    %v3387 = vpack.c.b16 %v3295, %v3293
    %v3388 = vpack.c.b16 %v3296, %v3294
    %v3389 = vpack.c.b16 %v3299, %v3297
    %v3390 = vpack.c.b16 %v3300, %v3298
    %v3391 = vpack.c.b16 %v3303, %v3301
    %v3392 = vpack.c.b16 %v3304, %v3302
    %v3393 = vpack.c.b16 %v3307, %v3305
    %v3394 = vpack.c.b16 %v3308, %v3306
    %v3395 = vpack.c.b16 %v3311, %v3309
    %v3396 = vpack.c.b16 %v3312, %v3310
    %v3397 = vpack.c.b16 %v3315, %v3313
    %v3398 = vpack.c.b16 %v3316, %v3314
    %v3399 = vpack.c.b16 %v3319, %v3317
    %v3400 = vpack.c.b16 %v3320, %v3318
    %v3401 = vpack.c.b16 %v3323, %v3321
    %v3402 = vpack.c.b16 %v3324, %v3322
    %v3403 = vpack.c.b16 %v3327, %v3325
    %v3404 = vpack.c.b16 %v3328, %v3326
    %v3405 = vpack.c.b16 %v3331, %v3329
    %v3406 = vpack.c.b16 %v3332, %v3330
    %v3407 = vpack.c.b16 %v3335, %v3333
    %v3408 = vpack.c.b16 %v3336, %v3334
    %v3409 = vpack.c.b16 %v3339, %v3337
    %v3410 = vpack.c.b16 %v3340, %v3338
    %v3411 = vpack.c.b16 %v3343, %v3341
    %v3412 = vpack.c.b16 %v3344, %v3342
    %v3413 = vpack.c.b16 %v3347, %v3345
    %v3414 = vpack.c.b16 %v3348, %v3346
    %v3415 = vpack.c.b16 %v3351, %v3349
    %v3416 = vpack.c.b16 %v3352, %v3350
    %v3417 = vpack.c.b16 %v3355, %v3353
    %v3418 = vpack.c.b16 %v3356, %v3354
    %v3419 = vpack.c.b16 %v3359, %v3357
    %v3420 = vpack.c.b16 %v3360, %v3358
    %v3421 = vpack.c.b16 %v3363, %v3361
    %v3422 = vpack.c.b16 %v3364, %v3362
    %v3423 = vpack.c.b16 %v3367, %v3365
    %v3424 = vpack.c.b16 %v3368, %v3366
    %v3425 = vpack.c.b16 %v3371, %v3369
    %v3426 = vpack.c.b16 %v3372, %v3370
    %v3427 = vpack.c.b16 %v3375, %v3373
    %v3428 = vpack.c.b16 %v3376, %v3374
    %v3429 = vpack.c.b16 %v3379, %v3377
    %v3430 = vpack.c.b16 %v3380, %v3378
    %v3431 = vpack.c.b16 %v3383, %v3381
    %v3432 = vpack.c.b16 %v3384, %v3382
    %3481 = vmatpush.bf16.msra.mxu0 %v3399
    %3482 = vmatpush.bf16.msra.mxu0 %v3397
    %3483 = vmatpush.bf16.msra.mxu0 %v3395
    %3484 = vmatpush.bf16.msra.mxu0 %v3393
    %3485 = vmatpush.bf16.msra.mxu0 %v3391
    %3486 = vmatpush.bf16.msra.mxu0 %v3389
    %3487 = vmatpush.bf16.msra.mxu0 %v3387
    %3488 = vmatpush.bf16.msra.mxu0 %v3385
    %3489 = vmatmul.bf16.gmra.mxu0 %v3235
    %v3490 = vpop.f32.mrf.mxu0
    %v3491 = vadd.f32 %v3226, %v3490
    %v3492 = vpop.f32.mrf.mxu0
    %3493 = vdwg.mxu0
    %3494 = vmatpush.bf16.msra.mxu0 %v3415
    %3495 = vmatpush.bf16.msra.mxu0 %v3413
    %3496 = vmatpush.bf16.msra.mxu0 %v3411
    %3497 = vmatpush.bf16.msra.mxu0 %v3409
    %3498 = vmatpush.bf16.msra.mxu0 %v3407
    %3499 = vmatpush.bf16.msra.mxu0 %v3405
    %3500 = vmatpush.bf16.msra.mxu0 %v3403
    %3501 = vmatpush.bf16.msra.mxu0 %v3401
    %3502 = vmatmul.bf16.gmra.mxu0 %v3236
    %v3503 = vpop.f32.mrf.mxu0
    %v3504 = vadd.f32 %v3491, %v3503
    %v3505 = vpop.f32.mrf.mxu0
    %3506 = vdwg.mxu0
    %3507 = vmatpush.bf16.msra.mxu0 %v3431
    %3508 = vmatpush.bf16.msra.mxu0 %v3429
    %3509 = vmatpush.bf16.msra.mxu0 %v3427
    %3510 = vmatpush.bf16.msra.mxu0 %v3425
    %3511 = vmatpush.bf16.msra.mxu0 %v3423
    %3512 = vmatpush.bf16.msra.mxu0 %v3421
    %3513 = vmatpush.bf16.msra.mxu0 %v3419
    %3514 = vmatpush.bf16.msra.mxu0 %v3417
    %3515 = vmatmul.bf16.gmra.mxu0 %v3237
    %v3516 = vpop.f32.mrf.mxu0
    %v3517 = vadd.f32 %v3504, %v3516
    %v3518 = vpop.f32.mrf.mxu0
    %3519 = vdwg.mxu0
    %3520 = vmatpush.bf16.msra.mxu0 %v3400
    %3521 = vmatpush.bf16.msra.mxu0 %v3398
    %3522 = vmatpush.bf16.msra.mxu0 %v3396
    %3523 = vmatpush.bf16.msra.mxu0 %v3394
    %3524 = vmatpush.bf16.msra.mxu0 %v3392
    %3525 = vmatpush.bf16.msra.mxu0 %v3390
    %3526 = vmatpush.bf16.msra.mxu0 %v3388
    %3527 = vmatpush.bf16.msra.mxu0 %v3386
    %3528 = vmatmul.bf16.gmra.mxu0 %v3235
    %v3529 = vpop.f32.mrf.mxu0
    %v3530 = vadd.f32 %v3227, %v3529
    %v3531 = vpop.f32.mrf.mxu0
    %3532 = vdwg.mxu0
    %3533 = vmatpush.bf16.msra.mxu0 %v3416
    %3534 = vmatpush.bf16.msra.mxu0 %v3414
    %3535 = vmatpush.bf16.msra.mxu0 %v3412
    %3536 = vmatpush.bf16.msra.mxu0 %v3410
    %3537 = vmatpush.bf16.msra.mxu0 %v3408
    %3538 = vmatpush.bf16.msra.mxu0 %v3406
    %3539 = vmatpush.bf16.msra.mxu0 %v3404
    %3540 = vmatpush.bf16.msra.mxu0 %v3402
    %3541 = vmatmul.bf16.gmra.mxu0 %v3236
    %v3542 = vpop.f32.mrf.mxu0
    %v3543 = vadd.f32 %v3530, %v3542
    %v3544 = vpop.f32.mrf.mxu0
    %3545 = vdwg.mxu0
    %3546 = vmatpush.bf16.msra.mxu0 %v3432
    %3547 = vmatpush.bf16.msra.mxu0 %v3430
    %3548 = vmatpush.bf16.msra.mxu0 %v3428
    %3549 = vmatpush.bf16.msra.mxu0 %v3426
    %3550 = vmatpush.bf16.msra.mxu0 %v3424
    %3551 = vmatpush.bf16.msra.mxu0 %v3422
    %3552 = vmatpush.bf16.msra.mxu0 %v3420
    %3553 = vmatpush.bf16.msra.mxu0 %v3418
    %3554 = vmatmul.bf16.gmra.mxu0 %v3237
    %v3555 = vpop.f32.mrf.mxu0
    %v3556 = vadd.f32 %v3543, %v3555
    %v3557 = vpop.f32.mrf.mxu0
    %3558 = vdwg.mxu0
    %v3559 = vmax.f32 %v3517, 0.0
    %v3560 = vmax.f32 %v3556, 0.0
    %v3561 = vpack.c.bf16 %v3560, %v3559
    %3562 = vst [vmem:[#allocation2 + $0x50] sm:$0xff] %v3561
    %v3563 = vld [vmem:[%s0 + $0x24] sm:$0xff]
    %v3564 = vld [vmem:[%s0 + $0x2c] sm:$0xf]
    %v3565 = vld [vmem:[%s3] sm:$0xff]
    %v3566 = vld [vmem:[%s3 + $0x8] sm:$0xff]
    %v3567 = vld [vmem:[%s3 + $0x10] sm:$0xff]
    %v3568 = vld [vmem:[%s3 + $0x18] sm:$0xff]
    %v3569 = vld [vmem:[%s3 + $0x20] sm:$0xff]
    %v3570 = vld [vmem:[%s3 + $0x28] sm:$0xff]
    %v3571 = vld [vmem:[%s3 + $0x30] sm:$0xff]
    %v3572 = vld [vmem:[%s3 + $0x38] sm:$0xff]
    %v3573 = vld [vmem:[%s3 + $0x40] sm:$0xff]
    %v3574 = vld [vmem:[%s3 + $0x48] sm:$0xff]
    %v3575 = vld [vmem:[%s3 + $0x50] sm:$0xff]
    %v3576 = vld [vmem:[%s3 + $0x58] sm:$0xff]
    %v3577 = vld [vmem:[%s3 + $0x60] sm:$0xff]
    %v3578 = vld [vmem:[%s3 + $0x68] sm:$0xff]
    %v3579 = vld [vmem:[%s3 + $0x70] sm:$0xff]
    %v3580 = vld [vmem:[%s3 + $0x78] sm:$0xff]
    %v3581 = vld [vmem:[%s3 + $0x80] sm:$0xff]
    %v3582 = vld [vmem:[%s3 + $0x88] sm:$0xff]
    %v3583 = vld [vmem:[%s3 + $0x90] sm:$0xff]
    %v3584 = vld [vmem:[%s3 + $0x98] sm:$0xff]
    %v3585 = vld [vmem:[%s3 + $0xa0] sm:$0xff]
    %v3586 = vld [vmem:[%s3 + $0xa8] sm:$0xff]
    %v3587 = vld [vmem:[%s3 + $0xb0] sm:$0xff]
    %v3588 = vld [vmem:[%s3 + $0xb8] sm:$0xff]
    %v3589 = vld [vmem:[%s3 + $0xc0] sm:$0xff]
    %v3590 = vld [vmem:[%s3 + $0xc8] sm:$0xff]
    %v3591 = vld [vmem:[%s3 + $0xd0] sm:$0xff]
    %v3592 = vld [vmem:[%s3 + $0xd8] sm:$0xff]
    %v3593 = vld [vmem:[%s3 + $0xe0] sm:$0xff]
    %v3594 = vld [vmem:[%s3 + $0xe8] sm:$0xff]
    %v3595 = vld [vmem:[%s3 + $0xf0] sm:$0xff]
    %v3596 = vld [vmem:[%s3 + $0xf8] sm:$0xff]
    %v3597 = vld [vmem:[%s3 + $0x100] sm:$0xff]
    %v3598 = vld [vmem:[%s3 + $0x108] sm:$0xff]
    %v3599 = vld [vmem:[%s3 + $0x110] sm:$0xff]
    %v3600 = vld [vmem:[%s3 + $0x118] sm:$0xff]
    %v3601 = vld [vmem:[%s3 + $0x120] sm:$0xff]
    %v3602 = vld [vmem:[%s3 + $0x128] sm:$0xff]
    %v3603 = vld [vmem:[%s3 + $0x130] sm:$0xff]
    %v3604 = vld [vmem:[%s3 + $0x138] sm:$0xff]
    %v3605 = vld [vmem:[%s3 + $0x140] sm:$0xff]
    %v3606 = vld [vmem:[%s3 + $0x148] sm:$0xff]
    %v3607 = vld [vmem:[%s3 + $0x150] sm:$0xff]
    %v3608 = vld [vmem:[%s3 + $0x158] sm:$0xff]
    %v3609 = vld [vmem:[%s3 + $0x160] sm:$0xff]
    %v3610 = vld [vmem:[%s3 + $0x168] sm:$0xff]
    %v3611 = vld [vmem:[%s3 + $0x170] sm:$0xff]
    %v3612 = vld [vmem:[%s3 + $0x178] sm:$0xff]
    %v3613 = vld [vmem:[%s4] sm:$0x3]
    %v3615 = vperm.slane %v3613, 0
    %v3616 = vperm.slane %v3613, 1
    %v3621 = vunpack.c.l.b16 %v3563
    %v3622 = vunpack.c.h.b16 %v3563
    %v3623 = vunpack.c.l.b16 %v3564
    %v3624 = vpack.c.b16 %v3621, %v3621
    %v3625 = vpack.c.b16 %v3622, %v3622
    %v3626 = vpack.c.b16 %v3623, %v3623
    %v3678 = vunpack.c.l.b16 %v3565
    %v3679 = vunpack.c.h.b16 %v3565
    %v3680 = vunpack.c.l.b16 %v3566
    %v3681 = vunpack.c.h.b16 %v3566
    %v3682 = vunpack.c.l.b16 %v3567
    %v3683 = vunpack.c.h.b16 %v3567
    %v3684 = vunpack.c.l.b16 %v3568
    %v3685 = vunpack.c.h.b16 %v3568
    %v3686 = vunpack.c.l.b16 %v3569
    %v3687 = vunpack.c.h.b16 %v3569
    %v3688 = vunpack.c.l.b16 %v3570
    %v3689 = vunpack.c.h.b16 %v3570
    %v3690 = vunpack.c.l.b16 %v3571
    %v3691 = vunpack.c.h.b16 %v3571
    %v3692 = vunpack.c.l.b16 %v3572
    %v3693 = vunpack.c.h.b16 %v3572
    %v3694 = vunpack.c.l.b16 %v3573
    %v3695 = vunpack.c.h.b16 %v3573
    %v3696 = vunpack.c.l.b16 %v3574
    %v3697 = vunpack.c.h.b16 %v3574
    %v3698 = vunpack.c.l.b16 %v3575
    %v3699 = vunpack.c.h.b16 %v3575
    %v3700 = vunpack.c.l.b16 %v3576
    %v3701 = vunpack.c.h.b16 %v3576
    %v3702 = vunpack.c.l.b16 %v3577
    %v3703 = vunpack.c.h.b16 %v3577
    %v3704 = vunpack.c.l.b16 %v3578
    %v3705 = vunpack.c.h.b16 %v3578
    %v3706 = vunpack.c.l.b16 %v3579
    %v3707 = vunpack.c.h.b16 %v3579
    %v3708 = vunpack.c.l.b16 %v3580
    %v3709 = vunpack.c.h.b16 %v3580
    %v3710 = vunpack.c.l.b16 %v3581
    %v3711 = vunpack.c.h.b16 %v3581
    %v3712 = vunpack.c.l.b16 %v3582
    %v3713 = vunpack.c.h.b16 %v3582
    %v3714 = vunpack.c.l.b16 %v3583
    %v3715 = vunpack.c.h.b16 %v3583
    %v3716 = vunpack.c.l.b16 %v3584
    %v3717 = vunpack.c.h.b16 %v3584
    %v3718 = vunpack.c.l.b16 %v3585
    %v3719 = vunpack.c.h.b16 %v3585
    %v3720 = vunpack.c.l.b16 %v3586
    %v3721 = vunpack.c.h.b16 %v3586
    %v3722 = vunpack.c.l.b16 %v3587
    %v3723 = vunpack.c.h.b16 %v3587
    %v3724 = vunpack.c.l.b16 %v3588
    %v3725 = vunpack.c.h.b16 %v3588
    %v3726 = vunpack.c.l.b16 %v3589
    %v3727 = vunpack.c.h.b16 %v3589
    %v3728 = vunpack.c.l.b16 %v3590
    %v3729 = vunpack.c.h.b16 %v3590
    %v3730 = vunpack.c.l.b16 %v3591
    %v3731 = vunpack.c.h.b16 %v3591
    %v3732 = vunpack.c.l.b16 %v3592
    %v3733 = vunpack.c.h.b16 %v3592
    %v3734 = vunpack.c.l.b16 %v3593
    %v3735 = vunpack.c.h.b16 %v3593
    %v3736 = vunpack.c.l.b16 %v3594
    %v3737 = vunpack.c.h.b16 %v3594
    %v3738 = vunpack.c.l.b16 %v3595
    %v3739 = vunpack.c.h.b16 %v3595
    %v3740 = vunpack.c.l.b16 %v3596
    %v3741 = vunpack.c.h.b16 %v3596
    %v3742 = vunpack.c.l.b16 %v3597
    %v3743 = vunpack.c.h.b16 %v3597
    %v3744 = vunpack.c.l.b16 %v3598
    %v3745 = vunpack.c.h.b16 %v3598
    %v3746 = vunpack.c.l.b16 %v3599
    %v3747 = vunpack.c.h.b16 %v3599
    %v3748 = vunpack.c.l.b16 %v3600
    %v3749 = vunpack.c.h.b16 %v3600
    %v3750 = vunpack.c.l.b16 %v3601
    %v3751 = vunpack.c.h.b16 %v3601
    %v3752 = vunpack.c.l.b16 %v3602
    %v3753 = vunpack.c.h.b16 %v3602
    %v3754 = vunpack.c.l.b16 %v3603
    %v3755 = vunpack.c.h.b16 %v3603
    %v3756 = vunpack.c.l.b16 %v3604
    %v3757 = vunpack.c.h.b16 %v3604
    %v3758 = vunpack.c.l.b16 %v3605
    %v3759 = vunpack.c.h.b16 %v3605
    %v3760 = vunpack.c.l.b16 %v3606
    %v3761 = vunpack.c.h.b16 %v3606
    %v3762 = vunpack.c.l.b16 %v3607
    %v3763 = vunpack.c.h.b16 %v3607
    %v3764 = vunpack.c.l.b16 %v3608
    %v3765 = vunpack.c.h.b16 %v3608
    %v3766 = vunpack.c.l.b16 %v3609
    %v3767 = vunpack.c.h.b16 %v3609
    %v3768 = vunpack.c.l.b16 %v3610
    %v3769 = vunpack.c.h.b16 %v3610
    %v3770 = vunpack.c.l.b16 %v3611
    %v3771 = vunpack.c.h.b16 %v3611
    %v3772 = vunpack.c.l.b16 %v3612
    %v3773 = vunpack.c.h.b16 %v3612
    %v3774 = vpack.c.b16 %v3680, %v3678
    %v3775 = vpack.c.b16 %v3681, %v3679
    %v3776 = vpack.c.b16 %v3684, %v3682
    %v3777 = vpack.c.b16 %v3685, %v3683
    %v3778 = vpack.c.b16 %v3688, %v3686
    %v3779 = vpack.c.b16 %v3689, %v3687
    %v3780 = vpack.c.b16 %v3692, %v3690
    %v3781 = vpack.c.b16 %v3693, %v3691
    %v3782 = vpack.c.b16 %v3696, %v3694
    %v3783 = vpack.c.b16 %v3697, %v3695
    %v3784 = vpack.c.b16 %v3700, %v3698
    %v3785 = vpack.c.b16 %v3701, %v3699
    %v3786 = vpack.c.b16 %v3704, %v3702
    %v3787 = vpack.c.b16 %v3705, %v3703
    %v3788 = vpack.c.b16 %v3708, %v3706
    %v3789 = vpack.c.b16 %v3709, %v3707
    %v3790 = vpack.c.b16 %v3712, %v3710
    %v3791 = vpack.c.b16 %v3713, %v3711
    %v3792 = vpack.c.b16 %v3716, %v3714
    %v3793 = vpack.c.b16 %v3717, %v3715
    %v3794 = vpack.c.b16 %v3720, %v3718
    %v3795 = vpack.c.b16 %v3721, %v3719
    %v3796 = vpack.c.b16 %v3724, %v3722
    %v3797 = vpack.c.b16 %v3725, %v3723
    %v3798 = vpack.c.b16 %v3728, %v3726
    %v3799 = vpack.c.b16 %v3729, %v3727
    %v3800 = vpack.c.b16 %v3732, %v3730
    %v3801 = vpack.c.b16 %v3733, %v3731
    %v3802 = vpack.c.b16 %v3736, %v3734
    %v3803 = vpack.c.b16 %v3737, %v3735
    %v3804 = vpack.c.b16 %v3740, %v3738
    %v3805 = vpack.c.b16 %v3741, %v3739
    %v3806 = vpack.c.b16 %v3744, %v3742
    %v3807 = vpack.c.b16 %v3745, %v3743
    %v3808 = vpack.c.b16 %v3748, %v3746
    %v3809 = vpack.c.b16 %v3749, %v3747
    %v3810 = vpack.c.b16 %v3752, %v3750
    %v3811 = vpack.c.b16 %v3753, %v3751
    %v3812 = vpack.c.b16 %v3756, %v3754
    %v3813 = vpack.c.b16 %v3757, %v3755
    %v3814 = vpack.c.b16 %v3760, %v3758
    %v3815 = vpack.c.b16 %v3761, %v3759
    %v3816 = vpack.c.b16 %v3764, %v3762
    %v3817 = vpack.c.b16 %v3765, %v3763
    %v3818 = vpack.c.b16 %v3768, %v3766
    %v3819 = vpack.c.b16 %v3769, %v3767
    %v3820 = vpack.c.b16 %v3772, %v3770
    %v3821 = vpack.c.b16 %v3773, %v3771
    %3870 = vmatpush.bf16.msra.mxu0 %v3788
    %3871 = vmatpush.bf16.msra.mxu0 %v3786
    %3872 = vmatpush.bf16.msra.mxu0 %v3784
    %3873 = vmatpush.bf16.msra.mxu0 %v3782
    %3874 = vmatpush.bf16.msra.mxu0 %v3780
    %3875 = vmatpush.bf16.msra.mxu0 %v3778
    %3876 = vmatpush.bf16.msra.mxu0 %v3776
    %3877 = vmatpush.bf16.msra.mxu0 %v3774
    %3878 = vmatmul.bf16.gmra.mxu0 %v3624
    %v3879 = vpop.f32.mrf.mxu0
    %v3880 = vadd.f32 %v3615, %v3879
    %v3881 = vpop.f32.mrf.mxu0
    %3882 = vdwg.mxu0
    %3883 = vmatpush.bf16.msra.mxu0 %v3804
    %3884 = vmatpush.bf16.msra.mxu0 %v3802
    %3885 = vmatpush.bf16.msra.mxu0 %v3800
    %3886 = vmatpush.bf16.msra.mxu0 %v3798
    %3887 = vmatpush.bf16.msra.mxu0 %v3796
    %3888 = vmatpush.bf16.msra.mxu0 %v3794
    %3889 = vmatpush.bf16.msra.mxu0 %v3792
    %3890 = vmatpush.bf16.msra.mxu0 %v3790
    %3891 = vmatmul.bf16.gmra.mxu0 %v3625
    %v3892 = vpop.f32.mrf.mxu0
    %v3893 = vadd.f32 %v3880, %v3892
    %v3894 = vpop.f32.mrf.mxu0
    %3895 = vdwg.mxu0
    %3896 = vmatpush.bf16.msra.mxu0 %v3820
    %3897 = vmatpush.bf16.msra.mxu0 %v3818
    %3898 = vmatpush.bf16.msra.mxu0 %v3816
    %3899 = vmatpush.bf16.msra.mxu0 %v3814
    %3900 = vmatpush.bf16.msra.mxu0 %v3812
    %3901 = vmatpush.bf16.msra.mxu0 %v3810
    %3902 = vmatpush.bf16.msra.mxu0 %v3808
    %3903 = vmatpush.bf16.msra.mxu0 %v3806
    %3904 = vmatmul.bf16.gmra.mxu0 %v3626
    %v3905 = vpop.f32.mrf.mxu0
    %v3906 = vadd.f32 %v3893, %v3905
    %v3907 = vpop.f32.mrf.mxu0
    %3908 = vdwg.mxu0
    %3909 = vmatpush.bf16.msra.mxu0 %v3789
    %3910 = vmatpush.bf16.msra.mxu0 %v3787
    %3911 = vmatpush.bf16.msra.mxu0 %v3785
    %3912 = vmatpush.bf16.msra.mxu0 %v3783
    %3913 = vmatpush.bf16.msra.mxu0 %v3781
    %3914 = vmatpush.bf16.msra.mxu0 %v3779
    %3915 = vmatpush.bf16.msra.mxu0 %v3777
    %3916 = vmatpush.bf16.msra.mxu0 %v3775
    %3917 = vmatmul.bf16.gmra.mxu0 %v3624
    %v3918 = vpop.f32.mrf.mxu0
    %v3919 = vadd.f32 %v3616, %v3918
    %v3920 = vpop.f32.mrf.mxu0
    %3921 = vdwg.mxu0
    %3922 = vmatpush.bf16.msra.mxu0 %v3805
    %3923 = vmatpush.bf16.msra.mxu0 %v3803
    %3924 = vmatpush.bf16.msra.mxu0 %v3801
    %3925 = vmatpush.bf16.msra.mxu0 %v3799
    %3926 = vmatpush.bf16.msra.mxu0 %v3797
    %3927 = vmatpush.bf16.msra.mxu0 %v3795
    %3928 = vmatpush.bf16.msra.mxu0 %v3793
    %3929 = vmatpush.bf16.msra.mxu0 %v3791
    %3930 = vmatmul.bf16.gmra.mxu0 %v3625
    %v3931 = vpop.f32.mrf.mxu0
    %v3932 = vadd.f32 %v3919, %v3931
    %v3933 = vpop.f32.mrf.mxu0
    %3934 = vdwg.mxu0
    %3935 = vmatpush.bf16.msra.mxu0 %v3821
    %3936 = vmatpush.bf16.msra.mxu0 %v3819
    %3937 = vmatpush.bf16.msra.mxu0 %v3817
    %3938 = vmatpush.bf16.msra.mxu0 %v3815
    %3939 = vmatpush.bf16.msra.mxu0 %v3813
    %3940 = vmatpush.bf16.msra.mxu0 %v3811
    %3941 = vmatpush.bf16.msra.mxu0 %v3809
    %3942 = vmatpush.bf16.msra.mxu0 %v3807
    %3943 = vmatmul.bf16.gmra.mxu0 %v3626
    %v3944 = vpop.f32.mrf.mxu0
    %v3945 = vadd.f32 %v3932, %v3944
    %v3946 = vpop.f32.mrf.mxu0
    %3947 = vdwg.mxu0
    %v3948 = vmax.f32 %v3906, 0.0
    %v3949 = vmax.f32 %v3945, 0.0
    %v3950 = vpack.c.bf16 %v3949, %v3948
    %3951 = vst [vmem:[#allocation2 + $0x58] sm:$0xff] %v3950
    %v3952 = vld [vmem:[%s0 + $0x28] sm:$0xff]
    %v3953 = vld [vmem:[%s0 + $0x30] sm:$0xf]
    %v3954 = vld [vmem:[%s3] sm:$0xff]
    %v3955 = vld [vmem:[%s3 + $0x8] sm:$0xff]
    %v3956 = vld [vmem:[%s3 + $0x10] sm:$0xff]
    %v3957 = vld [vmem:[%s3 + $0x18] sm:$0xff]
    %v3958 = vld [vmem:[%s3 + $0x20] sm:$0xff]
    %v3959 = vld [vmem:[%s3 + $0x28] sm:$0xff]
    %v3960 = vld [vmem:[%s3 + $0x30] sm:$0xff]
    %v3961 = vld [vmem:[%s3 + $0x38] sm:$0xff]
    %v3962 = vld [vmem:[%s3 + $0x40] sm:$0xff]
    %v3963 = vld [vmem:[%s3 + $0x48] sm:$0xff]
    %v3964 = vld [vmem:[%s3 + $0x50] sm:$0xff]
    %v3965 = vld [vmem:[%s3 + $0x58] sm:$0xff]
    %v3966 = vld [vmem:[%s3 + $0x60] sm:$0xff]
    %v3967 = vld [vmem:[%s3 + $0x68] sm:$0xff]
    %v3968 = vld [vmem:[%s3 + $0x70] sm:$0xff]
    %v3969 = vld [vmem:[%s3 + $0x78] sm:$0xff]
    %v3970 = vld [vmem:[%s3 + $0x80] sm:$0xff]
    %v3971 = vld [vmem:[%s3 + $0x88] sm:$0xff]
    %v3972 = vld [vmem:[%s3 + $0x90] sm:$0xff]
    %v3973 = vld [vmem:[%s3 + $0x98] sm:$0xff]
    %v3974 = vld [vmem:[%s3 + $0xa0] sm:$0xff]
    %v3975 = vld [vmem:[%s3 + $0xa8] sm:$0xff]
    %v3976 = vld [vmem:[%s3 + $0xb0] sm:$0xff]
    %v3977 = vld [vmem:[%s3 + $0xb8] sm:$0xff]
    %v3978 = vld [vmem:[%s3 + $0xc0] sm:$0xff]
    %v3979 = vld [vmem:[%s3 + $0xc8] sm:$0xff]
    %v3980 = vld [vmem:[%s3 + $0xd0] sm:$0xff]
    %v3981 = vld [vmem:[%s3 + $0xd8] sm:$0xff]
    %v3982 = vld [vmem:[%s3 + $0xe0] sm:$0xff]
    %v3983 = vld [vmem:[%s3 + $0xe8] sm:$0xff]
    %v3984 = vld [vmem:[%s3 + $0xf0] sm:$0xff]
    %v3985 = vld [vmem:[%s3 + $0xf8] sm:$0xff]
    %v3986 = vld [vmem:[%s3 + $0x100] sm:$0xff]
    %v3987 = vld [vmem:[%s3 + $0x108] sm:$0xff]
    %v3988 = vld [vmem:[%s3 + $0x110] sm:$0xff]
    %v3989 = vld [vmem:[%s3 + $0x118] sm:$0xff]
    %v3990 = vld [vmem:[%s3 + $0x120] sm:$0xff]
    %v3991 = vld [vmem:[%s3 + $0x128] sm:$0xff]
    %v3992 = vld [vmem:[%s3 + $0x130] sm:$0xff]
    %v3993 = vld [vmem:[%s3 + $0x138] sm:$0xff]
    %v3994 = vld [vmem:[%s3 + $0x140] sm:$0xff]
    %v3995 = vld [vmem:[%s3 + $0x148] sm:$0xff]
    %v3996 = vld [vmem:[%s3 + $0x150] sm:$0xff]
    %v3997 = vld [vmem:[%s3 + $0x158] sm:$0xff]
    %v3998 = vld [vmem:[%s3 + $0x160] sm:$0xff]
    %v3999 = vld [vmem:[%s3 + $0x168] sm:$0xff]
    %v4000 = vld [vmem:[%s3 + $0x170] sm:$0xff]
    %v4001 = vld [vmem:[%s3 + $0x178] sm:$0xff]
    %v4002 = vld [vmem:[%s4] sm:$0x3]
    %v4004 = vperm.slane %v4002, 0
    %v4005 = vperm.slane %v4002, 1
    %v4010 = vunpack.c.l.b16 %v3952
    %v4011 = vunpack.c.h.b16 %v3952
    %v4012 = vunpack.c.l.b16 %v3953
    %v4013 = vpack.c.b16 %v4010, %v4010
    %v4014 = vpack.c.b16 %v4011, %v4011
    %v4015 = vpack.c.b16 %v4012, %v4012
    %v4067 = vunpack.c.l.b16 %v3954
    %v4068 = vunpack.c.h.b16 %v3954
    %v4069 = vunpack.c.l.b16 %v3955
    %v4070 = vunpack.c.h.b16 %v3955
    %v4071 = vunpack.c.l.b16 %v3956
    %v4072 = vunpack.c.h.b16 %v3956
    %v4073 = vunpack.c.l.b16 %v3957
    %v4074 = vunpack.c.h.b16 %v3957
    %v4075 = vunpack.c.l.b16 %v3958
    %v4076 = vunpack.c.h.b16 %v3958
    %v4077 = vunpack.c.l.b16 %v3959
    %v4078 = vunpack.c.h.b16 %v3959
    %v4079 = vunpack.c.l.b16 %v3960
    %v4080 = vunpack.c.h.b16 %v3960
    %v4081 = vunpack.c.l.b16 %v3961
    %v4082 = vunpack.c.h.b16 %v3961
    %v4083 = vunpack.c.l.b16 %v3962
    %v4084 = vunpack.c.h.b16 %v3962
    %v4085 = vunpack.c.l.b16 %v3963
    %v4086 = vunpack.c.h.b16 %v3963
    %v4087 = vunpack.c.l.b16 %v3964
    %v4088 = vunpack.c.h.b16 %v3964
    %v4089 = vunpack.c.l.b16 %v3965
    %v4090 = vunpack.c.h.b16 %v3965
    %v4091 = vunpack.c.l.b16 %v3966
    %v4092 = vunpack.c.h.b16 %v3966
    %v4093 = vunpack.c.l.b16 %v3967
    %v4094 = vunpack.c.h.b16 %v3967
    %v4095 = vunpack.c.l.b16 %v3968
    %v4096 = vunpack.c.h.b16 %v3968
    %v4097 = vunpack.c.l.b16 %v3969
    %v4098 = vunpack.c.h.b16 %v3969
    %v4099 = vunpack.c.l.b16 %v3970
    %v4100 = vunpack.c.h.b16 %v3970
    %v4101 = vunpack.c.l.b16 %v3971
    %v4102 = vunpack.c.h.b16 %v3971
    %v4103 = vunpack.c.l.b16 %v3972
    %v4104 = vunpack.c.h.b16 %v3972
    %v4105 = vunpack.c.l.b16 %v3973
    %v4106 = vunpack.c.h.b16 %v3973
    %v4107 = vunpack.c.l.b16 %v3974
    %v4108 = vunpack.c.h.b16 %v3974
    %v4109 = vunpack.c.l.b16 %v3975
    %v4110 = vunpack.c.h.b16 %v3975
    %v4111 = vunpack.c.l.b16 %v3976
    %v4112 = vunpack.c.h.b16 %v3976
    %v4113 = vunpack.c.l.b16 %v3977
    %v4114 = vunpack.c.h.b16 %v3977
    %v4115 = vunpack.c.l.b16 %v3978
    %v4116 = vunpack.c.h.b16 %v3978
    %v4117 = vunpack.c.l.b16 %v3979
    %v4118 = vunpack.c.h.b16 %v3979
    %v4119 = vunpack.c.l.b16 %v3980
    %v4120 = vunpack.c.h.b16 %v3980
    %v4121 = vunpack.c.l.b16 %v3981
    %v4122 = vunpack.c.h.b16 %v3981
    %v4123 = vunpack.c.l.b16 %v3982
    %v4124 = vunpack.c.h.b16 %v3982
    %v4125 = vunpack.c.l.b16 %v3983
    %v4126 = vunpack.c.h.b16 %v3983
    %v4127 = vunpack.c.l.b16 %v3984
    %v4128 = vunpack.c.h.b16 %v3984
    %v4129 = vunpack.c.l.b16 %v3985
    %v4130 = vunpack.c.h.b16 %v3985
    %v4131 = vunpack.c.l.b16 %v3986
    %v4132 = vunpack.c.h.b16 %v3986
    %v4133 = vunpack.c.l.b16 %v3987
    %v4134 = vunpack.c.h.b16 %v3987
    %v4135 = vunpack.c.l.b16 %v3988
    %v4136 = vunpack.c.h.b16 %v3988
    %v4137 = vunpack.c.l.b16 %v3989
    %v4138 = vunpack.c.h.b16 %v3989
    %v4139 = vunpack.c.l.b16 %v3990
    %v4140 = vunpack.c.h.b16 %v3990
    %v4141 = vunpack.c.l.b16 %v3991
    %v4142 = vunpack.c.h.b16 %v3991
    %v4143 = vunpack.c.l.b16 %v3992
    %v4144 = vunpack.c.h.b16 %v3992
    %v4145 = vunpack.c.l.b16 %v3993
    %v4146 = vunpack.c.h.b16 %v3993
    %v4147 = vunpack.c.l.b16 %v3994
    %v4148 = vunpack.c.h.b16 %v3994
    %v4149 = vunpack.c.l.b16 %v3995
    %v4150 = vunpack.c.h.b16 %v3995
    %v4151 = vunpack.c.l.b16 %v3996
    %v4152 = vunpack.c.h.b16 %v3996
    %v4153 = vunpack.c.l.b16 %v3997
    %v4154 = vunpack.c.h.b16 %v3997
    %v4155 = vunpack.c.l.b16 %v3998
    %v4156 = vunpack.c.h.b16 %v3998
    %v4157 = vunpack.c.l.b16 %v3999
    %v4158 = vunpack.c.h.b16 %v3999
    %v4159 = vunpack.c.l.b16 %v4000
    %v4160 = vunpack.c.h.b16 %v4000
    %v4161 = vunpack.c.l.b16 %v4001
    %v4162 = vunpack.c.h.b16 %v4001
    %v4163 = vpack.c.b16 %v4069, %v4067
    %v4164 = vpack.c.b16 %v4070, %v4068
    %v4165 = vpack.c.b16 %v4073, %v4071
    %v4166 = vpack.c.b16 %v4074, %v4072
    %v4167 = vpack.c.b16 %v4077, %v4075
    %v4168 = vpack.c.b16 %v4078, %v4076
    %v4169 = vpack.c.b16 %v4081, %v4079
    %v4170 = vpack.c.b16 %v4082, %v4080
    %v4171 = vpack.c.b16 %v4085, %v4083
    %v4172 = vpack.c.b16 %v4086, %v4084
    %v4173 = vpack.c.b16 %v4089, %v4087
    %v4174 = vpack.c.b16 %v4090, %v4088
    %v4175 = vpack.c.b16 %v4093, %v4091
    %v4176 = vpack.c.b16 %v4094, %v4092
    %v4177 = vpack.c.b16 %v4097, %v4095
    %v4178 = vpack.c.b16 %v4098, %v4096
    %v4179 = vpack.c.b16 %v4101, %v4099
    %v4180 = vpack.c.b16 %v4102, %v4100
    %v4181 = vpack.c.b16 %v4105, %v4103
    %v4182 = vpack.c.b16 %v4106, %v4104
    %v4183 = vpack.c.b16 %v4109, %v4107
    %v4184 = vpack.c.b16 %v4110, %v4108
    %v4185 = vpack.c.b16 %v4113, %v4111
    %v4186 = vpack.c.b16 %v4114, %v4112
    %v4187 = vpack.c.b16 %v4117, %v4115
    %v4188 = vpack.c.b16 %v4118, %v4116
    %v4189 = vpack.c.b16 %v4121, %v4119
    %v4190 = vpack.c.b16 %v4122, %v4120
    %v4191 = vpack.c.b16 %v4125, %v4123
    %v4192 = vpack.c.b16 %v4126, %v4124
    %v4193 = vpack.c.b16 %v4129, %v4127
    %v4194 = vpack.c.b16 %v4130, %v4128
    %v4195 = vpack.c.b16 %v4133, %v4131
    %v4196 = vpack.c.b16 %v4134, %v4132
    %v4197 = vpack.c.b16 %v4137, %v4135
    %v4198 = vpack.c.b16 %v4138, %v4136
    %v4199 = vpack.c.b16 %v4141, %v4139
    %v4200 = vpack.c.b16 %v4142, %v4140
    %v4201 = vpack.c.b16 %v4145, %v4143
    %v4202 = vpack.c.b16 %v4146, %v4144
    %v4203 = vpack.c.b16 %v4149, %v4147
    %v4204 = vpack.c.b16 %v4150, %v4148
    %v4205 = vpack.c.b16 %v4153, %v4151
    %v4206 = vpack.c.b16 %v4154, %v4152
    %v4207 = vpack.c.b16 %v4157, %v4155
    %v4208 = vpack.c.b16 %v4158, %v4156
    %v4209 = vpack.c.b16 %v4161, %v4159
    %v4210 = vpack.c.b16 %v4162, %v4160
    %4259 = vmatpush.bf16.msra.mxu0 %v4177
    %4260 = vmatpush.bf16.msra.mxu0 %v4175
    %4261 = vmatpush.bf16.msra.mxu0 %v4173
    %4262 = vmatpush.bf16.msra.mxu0 %v4171
    %4263 = vmatpush.bf16.msra.mxu0 %v4169
    %4264 = vmatpush.bf16.msra.mxu0 %v4167
    %4265 = vmatpush.bf16.msra.mxu0 %v4165
    %4266 = vmatpush.bf16.msra.mxu0 %v4163
    %4267 = vmatmul.bf16.gmra.mxu0 %v4013
    %v4268 = vpop.f32.mrf.mxu0
    %v4269 = vadd.f32 %v4004, %v4268
    %v4270 = vpop.f32.mrf.mxu0
    %4271 = vdwg.mxu0
    %4272 = vmatpush.bf16.msra.mxu0 %v4193
    %4273 = vmatpush.bf16.msra.mxu0 %v4191
    %4274 = vmatpush.bf16.msra.mxu0 %v4189
    %4275 = vmatpush.bf16.msra.mxu0 %v4187
    %4276 = vmatpush.bf16.msra.mxu0 %v4185
    %4277 = vmatpush.bf16.msra.mxu0 %v4183
    %4278 = vmatpush.bf16.msra.mxu0 %v4181
    %4279 = vmatpush.bf16.msra.mxu0 %v4179
    %4280 = vmatmul.bf16.gmra.mxu0 %v4014
    %v4281 = vpop.f32.mrf.mxu0
    %v4282 = vadd.f32 %v4269, %v4281
    %v4283 = vpop.f32.mrf.mxu0
    %4284 = vdwg.mxu0
    %4285 = vmatpush.bf16.msra.mxu0 %v4209
    %4286 = vmatpush.bf16.msra.mxu0 %v4207
    %4287 = vmatpush.bf16.msra.mxu0 %v4205
    %4288 = vmatpush.bf16.msra.mxu0 %v4203
    %4289 = vmatpush.bf16.msra.mxu0 %v4201
    %4290 = vmatpush.bf16.msra.mxu0 %v4199
    %4291 = vmatpush.bf16.msra.mxu0 %v4197
    %4292 = vmatpush.bf16.msra.mxu0 %v4195
    %4293 = vmatmul.bf16.gmra.mxu0 %v4015
    %v4294 = vpop.f32.mrf.mxu0
    %v4295 = vadd.f32 %v4282, %v4294
    %v4296 = vpop.f32.mrf.mxu0
    %4297 = vdwg.mxu0
    %4298 = vmatpush.bf16.msra.mxu0 %v4178
    %4299 = vmatpush.bf16.msra.mxu0 %v4176
    %4300 = vmatpush.bf16.msra.mxu0 %v4174
    %4301 = vmatpush.bf16.msra.mxu0 %v4172
    %4302 = vmatpush.bf16.msra.mxu0 %v4170
    %4303 = vmatpush.bf16.msra.mxu0 %v4168
    %4304 = vmatpush.bf16.msra.mxu0 %v4166
    %4305 = vmatpush.bf16.msra.mxu0 %v4164
    %4306 = vmatmul.bf16.gmra.mxu0 %v4013
    %v4307 = vpop.f32.mrf.mxu0
    %v4308 = vadd.f32 %v4005, %v4307
    %v4309 = vpop.f32.mrf.mxu0
    %4310 = vdwg.mxu0
    %4311 = vmatpush.bf16.msra.mxu0 %v4194
    %4312 = vmatpush.bf16.msra.mxu0 %v4192
    %4313 = vmatpush.bf16.msra.mxu0 %v4190
    %4314 = vmatpush.bf16.msra.mxu0 %v4188
    %4315 = vmatpush.bf16.msra.mxu0 %v4186
    %4316 = vmatpush.bf16.msra.mxu0 %v4184
    %4317 = vmatpush.bf16.msra.mxu0 %v4182
    %4318 = vmatpush.bf16.msra.mxu0 %v4180
    %4319 = vmatmul.bf16.gmra.mxu0 %v4014
    %v4320 = vpop.f32.mrf.mxu0
    %v4321 = vadd.f32 %v4308, %v4320
    %v4322 = vpop.f32.mrf.mxu0
    %4323 = vdwg.mxu0
    %4324 = vmatpush.bf16.msra.mxu0 %v4210
    %4325 = vmatpush.bf16.msra.mxu0 %v4208
    %4326 = vmatpush.bf16.msra.mxu0 %v4206
    %4327 = vmatpush.bf16.msra.mxu0 %v4204
    %4328 = vmatpush.bf16.msra.mxu0 %v4202
    %4329 = vmatpush.bf16.msra.mxu0 %v4200
    %4330 = vmatpush.bf16.msra.mxu0 %v4198
    %4331 = vmatpush.bf16.msra.mxu0 %v4196
    %4332 = vmatmul.bf16.gmra.mxu0 %v4015
    %v4333 = vpop.f32.mrf.mxu0
    %v4334 = vadd.f32 %v4321, %v4333
    %v4335 = vpop.f32.mrf.mxu0
    %4336 = vdwg.mxu0
    %v4337 = vmax.f32 %v4295, 0.0
    %v4338 = vmax.f32 %v4334, 0.0
    %v4339 = vpack.c.bf16 %v4338, %v4337
    %4340 = vst [vmem:[#allocation2 + $0x60] sm:$0xff] %v4339
    %v4341 = vld [vmem:[%s0 + $0x2c] sm:$0xff]
    %v4342 = vld [vmem:[%s0 + $0x34] sm:$0xf]
    %v4343 = vld [vmem:[%s3] sm:$0xff]
    %v4344 = vld [vmem:[%s3 + $0x8] sm:$0xff]
    %v4345 = vld [vmem:[%s3 + $0x10] sm:$0xff]
    %v4346 = vld [vmem:[%s3 + $0x18] sm:$0xff]
    %v4347 = vld [vmem:[%s3 + $0x20] sm:$0xff]
    %v4348 = vld [vmem:[%s3 + $0x28] sm:$0xff]
    %v4349 = vld [vmem:[%s3 + $0x30] sm:$0xff]
    %v4350 = vld [vmem:[%s3 + $0x38] sm:$0xff]
    %v4351 = vld [vmem:[%s3 + $0x40] sm:$0xff]
    %v4352 = vld [vmem:[%s3 + $0x48] sm:$0xff]
    %v4353 = vld [vmem:[%s3 + $0x50] sm:$0xff]
    %v4354 = vld [vmem:[%s3 + $0x58] sm:$0xff]
    %v4355 = vld [vmem:[%s3 + $0x60] sm:$0xff]
    %v4356 = vld [vmem:[%s3 + $0x68] sm:$0xff]
    %v4357 = vld [vmem:[%s3 + $0x70] sm:$0xff]
    %v4358 = vld [vmem:[%s3 + $0x78] sm:$0xff]
    %v4359 = vld [vmem:[%s3 + $0x80] sm:$0xff]
    %v4360 = vld [vmem:[%s3 + $0x88] sm:$0xff]
    %v4361 = vld [vmem:[%s3 + $0x90] sm:$0xff]
    %v4362 = vld [vmem:[%s3 + $0x98] sm:$0xff]
    %v4363 = vld [vmem:[%s3 + $0xa0] sm:$0xff]
    %v4364 = vld [vmem:[%s3 + $0xa8] sm:$0xff]
    %v4365 = vld [vmem:[%s3 + $0xb0] sm:$0xff]
    %v4366 = vld [vmem:[%s3 + $0xb8] sm:$0xff]
    %v4367 = vld [vmem:[%s3 + $0xc0] sm:$0xff]
    %v4368 = vld [vmem:[%s3 + $0xc8] sm:$0xff]
    %v4369 = vld [vmem:[%s3 + $0xd0] sm:$0xff]
    %v4370 = vld [vmem:[%s3 + $0xd8] sm:$0xff]
    %v4371 = vld [vmem:[%s3 + $0xe0] sm:$0xff]
    %v4372 = vld [vmem:[%s3 + $0xe8] sm:$0xff]
    %v4373 = vld [vmem:[%s3 + $0xf0] sm:$0xff]
    %v4374 = vld [vmem:[%s3 + $0xf8] sm:$0xff]
    %v4375 = vld [vmem:[%s3 + $0x100] sm:$0xff]
    %v4376 = vld [vmem:[%s3 + $0x108] sm:$0xff]
    %v4377 = vld [vmem:[%s3 + $0x110] sm:$0xff]
    %v4378 = vld [vmem:[%s3 + $0x118] sm:$0xff]
    %v4379 = vld [vmem:[%s3 + $0x120] sm:$0xff]
    %v4380 = vld [vmem:[%s3 + $0x128] sm:$0xff]
    %v4381 = vld [vmem:[%s3 + $0x130] sm:$0xff]
    %v4382 = vld [vmem:[%s3 + $0x138] sm:$0xff]
    %v4383 = vld [vmem:[%s3 + $0x140] sm:$0xff]
    %v4384 = vld [vmem:[%s3 + $0x148] sm:$0xff]
    %v4385 = vld [vmem:[%s3 + $0x150] sm:$0xff]
    %v4386 = vld [vmem:[%s3 + $0x158] sm:$0xff]
    %v4387 = vld [vmem:[%s3 + $0x160] sm:$0xff]
    %v4388 = vld [vmem:[%s3 + $0x168] sm:$0xff]
    %v4389 = vld [vmem:[%s3 + $0x170] sm:$0xff]
    %v4390 = vld [vmem:[%s3 + $0x178] sm:$0xff]
    %v4391 = vld [vmem:[%s4] sm:$0x3]
    %v4393 = vperm.slane %v4391, 0
    %v4394 = vperm.slane %v4391, 1
    %v4399 = vunpack.c.l.b16 %v4341
    %v4400 = vunpack.c.h.b16 %v4341
    %v4401 = vunpack.c.l.b16 %v4342
    %v4402 = vpack.c.b16 %v4399, %v4399
    %v4403 = vpack.c.b16 %v4400, %v4400
    %v4404 = vpack.c.b16 %v4401, %v4401
    %v4456 = vunpack.c.l.b16 %v4343
    %v4457 = vunpack.c.h.b16 %v4343
    %v4458 = vunpack.c.l.b16 %v4344
    %v4459 = vunpack.c.h.b16 %v4344
    %v4460 = vunpack.c.l.b16 %v4345
    %v4461 = vunpack.c.h.b16 %v4345
    %v4462 = vunpack.c.l.b16 %v4346
    %v4463 = vunpack.c.h.b16 %v4346
    %v4464 = vunpack.c.l.b16 %v4347
    %v4465 = vunpack.c.h.b16 %v4347
    %v4466 = vunpack.c.l.b16 %v4348
    %v4467 = vunpack.c.h.b16 %v4348
    %v4468 = vunpack.c.l.b16 %v4349
    %v4469 = vunpack.c.h.b16 %v4349
    %v4470 = vunpack.c.l.b16 %v4350
    %v4471 = vunpack.c.h.b16 %v4350
    %v4472 = vunpack.c.l.b16 %v4351
    %v4473 = vunpack.c.h.b16 %v4351
    %v4474 = vunpack.c.l.b16 %v4352
    %v4475 = vunpack.c.h.b16 %v4352
    %v4476 = vunpack.c.l.b16 %v4353
    %v4477 = vunpack.c.h.b16 %v4353
    %v4478 = vunpack.c.l.b16 %v4354
    %v4479 = vunpack.c.h.b16 %v4354
    %v4480 = vunpack.c.l.b16 %v4355
    %v4481 = vunpack.c.h.b16 %v4355
    %v4482 = vunpack.c.l.b16 %v4356
    %v4483 = vunpack.c.h.b16 %v4356
    %v4484 = vunpack.c.l.b16 %v4357
    %v4485 = vunpack.c.h.b16 %v4357
    %v4486 = vunpack.c.l.b16 %v4358
    %v4487 = vunpack.c.h.b16 %v4358
    %v4488 = vunpack.c.l.b16 %v4359
    %v4489 = vunpack.c.h.b16 %v4359
    %v4490 = vunpack.c.l.b16 %v4360
    %v4491 = vunpack.c.h.b16 %v4360
    %v4492 = vunpack.c.l.b16 %v4361
    %v4493 = vunpack.c.h.b16 %v4361
    %v4494 = vunpack.c.l.b16 %v4362
    %v4495 = vunpack.c.h.b16 %v4362
    %v4496 = vunpack.c.l.b16 %v4363
    %v4497 = vunpack.c.h.b16 %v4363
    %v4498 = vunpack.c.l.b16 %v4364
    %v4499 = vunpack.c.h.b16 %v4364
    %v4500 = vunpack.c.l.b16 %v4365
    %v4501 = vunpack.c.h.b16 %v4365
    %v4502 = vunpack.c.l.b16 %v4366
    %v4503 = vunpack.c.h.b16 %v4366
    %v4504 = vunpack.c.l.b16 %v4367
    %v4505 = vunpack.c.h.b16 %v4367
    %v4506 = vunpack.c.l.b16 %v4368
    %v4507 = vunpack.c.h.b16 %v4368
    %v4508 = vunpack.c.l.b16 %v4369
    %v4509 = vunpack.c.h.b16 %v4369
    %v4510 = vunpack.c.l.b16 %v4370
    %v4511 = vunpack.c.h.b16 %v4370
    %v4512 = vunpack.c.l.b16 %v4371
    %v4513 = vunpack.c.h.b16 %v4371
    %v4514 = vunpack.c.l.b16 %v4372
    %v4515 = vunpack.c.h.b16 %v4372
    %v4516 = vunpack.c.l.b16 %v4373
    %v4517 = vunpack.c.h.b16 %v4373
    %v4518 = vunpack.c.l.b16 %v4374
    %v4519 = vunpack.c.h.b16 %v4374
    %v4520 = vunpack.c.l.b16 %v4375
    %v4521 = vunpack.c.h.b16 %v4375
    %v4522 = vunpack.c.l.b16 %v4376
    %v4523 = vunpack.c.h.b16 %v4376
    %v4524 = vunpack.c.l.b16 %v4377
    %v4525 = vunpack.c.h.b16 %v4377
    %v4526 = vunpack.c.l.b16 %v4378
    %v4527 = vunpack.c.h.b16 %v4378
    %v4528 = vunpack.c.l.b16 %v4379
    %v4529 = vunpack.c.h.b16 %v4379
    %v4530 = vunpack.c.l.b16 %v4380
    %v4531 = vunpack.c.h.b16 %v4380
    %v4532 = vunpack.c.l.b16 %v4381
    %v4533 = vunpack.c.h.b16 %v4381
    %v4534 = vunpack.c.l.b16 %v4382
    %v4535 = vunpack.c.h.b16 %v4382
    %v4536 = vunpack.c.l.b16 %v4383
    %v4537 = vunpack.c.h.b16 %v4383
    %v4538 = vunpack.c.l.b16 %v4384
    %v4539 = vunpack.c.h.b16 %v4384
    %v4540 = vunpack.c.l.b16 %v4385
    %v4541 = vunpack.c.h.b16 %v4385
    %v4542 = vunpack.c.l.b16 %v4386
    %v4543 = vunpack.c.h.b16 %v4386
    %v4544 = vunpack.c.l.b16 %v4387
    %v4545 = vunpack.c.h.b16 %v4387
    %v4546 = vunpack.c.l.b16 %v4388
    %v4547 = vunpack.c.h.b16 %v4388
    %v4548 = vunpack.c.l.b16 %v4389
    %v4549 = vunpack.c.h.b16 %v4389
    %v4550 = vunpack.c.l.b16 %v4390
    %v4551 = vunpack.c.h.b16 %v4390
    %v4552 = vpack.c.b16 %v4458, %v4456
    %v4553 = vpack.c.b16 %v4459, %v4457
    %v4554 = vpack.c.b16 %v4462, %v4460
    %v4555 = vpack.c.b16 %v4463, %v4461
    %v4556 = vpack.c.b16 %v4466, %v4464
    %v4557 = vpack.c.b16 %v4467, %v4465
    %v4558 = vpack.c.b16 %v4470, %v4468
    %v4559 = vpack.c.b16 %v4471, %v4469
    %v4560 = vpack.c.b16 %v4474, %v4472
    %v4561 = vpack.c.b16 %v4475, %v4473
    %v4562 = vpack.c.b16 %v4478, %v4476
    %v4563 = vpack.c.b16 %v4479, %v4477
    %v4564 = vpack.c.b16 %v4482, %v4480
    %v4565 = vpack.c.b16 %v4483, %v4481
    %v4566 = vpack.c.b16 %v4486, %v4484
    %v4567 = vpack.c.b16 %v4487, %v4485
    %v4568 = vpack.c.b16 %v4490, %v4488
    %v4569 = vpack.c.b16 %v4491, %v4489
    %v4570 = vpack.c.b16 %v4494, %v4492
    %v4571 = vpack.c.b16 %v4495, %v4493
    %v4572 = vpack.c.b16 %v4498, %v4496
    %v4573 = vpack.c.b16 %v4499, %v4497
    %v4574 = vpack.c.b16 %v4502, %v4500
    %v4575 = vpack.c.b16 %v4503, %v4501
    %v4576 = vpack.c.b16 %v4506, %v4504
    %v4577 = vpack.c.b16 %v4507, %v4505
    %v4578 = vpack.c.b16 %v4510, %v4508
    %v4579 = vpack.c.b16 %v4511, %v4509
    %v4580 = vpack.c.b16 %v4514, %v4512
    %v4581 = vpack.c.b16 %v4515, %v4513
    %v4582 = vpack.c.b16 %v4518, %v4516
    %v4583 = vpack.c.b16 %v4519, %v4517
    %v4584 = vpack.c.b16 %v4522, %v4520
    %v4585 = vpack.c.b16 %v4523, %v4521
    %v4586 = vpack.c.b16 %v4526, %v4524
    %v4587 = vpack.c.b16 %v4527, %v4525
    %v4588 = vpack.c.b16 %v4530, %v4528
    %v4589 = vpack.c.b16 %v4531, %v4529
    %v4590 = vpack.c.b16 %v4534, %v4532
    %v4591 = vpack.c.b16 %v4535, %v4533
    %v4592 = vpack.c.b16 %v4538, %v4536
    %v4593 = vpack.c.b16 %v4539, %v4537
    %v4594 = vpack.c.b16 %v4542, %v4540
    %v4595 = vpack.c.b16 %v4543, %v4541
    %v4596 = vpack.c.b16 %v4546, %v4544
    %v4597 = vpack.c.b16 %v4547, %v4545
    %v4598 = vpack.c.b16 %v4550, %v4548
    %v4599 = vpack.c.b16 %v4551, %v4549
    %4648 = vmatpush.bf16.msra.mxu0 %v4566
    %4649 = vmatpush.bf16.msra.mxu0 %v4564
    %4650 = vmatpush.bf16.msra.mxu0 %v4562
    %4651 = vmatpush.bf16.msra.mxu0 %v4560
    %4652 = vmatpush.bf16.msra.mxu0 %v4558
    %4653 = vmatpush.bf16.msra.mxu0 %v4556
    %4654 = vmatpush.bf16.msra.mxu0 %v4554
    %4655 = vmatpush.bf16.msra.mxu0 %v4552
    %4656 = vmatmul.bf16.gmra.mxu0 %v4402
    %v4657 = vpop.f32.mrf.mxu0
    %v4658 = vadd.f32 %v4393, %v4657
    %v4659 = vpop.f32.mrf.mxu0
    %4660 = vdwg.mxu0
    %4661 = vmatpush.bf16.msra.mxu0 %v4582
    %4662 = vmatpush.bf16.msra.mxu0 %v4580
    %4663 = vmatpush.bf16.msra.mxu0 %v4578
    %4664 = vmatpush.bf16.msra.mxu0 %v4576
    %4665 = vmatpush.bf16.msra.mxu0 %v4574
    %4666 = vmatpush.bf16.msra.mxu0 %v4572
    %4667 = vmatpush.bf16.msra.mxu0 %v4570
    %4668 = vmatpush.bf16.msra.mxu0 %v4568
    %4669 = vmatmul.bf16.gmra.mxu0 %v4403
    %v4670 = vpop.f32.mrf.mxu0
    %v4671 = vadd.f32 %v4658, %v4670
    %v4672 = vpop.f32.mrf.mxu0
    %4673 = vdwg.mxu0
    %4674 = vmatpush.bf16.msra.mxu0 %v4598
    %4675 = vmatpush.bf16.msra.mxu0 %v4596
    %4676 = vmatpush.bf16.msra.mxu0 %v4594
    %4677 = vmatpush.bf16.msra.mxu0 %v4592
    %4678 = vmatpush.bf16.msra.mxu0 %v4590
    %4679 = vmatpush.bf16.msra.mxu0 %v4588
    %4680 = vmatpush.bf16.msra.mxu0 %v4586
    %4681 = vmatpush.bf16.msra.mxu0 %v4584
    %4682 = vmatmul.bf16.gmra.mxu0 %v4404
    %v4683 = vpop.f32.mrf.mxu0
    %v4684 = vadd.f32 %v4671, %v4683
    %v4685 = vpop.f32.mrf.mxu0
    %4686 = vdwg.mxu0
    %4687 = vmatpush.bf16.msra.mxu0 %v4567
    %4688 = vmatpush.bf16.msra.mxu0 %v4565
    %4689 = vmatpush.bf16.msra.mxu0 %v4563
    %4690 = vmatpush.bf16.msra.mxu0 %v4561
    %4691 = vmatpush.bf16.msra.mxu0 %v4559
    %4692 = vmatpush.bf16.msra.mxu0 %v4557
    %4693 = vmatpush.bf16.msra.mxu0 %v4555
    %4694 = vmatpush.bf16.msra.mxu0 %v4553
    %4695 = vmatmul.bf16.gmra.mxu0 %v4402
    %v4696 = vpop.f32.mrf.mxu0
    %v4697 = vadd.f32 %v4394, %v4696
    %v4698 = vpop.f32.mrf.mxu0
    %4699 = vdwg.mxu0
    %4700 = vmatpush.bf16.msra.mxu0 %v4583
    %4701 = vmatpush.bf16.msra.mxu0 %v4581
    %4702 = vmatpush.bf16.msra.mxu0 %v4579
    %4703 = vmatpush.bf16.msra.mxu0 %v4577
    %4704 = vmatpush.bf16.msra.mxu0 %v4575
    %4705 = vmatpush.bf16.msra.mxu0 %v4573
    %4706 = vmatpush.bf16.msra.mxu0 %v4571
    %4707 = vmatpush.bf16.msra.mxu0 %v4569
    %4708 = vmatmul.bf16.gmra.mxu0 %v4403
    %v4709 = vpop.f32.mrf.mxu0
    %v4710 = vadd.f32 %v4697, %v4709
    %v4711 = vpop.f32.mrf.mxu0
    %4712 = vdwg.mxu0
    %4713 = vmatpush.bf16.msra.mxu0 %v4599
    %4714 = vmatpush.bf16.msra.mxu0 %v4597
    %4715 = vmatpush.bf16.msra.mxu0 %v4595
    %4716 = vmatpush.bf16.msra.mxu0 %v4593
    %4717 = vmatpush.bf16.msra.mxu0 %v4591
    %4718 = vmatpush.bf16.msra.mxu0 %v4589
    %4719 = vmatpush.bf16.msra.mxu0 %v4587
    %4720 = vmatpush.bf16.msra.mxu0 %v4585
    %4721 = vmatmul.bf16.gmra.mxu0 %v4404
    %v4722 = vpop.f32.mrf.mxu0
    %v4723 = vadd.f32 %v4710, %v4722
    %v4724 = vpop.f32.mrf.mxu0
    %4725 = vdwg.mxu0
    %v4726 = vmax.f32 %v4684, 0.0
    %v4727 = vmax.f32 %v4723, 0.0
    %v4728 = vpack.c.bf16 %v4727, %v4726
    %4729 = vst [vmem:[#allocation2 + $0x68] sm:$0xff] %v4728
    %v4730 = vld [vmem:[#allocation2] sm:$0xff]
    %v4731 = vld [vmem:[#allocation2 + $0x8] sm:$0xff]
    %v4732 = vld [vmem:[#allocation2 + $0x10] sm:$0xff]
    %v4733 = vld [vmem:[%s5] sm:$0xff]
    %v4734 = vld [vmem:[%s5 + $0x8] sm:$0xf]
    %v4735 = vld [vmem:[%s5 + $0xc] sm:$0xff]
    %v4736 = vld [vmem:[%s5 + $0x14] sm:$0xf]
    %v4737 = vld [vmem:[%s5 + $0x18] sm:$0xff]
    %v4738 = vld [vmem:[%s5 + $0x20] sm:$0xf]
    %v4739 = vld [vmem:[%s5 + $0x24] sm:$0xff]
    %v4740 = vld [vmem:[%s5 + $0x2c] sm:$0xf]
    %v4741 = vld [vmem:[%s5 + $0x30] sm:$0xff]
    %v4742 = vld [vmem:[%s5 + $0x38] sm:$0xf]
    %v4743 = vld [vmem:[%s5 + $0x3c] sm:$0xff]
    %v4744 = vld [vmem:[%s5 + $0x44] sm:$0xf]
    %v4745 = vld [vmem:[%s5 + $0x48] sm:$0xff]
    %v4746 = vld [vmem:[%s5 + $0x50] sm:$0xf]
    %v4747 = vld [vmem:[%s5 + $0x54] sm:$0xff]
    %v4748 = vld [vmem:[%s5 + $0x5c] sm:$0xf]
    %v4749 = vld [vmem:[%s5 + $0x60] sm:$0xff]
    %v4750 = vld [vmem:[%s5 + $0x68] sm:$0xf]
    %v4751 = vld [vmem:[%s5 + $0x6c] sm:$0xff]
    %v4752 = vld [vmem:[%s5 + $0x74] sm:$0xf]
    %v4753 = vld [vmem:[%s5 + $0x78] sm:$0xff]
    %v4754 = vld [vmem:[%s5 + $0x80] sm:$0xf]
    %v4755 = vld [vmem:[%s5 + $0x84] sm:$0xff]
    %v4756 = vld [vmem:[%s5 + $0x8c] sm:$0xf]
    %v4757 = vld [vmem:[%s5 + $0x90] sm:$0xff]
    %v4758 = vld [vmem:[%s5 + $0x98] sm:$0xf]
    %v4759 = vld [vmem:[%s5 + $0x9c] sm:$0xff]
    %v4760 = vld [vmem:[%s5 + $0xa4] sm:$0xf]
    %v4761 = vld [vmem:[%s5 + $0xa8] sm:$0xff]
    %v4762 = vld [vmem:[%s5 + $0xb0] sm:$0xf]
    %v4763 = vld [vmem:[%s5 + $0xb4] sm:$0xff]
    %v4764 = vld [vmem:[%s5 + $0xbc] sm:$0xf]
    %v4765 = vld [vmem:[%s5 + $0xc0] sm:$0xff]
    %v4766 = vld [vmem:[%s5 + $0xc8] sm:$0xf]
    %v4767 = vld [vmem:[%s5 + $0xcc] sm:$0xff]
    %v4768 = vld [vmem:[%s5 + $0xd4] sm:$0xf]
    %v4769 = vld [vmem:[%s5 + $0xd8] sm:$0xff]
    %v4770 = vld [vmem:[%s5 + $0xe0] sm:$0xf]
    %v4771 = vld [vmem:[%s5 + $0xe4] sm:$0xff]
    %v4772 = vld [vmem:[%s5 + $0xec] sm:$0xf]
    %v4773 = vld [vmem:[%s5 + $0xf0] sm:$0xff]
    %v4774 = vld [vmem:[%s5 + $0xf8] sm:$0xf]
    %v4775 = vld [vmem:[%s5 + $0xfc] sm:$0xff]
    %v4776 = vld [vmem:[%s5 + $0x104] sm:$0xf]
    %v4777 = vld [vmem:[%s5 + $0x108] sm:$0xff]
    %v4778 = vld [vmem:[%s5 + $0x110] sm:$0xf]
    %v4779 = vld [vmem:[%s5 + $0x114] sm:$0xff]
    %v4780 = vld [vmem:[%s5 + $0x11c] sm:$0xf]
    %v4781 = vld [vmem:[%s5 + $0x120] sm:$0xff]
    %v4782 = vld [vmem:[%s5 + $0x128] sm:$0xf]
    %v4783 = vld [vmem:[%s5 + $0x12c] sm:$0xff]
    %v4784 = vld [vmem:[%s5 + $0x134] sm:$0xf]
    %v4785 = vld [vmem:[%s5 + $0x138] sm:$0xff]
    %v4786 = vld [vmem:[%s5 + $0x140] sm:$0xf]
    %v4787 = vld [vmem:[%s5 + $0x144] sm:$0xff]
    %v4788 = vld [vmem:[%s5 + $0x14c] sm:$0xf]
    %v4789 = vld [vmem:[%s5 + $0x150] sm:$0xff]
    %v4790 = vld [vmem:[%s5 + $0x158] sm:$0xf]
    %v4791 = vld [vmem:[%s5 + $0x15c] sm:$0xff]
    %v4792 = vld [vmem:[%s5 + $0x164] sm:$0xf]
    %v4793 = vld [vmem:[%s5 + $0x168] sm:$0xff]
    %v4794 = vld [vmem:[%s5 + $0x170] sm:$0xf]
    %v4795 = vld [vmem:[%s5 + $0x174] sm:$0xff]
    %v4796 = vld [vmem:[%s5 + $0x17c] sm:$0xf]
    %v4797 = vld [vmem:[%s5 + $0x180] sm:$0xff]
    %v4798 = vld [vmem:[%s5 + $0x188] sm:$0xf]
    %v4799 = vld [vmem:[%s5 + $0x18c] sm:$0xff]
    %v4800 = vld [vmem:[%s5 + $0x194] sm:$0xf]
    %v4801 = vld [vmem:[%s5 + $0x198] sm:$0xff]
    %v4802 = vld [vmem:[%s5 + $0x1a0] sm:$0xf]
    %v4803 = vld [vmem:[%s5 + $0x1a4] sm:$0xff]
    %v4804 = vld [vmem:[%s5 + $0x1ac] sm:$0xf]
    %v4805 = vld [vmem:[%s5 + $0x1b0] sm:$0xff]
    %v4806 = vld [vmem:[%s5 + $0x1b8] sm:$0xf]
    %v4807 = vld [vmem:[%s5 + $0x1bc] sm:$0xff]
    %v4808 = vld [vmem:[%s5 + $0x1c4] sm:$0xf]
    %v4809 = vld [vmem:[%s5 + $0x1c8] sm:$0xff]
    %v4810 = vld [vmem:[%s5 + $0x1d0] sm:$0xf]
    %v4811 = vld [vmem:[%s5 + $0x1d4] sm:$0xff]
    %v4812 = vld [vmem:[%s5 + $0x1dc] sm:$0xf]
    %v4813 = vld [vmem:[%s5 + $0x1e0] sm:$0xff]
    %v4814 = vld [vmem:[%s5 + $0x1e8] sm:$0xf]
    %v4815 = vld [vmem:[%s5 + $0x1ec] sm:$0xff]
    %v4816 = vld [vmem:[%s5 + $0x1f4] sm:$0xf]
    %v4817 = vld [vmem:[%s5 + $0x1f8] sm:$0xff]
    %v4818 = vld [vmem:[%s5 + $0x200] sm:$0xf]
    %v4819 = vld [vmem:[%s5 + $0x204] sm:$0xff]
    %v4820 = vld [vmem:[%s5 + $0x20c] sm:$0xf]
    %v4821 = vld [vmem:[%s5 + $0x210] sm:$0xff]
    %v4822 = vld [vmem:[%s5 + $0x218] sm:$0xf]
    %v4823 = vld [vmem:[%s5 + $0x21c] sm:$0xff]
    %v4824 = vld [vmem:[%s5 + $0x224] sm:$0xf]
    %v4825 = vld [vmem:[%s5 + $0x228] sm:$0xff]
    %v4826 = vld [vmem:[%s5 + $0x230] sm:$0xf]
    %v4827 = vld [vmem:[%s5 + $0x234] sm:$0xff]
    %v4828 = vld [vmem:[%s5 + $0x23c] sm:$0xf]
    %v4829 = vld [vmem:[%s5 + $0x240] sm:$0xff]
    %v4830 = vld [vmem:[%s5 + $0x248] sm:$0xf]
    %v4831 = vld [vmem:[%s5 + $0x24c] sm:$0xff]
    %v4832 = vld [vmem:[%s5 + $0x254] sm:$0xf]
    %v4833 = vld [vmem:[%s5 + $0x258] sm:$0xff]
    %v4834 = vld [vmem:[%s5 + $0x260] sm:$0xf]
    %v4835 = vld [vmem:[%s5 + $0x264] sm:$0xff]
    %v4836 = vld [vmem:[%s5 + $0x26c] sm:$0xf]
    %v4837 = vld [vmem:[%s5 + $0x270] sm:$0xff]
    %v4838 = vld [vmem:[%s5 + $0x278] sm:$0xf]
    %v4839 = vld [vmem:[%s5 + $0x27c] sm:$0xff]
    %v4840 = vld [vmem:[%s5 + $0x284] sm:$0xf]
    %v4841 = vld [vmem:[%s5 + $0x288] sm:$0xff]
    %v4842 = vld [vmem:[%s5 + $0x290] sm:$0xf]
    %v4843 = vld [vmem:[%s5 + $0x294] sm:$0xff]
    %v4844 = vld [vmem:[%s5 + $0x29c] sm:$0xf]
    %v4845 = vld [vmem:[%s5 + $0x2a0] sm:$0xff]
    %v4846 = vld [vmem:[%s5 + $0x2a8] sm:$0xf]
    %v4847 = vld [vmem:[%s5 + $0x2ac] sm:$0xff]
    %v4848 = vld [vmem:[%s5 + $0x2b4] sm:$0xf]
    %v4849 = vld [vmem:[%s5 + $0x2b8] sm:$0xff]
    %v4850 = vld [vmem:[%s5 + $0x2c0] sm:$0xf]
    %v4851 = vld [vmem:[%s5 + $0x2c4] sm:$0xff]
    %v4852 = vld [vmem:[%s5 + $0x2cc] sm:$0xf]
    %v4853 = vld [vmem:[%s5 + $0x2d0] sm:$0xff]
    %v4854 = vld [vmem:[%s5 + $0x2d8] sm:$0xf]
    %v4855 = vld [vmem:[%s5 + $0x2dc] sm:$0xff]
    %v4856 = vld [vmem:[%s5 + $0x2e4] sm:$0xf]
    %v4857 = vld [vmem:[%s5 + $0x2e8] sm:$0xff]
    %v4858 = vld [vmem:[%s5 + $0x2f0] sm:$0xf]
    %v4859 = vld [vmem:[%s5 + $0x2f4] sm:$0xff]
    %v4860 = vld [vmem:[%s5 + $0x2fc] sm:$0xf]
    %v4861 = vld [vmem:[%s5 + $0x300] sm:$0xff]
    %v4862 = vld [vmem:[%s5 + $0x308] sm:$0xf]
    %v4863 = vld [vmem:[%s5 + $0x30c] sm:$0xff]
    %v4864 = vld [vmem:[%s5 + $0x314] sm:$0xf]
    %v4865 = vld [vmem:[%s5 + $0x318] sm:$0xff]
    %v4866 = vld [vmem:[%s5 + $0x320] sm:$0xf]
    %v4867 = vld [vmem:[%s5 + $0x324] sm:$0xff]
    %v4868 = vld [vmem:[%s5 + $0x32c] sm:$0xf]
    %v4869 = vld [vmem:[%s5 + $0x330] sm:$0xff]
    %v4870 = vld [vmem:[%s5 + $0x338] sm:$0xf]
    %v4871 = vld [vmem:[%s5 + $0x33c] sm:$0xff]
    %v4872 = vld [vmem:[%s5 + $0x344] sm:$0xf]
    %v4873 = vld [vmem:[%s5 + $0x348] sm:$0xff]
    %v4874 = vld [vmem:[%s5 + $0x350] sm:$0xf]
    %v4875 = vld [vmem:[%s5 + $0x354] sm:$0xff]
    %v4876 = vld [vmem:[%s5 + $0x35c] sm:$0xf]
    %v4877 = vld [vmem:[%s5 + $0x360] sm:$0xff]
    %v4878 = vld [vmem:[%s5 + $0x368] sm:$0xf]
    %v4879 = vld [vmem:[%s5 + $0x36c] sm:$0xff]
    %v4880 = vld [vmem:[%s5 + $0x374] sm:$0xf]
    %v4881 = vld [vmem:[%s5 + $0x378] sm:$0xff]
    %v4882 = vld [vmem:[%s5 + $0x380] sm:$0xf]
    %v4883 = vld [vmem:[%s5 + $0x384] sm:$0xff]
    %v4884 = vld [vmem:[%s5 + $0x38c] sm:$0xf]
    %v4885 = vld [vmem:[%s5 + $0x390] sm:$0xff]
    %v4886 = vld [vmem:[%s5 + $0x398] sm:$0xf]
    %v4887 = vld [vmem:[%s5 + $0x39c] sm:$0xff]
    %v4888 = vld [vmem:[%s5 + $0x3a4] sm:$0xf]
    %v4889 = vld [vmem:[%s5 + $0x3a8] sm:$0xff]
    %v4890 = vld [vmem:[%s5 + $0x3b0] sm:$0xf]
    %v4891 = vld [vmem:[%s5 + $0x3b4] sm:$0xff]
    %v4892 = vld [vmem:[%s5 + $0x3bc] sm:$0xf]
    %v4893 = vld [vmem:[%s5 + $0x3c0] sm:$0xff]
    %v4894 = vld [vmem:[%s5 + $0x3c8] sm:$0xf]
    %v4895 = vld [vmem:[%s5 + $0x3cc] sm:$0xff]
    %v4896 = vld [vmem:[%s5 + $0x3d4] sm:$0xf]
    %v4897 = vld [vmem:[%s5 + $0x3d8] sm:$0xff]
    %v4898 = vld [vmem:[%s5 + $0x3e0] sm:$0xf]
    %v4899 = vld [vmem:[%s5 + $0x3e4] sm:$0xff]
    %v4900 = vld [vmem:[%s5 + $0x3ec] sm:$0xf]
    %v4901 = vld [vmem:[%s5 + $0x3f0] sm:$0xff]
    %v4902 = vld [vmem:[%s5 + $0x3f8] sm:$0xf]
    %v4903 = vld [vmem:[%s5 + $0x3fc] sm:$0xff]
    %v4904 = vld [vmem:[%s5 + $0x404] sm:$0xf]
    %v4905 = vld [vmem:[%s5 + $0x408] sm:$0xff]
    %v4906 = vld [vmem:[%s5 + $0x410] sm:$0xf]
    %v4907 = vld [vmem:[%s5 + $0x414] sm:$0xff]
    %v4908 = vld [vmem:[%s5 + $0x41c] sm:$0xf]
    %v4909 = vld [vmem:[%s5 + $0x420] sm:$0xff]
    %v4910 = vld [vmem:[%s5 + $0x428] sm:$0xf]
    %v4911 = vld [vmem:[%s5 + $0x42c] sm:$0xff]
    %v4912 = vld [vmem:[%s5 + $0x434] sm:$0xf]
    %v4913 = vld [vmem:[%s5 + $0x438] sm:$0xff]
    %v4914 = vld [vmem:[%s5 + $0x440] sm:$0xf]
    %v4915 = vld [vmem:[%s5 + $0x444] sm:$0xff]
    %v4916 = vld [vmem:[%s5 + $0x44c] sm:$0xf]
    %v4917 = vld [vmem:[%s5 + $0x450] sm:$0xff]
    %v4918 = vld [vmem:[%s5 + $0x458] sm:$0xf]
    %v4919 = vld [vmem:[%s5 + $0x45c] sm:$0xff]
    %v4920 = vld [vmem:[%s5 + $0x464] sm:$0xf]
    %v4921 = vld [vmem:[%s5 + $0x468] sm:$0xff]
    %v4922 = vld [vmem:[%s5 + $0x470] sm:$0xf]
    %v4923 = vld [vmem:[%s5 + $0x474] sm:$0xff]
    %v4924 = vld [vmem:[%s5 + $0x47c] sm:$0xf]
    %v4925 = vld [vmem:[%s6] sm:$0x7]
    %v4927 = vperm.slane %v4925, 0
    %v4928 = vperm.slane %v4925, 1
    %v4929 = vperm.slane %v4925, 2
    %v4936 = vunpack.c.l.b16 %v4730
    %v4937 = vunpack.c.h.b16 %v4730
    %v4938 = vunpack.c.l.b16 %v4731
    %v4939 = vunpack.c.h.b16 %v4731
    %v4940 = vunpack.c.l.b16 %v4732
    %v4941 = vunpack.c.h.b16 %v4732
    %v4942 = vpack.c.b16 %v4936, %v4936
    %v4943 = vpack.c.b16 %v4937, %v4937
    %v4944 = vpack.c.b16 %v4938, %v4938
    %v4945 = vpack.c.b16 %v4939, %v4939
    %v4946 = vpack.c.b16 %v4940, %v4940
    %v4947 = vpack.c.b16 %v4941, %v4941
    %v5146 = vunpack.c.l.b16 %v4733
    %v5147 = vunpack.c.h.b16 %v4733
    %v5148 = vunpack.c.l.b16 %v4734
    %v5149 = vunpack.c.l.b16 %v4735
    %v5150 = vunpack.c.h.b16 %v4735
    %v5151 = vunpack.c.l.b16 %v4736
    %v5152 = vunpack.c.l.b16 %v4737
    %v5153 = vunpack.c.h.b16 %v4737
    %v5154 = vunpack.c.l.b16 %v4738
    %v5155 = vunpack.c.l.b16 %v4739
    %v5156 = vunpack.c.h.b16 %v4739
    %v5157 = vunpack.c.l.b16 %v4740
    %v5158 = vunpack.c.l.b16 %v4741
    %v5159 = vunpack.c.h.b16 %v4741
    %v5160 = vunpack.c.l.b16 %v4742
    %v5161 = vunpack.c.l.b16 %v4743
    %v5162 = vunpack.c.h.b16 %v4743
    %v5163 = vunpack.c.l.b16 %v4744
    %v5164 = vunpack.c.l.b16 %v4745
    %v5165 = vunpack.c.h.b16 %v4745
    %v5166 = vunpack.c.l.b16 %v4746
    %v5167 = vunpack.c.l.b16 %v4747
    %v5168 = vunpack.c.h.b16 %v4747
    %v5169 = vunpack.c.l.b16 %v4748
    %v5170 = vunpack.c.l.b16 %v4749
    %v5171 = vunpack.c.h.b16 %v4749
    %v5172 = vunpack.c.l.b16 %v4750
    %v5173 = vunpack.c.l.b16 %v4751
    %v5174 = vunpack.c.h.b16 %v4751
    %v5175 = vunpack.c.l.b16 %v4752
    %v5176 = vunpack.c.l.b16 %v4753
    %v5177 = vunpack.c.h.b16 %v4753
    %v5178 = vunpack.c.l.b16 %v4754
    %v5179 = vunpack.c.l.b16 %v4755
    %v5180 = vunpack.c.h.b16 %v4755
    %v5181 = vunpack.c.l.b16 %v4756
    %v5182 = vunpack.c.l.b16 %v4757
    %v5183 = vunpack.c.h.b16 %v4757
    %v5184 = vunpack.c.l.b16 %v4758
    %v5185 = vunpack.c.l.b16 %v4759
    %v5186 = vunpack.c.h.b16 %v4759
    %v5187 = vunpack.c.l.b16 %v4760
    %v5188 = vunpack.c.l.b16 %v4761
    %v5189 = vunpack.c.h.b16 %v4761
    %v5190 = vunpack.c.l.b16 %v4762
    %v5191 = vunpack.c.l.b16 %v4763
    %v5192 = vunpack.c.h.b16 %v4763
    %v5193 = vunpack.c.l.b16 %v4764
    %v5194 = vunpack.c.l.b16 %v4765
    %v5195 = vunpack.c.h.b16 %v4765
    %v5196 = vunpack.c.l.b16 %v4766
    %v5197 = vunpack.c.l.b16 %v4767
    %v5198 = vunpack.c.h.b16 %v4767
    %v5199 = vunpack.c.l.b16 %v4768
    %v5200 = vunpack.c.l.b16 %v4769
    %v5201 = vunpack.c.h.b16 %v4769
    %v5202 = vunpack.c.l.b16 %v4770
    %v5203 = vunpack.c.l.b16 %v4771
    %v5204 = vunpack.c.h.b16 %v4771
    %v5205 = vunpack.c.l.b16 %v4772
    %v5206 = vunpack.c.l.b16 %v4773
    %v5207 = vunpack.c.h.b16 %v4773
    %v5208 = vunpack.c.l.b16 %v4774
    %v5209 = vunpack.c.l.b16 %v4775
    %v5210 = vunpack.c.h.b16 %v4775
    %v5211 = vunpack.c.l.b16 %v4776
    %v5212 = vunpack.c.l.b16 %v4777
    %v5213 = vunpack.c.h.b16 %v4777
    %v5214 = vunpack.c.l.b16 %v4778
    %v5215 = vunpack.c.l.b16 %v4779
    %v5216 = vunpack.c.h.b16 %v4779
    %v5217 = vunpack.c.l.b16 %v4780
    %v5218 = vunpack.c.l.b16 %v4781
    %v5219 = vunpack.c.h.b16 %v4781
    %v5220 = vunpack.c.l.b16 %v4782
    %v5221 = vunpack.c.l.b16 %v4783
    %v5222 = vunpack.c.h.b16 %v4783
    %v5223 = vunpack.c.l.b16 %v4784
    %v5224 = vunpack.c.l.b16 %v4785
    %v5225 = vunpack.c.h.b16 %v4785
    %v5226 = vunpack.c.l.b16 %v4786
    %v5227 = vunpack.c.l.b16 %v4787
    %v5228 = vunpack.c.h.b16 %v4787
    %v5229 = vunpack.c.l.b16 %v4788
    %v5230 = vunpack.c.l.b16 %v4789
    %v5231 = vunpack.c.h.b16 %v4789
    %v5232 = vunpack.c.l.b16 %v4790
    %v5233 = vunpack.c.l.b16 %v4791
    %v5234 = vunpack.c.h.b16 %v4791
    %v5235 = vunpack.c.l.b16 %v4792
    %v5236 = vunpack.c.l.b16 %v4793
    %v5237 = vunpack.c.h.b16 %v4793
    %v5238 = vunpack.c.l.b16 %v4794
    %v5239 = vunpack.c.l.b16 %v4795
    %v5240 = vunpack.c.h.b16 %v4795
    %v5241 = vunpack.c.l.b16 %v4796
    %v5242 = vunpack.c.l.b16 %v4797
    %v5243 = vunpack.c.h.b16 %v4797
    %v5244 = vunpack.c.l.b16 %v4798
    %v5245 = vunpack.c.l.b16 %v4799
    %v5246 = vunpack.c.h.b16 %v4799
    %v5247 = vunpack.c.l.b16 %v4800
    %v5248 = vunpack.c.l.b16 %v4801
    %v5249 = vunpack.c.h.b16 %v4801
    %v5250 = vunpack.c.l.b16 %v4802
    %v5251 = vunpack.c.l.b16 %v4803
    %v5252 = vunpack.c.h.b16 %v4803
    %v5253 = vunpack.c.l.b16 %v4804
    %v5254 = vunpack.c.l.b16 %v4805
    %v5255 = vunpack.c.h.b16 %v4805
    %v5256 = vunpack.c.l.b16 %v4806
    %v5257 = vunpack.c.l.b16 %v4807
    %v5258 = vunpack.c.h.b16 %v4807
    %v5259 = vunpack.c.l.b16 %v4808
    %v5260 = vunpack.c.l.b16 %v4809
    %v5261 = vunpack.c.h.b16 %v4809
    %v5262 = vunpack.c.l.b16 %v4810
    %v5263 = vunpack.c.l.b16 %v4811
    %v5264 = vunpack.c.h.b16 %v4811
    %v5265 = vunpack.c.l.b16 %v4812
    %v5266 = vunpack.c.l.b16 %v4813
    %v5267 = vunpack.c.h.b16 %v4813
    %v5268 = vunpack.c.l.b16 %v4814
    %v5269 = vunpack.c.l.b16 %v4815
    %v5270 = vunpack.c.h.b16 %v4815
    %v5271 = vunpack.c.l.b16 %v4816
    %v5272 = vunpack.c.l.b16 %v4817
    %v5273 = vunpack.c.h.b16 %v4817
    %v5274 = vunpack.c.l.b16 %v4818
    %v5275 = vunpack.c.l.b16 %v4819
    %v5276 = vunpack.c.h.b16 %v4819
    %v5277 = vunpack.c.l.b16 %v4820
    %v5278 = vunpack.c.l.b16 %v4821
    %v5279 = vunpack.c.h.b16 %v4821
    %v5280 = vunpack.c.l.b16 %v4822
    %v5281 = vunpack.c.l.b16 %v4823
    %v5282 = vunpack.c.h.b16 %v4823
    %v5283 = vunpack.c.l.b16 %v4824
    %v5284 = vunpack.c.l.b16 %v4825
    %v5285 = vunpack.c.h.b16 %v4825
    %v5286 = vunpack.c.l.b16 %v4826
    %v5287 = vunpack.c.l.b16 %v4827
    %v5288 = vunpack.c.h.b16 %v4827
    %v5289 = vunpack.c.l.b16 %v4828
    %v5290 = vunpack.c.l.b16 %v4829
    %v5291 = vunpack.c.h.b16 %v4829
    %v5292 = vunpack.c.l.b16 %v4830
    %v5293 = vunpack.c.l.b16 %v4831
    %v5294 = vunpack.c.h.b16 %v4831
    %v5295 = vunpack.c.l.b16 %v4832
    %v5296 = vunpack.c.l.b16 %v4833
    %v5297 = vunpack.c.h.b16 %v4833
    %v5298 = vunpack.c.l.b16 %v4834
    %v5299 = vunpack.c.l.b16 %v4835
    %v5300 = vunpack.c.h.b16 %v4835
    %v5301 = vunpack.c.l.b16 %v4836
    %v5302 = vunpack.c.l.b16 %v4837
    %v5303 = vunpack.c.h.b16 %v4837
    %v5304 = vunpack.c.l.b16 %v4838
    %v5305 = vunpack.c.l.b16 %v4839
    %v5306 = vunpack.c.h.b16 %v4839
    %v5307 = vunpack.c.l.b16 %v4840
    %v5308 = vunpack.c.l.b16 %v4841
    %v5309 = vunpack.c.h.b16 %v4841
    %v5310 = vunpack.c.l.b16 %v4842
    %v5311 = vunpack.c.l.b16 %v4843
    %v5312 = vunpack.c.h.b16 %v4843
    %v5313 = vunpack.c.l.b16 %v4844
    %v5314 = vunpack.c.l.b16 %v4845
    %v5315 = vunpack.c.h.b16 %v4845
    %v5316 = vunpack.c.l.b16 %v4846
    %v5317 = vunpack.c.l.b16 %v4847
    %v5318 = vunpack.c.h.b16 %v4847
    %v5319 = vunpack.c.l.b16 %v4848
    %v5320 = vunpack.c.l.b16 %v4849
    %v5321 = vunpack.c.h.b16 %v4849
    %v5322 = vunpack.c.l.b16 %v4850
    %v5323 = vunpack.c.l.b16 %v4851
    %v5324 = vunpack.c.h.b16 %v4851
    %v5325 = vunpack.c.l.b16 %v4852
    %v5326 = vunpack.c.l.b16 %v4853
    %v5327 = vunpack.c.h.b16 %v4853
    %v5328 = vunpack.c.l.b16 %v4854
    %v5329 = vunpack.c.l.b16 %v4855
    %v5330 = vunpack.c.h.b16 %v4855
    %v5331 = vunpack.c.l.b16 %v4856
    %v5332 = vunpack.c.l.b16 %v4857
    %v5333 = vunpack.c.h.b16 %v4857
    %v5334 = vunpack.c.l.b16 %v4858
    %v5335 = vunpack.c.l.b16 %v4859
    %v5336 = vunpack.c.h.b16 %v4859
    %v5337 = vunpack.c.l.b16 %v4860
    %v5338 = vunpack.c.l.b16 %v4861
    %v5339 = vunpack.c.h.b16 %v4861
    %v5340 = vunpack.c.l.b16 %v4862
    %v5341 = vunpack.c.l.b16 %v4863
    %v5342 = vunpack.c.h.b16 %v4863
    %v5343 = vunpack.c.l.b16 %v4864
    %v5344 = vunpack.c.l.b16 %v4865
    %v5345 = vunpack.c.h.b16 %v4865
    %v5346 = vunpack.c.l.b16 %v4866
    %v5347 = vunpack.c.l.b16 %v4867
    %v5348 = vunpack.c.h.b16 %v4867
    %v5349 = vunpack.c.l.b16 %v4868
    %v5350 = vunpack.c.l.b16 %v4869
    %v5351 = vunpack.c.h.b16 %v4869
    %v5352 = vunpack.c.l.b16 %v4870
    %v5353 = vunpack.c.l.b16 %v4871
    %v5354 = vunpack.c.h.b16 %v4871
    %v5355 = vunpack.c.l.b16 %v4872
    %v5356 = vunpack.c.l.b16 %v4873
    %v5357 = vunpack.c.h.b16 %v4873
    %v5358 = vunpack.c.l.b16 %v4874
    %v5359 = vunpack.c.l.b16 %v4875
    %v5360 = vunpack.c.h.b16 %v4875
    %v5361 = vunpack.c.l.b16 %v4876
    %v5362 = vunpack.c.l.b16 %v4877
    %v5363 = vunpack.c.h.b16 %v4877
    %v5364 = vunpack.c.l.b16 %v4878
    %v5365 = vunpack.c.l.b16 %v4879
    %v5366 = vunpack.c.h.b16 %v4879
    %v5367 = vunpack.c.l.b16 %v4880
    %v5368 = vunpack.c.l.b16 %v4881
    %v5369 = vunpack.c.h.b16 %v4881
    %v5370 = vunpack.c.l.b16 %v4882
    %v5371 = vunpack.c.l.b16 %v4883
    %v5372 = vunpack.c.h.b16 %v4883
    %v5373 = vunpack.c.l.b16 %v4884
    %v5374 = vunpack.c.l.b16 %v4885
    %v5375 = vunpack.c.h.b16 %v4885
    %v5376 = vunpack.c.l.b16 %v4886
    %v5377 = vunpack.c.l.b16 %v4887
    %v5378 = vunpack.c.h.b16 %v4887
    %v5379 = vunpack.c.l.b16 %v4888
    %v5380 = vunpack.c.l.b16 %v4889
    %v5381 = vunpack.c.h.b16 %v4889
    %v5382 = vunpack.c.l.b16 %v4890
    %v5383 = vunpack.c.l.b16 %v4891
    %v5384 = vunpack.c.h.b16 %v4891
    %v5385 = vunpack.c.l.b16 %v4892
    %v5386 = vunpack.c.l.b16 %v4893
    %v5387 = vunpack.c.h.b16 %v4893
    %v5388 = vunpack.c.l.b16 %v4894
    %v5389 = vunpack.c.l.b16 %v4895
    %v5390 = vunpack.c.h.b16 %v4895
    %v5391 = vunpack.c.l.b16 %v4896
    %v5392 = vunpack.c.l.b16 %v4897
    %v5393 = vunpack.c.h.b16 %v4897
    %v5394 = vunpack.c.l.b16 %v4898
    %v5395 = vunpack.c.l.b16 %v4899
    %v5396 = vunpack.c.h.b16 %v4899
    %v5397 = vunpack.c.l.b16 %v4900
    %v5398 = vunpack.c.l.b16 %v4901
    %v5399 = vunpack.c.h.b16 %v4901
    %v5400 = vunpack.c.l.b16 %v4902
    %v5401 = vunpack.c.l.b16 %v4903
    %v5402 = vunpack.c.h.b16 %v4903
    %v5403 = vunpack.c.l.b16 %v4904
    %v5404 = vunpack.c.l.b16 %v4905
    %v5405 = vunpack.c.h.b16 %v4905
    %v5406 = vunpack.c.l.b16 %v4906
    %v5407 = vunpack.c.l.b16 %v4907
    %v5408 = vunpack.c.h.b16 %v4907
    %v5409 = vunpack.c.l.b16 %v4908
    %v5410 = vunpack.c.l.b16 %v4909
    %v5411 = vunpack.c.h.b16 %v4909
    %v5412 = vunpack.c.l.b16 %v4910
    %v5413 = vunpack.c.l.b16 %v4911
    %v5414 = vunpack.c.h.b16 %v4911
    %v5415 = vunpack.c.l.b16 %v4912
    %v5416 = vunpack.c.l.b16 %v4913
    %v5417 = vunpack.c.h.b16 %v4913
    %v5418 = vunpack.c.l.b16 %v4914
    %v5419 = vunpack.c.l.b16 %v4915
    %v5420 = vunpack.c.h.b16 %v4915
    %v5421 = vunpack.c.l.b16 %v4916
    %v5422 = vunpack.c.l.b16 %v4917
    %v5423 = vunpack.c.h.b16 %v4917
    %v5424 = vunpack.c.l.b16 %v4918
    %v5425 = vunpack.c.l.b16 %v4919
    %v5426 = vunpack.c.h.b16 %v4919
    %v5427 = vunpack.c.l.b16 %v4920
    %v5428 = vunpack.c.l.b16 %v4921
    %v5429 = vunpack.c.h.b16 %v4921
    %v5430 = vunpack.c.l.b16 %v4922
    %v5431 = vunpack.c.l.b16 %v4923
    %v5432 = vunpack.c.h.b16 %v4923
    %v5433 = vunpack.c.l.b16 %v4924
    %v5434 = vpack.c.b16 %v5149, %v5146
    %v5435 = vpack.c.b16 %v5150, %v5147
    %v5436 = vpack.c.b16 %v5151, %v5148
    %v5437 = vpack.c.b16 %v5155, %v5152
    %v5438 = vpack.c.b16 %v5156, %v5153
    %v5439 = vpack.c.b16 %v5157, %v5154
    %v5440 = vpack.c.b16 %v5161, %v5158
    %v5441 = vpack.c.b16 %v5162, %v5159
    %v5442 = vpack.c.b16 %v5163, %v5160
    %v5443 = vpack.c.b16 %v5167, %v5164
    %v5444 = vpack.c.b16 %v5168, %v5165
    %v5445 = vpack.c.b16 %v5169, %v5166
    %v5446 = vpack.c.b16 %v5173, %v5170
    %v5447 = vpack.c.b16 %v5174, %v5171
    %v5448 = vpack.c.b16 %v5175, %v5172
    %v5449 = vpack.c.b16 %v5179, %v5176
    %v5450 = vpack.c.b16 %v5180, %v5177
    %v5451 = vpack.c.b16 %v5181, %v5178
    %v5452 = vpack.c.b16 %v5185, %v5182
    %v5453 = vpack.c.b16 %v5186, %v5183
    %v5454 = vpack.c.b16 %v5187, %v5184
    %v5455 = vpack.c.b16 %v5191, %v5188
    %v5456 = vpack.c.b16 %v5192, %v5189
    %v5457 = vpack.c.b16 %v5193, %v5190
    %v5458 = vpack.c.b16 %v5197, %v5194
    %v5459 = vpack.c.b16 %v5198, %v5195
    %v5460 = vpack.c.b16 %v5199, %v5196
    %v5461 = vpack.c.b16 %v5203, %v5200
    %v5462 = vpack.c.b16 %v5204, %v5201
    %v5463 = vpack.c.b16 %v5205, %v5202
    %v5464 = vpack.c.b16 %v5209, %v5206
    %v5465 = vpack.c.b16 %v5210, %v5207
    %v5466 = vpack.c.b16 %v5211, %v5208
    %v5467 = vpack.c.b16 %v5215, %v5212
    %v5468 = vpack.c.b16 %v5216, %v5213
    %v5469 = vpack.c.b16 %v5217, %v5214
    %v5470 = vpack.c.b16 %v5221, %v5218
    %v5471 = vpack.c.b16 %v5222, %v5219
    %v5472 = vpack.c.b16 %v5223, %v5220
    %v5473 = vpack.c.b16 %v5227, %v5224
    %v5474 = vpack.c.b16 %v5228, %v5225
    %v5475 = vpack.c.b16 %v5229, %v5226
    %v5476 = vpack.c.b16 %v5233, %v5230
    %v5477 = vpack.c.b16 %v5234, %v5231
    %v5478 = vpack.c.b16 %v5235, %v5232
    %v5479 = vpack.c.b16 %v5239, %v5236
    %v5480 = vpack.c.b16 %v5240, %v5237
    %v5481 = vpack.c.b16 %v5241, %v5238
    %v5482 = vpack.c.b16 %v5245, %v5242
    %v5483 = vpack.c.b16 %v5246, %v5243
    %v5484 = vpack.c.b16 %v5247, %v5244
    %v5485 = vpack.c.b16 %v5251, %v5248
    %v5486 = vpack.c.b16 %v5252, %v5249
    %v5487 = vpack.c.b16 %v5253, %v5250
    %v5488 = vpack.c.b16 %v5257, %v5254
    %v5489 = vpack.c.b16 %v5258, %v5255
    %v5490 = vpack.c.b16 %v5259, %v5256
    %v5491 = vpack.c.b16 %v5263, %v5260
    %v5492 = vpack.c.b16 %v5264, %v5261
    %v5493 = vpack.c.b16 %v5265, %v5262
    %v5494 = vpack.c.b16 %v5269, %v5266
    %v5495 = vpack.c.b16 %v5270, %v5267
    %v5496 = vpack.c.b16 %v5271, %v5268
    %v5497 = vpack.c.b16 %v5275, %v5272
    %v5498 = vpack.c.b16 %v5276, %v5273
    %v5499 = vpack.c.b16 %v5277, %v5274
    %v5500 = vpack.c.b16 %v5281, %v5278
    %v5501 = vpack.c.b16 %v5282, %v5279
    %v5502 = vpack.c.b16 %v5283, %v5280
    %v5503 = vpack.c.b16 %v5287, %v5284
    %v5504 = vpack.c.b16 %v5288, %v5285
    %v5505 = vpack.c.b16 %v5289, %v5286
    %v5506 = vpack.c.b16 %v5293, %v5290
    %v5507 = vpack.c.b16 %v5294, %v5291
    %v5508 = vpack.c.b16 %v5295, %v5292
    %v5509 = vpack.c.b16 %v5299, %v5296
    %v5510 = vpack.c.b16 %v5300, %v5297
    %v5511 = vpack.c.b16 %v5301, %v5298
    %v5512 = vpack.c.b16 %v5305, %v5302
    %v5513 = vpack.c.b16 %v5306, %v5303
    %v5514 = vpack.c.b16 %v5307, %v5304
    %v5515 = vpack.c.b16 %v5311, %v5308
    %v5516 = vpack.c.b16 %v5312, %v5309
    %v5517 = vpack.c.b16 %v5313, %v5310
    %v5518 = vpack.c.b16 %v5317, %v5314
    %v5519 = vpack.c.b16 %v5318, %v5315
    %v5520 = vpack.c.b16 %v5319, %v5316
    %v5521 = vpack.c.b16 %v5323, %v5320
    %v5522 = vpack.c.b16 %v5324, %v5321
    %v5523 = vpack.c.b16 %v5325, %v5322
    %v5524 = vpack.c.b16 %v5329, %v5326
    %v5525 = vpack.c.b16 %v5330, %v5327
    %v5526 = vpack.c.b16 %v5331, %v5328
    %v5527 = vpack.c.b16 %v5335, %v5332
    %v5528 = vpack.c.b16 %v5336, %v5333
    %v5529 = vpack.c.b16 %v5337, %v5334
    %v5530 = vpack.c.b16 %v5341, %v5338
    %v5531 = vpack.c.b16 %v5342, %v5339
    %v5532 = vpack.c.b16 %v5343, %v5340
    %v5533 = vpack.c.b16 %v5347, %v5344
    %v5534 = vpack.c.b16 %v5348, %v5345
    %v5535 = vpack.c.b16 %v5349, %v5346
    %v5536 = vpack.c.b16 %v5353, %v5350
    %v5537 = vpack.c.b16 %v5354, %v5351
    %v5538 = vpack.c.b16 %v5355, %v5352
    %v5539 = vpack.c.b16 %v5359, %v5356
    %v5540 = vpack.c.b16 %v5360, %v5357
    %v5541 = vpack.c.b16 %v5361, %v5358
    %v5542 = vpack.c.b16 %v5365, %v5362
    %v5543 = vpack.c.b16 %v5366, %v5363
    %v5544 = vpack.c.b16 %v5367, %v5364
    %v5545 = vpack.c.b16 %v5371, %v5368
    %v5546 = vpack.c.b16 %v5372, %v5369
    %v5547 = vpack.c.b16 %v5373, %v5370
    %v5548 = vpack.c.b16 %v5377, %v5374
    %v5549 = vpack.c.b16 %v5378, %v5375
    %v5550 = vpack.c.b16 %v5379, %v5376
    %v5551 = vpack.c.b16 %v5383, %v5380
    %v5552 = vpack.c.b16 %v5384, %v5381
    %v5553 = vpack.c.b16 %v5385, %v5382
    %v5554 = vpack.c.b16 %v5389, %v5386
    %v5555 = vpack.c.b16 %v5390, %v5387
    %v5556 = vpack.c.b16 %v5391, %v5388
    %v5557 = vpack.c.b16 %v5395, %v5392
    %v5558 = vpack.c.b16 %v5396, %v5393
    %v5559 = vpack.c.b16 %v5397, %v5394
    %v5560 = vpack.c.b16 %v5401, %v5398
    %v5561 = vpack.c.b16 %v5402, %v5399
    %v5562 = vpack.c.b16 %v5403, %v5400
    %v5563 = vpack.c.b16 %v5407, %v5404
    %v5564 = vpack.c.b16 %v5408, %v5405
    %v5565 = vpack.c.b16 %v5409, %v5406
    %v5566 = vpack.c.b16 %v5413, %v5410
    %v5567 = vpack.c.b16 %v5414, %v5411
    %v5568 = vpack.c.b16 %v5415, %v5412
    %v5569 = vpack.c.b16 %v5419, %v5416
    %v5570 = vpack.c.b16 %v5420, %v5417
    %v5571 = vpack.c.b16 %v5421, %v5418
    %v5572 = vpack.c.b16 %v5425, %v5422
    %v5573 = vpack.c.b16 %v5426, %v5423
    %v5574 = vpack.c.b16 %v5427, %v5424
    %v5575 = vpack.c.b16 %v5431, %v5428
    %v5576 = vpack.c.b16 %v5432, %v5429
    %v5577 = vpack.c.b16 %v5433, %v5430
    %5722 = vmatpush.bf16.msra.mxu0 %v5455
    %5723 = vmatpush.bf16.msra.mxu0 %v5452
    %5724 = vmatpush.bf16.msra.mxu0 %v5449
    %5725 = vmatpush.bf16.msra.mxu0 %v5446
    %5726 = vmatpush.bf16.msra.mxu0 %v5443
    %5727 = vmatpush.bf16.msra.mxu0 %v5440
    %5728 = vmatpush.bf16.msra.mxu0 %v5437
    %5729 = vmatpush.bf16.msra.mxu0 %v5434
    %5730 = vmatmul.bf16.gmra.mxu0 %v4942
    %v5731 = vpop.f32.mrf.mxu0
    %v5732 = vadd.f32 %v4927, %v5731
    %v5733 = vpop.f32.mrf.mxu0
    %5734 = vdwg.mxu0
    %5735 = vmatpush.bf16.msra.mxu0 %v5479
    %5736 = vmatpush.bf16.msra.mxu0 %v5476
    %5737 = vmatpush.bf16.msra.mxu0 %v5473
    %5738 = vmatpush.bf16.msra.mxu0 %v5470
    %5739 = vmatpush.bf16.msra.mxu0 %v5467
    %5740 = vmatpush.bf16.msra.mxu0 %v5464
    %5741 = vmatpush.bf16.msra.mxu0 %v5461
    %5742 = vmatpush.bf16.msra.mxu0 %v5458
    %5743 = vmatmul.bf16.gmra.mxu0 %v4943
    %v5744 = vpop.f32.mrf.mxu0
    %v5745 = vadd.f32 %v5732, %v5744
    %v5746 = vpop.f32.mrf.mxu0
    %5747 = vdwg.mxu0
    %5748 = vmatpush.bf16.msra.mxu0 %v5503
    %5749 = vmatpush.bf16.msra.mxu0 %v5500
    %5750 = vmatpush.bf16.msra.mxu0 %v5497
    %5751 = vmatpush.bf16.msra.mxu0 %v5494
    %5752 = vmatpush.bf16.msra.mxu0 %v5491
    %5753 = vmatpush.bf16.msra.mxu0 %v5488
    %5754 = vmatpush.bf16.msra.mxu0 %v5485
    %5755 = vmatpush.bf16.msra.mxu0 %v5482
    %5756 = vmatmul.bf16.gmra.mxu0 %v4944
    %v5757 = vpop.f32.mrf.mxu0
    %v5758 = vadd.f32 %v5745, %v5757
    %v5759 = vpop.f32.mrf.mxu0
    %5760 = vdwg.mxu0
    %5761 = vmatpush.bf16.msra.mxu0 %v5527
    %5762 = vmatpush.bf16.msra.mxu0 %v5524
    %5763 = vmatpush.bf16.msra.mxu0 %v5521
    %5764 = vmatpush.bf16.msra.mxu0 %v5518
    %5765 = vmatpush.bf16.msra.mxu0 %v5515
    %5766 = vmatpush.bf16.msra.mxu0 %v5512
    %5767 = vmatpush.bf16.msra.mxu0 %v5509
    %5768 = vmatpush.bf16.msra.mxu0 %v5506
    %5769 = vmatmul.bf16.gmra.mxu0 %v4945
    %v5770 = vpop.f32.mrf.mxu0
    %v5771 = vadd.f32 %v5758, %v5770
    %v5772 = vpop.f32.mrf.mxu0
    %5773 = vdwg.mxu0
    %5774 = vmatpush.bf16.msra.mxu0 %v5551
    %5775 = vmatpush.bf16.msra.mxu0 %v5548
    %5776 = vmatpush.bf16.msra.mxu0 %v5545
    %5777 = vmatpush.bf16.msra.mxu0 %v5542
    %5778 = vmatpush.bf16.msra.mxu0 %v5539
    %5779 = vmatpush.bf16.msra.mxu0 %v5536
    %5780 = vmatpush.bf16.msra.mxu0 %v5533
    %5781 = vmatpush.bf16.msra.mxu0 %v5530
    %5782 = vmatmul.bf16.gmra.mxu0 %v4946
    %v5783 = vpop.f32.mrf.mxu0
    %v5784 = vadd.f32 %v5771, %v5783
    %v5785 = vpop.f32.mrf.mxu0
    %5786 = vdwg.mxu0
    %5787 = vmatpush.bf16.msra.mxu0 %v5575
    %5788 = vmatpush.bf16.msra.mxu0 %v5572
    %5789 = vmatpush.bf16.msra.mxu0 %v5569
    %5790 = vmatpush.bf16.msra.mxu0 %v5566
    %5791 = vmatpush.bf16.msra.mxu0 %v5563
    %5792 = vmatpush.bf16.msra.mxu0 %v5560
    %5793 = vmatpush.bf16.msra.mxu0 %v5557
    %5794 = vmatpush.bf16.msra.mxu0 %v5554
    %5795 = vmatmul.bf16.gmra.mxu0 %v4947
    %v5796 = vpop.f32.mrf.mxu0
    %v5797 = vadd.f32 %v5784, %v5796
    %v5798 = vpop.f32.mrf.mxu0
    %5799 = vdwg.mxu0
    %5800 = vmatpush.bf16.msra.mxu0 %v5456
    %5801 = vmatpush.bf16.msra.mxu0 %v5453
    %5802 = vmatpush.bf16.msra.mxu0 %v5450
    %5803 = vmatpush.bf16.msra.mxu0 %v5447
    %5804 = vmatpush.bf16.msra.mxu0 %v5444
    %5805 = vmatpush.bf16.msra.mxu0 %v5441
    %5806 = vmatpush.bf16.msra.mxu0 %v5438
    %5807 = vmatpush.bf16.msra.mxu0 %v5435
    %5808 = vmatmul.bf16.gmra.mxu0 %v4942
    %v5809 = vpop.f32.mrf.mxu0
    %v5810 = vadd.f32 %v4928, %v5809
    %v5811 = vpop.f32.mrf.mxu0
    %5812 = vdwg.mxu0
    %5813 = vmatpush.bf16.msra.mxu0 %v5480
    %5814 = vmatpush.bf16.msra.mxu0 %v5477
    %5815 = vmatpush.bf16.msra.mxu0 %v5474
    %5816 = vmatpush.bf16.msra.mxu0 %v5471
    %5817 = vmatpush.bf16.msra.mxu0 %v5468
    %5818 = vmatpush.bf16.msra.mxu0 %v5465
    %5819 = vmatpush.bf16.msra.mxu0 %v5462
    %5820 = vmatpush.bf16.msra.mxu0 %v5459
    %5821 = vmatmul.bf16.gmra.mxu0 %v4943
    %v5822 = vpop.f32.mrf.mxu0
    %v5823 = vadd.f32 %v5810, %v5822
    %v5824 = vpop.f32.mrf.mxu0
    %5825 = vdwg.mxu0
    %5826 = vmatpush.bf16.msra.mxu0 %v5504
    %5827 = vmatpush.bf16.msra.mxu0 %v5501
    %5828 = vmatpush.bf16.msra.mxu0 %v5498
    %5829 = vmatpush.bf16.msra.mxu0 %v5495
    %5830 = vmatpush.bf16.msra.mxu0 %v5492
    %5831 = vmatpush.bf16.msra.mxu0 %v5489
    %5832 = vmatpush.bf16.msra.mxu0 %v5486
    %5833 = vmatpush.bf16.msra.mxu0 %v5483
    %5834 = vmatmul.bf16.gmra.mxu0 %v4944
    %v5835 = vpop.f32.mrf.mxu0
    %v5836 = vadd.f32 %v5823, %v5835
    %v5837 = vpop.f32.mrf.mxu0
    %5838 = vdwg.mxu0
    %5839 = vmatpush.bf16.msra.mxu0 %v5528
    %5840 = vmatpush.bf16.msra.mxu0 %v5525
    %5841 = vmatpush.bf16.msra.mxu0 %v5522
    %5842 = vmatpush.bf16.msra.mxu0 %v5519
    %5843 = vmatpush.bf16.msra.mxu0 %v5516
    %5844 = vmatpush.bf16.msra.mxu0 %v5513
    %5845 = vmatpush.bf16.msra.mxu0 %v5510
    %5846 = vmatpush.bf16.msra.mxu0 %v5507
    %5847 = vmatmul.bf16.gmra.mxu0 %v4945
    %v5848 = vpop.f32.mrf.mxu0
    %v5849 = vadd.f32 %v5836, %v5848
    %v5850 = vpop.f32.mrf.mxu0
    %5851 = vdwg.mxu0
    %5852 = vmatpush.bf16.msra.mxu0 %v5552
    %5853 = vmatpush.bf16.msra.mxu0 %v5549
    %5854 = vmatpush.bf16.msra.mxu0 %v5546
    %5855 = vmatpush.bf16.msra.mxu0 %v5543
    %5856 = vmatpush.bf16.msra.mxu0 %v5540
    %5857 = vmatpush.bf16.msra.mxu0 %v5537
    %5858 = vmatpush.bf16.msra.mxu0 %v5534
    %5859 = vmatpush.bf16.msra.mxu0 %v5531
    %5860 = vmatmul.bf16.gmra.mxu0 %v4946
    %v5861 = vpop.f32.mrf.mxu0
    %v5862 = vadd.f32 %v5849, %v5861
    %v5863 = vpop.f32.mrf.mxu0
    %5864 = vdwg.mxu0
    %5865 = vmatpush.bf16.msra.mxu0 %v5576
    %5866 = vmatpush.bf16.msra.mxu0 %v5573
    %5867 = vmatpush.bf16.msra.mxu0 %v5570
    %5868 = vmatpush.bf16.msra.mxu0 %v5567
    %5869 = vmatpush.bf16.msra.mxu0 %v5564
    %5870 = vmatpush.bf16.msra.mxu0 %v5561
    %5871 = vmatpush.bf16.msra.mxu0 %v5558
    %5872 = vmatpush.bf16.msra.mxu0 %v5555
    %5873 = vmatmul.bf16.gmra.mxu0 %v4947
    %v5874 = vpop.f32.mrf.mxu0
    %v5875 = vadd.f32 %v5862, %v5874
    %v5876 = vpop.f32.mrf.mxu0
    %5877 = vdwg.mxu0
    %5878 = vmatpush.bf16.msra.mxu0 %v5457
    %5879 = vmatpush.bf16.msra.mxu0 %v5454
    %5880 = vmatpush.bf16.msra.mxu0 %v5451
    %5881 = vmatpush.bf16.msra.mxu0 %v5448
    %5882 = vmatpush.bf16.msra.mxu0 %v5445
    %5883 = vmatpush.bf16.msra.mxu0 %v5442
    %5884 = vmatpush.bf16.msra.mxu0 %v5439
    %5885 = vmatpush.bf16.msra.mxu0 %v5436
    %5886 = vmatmul.bf16.gmra.mxu0 %v4942
    %v5887 = vpop.f32.mrf.mxu0
    %v5888 = vadd.f32 %v4929, %v5887
    %v5889 = vpop.f32.mrf.mxu0
    %5890 = vdwg.mxu0
    %5891 = vmatpush.bf16.msra.mxu0 %v5481
    %5892 = vmatpush.bf16.msra.mxu0 %v5478
    %5893 = vmatpush.bf16.msra.mxu0 %v5475
    %5894 = vmatpush.bf16.msra.mxu0 %v5472
    %5895 = vmatpush.bf16.msra.mxu0 %v5469
    %5896 = vmatpush.bf16.msra.mxu0 %v5466
    %5897 = vmatpush.bf16.msra.mxu0 %v5463
    %5898 = vmatpush.bf16.msra.mxu0 %v5460
    %5899 = vmatmul.bf16.gmra.mxu0 %v4943
    %v5900 = vpop.f32.mrf.mxu0
    %v5901 = vadd.f32 %v5888, %v5900
    %v5902 = vpop.f32.mrf.mxu0
    %5903 = vdwg.mxu0
    %5904 = vmatpush.bf16.msra.mxu0 %v5505
    %5905 = vmatpush.bf16.msra.mxu0 %v5502
    %5906 = vmatpush.bf16.msra.mxu0 %v5499
    %5907 = vmatpush.bf16.msra.mxu0 %v5496
    %5908 = vmatpush.bf16.msra.mxu0 %v5493
    %5909 = vmatpush.bf16.msra.mxu0 %v5490
    %5910 = vmatpush.bf16.msra.mxu0 %v5487
    %5911 = vmatpush.bf16.msra.mxu0 %v5484
    %5912 = vmatmul.bf16.gmra.mxu0 %v4944
    %v5913 = vpop.f32.mrf.mxu0
    %v5914 = vadd.f32 %v5901, %v5913
    %v5915 = vpop.f32.mrf.mxu0
    %5916 = vdwg.mxu0
    %5917 = vmatpush.bf16.msra.mxu0 %v5529
    %5918 = vmatpush.bf16.msra.mxu0 %v5526
    %5919 = vmatpush.bf16.msra.mxu0 %v5523
    %5920 = vmatpush.bf16.msra.mxu0 %v5520
    %5921 = vmatpush.bf16.msra.mxu0 %v5517
    %5922 = vmatpush.bf16.msra.mxu0 %v5514
    %5923 = vmatpush.bf16.msra.mxu0 %v5511
    %5924 = vmatpush.bf16.msra.mxu0 %v5508
    %5925 = vmatmul.bf16.gmra.mxu0 %v4945
    %v5926 = vpop.f32.mrf.mxu0
    %v5927 = vadd.f32 %v5914, %v5926
    %v5928 = vpop.f32.mrf.mxu0
    %5929 = vdwg.mxu0
    %5930 = vmatpush.bf16.msra.mxu0 %v5553
    %5931 = vmatpush.bf16.msra.mxu0 %v5550
    %5932 = vmatpush.bf16.msra.mxu0 %v5547
    %5933 = vmatpush.bf16.msra.mxu0 %v5544
    %5934 = vmatpush.bf16.msra.mxu0 %v5541
    %5935 = vmatpush.bf16.msra.mxu0 %v5538
    %5936 = vmatpush.bf16.msra.mxu0 %v5535
    %5937 = vmatpush.bf16.msra.mxu0 %v5532
    %5938 = vmatmul.bf16.gmra.mxu0 %v4946
    %v5939 = vpop.f32.mrf.mxu0
    %v5940 = vadd.f32 %v5927, %v5939
    %v5941 = vpop.f32.mrf.mxu0
    %5942 = vdwg.mxu0
    %5943 = vmatpush.bf16.msra.mxu0 %v5577
    %5944 = vmatpush.bf16.msra.mxu0 %v5574
    %5945 = vmatpush.bf16.msra.mxu0 %v5571
    %5946 = vmatpush.bf16.msra.mxu0 %v5568
    %5947 = vmatpush.bf16.msra.mxu0 %v5565
    %5948 = vmatpush.bf16.msra.mxu0 %v5562
    %5949 = vmatpush.bf16.msra.mxu0 %v5559
    %5950 = vmatpush.bf16.msra.mxu0 %v5556
    %5951 = vmatmul.bf16.gmra.mxu0 %v4947
    %v5952 = vpop.f32.mrf.mxu0
    %v5953 = vadd.f32 %v5940, %v5952
    %v5954 = vpop.f32.mrf.mxu0
    %5955 = vdwg.mxu0
    %v5956 = vmax.f32 %v5797, 0.0
    %v5957 = vmax.f32 %v5875, 0.0
    %v5958 = vmax.f32 %v5953, 0.0
    %v5959 = vpack.c.bf16 %v5956, %v5956
    %v5960 = vpack.c.bf16 %v5957, %v5957
    %v5961 = vpack.c.bf16 %v5958, %v5958
    %v5962 = vld [vmem:[%s7] sm:$0xf]
    %v5963 = vld [vmem:[%s7 + $0x4] sm:$0xf]
    %v5964 = vld [vmem:[%s7 + $0x8] sm:$0xf]
    %v5965 = vld [vmem:[%s7 + $0xc] sm:$0xf]
    %v5966 = vld [vmem:[%s7 + $0x10] sm:$0xf]
    %v5967 = vld [vmem:[%s7 + $0x14] sm:$0xf]
    %v5968 = vld [vmem:[%s7 + $0x18] sm:$0xf]
    %v5969 = vld [vmem:[%s7 + $0x1c] sm:$0xf]
    %v5970 = vld [vmem:[%s7 + $0x20] sm:$0xf]
    %v5971 = vld [vmem:[%s7 + $0x24] sm:$0xf]
    %v5972 = vld [vmem:[%s7 + $0x28] sm:$0xf]
    %v5973 = vld [vmem:[%s7 + $0x2c] sm:$0xf]
    %v5974 = vld [vmem:[%s7 + $0x30] sm:$0xf]
    %v5975 = vld [vmem:[%s7 + $0x34] sm:$0xf]
    %v5976 = vld [vmem:[%s7 + $0x38] sm:$0xf]
    %v5977 = vld [vmem:[%s7 + $0x3c] sm:$0xf]
    %v5978 = vld [vmem:[%s7 + $0x40] sm:$0xf]
    %v5979 = vld [vmem:[%s7 + $0x44] sm:$0xf]
    %v5980 = vld [vmem:[%s7 + $0x48] sm:$0xf]
    %v5981 = vld [vmem:[%s7 + $0x4c] sm:$0xf]
    %v5982 = vld [vmem:[%s7 + $0x50] sm:$0xf]
    %v5983 = vld [vmem:[%s7 + $0x54] sm:$0xf]
    %v5984 = vld [vmem:[%s7 + $0x58] sm:$0xf]
    %v5985 = vld [vmem:[%s7 + $0x5c] sm:$0xf]
    %v5986 = vld [vmem:[%s7 + $0x60] sm:$0xf]
    %v5987 = vld [vmem:[%s7 + $0x64] sm:$0xf]
    %v5988 = vld [vmem:[%s7 + $0x68] sm:$0xf]
    %v5989 = vld [vmem:[%s7 + $0x6c] sm:$0xf]
    %v5990 = vld [vmem:[%s7 + $0x70] sm:$0xf]
    %v5991 = vld [vmem:[%s7 + $0x74] sm:$0xf]
    %v5992 = vld [vmem:[%s7 + $0x78] sm:$0xf]
    %v5993 = vld [vmem:[%s7 + $0x7c] sm:$0xf]
    %v5994 = vld [vmem:[%s7 + $0x80] sm:$0xf]
    %v5995 = vld [vmem:[%s7 + $0x84] sm:$0xf]
    %v5996 = vld [vmem:[%s7 + $0x88] sm:$0xf]
    %v5997 = vld [vmem:[%s7 + $0x8c] sm:$0xf]
    %v5998 = vld [vmem:[#allocation2 + $0x8] sm:$0xff]
    %v5999 = vld [vmem:[#allocation2 + $0x10] sm:$0xff]
    %v6000 = vld [vmem:[#allocation2 + $0x18] sm:$0xff]
    %v6004 = vunpack.c.l.b16 %v5998
    %v6005 = vunpack.c.h.b16 %v5998
    %v6006 = vunpack.c.l.b16 %v5999
    %v6007 = vunpack.c.h.b16 %v5999
    %v6008 = vunpack.c.l.b16 %v6000
    %v6009 = vunpack.c.h.b16 %v6000
    %v6010 = vpack.c.b16 %v6004, %v6004
    %v6011 = vpack.c.b16 %v6005, %v6005
    %v6012 = vpack.c.b16 %v6006, %v6006
    %v6013 = vpack.c.b16 %v6007, %v6007
    %v6014 = vpack.c.b16 %v6008, %v6008
    %v6015 = vpack.c.b16 %v6009, %v6009
    %6022 = vmatpush.bf16.msra.mxu0 %v5455
    %6023 = vmatpush.bf16.msra.mxu0 %v5452
    %6024 = vmatpush.bf16.msra.mxu0 %v5449
    %6025 = vmatpush.bf16.msra.mxu0 %v5446
    %6026 = vmatpush.bf16.msra.mxu0 %v5443
    %6027 = vmatpush.bf16.msra.mxu0 %v5440
    %6028 = vmatpush.bf16.msra.mxu0 %v5437
    %6029 = vmatpush.bf16.msra.mxu0 %v5434
    %6030 = vmatmul.bf16.gmra.mxu0 %v6010
    %v6031 = vpop.f32.mrf.mxu0
    %v6032 = vadd.f32 %v4927, %v6031
    %v6033 = vpop.f32.mrf.mxu0
    %6034 = vdwg.mxu0
    %6035 = vmatpush.bf16.msra.mxu0 %v5479
    %6036 = vmatpush.bf16.msra.mxu0 %v5476
    %6037 = vmatpush.bf16.msra.mxu0 %v5473
    %6038 = vmatpush.bf16.msra.mxu0 %v5470
    %6039 = vmatpush.bf16.msra.mxu0 %v5467
    %6040 = vmatpush.bf16.msra.mxu0 %v5464
    %6041 = vmatpush.bf16.msra.mxu0 %v5461
    %6042 = vmatpush.bf16.msra.mxu0 %v5458
    %6043 = vmatmul.bf16.gmra.mxu0 %v6011
    %v6044 = vpop.f32.mrf.mxu0
    %v6045 = vadd.f32 %v6032, %v6044
    %v6046 = vpop.f32.mrf.mxu0
    %6047 = vdwg.mxu0
    %6048 = vmatpush.bf16.msra.mxu0 %v5503
    %6049 = vmatpush.bf16.msra.mxu0 %v5500
    %6050 = vmatpush.bf16.msra.mxu0 %v5497
    %6051 = vmatpush.bf16.msra.mxu0 %v5494
    %6052 = vmatpush.bf16.msra.mxu0 %v5491
    %6053 = vmatpush.bf16.msra.mxu0 %v5488
    %6054 = vmatpush.bf16.msra.mxu0 %v5485
    %6055 = vmatpush.bf16.msra.mxu0 %v5482
    %6056 = vmatmul.bf16.gmra.mxu0 %v6012
    %v6057 = vpop.f32.mrf.mxu0
    %v6058 = vadd.f32 %v6045, %v6057
    %v6059 = vpop.f32.mrf.mxu0
    %6060 = vdwg.mxu0
    %6061 = vmatpush.bf16.msra.mxu0 %v5527
    %6062 = vmatpush.bf16.msra.mxu0 %v5524
    %6063 = vmatpush.bf16.msra.mxu0 %v5521
    %6064 = vmatpush.bf16.msra.mxu0 %v5518
    %6065 = vmatpush.bf16.msra.mxu0 %v5515
    %6066 = vmatpush.bf16.msra.mxu0 %v5512
    %6067 = vmatpush.bf16.msra.mxu0 %v5509
    %6068 = vmatpush.bf16.msra.mxu0 %v5506
    %6069 = vmatmul.bf16.gmra.mxu0 %v6013
    %v6070 = vpop.f32.mrf.mxu0
    %v6071 = vadd.f32 %v6058, %v6070
    %v6072 = vpop.f32.mrf.mxu0
    %6073 = vdwg.mxu0
    %6074 = vmatpush.bf16.msra.mxu0 %v5551
    %6075 = vmatpush.bf16.msra.mxu0 %v5548
    %6076 = vmatpush.bf16.msra.mxu0 %v5545
    %6077 = vmatpush.bf16.msra.mxu0 %v5542
    %6078 = vmatpush.bf16.msra.mxu0 %v5539
    %6079 = vmatpush.bf16.msra.mxu0 %v5536
    %6080 = vmatpush.bf16.msra.mxu0 %v5533
    %6081 = vmatpush.bf16.msra.mxu0 %v5530
    %6082 = vmatmul.bf16.gmra.mxu0 %v6014
    %v6083 = vpop.f32.mrf.mxu0
    %v6084 = vadd.f32 %v6071, %v6083
    %v6085 = vpop.f32.mrf.mxu0
    %6086 = vdwg.mxu0
    %6087 = vmatpush.bf16.msra.mxu0 %v5575
    %6088 = vmatpush.bf16.msra.mxu0 %v5572
    %6089 = vmatpush.bf16.msra.mxu0 %v5569
    %6090 = vmatpush.bf16.msra.mxu0 %v5566
    %6091 = vmatpush.bf16.msra.mxu0 %v5563
    %6092 = vmatpush.bf16.msra.mxu0 %v5560
    %6093 = vmatpush.bf16.msra.mxu0 %v5557
    %6094 = vmatpush.bf16.msra.mxu0 %v5554
    %6095 = vmatmul.bf16.gmra.mxu0 %v6015
    %v6096 = vpop.f32.mrf.mxu0
    %v6097 = vadd.f32 %v6084, %v6096
    %v6098 = vpop.f32.mrf.mxu0
    %6099 = vdwg.mxu0
    %6100 = vmatpush.bf16.msra.mxu0 %v5456
    %6101 = vmatpush.bf16.msra.mxu0 %v5453
    %6102 = vmatpush.bf16.msra.mxu0 %v5450
    %6103 = vmatpush.bf16.msra.mxu0 %v5447
    %6104 = vmatpush.bf16.msra.mxu0 %v5444
    %6105 = vmatpush.bf16.msra.mxu0 %v5441
    %6106 = vmatpush.bf16.msra.mxu0 %v5438
    %6107 = vmatpush.bf16.msra.mxu0 %v5435
    %6108 = vmatmul.bf16.gmra.mxu0 %v6010
    %v6109 = vpop.f32.mrf.mxu0
    %v6110 = vadd.f32 %v4928, %v6109
    %v6111 = vpop.f32.mrf.mxu0
    %6112 = vdwg.mxu0
    %6113 = vmatpush.bf16.msra.mxu0 %v5480
    %6114 = vmatpush.bf16.msra.mxu0 %v5477
    %6115 = vmatpush.bf16.msra.mxu0 %v5474
    %6116 = vmatpush.bf16.msra.mxu0 %v5471
    %6117 = vmatpush.bf16.msra.mxu0 %v5468
    %6118 = vmatpush.bf16.msra.mxu0 %v5465
    %6119 = vmatpush.bf16.msra.mxu0 %v5462
    %6120 = vmatpush.bf16.msra.mxu0 %v5459
    %6121 = vmatmul.bf16.gmra.mxu0 %v6011
    %v6122 = vpop.f32.mrf.mxu0
    %v6123 = vadd.f32 %v6110, %v6122
    %v6124 = vpop.f32.mrf.mxu0
    %6125 = vdwg.mxu0
    %6126 = vmatpush.bf16.msra.mxu0 %v5504
    %6127 = vmatpush.bf16.msra.mxu0 %v5501
    %6128 = vmatpush.bf16.msra.mxu0 %v5498
    %6129 = vmatpush.bf16.msra.mxu0 %v5495
    %6130 = vmatpush.bf16.msra.mxu0 %v5492
    %6131 = vmatpush.bf16.msra.mxu0 %v5489
    %6132 = vmatpush.bf16.msra.mxu0 %v5486
    %6133 = vmatpush.bf16.msra.mxu0 %v5483
    %6134 = vmatmul.bf16.gmra.mxu0 %v6012
    %v6135 = vpop.f32.mrf.mxu0
    %v6136 = vadd.f32 %v6123, %v6135
    %v6137 = vpop.f32.mrf.mxu0
    %6138 = vdwg.mxu0
    %6139 = vmatpush.bf16.msra.mxu0 %v5528
    %6140 = vmatpush.bf16.msra.mxu0 %v5525
    %6141 = vmatpush.bf16.msra.mxu0 %v5522
    %6142 = vmatpush.bf16.msra.mxu0 %v5519
    %6143 = vmatpush.bf16.msra.mxu0 %v5516
    %6144 = vmatpush.bf16.msra.mxu0 %v5513
    %6145 = vmatpush.bf16.msra.mxu0 %v5510
    %6146 = vmatpush.bf16.msra.mxu0 %v5507
    %6147 = vmatmul.bf16.gmra.mxu0 %v6013
    %v6148 = vpop.f32.mrf.mxu0
    %v6149 = vadd.f32 %v6136, %v6148
    %v6150 = vpop.f32.mrf.mxu0
    %6151 = vdwg.mxu0
    %6152 = vmatpush.bf16.msra.mxu0 %v5552
    %6153 = vmatpush.bf16.msra.mxu0 %v5549
    %6154 = vmatpush.bf16.msra.mxu0 %v5546
    %6155 = vmatpush.bf16.msra.mxu0 %v5543
    %6156 = vmatpush.bf16.msra.mxu0 %v5540
    %6157 = vmatpush.bf16.msra.mxu0 %v5537
    %6158 = vmatpush.bf16.msra.mxu0 %v5534
    %6159 = vmatpush.bf16.msra.mxu0 %v5531
    %6160 = vmatmul.bf16.gmra.mxu0 %v6014
    %v6161 = vpop.f32.mrf.mxu0
    %v6162 = vadd.f32 %v6149, %v6161
    %v6163 = vpop.f32.mrf.mxu0
    %6164 = vdwg.mxu0
    %6165 = vmatpush.bf16.msra.mxu0 %v5576
    %6166 = vmatpush.bf16.msra.mxu0 %v5573
    %6167 = vmatpush.bf16.msra.mxu0 %v5570
    %6168 = vmatpush.bf16.msra.mxu0 %v5567
    %6169 = vmatpush.bf16.msra.mxu0 %v5564
    %6170 = vmatpush.bf16.msra.mxu0 %v5561
    %6171 = vmatpush.bf16.msra.mxu0 %v5558
    %6172 = vmatpush.bf16.msra.mxu0 %v5555
    %6173 = vmatmul.bf16.gmra.mxu0 %v6015
    %v6174 = vpop.f32.mrf.mxu0
    %v6175 = vadd.f32 %v6162, %v6174
    %v6176 = vpop.f32.mrf.mxu0
    %6177 = vdwg.mxu0
    %6178 = vmatpush.bf16.msra.mxu0 %v5457
    %6179 = vmatpush.bf16.msra.mxu0 %v5454
    %6180 = vmatpush.bf16.msra.mxu0 %v5451
    %6181 = vmatpush.bf16.msra.mxu0 %v5448
    %6182 = vmatpush.bf16.msra.mxu0 %v5445
    %6183 = vmatpush.bf16.msra.mxu0 %v5442
    %6184 = vmatpush.bf16.msra.mxu0 %v5439
    %6185 = vmatpush.bf16.msra.mxu0 %v5436
    %6186 = vmatmul.bf16.gmra.mxu0 %v6010
    %v6187 = vpop.f32.mrf.mxu0
    %v6188 = vadd.f32 %v4929, %v6187
    %v6189 = vpop.f32.mrf.mxu0
    %6190 = vdwg.mxu0
    %6191 = vmatpush.bf16.msra.mxu0 %v5481
    %6192 = vmatpush.bf16.msra.mxu0 %v5478
    %6193 = vmatpush.bf16.msra.mxu0 %v5475
    %6194 = vmatpush.bf16.msra.mxu0 %v5472
    %6195 = vmatpush.bf16.msra.mxu0 %v5469
    %6196 = vmatpush.bf16.msra.mxu0 %v5466
    %6197 = vmatpush.bf16.msra.mxu0 %v5463
    %6198 = vmatpush.bf16.msra.mxu0 %v5460
    %6199 = vmatmul.bf16.gmra.mxu0 %v6011
    %v6200 = vpop.f32.mrf.mxu0
    %v6201 = vadd.f32 %v6188, %v6200
    %v6202 = vpop.f32.mrf.mxu0
    %6203 = vdwg.mxu0
    %6204 = vmatpush.bf16.msra.mxu0 %v5505
    %6205 = vmatpush.bf16.msra.mxu0 %v5502
    %6206 = vmatpush.bf16.msra.mxu0 %v5499
    %6207 = vmatpush.bf16.msra.mxu0 %v5496
    %6208 = vmatpush.bf16.msra.mxu0 %v5493
    %6209 = vmatpush.bf16.msra.mxu0 %v5490
    %6210 = vmatpush.bf16.msra.mxu0 %v5487
    %6211 = vmatpush.bf16.msra.mxu0 %v5484
    %6212 = vmatmul.bf16.gmra.mxu0 %v6012
    %v6213 = vpop.f32.mrf.mxu0
    %v6214 = vadd.f32 %v6201, %v6213
    %v6215 = vpop.f32.mrf.mxu0
    %6216 = vdwg.mxu0
    %6217 = vmatpush.bf16.msra.mxu0 %v5529
    %6218 = vmatpush.bf16.msra.mxu0 %v5526
    %6219 = vmatpush.bf16.msra.mxu0 %v5523
    %6220 = vmatpush.bf16.msra.mxu0 %v5520
    %6221 = vmatpush.bf16.msra.mxu0 %v5517
    %6222 = vmatpush.bf16.msra.mxu0 %v5514
    %6223 = vmatpush.bf16.msra.mxu0 %v5511
    %6224 = vmatpush.bf16.msra.mxu0 %v5508
    %6225 = vmatmul.bf16.gmra.mxu0 %v6013
    %v6226 = vpop.f32.mrf.mxu0
    %v6227 = vadd.f32 %v6214, %v6226
    %v6228 = vpop.f32.mrf.mxu0
    %6229 = vdwg.mxu0
    %6230 = vmatpush.bf16.msra.mxu0 %v5553
    %6231 = vmatpush.bf16.msra.mxu0 %v5550
    %6232 = vmatpush.bf16.msra.mxu0 %v5547
    %6233 = vmatpush.bf16.msra.mxu0 %v5544
    %6234 = vmatpush.bf16.msra.mxu0 %v5541
    %6235 = vmatpush.bf16.msra.mxu0 %v5538
    %6236 = vmatpush.bf16.msra.mxu0 %v5535
    %6237 = vmatpush.bf16.msra.mxu0 %v5532
    %6238 = vmatmul.bf16.gmra.mxu0 %v6014
    %v6239 = vpop.f32.mrf.mxu0
    %v6240 = vadd.f32 %v6227, %v6239
    %v6241 = vpop.f32.mrf.mxu0
    %6242 = vdwg.mxu0
    %6243 = vmatpush.bf16.msra.mxu0 %v5577
    %6244 = vmatpush.bf16.msra.mxu0 %v5574
    %6245 = vmatpush.bf16.msra.mxu0 %v5571
    %6246 = vmatpush.bf16.msra.mxu0 %v5568
    %6247 = vmatpush.bf16.msra.mxu0 %v5565
    %6248 = vmatpush.bf16.msra.mxu0 %v5562
    %6249 = vmatpush.bf16.msra.mxu0 %v5559
    %6250 = vmatpush.bf16.msra.mxu0 %v5556
    %6251 = vmatmul.bf16.gmra.mxu0 %v6015
    %v6252 = vpop.f32.mrf.mxu0
    %v6253 = vadd.f32 %v6240, %v6252
    %v6254 = vpop.f32.mrf.mxu0
    %6255 = vdwg.mxu0
    %v6256 = vmax.f32 %v6097, 0.0
    %v6257 = vmax.f32 %v6175, 0.0
    %v6258 = vmax.f32 %v6253, 0.0
    %v6259 = vpack.c.bf16 %v6256, %v6256
    %v6260 = vpack.c.bf16 %v6257, %v6257
    %v6261 = vpack.c.bf16 %v6258, %v6258
    %s6262 = scalar_lea.vmem %s7, 144
    %v6263 = vld [vmem:[%s6262] sm:$0xf]
    %v6264 = vld [vmem:[%s6262 + $0x4] sm:$0xf]
    %v6265 = vld [vmem:[%s6262 + $0x8] sm:$0xf]
    %v6266 = vld [vmem:[%s6262 + $0xc] sm:$0xf]
    %v6267 = vld [vmem:[%s6262 + $0x10] sm:$0xf]
    %v6268 = vld [vmem:[%s6262 + $0x14] sm:$0xf]
    %v6269 = vld [vmem:[%s6262 + $0x18] sm:$0xf]
    %v6270 = vld [vmem:[%s6262 + $0x1c] sm:$0xf]
    %v6271 = vld [vmem:[%s6262 + $0x20] sm:$0xf]
    %v6272 = vld [vmem:[%s6262 + $0x24] sm:$0xf]
    %v6273 = vld [vmem:[%s6262 + $0x28] sm:$0xf]
    %v6274 = vld [vmem:[%s6262 + $0x2c] sm:$0xf]
    %v6275 = vld [vmem:[%s6262 + $0x30] sm:$0xf]
    %v6276 = vld [vmem:[%s6262 + $0x34] sm:$0xf]
    %v6277 = vld [vmem:[%s6262 + $0x38] sm:$0xf]
    %v6278 = vld [vmem:[%s6262 + $0x3c] sm:$0xf]
    %v6279 = vld [vmem:[%s6262 + $0x40] sm:$0xf]
    %v6280 = vld [vmem:[%s6262 + $0x44] sm:$0xf]
    %v6281 = vld [vmem:[%s6262 + $0x48] sm:$0xf]
    %v6282 = vld [vmem:[%s6262 + $0x4c] sm:$0xf]
    %v6283 = vld [vmem:[%s6262 + $0x50] sm:$0xf]
    %v6284 = vld [vmem:[%s6262 + $0x54] sm:$0xf]
    %v6285 = vld [vmem:[%s6262 + $0x58] sm:$0xf]
    %v6286 = vld [vmem:[%s6262 + $0x5c] sm:$0xf]
    %v6287 = vld [vmem:[%s6262 + $0x60] sm:$0xf]
    %v6288 = vld [vmem:[%s6262 + $0x64] sm:$0xf]
    %v6289 = vld [vmem:[%s6262 + $0x68] sm:$0xf]
    %v6290 = vld [vmem:[%s6262 + $0x6c] sm:$0xf]
    %v6291 = vld [vmem:[%s6262 + $0x70] sm:$0xf]
    %v6292 = vld [vmem:[%s6262 + $0x74] sm:$0xf]
    %v6293 = vld [vmem:[%s6262 + $0x78] sm:$0xf]
    %v6294 = vld [vmem:[%s6262 + $0x7c] sm:$0xf]
    %v6295 = vld [vmem:[%s6262 + $0x80] sm:$0xf]
    %v6296 = vld [vmem:[%s6262 + $0x84] sm:$0xf]
    %v6297 = vld [vmem:[%s6262 + $0x88] sm:$0xf]
    %v6298 = vld [vmem:[%s6262 + $0x8c] sm:$0xf]
    %v6335 = vunpack.c.l.b16 %v6263
    %v6336 = vunpack.c.l.b16 %v6264
    %v6337 = vunpack.c.l.b16 %v6265
    %v6338 = vunpack.c.l.b16 %v6266
    %v6339 = vunpack.c.l.b16 %v6267
    %v6340 = vunpack.c.l.b16 %v6268
    %v6341 = vunpack.c.l.b16 %v6269
    %v6342 = vunpack.c.l.b16 %v6270
    %v6343 = vunpack.c.l.b16 %v6271
    %v6344 = vunpack.c.l.b16 %v6272
    %v6345 = vunpack.c.l.b16 %v6273
    %v6346 = vunpack.c.l.b16 %v6274
    %v6347 = vunpack.c.l.b16 %v6275
    %v6348 = vunpack.c.l.b16 %v6276
    %v6349 = vunpack.c.l.b16 %v6277
    %v6350 = vunpack.c.l.b16 %v6278
    %v6351 = vunpack.c.l.b16 %v6279
    %v6352 = vunpack.c.l.b16 %v6280
    %v6353 = vunpack.c.l.b16 %v6281
    %v6354 = vunpack.c.l.b16 %v6282
    %v6355 = vunpack.c.l.b16 %v6283
    %v6356 = vunpack.c.l.b16 %v6284
    %v6357 = vunpack.c.l.b16 %v6285
    %v6358 = vunpack.c.l.b16 %v6286
    %v6359 = vunpack.c.l.b16 %v6287
    %v6360 = vunpack.c.l.b16 %v6288
    %v6361 = vunpack.c.l.b16 %v6289
    %v6362 = vunpack.c.l.b16 %v6290
    %v6363 = vunpack.c.l.b16 %v6291
    %v6364 = vunpack.c.l.b16 %v6292
    %v6365 = vunpack.c.l.b16 %v6293
    %v6366 = vunpack.c.l.b16 %v6294
    %v6367 = vunpack.c.l.b16 %v6295
    %v6368 = vunpack.c.l.b16 %v6296
    %v6369 = vunpack.c.l.b16 %v6297
    %v6370 = vunpack.c.l.b16 %v6298
    %v6371 = vpack.c.b16 %v6336, %v6335
    %v6372 = vpack.c.b16 %v6338, %v6337
    %v6373 = vpack.c.b16 %v6340, %v6339
    %v6374 = vpack.c.b16 %v6342, %v6341
    %v6375 = vpack.c.b16 %v6344, %v6343
    %v6376 = vpack.c.b16 %v6346, %v6345
    %v6377 = vpack.c.b16 %v6348, %v6347
    %v6378 = vpack.c.b16 %v6350, %v6349
    %v6379 = vpack.c.b16 %v6352, %v6351
    %v6380 = vpack.c.b16 %v6354, %v6353
    %v6381 = vpack.c.b16 %v6356, %v6355
    %v6382 = vpack.c.b16 %v6358, %v6357
    %v6383 = vpack.c.b16 %v6360, %v6359
    %v6384 = vpack.c.b16 %v6362, %v6361
    %v6385 = vpack.c.b16 %v6364, %v6363
    %v6386 = vpack.c.b16 %v6366, %v6365
    %v6387 = vpack.c.b16 %v6368, %v6367
    %v6388 = vpack.c.b16 %v6370, %v6369
    %vm6407 = vcmask 261120
    %v6409 = vsel %vm6407, %v6261, 0
    %6411 = vmatpush.bf16.msra.mxu0 %v6378
    %6412 = vmatpush.bf16.msra.mxu0 %v6377
    %6413 = vmatpush.bf16.msra.mxu0 %v6376
    %6414 = vmatpush.bf16.msra.mxu0 %v6375
    %6415 = vmatpush.bf16.msra.mxu0 %v6374
    %6416 = vmatpush.bf16.msra.mxu0 %v6373
    %6417 = vmatpush.bf16.msra.mxu0 %v6372
    %6418 = vmatpush.bf16.msra.mxu0 %v6371
    %6419 = vmatmul.bf16.gmra.mxu0 %v6259
    %v6420 = vpop.f32.mrf.mxu0
    %v6421 = vadd.f32 0.0, %v6420
    %v6422 = vpop.f32.mrf.mxu0
    %6423 = vdwg.mxu0
    %6424 = vmatpush.bf16.msra.mxu0 %v6386
    %6425 = vmatpush.bf16.msra.mxu0 %v6385
    %6426 = vmatpush.bf16.msra.mxu0 %v6384
    %6427 = vmatpush.bf16.msra.mxu0 %v6383
    %6428 = vmatpush.bf16.msra.mxu0 %v6382
    %6429 = vmatpush.bf16.msra.mxu0 %v6381
    %6430 = vmatpush.bf16.msra.mxu0 %v6380
    %6431 = vmatpush.bf16.msra.mxu0 %v6379
    %6432 = vmatmul.bf16.gmra.mxu0 %v6260
    %v6433 = vpop.f32.mrf.mxu0
    %v6434 = vadd.f32 %v6421, %v6433
    %v6435 = vpop.f32.mrf.mxu0
    %6436 = vdwg.mxu0
    %6437 = vmatpush.bf16.msra.mxu0 0
    %6438 = vmatpush.bf16.msra.mxu0 0
    %6439 = vmatpush.bf16.msra.mxu0 0
    %6440 = vmatpush.bf16.msra.mxu0 0
    %6441 = vmatpush.bf16.msra.mxu0 0
    %6442 = vmatpush.bf16.msra.mxu0 0
    %6443 = vmatpush.bf16.msra.mxu0 %v6388
    %6444 = vmatpush.bf16.msra.mxu0 %v6387
    %6445 = vmatmul.bf16.gmra.mxu0 %v6409
    %v6446 = vpop.f32.mrf.mxu0
    %v6447 = vadd.f32 %v6434, %v6446
    %v6448 = vpop.f32.mrf.mxu0
    %6449 = vdwg.mxu0
    %v6486 = vunpack.c.l.b16 %v5962
    %v6487 = vunpack.c.l.b16 %v5963
    %v6488 = vunpack.c.l.b16 %v5964
    %v6489 = vunpack.c.l.b16 %v5965
    %v6490 = vunpack.c.l.b16 %v5966
    %v6491 = vunpack.c.l.b16 %v5967
    %v6492 = vunpack.c.l.b16 %v5968
    %v6493 = vunpack.c.l.b16 %v5969
    %v6494 = vunpack.c.l.b16 %v5970
    %v6495 = vunpack.c.l.b16 %v5971
    %v6496 = vunpack.c.l.b16 %v5972
    %v6497 = vunpack.c.l.b16 %v5973
    %v6498 = vunpack.c.l.b16 %v5974
    %v6499 = vunpack.c.l.b16 %v5975
    %v6500 = vunpack.c.l.b16 %v5976
    %v6501 = vunpack.c.l.b16 %v5977
    %v6502 = vunpack.c.l.b16 %v5978
    %v6503 = vunpack.c.l.b16 %v5979
    %v6504 = vunpack.c.l.b16 %v5980
    %v6505 = vunpack.c.l.b16 %v5981
    %v6506 = vunpack.c.l.b16 %v5982
    %v6507 = vunpack.c.l.b16 %v5983
    %v6508 = vunpack.c.l.b16 %v5984
    %v6509 = vunpack.c.l.b16 %v5985
    %v6510 = vunpack.c.l.b16 %v5986
    %v6511 = vunpack.c.l.b16 %v5987
    %v6512 = vunpack.c.l.b16 %v5988
    %v6513 = vunpack.c.l.b16 %v5989
    %v6514 = vunpack.c.l.b16 %v5990
    %v6515 = vunpack.c.l.b16 %v5991
    %v6516 = vunpack.c.l.b16 %v5992
    %v6517 = vunpack.c.l.b16 %v5993
    %v6518 = vunpack.c.l.b16 %v5994
    %v6519 = vunpack.c.l.b16 %v5995
    %v6520 = vunpack.c.l.b16 %v5996
    %v6521 = vunpack.c.l.b16 %v5997
    %v6522 = vpack.c.b16 %v6487, %v6486
    %v6523 = vpack.c.b16 %v6489, %v6488
    %v6524 = vpack.c.b16 %v6491, %v6490
    %v6525 = vpack.c.b16 %v6493, %v6492
    %v6526 = vpack.c.b16 %v6495, %v6494
    %v6527 = vpack.c.b16 %v6497, %v6496
    %v6528 = vpack.c.b16 %v6499, %v6498
    %v6529 = vpack.c.b16 %v6501, %v6500
    %v6530 = vpack.c.b16 %v6503, %v6502
    %v6531 = vpack.c.b16 %v6505, %v6504
    %v6532 = vpack.c.b16 %v6507, %v6506
    %v6533 = vpack.c.b16 %v6509, %v6508
    %v6534 = vpack.c.b16 %v6511, %v6510
    %v6535 = vpack.c.b16 %v6513, %v6512
    %v6536 = vpack.c.b16 %v6515, %v6514
    %v6537 = vpack.c.b16 %v6517, %v6516
    %v6538 = vpack.c.b16 %v6519, %v6518
    %v6539 = vpack.c.b16 %v6521, %v6520
    %v6559 = vsel %vm6407, %v5961, 0
    %6561 = vmatpush.bf16.msra.mxu0 %v6529
    %6562 = vmatpush.bf16.msra.mxu0 %v6528
    %6563 = vmatpush.bf16.msra.mxu0 %v6527
    %6564 = vmatpush.bf16.msra.mxu0 %v6526
    %6565 = vmatpush.bf16.msra.mxu0 %v6525
    %6566 = vmatpush.bf16.msra.mxu0 %v6524
    %6567 = vmatpush.bf16.msra.mxu0 %v6523
    %6568 = vmatpush.bf16.msra.mxu0 %v6522
    %6569 = vmatmul.bf16.gmra.mxu0 %v5959
    %v6570 = vpop.f32.mrf.mxu0
    %v6571 = vadd.f32 %v6447, %v6570
    %v6572 = vpop.f32.mrf.mxu0
    %6573 = vdwg.mxu0
    %6574 = vmatpush.bf16.msra.mxu0 %v6537
    %6575 = vmatpush.bf16.msra.mxu0 %v6536
    %6576 = vmatpush.bf16.msra.mxu0 %v6535
    %6577 = vmatpush.bf16.msra.mxu0 %v6534
    %6578 = vmatpush.bf16.msra.mxu0 %v6533
    %6579 = vmatpush.bf16.msra.mxu0 %v6532
    %6580 = vmatpush.bf16.msra.mxu0 %v6531
    %6581 = vmatpush.bf16.msra.mxu0 %v6530
    %6582 = vmatmul.bf16.gmra.mxu0 %v5960
    %v6583 = vpop.f32.mrf.mxu0
    %v6584 = vadd.f32 %v6571, %v6583
    %v6585 = vpop.f32.mrf.mxu0
    %6586 = vdwg.mxu0
    %6587 = vmatpush.bf16.msra.mxu0 0
    %6588 = vmatpush.bf16.msra.mxu0 0
    %6589 = vmatpush.bf16.msra.mxu0 0
    %6590 = vmatpush.bf16.msra.mxu0 0
    %6591 = vmatpush.bf16.msra.mxu0 0
    %6592 = vmatpush.bf16.msra.mxu0 0
    %6593 = vmatpush.bf16.msra.mxu0 %v6539
    %6594 = vmatpush.bf16.msra.mxu0 %v6538
    %6595 = vmatmul.bf16.gmra.mxu0 %v6559
    %v6596 = vpop.f32.mrf.mxu0
    %v6597 = vadd.f32 %v6584, %v6596
    %v6598 = vpop.f32.mrf.mxu0
    %6599 = vdwg.mxu0
    %v6600 = vld [vmem:[#allocation2 + $0x10] sm:$0xff]
    %v6601 = vld [vmem:[#allocation2 + $0x18] sm:$0xff]
    %v6602 = vld [vmem:[#allocation2 + $0x20] sm:$0xff]
    %v6606 = vunpack.c.l.b16 %v6600
    %v6607 = vunpack.c.h.b16 %v6600
    %v6608 = vunpack.c.l.b16 %v6601
    %v6609 = vunpack.c.h.b16 %v6601
    %v6610 = vunpack.c.l.b16 %v6602
    %v6611 = vunpack.c.h.b16 %v6602
    %v6612 = vpack.c.b16 %v6606, %v6606
    %v6613 = vpack.c.b16 %v6607, %v6607
    %v6614 = vpack.c.b16 %v6608, %v6608
    %v6615 = vpack.c.b16 %v6609, %v6609
    %v6616 = vpack.c.b16 %v6610, %v6610
    %v6617 = vpack.c.b16 %v6611, %v6611
    %6624 = vmatpush.bf16.msra.mxu0 %v5455
    %6625 = vmatpush.bf16.msra.mxu0 %v5452
    %6626 = vmatpush.bf16.msra.mxu0 %v5449
    %6627 = vmatpush.bf16.msra.mxu0 %v5446
    %6628 = vmatpush.bf16.msra.mxu0 %v5443
    %6629 = vmatpush.bf16.msra.mxu0 %v5440
    %6630 = vmatpush.bf16.msra.mxu0 %v5437
    %6631 = vmatpush.bf16.msra.mxu0 %v5434
    %6632 = vmatmul.bf16.gmra.mxu0 %v6612
    %v6633 = vpop.f32.mrf.mxu0
    %v6634 = vadd.f32 %v4927, %v6633
    %v6635 = vpop.f32.mrf.mxu0
    %6636 = vdwg.mxu0
    %6637 = vmatpush.bf16.msra.mxu0 %v5479
    %6638 = vmatpush.bf16.msra.mxu0 %v5476
    %6639 = vmatpush.bf16.msra.mxu0 %v5473
    %6640 = vmatpush.bf16.msra.mxu0 %v5470
    %6641 = vmatpush.bf16.msra.mxu0 %v5467
    %6642 = vmatpush.bf16.msra.mxu0 %v5464
    %6643 = vmatpush.bf16.msra.mxu0 %v5461
    %6644 = vmatpush.bf16.msra.mxu0 %v5458
    %6645 = vmatmul.bf16.gmra.mxu0 %v6613
    %v6646 = vpop.f32.mrf.mxu0
    %v6647 = vadd.f32 %v6634, %v6646
    %v6648 = vpop.f32.mrf.mxu0
    %6649 = vdwg.mxu0
    %6650 = vmatpush.bf16.msra.mxu0 %v5503
    %6651 = vmatpush.bf16.msra.mxu0 %v5500
    %6652 = vmatpush.bf16.msra.mxu0 %v5497
    %6653 = vmatpush.bf16.msra.mxu0 %v5494
    %6654 = vmatpush.bf16.msra.mxu0 %v5491
    %6655 = vmatpush.bf16.msra.mxu0 %v5488
    %6656 = vmatpush.bf16.msra.mxu0 %v5485
    %6657 = vmatpush.bf16.msra.mxu0 %v5482
    %6658 = vmatmul.bf16.gmra.mxu0 %v6614
    %v6659 = vpop.f32.mrf.mxu0
    %v6660 = vadd.f32 %v6647, %v6659
    %v6661 = vpop.f32.mrf.mxu0
    %6662 = vdwg.mxu0
    %6663 = vmatpush.bf16.msra.mxu0 %v5527
    %6664 = vmatpush.bf16.msra.mxu0 %v5524
    %6665 = vmatpush.bf16.msra.mxu0 %v5521
    %6666 = vmatpush.bf16.msra.mxu0 %v5518
    %6667 = vmatpush.bf16.msra.mxu0 %v5515
    %6668 = vmatpush.bf16.msra.mxu0 %v5512
    %6669 = vmatpush.bf16.msra.mxu0 %v5509
    %6670 = vmatpush.bf16.msra.mxu0 %v5506
    %6671 = vmatmul.bf16.gmra.mxu0 %v6615
    %v6672 = vpop.f32.mrf.mxu0
    %v6673 = vadd.f32 %v6660, %v6672
    %v6674 = vpop.f32.mrf.mxu0
    %6675 = vdwg.mxu0
    %6676 = vmatpush.bf16.msra.mxu0 %v5551
    %6677 = vmatpush.bf16.msra.mxu0 %v5548
    %6678 = vmatpush.bf16.msra.mxu0 %v5545
    %6679 = vmatpush.bf16.msra.mxu0 %v5542
    %6680 = vmatpush.bf16.msra.mxu0 %v5539
    %6681 = vmatpush.bf16.msra.mxu0 %v5536
    %6682 = vmatpush.bf16.msra.mxu0 %v5533
    %6683 = vmatpush.bf16.msra.mxu0 %v5530
    %6684 = vmatmul.bf16.gmra.mxu0 %v6616
    %v6685 = vpop.f32.mrf.mxu0
    %v6686 = vadd.f32 %v6673, %v6685
    %v6687 = vpop.f32.mrf.mxu0
    %6688 = vdwg.mxu0
    %6689 = vmatpush.bf16.msra.mxu0 %v5575
    %6690 = vmatpush.bf16.msra.mxu0 %v5572
    %6691 = vmatpush.bf16.msra.mxu0 %v5569
    %6692 = vmatpush.bf16.msra.mxu0 %v5566
    %6693 = vmatpush.bf16.msra.mxu0 %v5563
    %6694 = vmatpush.bf16.msra.mxu0 %v5560
    %6695 = vmatpush.bf16.msra.mxu0 %v5557
    %6696 = vmatpush.bf16.msra.mxu0 %v5554
    %6697 = vmatmul.bf16.gmra.mxu0 %v6617
    %v6698 = vpop.f32.mrf.mxu0
    %v6699 = vadd.f32 %v6686, %v6698
    %v6700 = vpop.f32.mrf.mxu0
    %6701 = vdwg.mxu0
    %6702 = vmatpush.bf16.msra.mxu0 %v5456
    %6703 = vmatpush.bf16.msra.mxu0 %v5453
    %6704 = vmatpush.bf16.msra.mxu0 %v5450
    %6705 = vmatpush.bf16.msra.mxu0 %v5447
    %6706 = vmatpush.bf16.msra.mxu0 %v5444
    %6707 = vmatpush.bf16.msra.mxu0 %v5441
    %6708 = vmatpush.bf16.msra.mxu0 %v5438
    %6709 = vmatpush.bf16.msra.mxu0 %v5435
    %6710 = vmatmul.bf16.gmra.mxu0 %v6612
    %v6711 = vpop.f32.mrf.mxu0
    %v6712 = vadd.f32 %v4928, %v6711
    %v6713 = vpop.f32.mrf.mxu0
    %6714 = vdwg.mxu0
    %6715 = vmatpush.bf16.msra.mxu0 %v5480
    %6716 = vmatpush.bf16.msra.mxu0 %v5477
    %6717 = vmatpush.bf16.msra.mxu0 %v5474
    %6718 = vmatpush.bf16.msra.mxu0 %v5471
    %6719 = vmatpush.bf16.msra.mxu0 %v5468
    %6720 = vmatpush.bf16.msra.mxu0 %v5465
    %6721 = vmatpush.bf16.msra.mxu0 %v5462
    %6722 = vmatpush.bf16.msra.mxu0 %v5459
    %6723 = vmatmul.bf16.gmra.mxu0 %v6613
    %v6724 = vpop.f32.mrf.mxu0
    %v6725 = vadd.f32 %v6712, %v6724
    %v6726 = vpop.f32.mrf.mxu0
    %6727 = vdwg.mxu0
    %6728 = vmatpush.bf16.msra.mxu0 %v5504
    %6729 = vmatpush.bf16.msra.mxu0 %v5501
    %6730 = vmatpush.bf16.msra.mxu0 %v5498
    %6731 = vmatpush.bf16.msra.mxu0 %v5495
    %6732 = vmatpush.bf16.msra.mxu0 %v5492
    %6733 = vmatpush.bf16.msra.mxu0 %v5489
    %6734 = vmatpush.bf16.msra.mxu0 %v5486
    %6735 = vmatpush.bf16.msra.mxu0 %v5483
    %6736 = vmatmul.bf16.gmra.mxu0 %v6614
    %v6737 = vpop.f32.mrf.mxu0
    %v6738 = vadd.f32 %v6725, %v6737
    %v6739 = vpop.f32.mrf.mxu0
    %6740 = vdwg.mxu0
    %6741 = vmatpush.bf16.msra.mxu0 %v5528
    %6742 = vmatpush.bf16.msra.mxu0 %v5525
    %6743 = vmatpush.bf16.msra.mxu0 %v5522
    %6744 = vmatpush.bf16.msra.mxu0 %v5519
    %6745 = vmatpush.bf16.msra.mxu0 %v5516
    %6746 = vmatpush.bf16.msra.mxu0 %v5513
    %6747 = vmatpush.bf16.msra.mxu0 %v5510
    %6748 = vmatpush.bf16.msra.mxu0 %v5507
    %6749 = vmatmul.bf16.gmra.mxu0 %v6615
    %v6750 = vpop.f32.mrf.mxu0
    %v6751 = vadd.f32 %v6738, %v6750
    %v6752 = vpop.f32.mrf.mxu0
    %6753 = vdwg.mxu0
    %6754 = vmatpush.bf16.msra.mxu0 %v5552
    %6755 = vmatpush.bf16.msra.mxu0 %v5549
    %6756 = vmatpush.bf16.msra.mxu0 %v5546
    %6757 = vmatpush.bf16.msra.mxu0 %v5543
    %6758 = vmatpush.bf16.msra.mxu0 %v5540
    %6759 = vmatpush.bf16.msra.mxu0 %v5537
    %6760 = vmatpush.bf16.msra.mxu0 %v5534
    %6761 = vmatpush.bf16.msra.mxu0 %v5531
    %6762 = vmatmul.bf16.gmra.mxu0 %v6616
    %v6763 = vpop.f32.mrf.mxu0
    %v6764 = vadd.f32 %v6751, %v6763
    %v6765 = vpop.f32.mrf.mxu0
    %6766 = vdwg.mxu0
    %6767 = vmatpush.bf16.msra.mxu0 %v5576
    %6768 = vmatpush.bf16.msra.mxu0 %v5573
    %6769 = vmatpush.bf16.msra.mxu0 %v5570
    %6770 = vmatpush.bf16.msra.mxu0 %v5567
    %6771 = vmatpush.bf16.msra.mxu0 %v5564
    %6772 = vmatpush.bf16.msra.mxu0 %v5561
    %6773 = vmatpush.bf16.msra.mxu0 %v5558
    %6774 = vmatpush.bf16.msra.mxu0 %v5555
    %6775 = vmatmul.bf16.gmra.mxu0 %v6617
    %v6776 = vpop.f32.mrf.mxu0
    %v6777 = vadd.f32 %v6764, %v6776
    %v6778 = vpop.f32.mrf.mxu0
    %6779 = vdwg.mxu0
    %6780 = vmatpush.bf16.msra.mxu0 %v5457
    %6781 = vmatpush.bf16.msra.mxu0 %v5454
    %6782 = vmatpush.bf16.msra.mxu0 %v5451
    %6783 = vmatpush.bf16.msra.mxu0 %v5448
    %6784 = vmatpush.bf16.msra.mxu0 %v5445
    %6785 = vmatpush.bf16.msra.mxu0 %v5442
    %6786 = vmatpush.bf16.msra.mxu0 %v5439
    %6787 = vmatpush.bf16.msra.mxu0 %v5436
    %6788 = vmatmul.bf16.gmra.mxu0 %v6612
    %v6789 = vpop.f32.mrf.mxu0
    %v6790 = vadd.f32 %v4929, %v6789
    %v6791 = vpop.f32.mrf.mxu0
    %6792 = vdwg.mxu0
    %6793 = vmatpush.bf16.msra.mxu0 %v5481
    %6794 = vmatpush.bf16.msra.mxu0 %v5478
    %6795 = vmatpush.bf16.msra.mxu0 %v5475
    %6796 = vmatpush.bf16.msra.mxu0 %v5472
    %6797 = vmatpush.bf16.msra.mxu0 %v5469
    %6798 = vmatpush.bf16.msra.mxu0 %v5466
    %6799 = vmatpush.bf16.msra.mxu0 %v5463
    %6800 = vmatpush.bf16.msra.mxu0 %v5460
    %6801 = vmatmul.bf16.gmra.mxu0 %v6613
    %v6802 = vpop.f32.mrf.mxu0
    %v6803 = vadd.f32 %v6790, %v6802
    %v6804 = vpop.f32.mrf.mxu0
    %6805 = vdwg.mxu0
    %6806 = vmatpush.bf16.msra.mxu0 %v5505
    %6807 = vmatpush.bf16.msra.mxu0 %v5502
    %6808 = vmatpush.bf16.msra.mxu0 %v5499
    %6809 = vmatpush.bf16.msra.mxu0 %v5496
    %6810 = vmatpush.bf16.msra.mxu0 %v5493
    %6811 = vmatpush.bf16.msra.mxu0 %v5490
    %6812 = vmatpush.bf16.msra.mxu0 %v5487
    %6813 = vmatpush.bf16.msra.mxu0 %v5484
    %6814 = vmatmul.bf16.gmra.mxu0 %v6614
    %v6815 = vpop.f32.mrf.mxu0
    %v6816 = vadd.f32 %v6803, %v6815
    %v6817 = vpop.f32.mrf.mxu0
    %6818 = vdwg.mxu0
    %6819 = vmatpush.bf16.msra.mxu0 %v5529
    %6820 = vmatpush.bf16.msra.mxu0 %v5526
    %6821 = vmatpush.bf16.msra.mxu0 %v5523
    %6822 = vmatpush.bf16.msra.mxu0 %v5520
    %6823 = vmatpush.bf16.msra.mxu0 %v5517
    %6824 = vmatpush.bf16.msra.mxu0 %v5514
    %6825 = vmatpush.bf16.msra.mxu0 %v5511
    %6826 = vmatpush.bf16.msra.mxu0 %v5508
    %6827 = vmatmul.bf16.gmra.mxu0 %v6615
    %v6828 = vpop.f32.mrf.mxu0
    %v6829 = vadd.f32 %v6816, %v6828
    %v6830 = vpop.f32.mrf.mxu0
    %6831 = vdwg.mxu0
    %6832 = vmatpush.bf16.msra.mxu0 %v5553
    %6833 = vmatpush.bf16.msra.mxu0 %v5550
    %6834 = vmatpush.bf16.msra.mxu0 %v5547
    %6835 = vmatpush.bf16.msra.mxu0 %v5544
    %6836 = vmatpush.bf16.msra.mxu0 %v5541
    %6837 = vmatpush.bf16.msra.mxu0 %v5538
    %6838 = vmatpush.bf16.msra.mxu0 %v5535
    %6839 = vmatpush.bf16.msra.mxu0 %v5532
    %6840 = vmatmul.bf16.gmra.mxu0 %v6616
    %v6841 = vpop.f32.mrf.mxu0
    %v6842 = vadd.f32 %v6829, %v6841
    %v6843 = vpop.f32.mrf.mxu0
    %6844 = vdwg.mxu0
    %6845 = vmatpush.bf16.msra.mxu0 %v5577
    %6846 = vmatpush.bf16.msra.mxu0 %v5574
    %6847 = vmatpush.bf16.msra.mxu0 %v5571
    %6848 = vmatpush.bf16.msra.mxu0 %v5568
    %6849 = vmatpush.bf16.msra.mxu0 %v5565
    %6850 = vmatpush.bf16.msra.mxu0 %v5562
    %6851 = vmatpush.bf16.msra.mxu0 %v5559
    %6852 = vmatpush.bf16.msra.mxu0 %v5556
    %6853 = vmatmul.bf16.gmra.mxu0 %v6617
    %v6854 = vpop.f32.mrf.mxu0
    %v6855 = vadd.f32 %v6842, %v6854
    %v6856 = vpop.f32.mrf.mxu0
    %6857 = vdwg.mxu0
    %v6858 = vmax.f32 %v6699, 0.0
    %v6859 = vmax.f32 %v6777, 0.0
    %v6860 = vmax.f32 %v6855, 0.0
    %v6861 = vpack.c.bf16 %v6858, %v6858
    %v6862 = vpack.c.bf16 %v6859, %v6859
    %v6863 = vpack.c.bf16 %v6860, %v6860
    %s6864 = scalar_lea.vmem %s7, 288
    %v6865 = vld [vmem:[%s6864] sm:$0xf]
    %v6866 = vld [vmem:[%s6864 + $0x4] sm:$0xf]
    %v6867 = vld [vmem:[%s6864 + $0x8] sm:$0xf]
    %v6868 = vld [vmem:[%s6864 + $0xc] sm:$0xf]
    %v6869 = vld [vmem:[%s6864 + $0x10] sm:$0xf]
    %v6870 = vld [vmem:[%s6864 + $0x14] sm:$0xf]
    %v6871 = vld [vmem:[%s6864 + $0x18] sm:$0xf]
    %v6872 = vld [vmem:[%s6864 + $0x1c] sm:$0xf]
    %v6873 = vld [vmem:[%s6864 + $0x20] sm:$0xf]
    %v6874 = vld [vmem:[%s6864 + $0x24] sm:$0xf]
    %v6875 = vld [vmem:[%s6864 + $0x28] sm:$0xf]
    %v6876 = vld [vmem:[%s6864 + $0x2c] sm:$0xf]
    %v6877 = vld [vmem:[%s6864 + $0x30] sm:$0xf]
    %v6878 = vld [vmem:[%s6864 + $0x34] sm:$0xf]
    %v6879 = vld [vmem:[%s6864 + $0x38] sm:$0xf]
    %v6880 = vld [vmem:[%s6864 + $0x3c] sm:$0xf]
    %v6881 = vld [vmem:[%s6864 + $0x40] sm:$0xf]
    %v6882 = vld [vmem:[%s6864 + $0x44] sm:$0xf]
    %v6883 = vld [vmem:[%s6864 + $0x48] sm:$0xf]
    %v6884 = vld [vmem:[%s6864 + $0x4c] sm:$0xf]
    %v6885 = vld [vmem:[%s6864 + $0x50] sm:$0xf]
    %v6886 = vld [vmem:[%s6864 + $0x54] sm:$0xf]
    %v6887 = vld [vmem:[%s6864 + $0x58] sm:$0xf]
    %v6888 = vld [vmem:[%s6864 + $0x5c] sm:$0xf]
    %v6889 = vld [vmem:[%s6864 + $0x60] sm:$0xf]
    %v6890 = vld [vmem:[%s6864 + $0x64] sm:$0xf]
    %v6891 = vld [vmem:[%s6864 + $0x68] sm:$0xf]
    %v6892 = vld [vmem:[%s6864 + $0x6c] sm:$0xf]
    %v6893 = vld [vmem:[%s6864 + $0x70] sm:$0xf]
    %v6894 = vld [vmem:[%s6864 + $0x74] sm:$0xf]
    %v6895 = vld [vmem:[%s6864 + $0x78] sm:$0xf]
    %v6896 = vld [vmem:[%s6864 + $0x7c] sm:$0xf]
    %v6897 = vld [vmem:[%s6864 + $0x80] sm:$0xf]
    %v6898 = vld [vmem:[%s6864 + $0x84] sm:$0xf]
    %v6899 = vld [vmem:[%s6864 + $0x88] sm:$0xf]
    %v6900 = vld [vmem:[%s6864 + $0x8c] sm:$0xf]
    %v6937 = vunpack.c.l.b16 %v6865
    %v6938 = vunpack.c.l.b16 %v6866
    %v6939 = vunpack.c.l.b16 %v6867
    %v6940 = vunpack.c.l.b16 %v6868
    %v6941 = vunpack.c.l.b16 %v6869
    %v6942 = vunpack.c.l.b16 %v6870
    %v6943 = vunpack.c.l.b16 %v6871
    %v6944 = vunpack.c.l.b16 %v6872
    %v6945 = vunpack.c.l.b16 %v6873
    %v6946 = vunpack.c.l.b16 %v6874
    %v6947 = vunpack.c.l.b16 %v6875
    %v6948 = vunpack.c.l.b16 %v6876
    %v6949 = vunpack.c.l.b16 %v6877
    %v6950 = vunpack.c.l.b16 %v6878
    %v6951 = vunpack.c.l.b16 %v6879
    %v6952 = vunpack.c.l.b16 %v6880
    %v6953 = vunpack.c.l.b16 %v6881
    %v6954 = vunpack.c.l.b16 %v6882
    %v6955 = vunpack.c.l.b16 %v6883
    %v6956 = vunpack.c.l.b16 %v6884
    %v6957 = vunpack.c.l.b16 %v6885
    %v6958 = vunpack.c.l.b16 %v6886
    %v6959 = vunpack.c.l.b16 %v6887
    %v6960 = vunpack.c.l.b16 %v6888
    %v6961 = vunpack.c.l.b16 %v6889
    %v6962 = vunpack.c.l.b16 %v6890
    %v6963 = vunpack.c.l.b16 %v6891
    %v6964 = vunpack.c.l.b16 %v6892
    %v6965 = vunpack.c.l.b16 %v6893
    %v6966 = vunpack.c.l.b16 %v6894
    %v6967 = vunpack.c.l.b16 %v6895
    %v6968 = vunpack.c.l.b16 %v6896
    %v6969 = vunpack.c.l.b16 %v6897
    %v6970 = vunpack.c.l.b16 %v6898
    %v6971 = vunpack.c.l.b16 %v6899
    %v6972 = vunpack.c.l.b16 %v6900
    %v6973 = vpack.c.b16 %v6938, %v6937
    %v6974 = vpack.c.b16 %v6940, %v6939
    %v6975 = vpack.c.b16 %v6942, %v6941
    %v6976 = vpack.c.b16 %v6944, %v6943
    %v6977 = vpack.c.b16 %v6946, %v6945
    %v6978 = vpack.c.b16 %v6948, %v6947
    %v6979 = vpack.c.b16 %v6950, %v6949
    %v6980 = vpack.c.b16 %v6952, %v6951
    %v6981 = vpack.c.b16 %v6954, %v6953
    %v6982 = vpack.c.b16 %v6956, %v6955
    %v6983 = vpack.c.b16 %v6958, %v6957
    %v6984 = vpack.c.b16 %v6960, %v6959
    %v6985 = vpack.c.b16 %v6962, %v6961
    %v6986 = vpack.c.b16 %v6964, %v6963
    %v6987 = vpack.c.b16 %v6966, %v6965
    %v6988 = vpack.c.b16 %v6968, %v6967
    %v6989 = vpack.c.b16 %v6970, %v6969
    %v6990 = vpack.c.b16 %v6972, %v6971
    %v7010 = vsel %vm6407, %v6863, 0
    %7012 = vmatpush.bf16.msra.mxu0 %v6980
    %7013 = vmatpush.bf16.msra.mxu0 %v6979
    %7014 = vmatpush.bf16.msra.mxu0 %v6978
    %7015 = vmatpush.bf16.msra.mxu0 %v6977
    %7016 = vmatpush.bf16.msra.mxu0 %v6976
    %7017 = vmatpush.bf16.msra.mxu0 %v6975
    %7018 = vmatpush.bf16.msra.mxu0 %v6974
    %7019 = vmatpush.bf16.msra.mxu0 %v6973
    %7020 = vmatmul.bf16.gmra.mxu0 %v6861
    %v7021 = vpop.f32.mrf.mxu0
    %v7022 = vadd.f32 0.0, %v7021
    %v7023 = vpop.f32.mrf.mxu0
    %7024 = vdwg.mxu0
    %7025 = vmatpush.bf16.msra.mxu0 %v6988
    %7026 = vmatpush.bf16.msra.mxu0 %v6987
    %7027 = vmatpush.bf16.msra.mxu0 %v6986
    %7028 = vmatpush.bf16.msra.mxu0 %v6985
    %7029 = vmatpush.bf16.msra.mxu0 %v6984
    %7030 = vmatpush.bf16.msra.mxu0 %v6983
    %7031 = vmatpush.bf16.msra.mxu0 %v6982
    %7032 = vmatpush.bf16.msra.mxu0 %v6981
    %7033 = vmatmul.bf16.gmra.mxu0 %v6862
    %v7034 = vpop.f32.mrf.mxu0
    %v7035 = vadd.f32 %v7022, %v7034
    %v7036 = vpop.f32.mrf.mxu0
    %7037 = vdwg.mxu0
    %7038 = vmatpush.bf16.msra.mxu0 0
    %7039 = vmatpush.bf16.msra.mxu0 0
    %7040 = vmatpush.bf16.msra.mxu0 0
    %7041 = vmatpush.bf16.msra.mxu0 0
    %7042 = vmatpush.bf16.msra.mxu0 0
    %7043 = vmatpush.bf16.msra.mxu0 0
    %7044 = vmatpush.bf16.msra.mxu0 %v6990
    %7045 = vmatpush.bf16.msra.mxu0 %v6989
    %7046 = vmatmul.bf16.gmra.mxu0 %v7010
    %v7047 = vpop.f32.mrf.mxu0
    %v7048 = vadd.f32 %v7035, %v7047
    %v7049 = vpop.f32.mrf.mxu0
    %7050 = vdwg.mxu0
    %v7051 = vadd.f32 %v6597, %v7048
    %v7052 = vld [vmem:[#allocation2 + $0x18] sm:$0xff]
    %v7053 = vld [vmem:[#allocation2 + $0x20] sm:$0xff]
    %v7054 = vld [vmem:[#allocation2 + $0x28] sm:$0xff]
    %v7058 = vunpack.c.l.b16 %v7052
    %v7059 = vunpack.c.h.b16 %v7052
    %v7060 = vunpack.c.l.b16 %v7053
    %v7061 = vunpack.c.h.b16 %v7053
    %v7062 = vunpack.c.l.b16 %v7054
    %v7063 = vunpack.c.h.b16 %v7054
    %v7064 = vpack.c.b16 %v7058, %v7058
    %v7065 = vpack.c.b16 %v7059, %v7059
    %v7066 = vpack.c.b16 %v7060, %v7060
    %v7067 = vpack.c.b16 %v7061, %v7061
    %v7068 = vpack.c.b16 %v7062, %v7062
    %v7069 = vpack.c.b16 %v7063, %v7063
    %7076 = vmatpush.bf16.msra.mxu0 %v5455
    %7077 = vmatpush.bf16.msra.mxu0 %v5452
    %7078 = vmatpush.bf16.msra.mxu0 %v5449
    %7079 = vmatpush.bf16.msra.mxu0 %v5446
    %7080 = vmatpush.bf16.msra.mxu0 %v5443
    %7081 = vmatpush.bf16.msra.mxu0 %v5440
    %7082 = vmatpush.bf16.msra.mxu0 %v5437
    %7083 = vmatpush.bf16.msra.mxu0 %v5434
    %7084 = vmatmul.bf16.gmra.mxu0 %v7064
    %v7085 = vpop.f32.mrf.mxu0
    %v7086 = vadd.f32 %v4927, %v7085
    %v7087 = vpop.f32.mrf.mxu0
    %7088 = vdwg.mxu0
    %7089 = vmatpush.bf16.msra.mxu0 %v5479
    %7090 = vmatpush.bf16.msra.mxu0 %v5476
    %7091 = vmatpush.bf16.msra.mxu0 %v5473
    %7092 = vmatpush.bf16.msra.mxu0 %v5470
    %7093 = vmatpush.bf16.msra.mxu0 %v5467
    %7094 = vmatpush.bf16.msra.mxu0 %v5464
    %7095 = vmatpush.bf16.msra.mxu0 %v5461
    %7096 = vmatpush.bf16.msra.mxu0 %v5458
    %7097 = vmatmul.bf16.gmra.mxu0 %v7065
    %v7098 = vpop.f32.mrf.mxu0
    %v7099 = vadd.f32 %v7086, %v7098
    %v7100 = vpop.f32.mrf.mxu0
    %7101 = vdwg.mxu0
    %7102 = vmatpush.bf16.msra.mxu0 %v5503
    %7103 = vmatpush.bf16.msra.mxu0 %v5500
    %7104 = vmatpush.bf16.msra.mxu0 %v5497
    %7105 = vmatpush.bf16.msra.mxu0 %v5494
    %7106 = vmatpush.bf16.msra.mxu0 %v5491
    %7107 = vmatpush.bf16.msra.mxu0 %v5488
    %7108 = vmatpush.bf16.msra.mxu0 %v5485
    %7109 = vmatpush.bf16.msra.mxu0 %v5482
    %7110 = vmatmul.bf16.gmra.mxu0 %v7066
    %v7111 = vpop.f32.mrf.mxu0
    %v7112 = vadd.f32 %v7099, %v7111
    %v7113 = vpop.f32.mrf.mxu0
    %7114 = vdwg.mxu0
    %7115 = vmatpush.bf16.msra.mxu0 %v5527
    %7116 = vmatpush.bf16.msra.mxu0 %v5524
    %7117 = vmatpush.bf16.msra.mxu0 %v5521
    %7118 = vmatpush.bf16.msra.mxu0 %v5518
    %7119 = vmatpush.bf16.msra.mxu0 %v5515
    %7120 = vmatpush.bf16.msra.mxu0 %v5512
    %7121 = vmatpush.bf16.msra.mxu0 %v5509
    %7122 = vmatpush.bf16.msra.mxu0 %v5506
    %7123 = vmatmul.bf16.gmra.mxu0 %v7067
    %v7124 = vpop.f32.mrf.mxu0
    %v7125 = vadd.f32 %v7112, %v7124
    %v7126 = vpop.f32.mrf.mxu0
    %7127 = vdwg.mxu0
    %7128 = vmatpush.bf16.msra.mxu0 %v5551
    %7129 = vmatpush.bf16.msra.mxu0 %v5548
    %7130 = vmatpush.bf16.msra.mxu0 %v5545
    %7131 = vmatpush.bf16.msra.mxu0 %v5542
    %7132 = vmatpush.bf16.msra.mxu0 %v5539
    %7133 = vmatpush.bf16.msra.mxu0 %v5536
    %7134 = vmatpush.bf16.msra.mxu0 %v5533
    %7135 = vmatpush.bf16.msra.mxu0 %v5530
    %7136 = vmatmul.bf16.gmra.mxu0 %v7068
    %v7137 = vpop.f32.mrf.mxu0
    %v7138 = vadd.f32 %v7125, %v7137
    %v7139 = vpop.f32.mrf.mxu0
    %7140 = vdwg.mxu0
    %7141 = vmatpush.bf16.msra.mxu0 %v5575
    %7142 = vmatpush.bf16.msra.mxu0 %v5572
    %7143 = vmatpush.bf16.msra.mxu0 %v5569
    %7144 = vmatpush.bf16.msra.mxu0 %v5566
    %7145 = vmatpush.bf16.msra.mxu0 %v5563
    %7146 = vmatpush.bf16.msra.mxu0 %v5560
    %7147 = vmatpush.bf16.msra.mxu0 %v5557
    %7148 = vmatpush.bf16.msra.mxu0 %v5554
    %7149 = vmatmul.bf16.gmra.mxu0 %v7069
    %v7150 = vpop.f32.mrf.mxu0
    %v7151 = vadd.f32 %v7138, %v7150
    %v7152 = vpop.f32.mrf.mxu0
    %7153 = vdwg.mxu0
    %7154 = vmatpush.bf16.msra.mxu0 %v5456
    %7155 = vmatpush.bf16.msra.mxu0 %v5453
    %7156 = vmatpush.bf16.msra.mxu0 %v5450
    %7157 = vmatpush.bf16.msra.mxu0 %v5447
    %7158 = vmatpush.bf16.msra.mxu0 %v5444
    %7159 = vmatpush.bf16.msra.mxu0 %v5441
    %7160 = vmatpush.bf16.msra.mxu0 %v5438
    %7161 = vmatpush.bf16.msra.mxu0 %v5435
    %7162 = vmatmul.bf16.gmra.mxu0 %v7064
    %v7163 = vpop.f32.mrf.mxu0
    %v7164 = vadd.f32 %v4928, %v7163
    %v7165 = vpop.f32.mrf.mxu0
    %7166 = vdwg.mxu0
    %7167 = vmatpush.bf16.msra.mxu0 %v5480
    %7168 = vmatpush.bf16.msra.mxu0 %v5477
    %7169 = vmatpush.bf16.msra.mxu0 %v5474
    %7170 = vmatpush.bf16.msra.mxu0 %v5471
    %7171 = vmatpush.bf16.msra.mxu0 %v5468
    %7172 = vmatpush.bf16.msra.mxu0 %v5465
    %7173 = vmatpush.bf16.msra.mxu0 %v5462
    %7174 = vmatpush.bf16.msra.mxu0 %v5459
    %7175 = vmatmul.bf16.gmra.mxu0 %v7065
    %v7176 = vpop.f32.mrf.mxu0
    %v7177 = vadd.f32 %v7164, %v7176
    %v7178 = vpop.f32.mrf.mxu0
    %7179 = vdwg.mxu0
    %7180 = vmatpush.bf16.msra.mxu0 %v5504
    %7181 = vmatpush.bf16.msra.mxu0 %v5501
    %7182 = vmatpush.bf16.msra.mxu0 %v5498
    %7183 = vmatpush.bf16.msra.mxu0 %v5495
    %7184 = vmatpush.bf16.msra.mxu0 %v5492
    %7185 = vmatpush.bf16.msra.mxu0 %v5489
    %7186 = vmatpush.bf16.msra.mxu0 %v5486
    %7187 = vmatpush.bf16.msra.mxu0 %v5483
    %7188 = vmatmul.bf16.gmra.mxu0 %v7066
    %v7189 = vpop.f32.mrf.mxu0
    %v7190 = vadd.f32 %v7177, %v7189
    %v7191 = vpop.f32.mrf.mxu0
    %7192 = vdwg.mxu0
    %7193 = vmatpush.bf16.msra.mxu0 %v5528
    %7194 = vmatpush.bf16.msra.mxu0 %v5525
    %7195 = vmatpush.bf16.msra.mxu0 %v5522
    %7196 = vmatpush.bf16.msra.mxu0 %v5519
    %7197 = vmatpush.bf16.msra.mxu0 %v5516
    %7198 = vmatpush.bf16.msra.mxu0 %v5513
    %7199 = vmatpush.bf16.msra.mxu0 %v5510
    %7200 = vmatpush.bf16.msra.mxu0 %v5507
    %7201 = vmatmul.bf16.gmra.mxu0 %v7067
    %v7202 = vpop.f32.mrf.mxu0
    %v7203 = vadd.f32 %v7190, %v7202
    %v7204 = vpop.f32.mrf.mxu0
    %7205 = vdwg.mxu0
    %7206 = vmatpush.bf16.msra.mxu0 %v5552
    %7207 = vmatpush.bf16.msra.mxu0 %v5549
    %7208 = vmatpush.bf16.msra.mxu0 %v5546
    %7209 = vmatpush.bf16.msra.mxu0 %v5543
    %7210 = vmatpush.bf16.msra.mxu0 %v5540
    %7211 = vmatpush.bf16.msra.mxu0 %v5537
    %7212 = vmatpush.bf16.msra.mxu0 %v5534
    %7213 = vmatpush.bf16.msra.mxu0 %v5531
    %7214 = vmatmul.bf16.gmra.mxu0 %v7068
    %v7215 = vpop.f32.mrf.mxu0
    %v7216 = vadd.f32 %v7203, %v7215
    %v7217 = vpop.f32.mrf.mxu0
    %7218 = vdwg.mxu0
    %7219 = vmatpush.bf16.msra.mxu0 %v5576
    %7220 = vmatpush.bf16.msra.mxu0 %v5573
    %7221 = vmatpush.bf16.msra.mxu0 %v5570
    %7222 = vmatpush.bf16.msra.mxu0 %v5567
    %7223 = vmatpush.bf16.msra.mxu0 %v5564
    %7224 = vmatpush.bf16.msra.mxu0 %v5561
    %7225 = vmatpush.bf16.msra.mxu0 %v5558
    %7226 = vmatpush.bf16.msra.mxu0 %v5555
    %7227 = vmatmul.bf16.gmra.mxu0 %v7069
    %v7228 = vpop.f32.mrf.mxu0
    %v7229 = vadd.f32 %v7216, %v7228
    %v7230 = vpop.f32.mrf.mxu0
    %7231 = vdwg.mxu0
    %7232 = vmatpush.bf16.msra.mxu0 %v5457
    %7233 = vmatpush.bf16.msra.mxu0 %v5454
    %7234 = vmatpush.bf16.msra.mxu0 %v5451
    %7235 = vmatpush.bf16.msra.mxu0 %v5448
    %7236 = vmatpush.bf16.msra.mxu0 %v5445
    %7237 = vmatpush.bf16.msra.mxu0 %v5442
    %7238 = vmatpush.bf16.msra.mxu0 %v5439
    %7239 = vmatpush.bf16.msra.mxu0 %v5436
    %7240 = vmatmul.bf16.gmra.mxu0 %v7064
    %v7241 = vpop.f32.mrf.mxu0
    %v7242 = vadd.f32 %v4929, %v7241
    %v7243 = vpop.f32.mrf.mxu0
    %7244 = vdwg.mxu0
    %7245 = vmatpush.bf16.msra.mxu0 %v5481
    %7246 = vmatpush.bf16.msra.mxu0 %v5478
    %7247 = vmatpush.bf16.msra.mxu0 %v5475
    %7248 = vmatpush.bf16.msra.mxu0 %v5472
    %7249 = vmatpush.bf16.msra.mxu0 %v5469
    %7250 = vmatpush.bf16.msra.mxu0 %v5466
    %7251 = vmatpush.bf16.msra.mxu0 %v5463
    %7252 = vmatpush.bf16.msra.mxu0 %v5460
    %7253 = vmatmul.bf16.gmra.mxu0 %v7065
    %v7254 = vpop.f32.mrf.mxu0
    %v7255 = vadd.f32 %v7242, %v7254
    %v7256 = vpop.f32.mrf.mxu0
    %7257 = vdwg.mxu0
    %7258 = vmatpush.bf16.msra.mxu0 %v5505
    %7259 = vmatpush.bf16.msra.mxu0 %v5502
    %7260 = vmatpush.bf16.msra.mxu0 %v5499
    %7261 = vmatpush.bf16.msra.mxu0 %v5496
    %7262 = vmatpush.bf16.msra.mxu0 %v5493
    %7263 = vmatpush.bf16.msra.mxu0 %v5490
    %7264 = vmatpush.bf16.msra.mxu0 %v5487
    %7265 = vmatpush.bf16.msra.mxu0 %v5484
    %7266 = vmatmul.bf16.gmra.mxu0 %v7066
    %v7267 = vpop.f32.mrf.mxu0
    %v7268 = vadd.f32 %v7255, %v7267
    %v7269 = vpop.f32.mrf.mxu0
    %7270 = vdwg.mxu0
    %7271 = vmatpush.bf16.msra.mxu0 %v5529
    %7272 = vmatpush.bf16.msra.mxu0 %v5526
    %7273 = vmatpush.bf16.msra.mxu0 %v5523
    %7274 = vmatpush.bf16.msra.mxu0 %v5520
    %7275 = vmatpush.bf16.msra.mxu0 %v5517
    %7276 = vmatpush.bf16.msra.mxu0 %v5514
    %7277 = vmatpush.bf16.msra.mxu0 %v5511
    %7278 = vmatpush.bf16.msra.mxu0 %v5508
    %7279 = vmatmul.bf16.gmra.mxu0 %v7067
    %v7280 = vpop.f32.mrf.mxu0
    %v7281 = vadd.f32 %v7268, %v7280
    %v7282 = vpop.f32.mrf.mxu0
    %7283 = vdwg.mxu0
    %7284 = vmatpush.bf16.msra.mxu0 %v5553
    %7285 = vmatpush.bf16.msra.mxu0 %v5550
    %7286 = vmatpush.bf16.msra.mxu0 %v5547
    %7287 = vmatpush.bf16.msra.mxu0 %v5544
    %7288 = vmatpush.bf16.msra.mxu0 %v5541
    %7289 = vmatpush.bf16.msra.mxu0 %v5538
    %7290 = vmatpush.bf16.msra.mxu0 %v5535
    %7291 = vmatpush.bf16.msra.mxu0 %v5532
    %7292 = vmatmul.bf16.gmra.mxu0 %v7068
    %v7293 = vpop.f32.mrf.mxu0
    %v7294 = vadd.f32 %v7281, %v7293
    %v7295 = vpop.f32.mrf.mxu0
    %7296 = vdwg.mxu0
    %7297 = vmatpush.bf16.msra.mxu0 %v5577
    %7298 = vmatpush.bf16.msra.mxu0 %v5574
    %7299 = vmatpush.bf16.msra.mxu0 %v5571
    %7300 = vmatpush.bf16.msra.mxu0 %v5568
    %7301 = vmatpush.bf16.msra.mxu0 %v5565
    %7302 = vmatpush.bf16.msra.mxu0 %v5562
    %7303 = vmatpush.bf16.msra.mxu0 %v5559
    %7304 = vmatpush.bf16.msra.mxu0 %v5556
    %7305 = vmatmul.bf16.gmra.mxu0 %v7069
    %v7306 = vpop.f32.mrf.mxu0
    %v7307 = vadd.f32 %v7294, %v7306
    %v7308 = vpop.f32.mrf.mxu0
    %7309 = vdwg.mxu0
    %v7310 = vmax.f32 %v7151, 0.0
    %v7311 = vmax.f32 %v7229, 0.0
    %v7312 = vmax.f32 %v7307, 0.0
    %v7313 = vpack.c.bf16 %v7310, %v7310
    %v7314 = vpack.c.bf16 %v7311, %v7311
    %v7315 = vpack.c.bf16 %v7312, %v7312
    %s7316 = scalar_lea.vmem %s7, 432
    %v7317 = vld [vmem:[%s7316] sm:$0xf]
    %v7318 = vld [vmem:[%s7316 + $0x4] sm:$0xf]
    %v7319 = vld [vmem:[%s7316 + $0x8] sm:$0xf]
    %v7320 = vld [vmem:[%s7316 + $0xc] sm:$0xf]
    %v7321 = vld [vmem:[%s7316 + $0x10] sm:$0xf]
    %v7322 = vld [vmem:[%s7316 + $0x14] sm:$0xf]
    %v7323 = vld [vmem:[%s7316 + $0x18] sm:$0xf]
    %v7324 = vld [vmem:[%s7316 + $0x1c] sm:$0xf]
    %v7325 = vld [vmem:[%s7316 + $0x20] sm:$0xf]
    %v7326 = vld [vmem:[%s7316 + $0x24] sm:$0xf]
    %v7327 = vld [vmem:[%s7316 + $0x28] sm:$0xf]
    %v7328 = vld [vmem:[%s7316 + $0x2c] sm:$0xf]
    %v7329 = vld [vmem:[%s7316 + $0x30] sm:$0xf]
    %v7330 = vld [vmem:[%s7316 + $0x34] sm:$0xf]
    %v7331 = vld [vmem:[%s7316 + $0x38] sm:$0xf]
    %v7332 = vld [vmem:[%s7316 + $0x3c] sm:$0xf]
    %v7333 = vld [vmem:[%s7316 + $0x40] sm:$0xf]
    %v7334 = vld [vmem:[%s7316 + $0x44] sm:$0xf]
    %v7335 = vld [vmem:[%s7316 + $0x48] sm:$0xf]
    %v7336 = vld [vmem:[%s7316 + $0x4c] sm:$0xf]
    %v7337 = vld [vmem:[%s7316 + $0x50] sm:$0xf]
    %v7338 = vld [vmem:[%s7316 + $0x54] sm:$0xf]
    %v7339 = vld [vmem:[%s7316 + $0x58] sm:$0xf]
    %v7340 = vld [vmem:[%s7316 + $0x5c] sm:$0xf]
    %v7341 = vld [vmem:[%s7316 + $0x60] sm:$0xf]
    %v7342 = vld [vmem:[%s7316 + $0x64] sm:$0xf]
    %v7343 = vld [vmem:[%s7316 + $0x68] sm:$0xf]
    %v7344 = vld [vmem:[%s7316 + $0x6c] sm:$0xf]
    %v7345 = vld [vmem:[%s7316 + $0x70] sm:$0xf]
    %v7346 = vld [vmem:[%s7316 + $0x74] sm:$0xf]
    %v7347 = vld [vmem:[%s7316 + $0x78] sm:$0xf]
    %v7348 = vld [vmem:[%s7316 + $0x7c] sm:$0xf]
    %v7349 = vld [vmem:[%s7316 + $0x80] sm:$0xf]
    %v7350 = vld [vmem:[%s7316 + $0x84] sm:$0xf]
    %v7351 = vld [vmem:[%s7316 + $0x88] sm:$0xf]
    %v7352 = vld [vmem:[%s7316 + $0x8c] sm:$0xf]
    %v7389 = vunpack.c.l.b16 %v7317
    %v7390 = vunpack.c.l.b16 %v7318
    %v7391 = vunpack.c.l.b16 %v7319
    %v7392 = vunpack.c.l.b16 %v7320
    %v7393 = vunpack.c.l.b16 %v7321
    %v7394 = vunpack.c.l.b16 %v7322
    %v7395 = vunpack.c.l.b16 %v7323
    %v7396 = vunpack.c.l.b16 %v7324
    %v7397 = vunpack.c.l.b16 %v7325
    %v7398 = vunpack.c.l.b16 %v7326
    %v7399 = vunpack.c.l.b16 %v7327
    %v7400 = vunpack.c.l.b16 %v7328
    %v7401 = vunpack.c.l.b16 %v7329
    %v7402 = vunpack.c.l.b16 %v7330
    %v7403 = vunpack.c.l.b16 %v7331
    %v7404 = vunpack.c.l.b16 %v7332
    %v7405 = vunpack.c.l.b16 %v7333
    %v7406 = vunpack.c.l.b16 %v7334
    %v7407 = vunpack.c.l.b16 %v7335
    %v7408 = vunpack.c.l.b16 %v7336
    %v7409 = vunpack.c.l.b16 %v7337
    %v7410 = vunpack.c.l.b16 %v7338
    %v7411 = vunpack.c.l.b16 %v7339
    %v7412 = vunpack.c.l.b16 %v7340
    %v7413 = vunpack.c.l.b16 %v7341
    %v7414 = vunpack.c.l.b16 %v7342
    %v7415 = vunpack.c.l.b16 %v7343
    %v7416 = vunpack.c.l.b16 %v7344
    %v7417 = vunpack.c.l.b16 %v7345
    %v7418 = vunpack.c.l.b16 %v7346
    %v7419 = vunpack.c.l.b16 %v7347
    %v7420 = vunpack.c.l.b16 %v7348
    %v7421 = vunpack.c.l.b16 %v7349
    %v7422 = vunpack.c.l.b16 %v7350
    %v7423 = vunpack.c.l.b16 %v7351
    %v7424 = vunpack.c.l.b16 %v7352
    %v7425 = vpack.c.b16 %v7390, %v7389
    %v7426 = vpack.c.b16 %v7392, %v7391
    %v7427 = vpack.c.b16 %v7394, %v7393
    %v7428 = vpack.c.b16 %v7396, %v7395
    %v7429 = vpack.c.b16 %v7398, %v7397
    %v7430 = vpack.c.b16 %v7400, %v7399
    %v7431 = vpack.c.b16 %v7402, %v7401
    %v7432 = vpack.c.b16 %v7404, %v7403
    %v7433 = vpack.c.b16 %v7406, %v7405
    %v7434 = vpack.c.b16 %v7408, %v7407
    %v7435 = vpack.c.b16 %v7410, %v7409
    %v7436 = vpack.c.b16 %v7412, %v7411
    %v7437 = vpack.c.b16 %v7414, %v7413
    %v7438 = vpack.c.b16 %v7416, %v7415
    %v7439 = vpack.c.b16 %v7418, %v7417
    %v7440 = vpack.c.b16 %v7420, %v7419
    %v7441 = vpack.c.b16 %v7422, %v7421
    %v7442 = vpack.c.b16 %v7424, %v7423
    %v7462 = vsel %vm6407, %v7315, 0
    %7464 = vmatpush.bf16.msra.mxu0 %v7432
    %7465 = vmatpush.bf16.msra.mxu0 %v7431
    %7466 = vmatpush.bf16.msra.mxu0 %v7430
    %7467 = vmatpush.bf16.msra.mxu0 %v7429
    %7468 = vmatpush.bf16.msra.mxu0 %v7428
    %7469 = vmatpush.bf16.msra.mxu0 %v7427
    %7470 = vmatpush.bf16.msra.mxu0 %v7426
    %7471 = vmatpush.bf16.msra.mxu0 %v7425
    %7472 = vmatmul.bf16.gmra.mxu0 %v7313
    %v7473 = vpop.f32.mrf.mxu0
    %v7474 = vadd.f32 0.0, %v7473
    %v7475 = vpop.f32.mrf.mxu0
    %7476 = vdwg.mxu0
    %7477 = vmatpush.bf16.msra.mxu0 %v7440
    %7478 = vmatpush.bf16.msra.mxu0 %v7439
    %7479 = vmatpush.bf16.msra.mxu0 %v7438
    %7480 = vmatpush.bf16.msra.mxu0 %v7437
    %7481 = vmatpush.bf16.msra.mxu0 %v7436
    %7482 = vmatpush.bf16.msra.mxu0 %v7435
    %7483 = vmatpush.bf16.msra.mxu0 %v7434
    %7484 = vmatpush.bf16.msra.mxu0 %v7433
    %7485 = vmatmul.bf16.gmra.mxu0 %v7314
    %v7486 = vpop.f32.mrf.mxu0
    %v7487 = vadd.f32 %v7474, %v7486
    %v7488 = vpop.f32.mrf.mxu0
    %7489 = vdwg.mxu0
    %7490 = vmatpush.bf16.msra.mxu0 0
    %7491 = vmatpush.bf16.msra.mxu0 0
    %7492 = vmatpush.bf16.msra.mxu0 0
    %7493 = vmatpush.bf16.msra.mxu0 0
    %7494 = vmatpush.bf16.msra.mxu0 0
    %7495 = vmatpush.bf16.msra.mxu0 0
    %7496 = vmatpush.bf16.msra.mxu0 %v7442
    %7497 = vmatpush.bf16.msra.mxu0 %v7441
    %7498 = vmatmul.bf16.gmra.mxu0 %v7462
    %v7499 = vpop.f32.mrf.mxu0
    %v7500 = vadd.f32 %v7487, %v7499
    %v7501 = vpop.f32.mrf.mxu0
    %7502 = vdwg.mxu0
    %v7503 = vadd.f32 %v7051, %v7500
    %v7504 = vld [vmem:[#allocation2 + $0x20] sm:$0xff]
    %v7505 = vld [vmem:[#allocation2 + $0x28] sm:$0xff]
    %v7506 = vld [vmem:[#allocation2 + $0x30] sm:$0xff]
    %v7510 = vunpack.c.l.b16 %v7504
    %v7511 = vunpack.c.h.b16 %v7504
    %v7512 = vunpack.c.l.b16 %v7505
    %v7513 = vunpack.c.h.b16 %v7505
    %v7514 = vunpack.c.l.b16 %v7506
    %v7515 = vunpack.c.h.b16 %v7506
    %v7516 = vpack.c.b16 %v7510, %v7510
    %v7517 = vpack.c.b16 %v7511, %v7511
    %v7518 = vpack.c.b16 %v7512, %v7512
    %v7519 = vpack.c.b16 %v7513, %v7513
    %v7520 = vpack.c.b16 %v7514, %v7514
    %v7521 = vpack.c.b16 %v7515, %v7515
    %7528 = vmatpush.bf16.msra.mxu0 %v5455
    %7529 = vmatpush.bf16.msra.mxu0 %v5452
    %7530 = vmatpush.bf16.msra.mxu0 %v5449
    %7531 = vmatpush.bf16.msra.mxu0 %v5446
    %7532 = vmatpush.bf16.msra.mxu0 %v5443
    %7533 = vmatpush.bf16.msra.mxu0 %v5440
    %7534 = vmatpush.bf16.msra.mxu0 %v5437
    %7535 = vmatpush.bf16.msra.mxu0 %v5434
    %7536 = vmatmul.bf16.gmra.mxu0 %v7516
    %v7537 = vpop.f32.mrf.mxu0
    %v7538 = vadd.f32 %v4927, %v7537
    %v7539 = vpop.f32.mrf.mxu0
    %7540 = vdwg.mxu0
    %7541 = vmatpush.bf16.msra.mxu0 %v5479
    %7542 = vmatpush.bf16.msra.mxu0 %v5476
    %7543 = vmatpush.bf16.msra.mxu0 %v5473
    %7544 = vmatpush.bf16.msra.mxu0 %v5470
    %7545 = vmatpush.bf16.msra.mxu0 %v5467
    %7546 = vmatpush.bf16.msra.mxu0 %v5464
    %7547 = vmatpush.bf16.msra.mxu0 %v5461
    %7548 = vmatpush.bf16.msra.mxu0 %v5458
    %7549 = vmatmul.bf16.gmra.mxu0 %v7517
    %v7550 = vpop.f32.mrf.mxu0
    %v7551 = vadd.f32 %v7538, %v7550
    %v7552 = vpop.f32.mrf.mxu0
    %7553 = vdwg.mxu0
    %7554 = vmatpush.bf16.msra.mxu0 %v5503
    %7555 = vmatpush.bf16.msra.mxu0 %v5500
    %7556 = vmatpush.bf16.msra.mxu0 %v5497
    %7557 = vmatpush.bf16.msra.mxu0 %v5494
    %7558 = vmatpush.bf16.msra.mxu0 %v5491
    %7559 = vmatpush.bf16.msra.mxu0 %v5488
    %7560 = vmatpush.bf16.msra.mxu0 %v5485
    %7561 = vmatpush.bf16.msra.mxu0 %v5482
    %7562 = vmatmul.bf16.gmra.mxu0 %v7518
    %v7563 = vpop.f32.mrf.mxu0
    %v7564 = vadd.f32 %v7551, %v7563
    %v7565 = vpop.f32.mrf.mxu0
    %7566 = vdwg.mxu0
    %7567 = vmatpush.bf16.msra.mxu0 %v5527
    %7568 = vmatpush.bf16.msra.mxu0 %v5524
    %7569 = vmatpush.bf16.msra.mxu0 %v5521
    %7570 = vmatpush.bf16.msra.mxu0 %v5518
    %7571 = vmatpush.bf16.msra.mxu0 %v5515
    %7572 = vmatpush.bf16.msra.mxu0 %v5512
    %7573 = vmatpush.bf16.msra.mxu0 %v5509
    %7574 = vmatpush.bf16.msra.mxu0 %v5506
    %7575 = vmatmul.bf16.gmra.mxu0 %v7519
    %v7576 = vpop.f32.mrf.mxu0
    %v7577 = vadd.f32 %v7564, %v7576
    %v7578 = vpop.f32.mrf.mxu0
    %7579 = vdwg.mxu0
    %7580 = vmatpush.bf16.msra.mxu0 %v5551
    %7581 = vmatpush.bf16.msra.mxu0 %v5548
    %7582 = vmatpush.bf16.msra.mxu0 %v5545
    %7583 = vmatpush.bf16.msra.mxu0 %v5542
    %7584 = vmatpush.bf16.msra.mxu0 %v5539
    %7585 = vmatpush.bf16.msra.mxu0 %v5536
    %7586 = vmatpush.bf16.msra.mxu0 %v5533
    %7587 = vmatpush.bf16.msra.mxu0 %v5530
    %7588 = vmatmul.bf16.gmra.mxu0 %v7520
    %v7589 = vpop.f32.mrf.mxu0
    %v7590 = vadd.f32 %v7577, %v7589
    %v7591 = vpop.f32.mrf.mxu0
    %7592 = vdwg.mxu0
    %7593 = vmatpush.bf16.msra.mxu0 %v5575
    %7594 = vmatpush.bf16.msra.mxu0 %v5572
    %7595 = vmatpush.bf16.msra.mxu0 %v5569
    %7596 = vmatpush.bf16.msra.mxu0 %v5566
    %7597 = vmatpush.bf16.msra.mxu0 %v5563
    %7598 = vmatpush.bf16.msra.mxu0 %v5560
    %7599 = vmatpush.bf16.msra.mxu0 %v5557
    %7600 = vmatpush.bf16.msra.mxu0 %v5554
    %7601 = vmatmul.bf16.gmra.mxu0 %v7521
    %v7602 = vpop.f32.mrf.mxu0
    %v7603 = vadd.f32 %v7590, %v7602
    %v7604 = vpop.f32.mrf.mxu0
    %7605 = vdwg.mxu0
    %7606 = vmatpush.bf16.msra.mxu0 %v5456
    %7607 = vmatpush.bf16.msra.mxu0 %v5453
    %7608 = vmatpush.bf16.msra.mxu0 %v5450
    %7609 = vmatpush.bf16.msra.mxu0 %v5447
    %7610 = vmatpush.bf16.msra.mxu0 %v5444
    %7611 = vmatpush.bf16.msra.mxu0 %v5441
    %7612 = vmatpush.bf16.msra.mxu0 %v5438
    %7613 = vmatpush.bf16.msra.mxu0 %v5435
    %7614 = vmatmul.bf16.gmra.mxu0 %v7516
    %v7615 = vpop.f32.mrf.mxu0
    %v7616 = vadd.f32 %v4928, %v7615
    %v7617 = vpop.f32.mrf.mxu0
    %7618 = vdwg.mxu0
    %7619 = vmatpush.bf16.msra.mxu0 %v5480
    %7620 = vmatpush.bf16.msra.mxu0 %v5477
    %7621 = vmatpush.bf16.msra.mxu0 %v5474
    %7622 = vmatpush.bf16.msra.mxu0 %v5471
    %7623 = vmatpush.bf16.msra.mxu0 %v5468
    %7624 = vmatpush.bf16.msra.mxu0 %v5465
    %7625 = vmatpush.bf16.msra.mxu0 %v5462
    %7626 = vmatpush.bf16.msra.mxu0 %v5459
    %7627 = vmatmul.bf16.gmra.mxu0 %v7517
    %v7628 = vpop.f32.mrf.mxu0
    %v7629 = vadd.f32 %v7616, %v7628
    %v7630 = vpop.f32.mrf.mxu0
    %7631 = vdwg.mxu0
    %7632 = vmatpush.bf16.msra.mxu0 %v5504
    %7633 = vmatpush.bf16.msra.mxu0 %v5501
    %7634 = vmatpush.bf16.msra.mxu0 %v5498
    %7635 = vmatpush.bf16.msra.mxu0 %v5495
    %7636 = vmatpush.bf16.msra.mxu0 %v5492
    %7637 = vmatpush.bf16.msra.mxu0 %v5489
    %7638 = vmatpush.bf16.msra.mxu0 %v5486
    %7639 = vmatpush.bf16.msra.mxu0 %v5483
    %7640 = vmatmul.bf16.gmra.mxu0 %v7518
    %v7641 = vpop.f32.mrf.mxu0
    %v7642 = vadd.f32 %v7629, %v7641
    %v7643 = vpop.f32.mrf.mxu0
    %7644 = vdwg.mxu0
    %7645 = vmatpush.bf16.msra.mxu0 %v5528
    %7646 = vmatpush.bf16.msra.mxu0 %v5525
    %7647 = vmatpush.bf16.msra.mxu0 %v5522
    %7648 = vmatpush.bf16.msra.mxu0 %v5519
    %7649 = vmatpush.bf16.msra.mxu0 %v5516
    %7650 = vmatpush.bf16.msra.mxu0 %v5513
    %7651 = vmatpush.bf16.msra.mxu0 %v5510
    %7652 = vmatpush.bf16.msra.mxu0 %v5507
    %7653 = vmatmul.bf16.gmra.mxu0 %v7519
    %v7654 = vpop.f32.mrf.mxu0
    %v7655 = vadd.f32 %v7642, %v7654
    %v7656 = vpop.f32.mrf.mxu0
    %7657 = vdwg.mxu0
    %7658 = vmatpush.bf16.msra.mxu0 %v5552
    %7659 = vmatpush.bf16.msra.mxu0 %v5549
    %7660 = vmatpush.bf16.msra.mxu0 %v5546
    %7661 = vmatpush.bf16.msra.mxu0 %v5543
    %7662 = vmatpush.bf16.msra.mxu0 %v5540
    %7663 = vmatpush.bf16.msra.mxu0 %v5537
    %7664 = vmatpush.bf16.msra.mxu0 %v5534
    %7665 = vmatpush.bf16.msra.mxu0 %v5531
    %7666 = vmatmul.bf16.gmra.mxu0 %v7520
    %v7667 = vpop.f32.mrf.mxu0
    %v7668 = vadd.f32 %v7655, %v7667
    %v7669 = vpop.f32.mrf.mxu0
    %7670 = vdwg.mxu0
    %7671 = vmatpush.bf16.msra.mxu0 %v5576
    %7672 = vmatpush.bf16.msra.mxu0 %v5573
    %7673 = vmatpush.bf16.msra.mxu0 %v5570
    %7674 = vmatpush.bf16.msra.mxu0 %v5567
    %7675 = vmatpush.bf16.msra.mxu0 %v5564
    %7676 = vmatpush.bf16.msra.mxu0 %v5561
    %7677 = vmatpush.bf16.msra.mxu0 %v5558
    %7678 = vmatpush.bf16.msra.mxu0 %v5555
    %7679 = vmatmul.bf16.gmra.mxu0 %v7521
    %v7680 = vpop.f32.mrf.mxu0
    %v7681 = vadd.f32 %v7668, %v7680
    %v7682 = vpop.f32.mrf.mxu0
    %7683 = vdwg.mxu0
    %7684 = vmatpush.bf16.msra.mxu0 %v5457
    %7685 = vmatpush.bf16.msra.mxu0 %v5454
    %7686 = vmatpush.bf16.msra.mxu0 %v5451
    %7687 = vmatpush.bf16.msra.mxu0 %v5448
    %7688 = vmatpush.bf16.msra.mxu0 %v5445
    %7689 = vmatpush.bf16.msra.mxu0 %v5442
    %7690 = vmatpush.bf16.msra.mxu0 %v5439
    %7691 = vmatpush.bf16.msra.mxu0 %v5436
    %7692 = vmatmul.bf16.gmra.mxu0 %v7516
    %v7693 = vpop.f32.mrf.mxu0
    %v7694 = vadd.f32 %v4929, %v7693
    %v7695 = vpop.f32.mrf.mxu0
    %7696 = vdwg.mxu0
    %7697 = vmatpush.bf16.msra.mxu0 %v5481
    %7698 = vmatpush.bf16.msra.mxu0 %v5478
    %7699 = vmatpush.bf16.msra.mxu0 %v5475
    %7700 = vmatpush.bf16.msra.mxu0 %v5472
    %7701 = vmatpush.bf16.msra.mxu0 %v5469
    %7702 = vmatpush.bf16.msra.mxu0 %v5466
    %7703 = vmatpush.bf16.msra.mxu0 %v5463
    %7704 = vmatpush.bf16.msra.mxu0 %v5460
    %7705 = vmatmul.bf16.gmra.mxu0 %v7517
    %v7706 = vpop.f32.mrf.mxu0
    %v7707 = vadd.f32 %v7694, %v7706
    %v7708 = vpop.f32.mrf.mxu0
    %7709 = vdwg.mxu0
    %7710 = vmatpush.bf16.msra.mxu0 %v5505
    %7711 = vmatpush.bf16.msra.mxu0 %v5502
    %7712 = vmatpush.bf16.msra.mxu0 %v5499
    %7713 = vmatpush.bf16.msra.mxu0 %v5496
    %7714 = vmatpush.bf16.msra.mxu0 %v5493
    %7715 = vmatpush.bf16.msra.mxu0 %v5490
    %7716 = vmatpush.bf16.msra.mxu0 %v5487
    %7717 = vmatpush.bf16.msra.mxu0 %v5484
    %7718 = vmatmul.bf16.gmra.mxu0 %v7518
    %v7719 = vpop.f32.mrf.mxu0
    %v7720 = vadd.f32 %v7707, %v7719
    %v7721 = vpop.f32.mrf.mxu0
    %7722 = vdwg.mxu0
    %7723 = vmatpush.bf16.msra.mxu0 %v5529
    %7724 = vmatpush.bf16.msra.mxu0 %v5526
    %7725 = vmatpush.bf16.msra.mxu0 %v5523
    %7726 = vmatpush.bf16.msra.mxu0 %v5520
    %7727 = vmatpush.bf16.msra.mxu0 %v5517
    %7728 = vmatpush.bf16.msra.mxu0 %v5514
    %7729 = vmatpush.bf16.msra.mxu0 %v5511
    %7730 = vmatpush.bf16.msra.mxu0 %v5508
    %7731 = vmatmul.bf16.gmra.mxu0 %v7519
    %v7732 = vpop.f32.mrf.mxu0
    %v7733 = vadd.f32 %v7720, %v7732
    %v7734 = vpop.f32.mrf.mxu0
    %7735 = vdwg.mxu0
    %7736 = vmatpush.bf16.msra.mxu0 %v5553
    %7737 = vmatpush.bf16.msra.mxu0 %v5550
    %7738 = vmatpush.bf16.msra.mxu0 %v5547
    %7739 = vmatpush.bf16.msra.mxu0 %v5544
    %7740 = vmatpush.bf16.msra.mxu0 %v5541
    %7741 = vmatpush.bf16.msra.mxu0 %v5538
    %7742 = vmatpush.bf16.msra.mxu0 %v5535
    %7743 = vmatpush.bf16.msra.mxu0 %v5532
    %7744 = vmatmul.bf16.gmra.mxu0 %v7520
    %v7745 = vpop.f32.mrf.mxu0
    %v7746 = vadd.f32 %v7733, %v7745
    %v7747 = vpop.f32.mrf.mxu0
    %7748 = vdwg.mxu0
    %7749 = vmatpush.bf16.msra.mxu0 %v5577
    %7750 = vmatpush.bf16.msra.mxu0 %v5574
    %7751 = vmatpush.bf16.msra.mxu0 %v5571
    %7752 = vmatpush.bf16.msra.mxu0 %v5568
    %7753 = vmatpush.bf16.msra.mxu0 %v5565
    %7754 = vmatpush.bf16.msra.mxu0 %v5562
    %7755 = vmatpush.bf16.msra.mxu0 %v5559
    %7756 = vmatpush.bf16.msra.mxu0 %v5556
    %7757 = vmatmul.bf16.gmra.mxu0 %v7521
    %v7758 = vpop.f32.mrf.mxu0
    %v7759 = vadd.f32 %v7746, %v7758
    %v7760 = vpop.f32.mrf.mxu0
    %7761 = vdwg.mxu0
    %v7762 = vmax.f32 %v7603, 0.0
    %v7763 = vmax.f32 %v7681, 0.0
    %v7764 = vmax.f32 %v7759, 0.0
    %v7765 = vpack.c.bf16 %v7762, %v7762
    %v7766 = vpack.c.bf16 %v7763, %v7763
    %v7767 = vpack.c.bf16 %v7764, %v7764
    %s7768 = scalar_lea.vmem %s7, 576
    %v7769 = vld [vmem:[%s7768] sm:$0xf]
    %v7770 = vld [vmem:[%s7768 + $0x4] sm:$0xf]
    %v7771 = vld [vmem:[%s7768 + $0x8] sm:$0xf]
    %v7772 = vld [vmem:[%s7768 + $0xc] sm:$0xf]
    %v7773 = vld [vmem:[%s7768 + $0x10] sm:$0xf]
    %v7774 = vld [vmem:[%s7768 + $0x14] sm:$0xf]
    %v7775 = vld [vmem:[%s7768 + $0x18] sm:$0xf]
    %v7776 = vld [vmem:[%s7768 + $0x1c] sm:$0xf]
    %v7777 = vld [vmem:[%s7768 + $0x20] sm:$0xf]
    %v7778 = vld [vmem:[%s7768 + $0x24] sm:$0xf]
    %v7779 = vld [vmem:[%s7768 + $0x28] sm:$0xf]
    %v7780 = vld [vmem:[%s7768 + $0x2c] sm:$0xf]
    %v7781 = vld [vmem:[%s7768 + $0x30] sm:$0xf]
    %v7782 = vld [vmem:[%s7768 + $0x34] sm:$0xf]
    %v7783 = vld [vmem:[%s7768 + $0x38] sm:$0xf]
    %v7784 = vld [vmem:[%s7768 + $0x3c] sm:$0xf]
    %v7785 = vld [vmem:[%s7768 + $0x40] sm:$0xf]
    %v7786 = vld [vmem:[%s7768 + $0x44] sm:$0xf]
    %v7787 = vld [vmem:[%s7768 + $0x48] sm:$0xf]
    %v7788 = vld [vmem:[%s7768 + $0x4c] sm:$0xf]
    %v7789 = vld [vmem:[%s7768 + $0x50] sm:$0xf]
    %v7790 = vld [vmem:[%s7768 + $0x54] sm:$0xf]
    %v7791 = vld [vmem:[%s7768 + $0x58] sm:$0xf]
    %v7792 = vld [vmem:[%s7768 + $0x5c] sm:$0xf]
    %v7793 = vld [vmem:[%s7768 + $0x60] sm:$0xf]
    %v7794 = vld [vmem:[%s7768 + $0x64] sm:$0xf]
    %v7795 = vld [vmem:[%s7768 + $0x68] sm:$0xf]
    %v7796 = vld [vmem:[%s7768 + $0x6c] sm:$0xf]
    %v7797 = vld [vmem:[%s7768 + $0x70] sm:$0xf]
    %v7798 = vld [vmem:[%s7768 + $0x74] sm:$0xf]
    %v7799 = vld [vmem:[%s7768 + $0x78] sm:$0xf]
    %v7800 = vld [vmem:[%s7768 + $0x7c] sm:$0xf]
    %v7801 = vld [vmem:[%s7768 + $0x80] sm:$0xf]
    %v7802 = vld [vmem:[%s7768 + $0x84] sm:$0xf]
    %v7803 = vld [vmem:[%s7768 + $0x88] sm:$0xf]
    %v7804 = vld [vmem:[%s7768 + $0x8c] sm:$0xf]
    %v7841 = vunpack.c.l.b16 %v7769
    %v7842 = vunpack.c.l.b16 %v7770
    %v7843 = vunpack.c.l.b16 %v7771
    %v7844 = vunpack.c.l.b16 %v7772
    %v7845 = vunpack.c.l.b16 %v7773
    %v7846 = vunpack.c.l.b16 %v7774
    %v7847 = vunpack.c.l.b16 %v7775
    %v7848 = vunpack.c.l.b16 %v7776
    %v7849 = vunpack.c.l.b16 %v7777
    %v7850 = vunpack.c.l.b16 %v7778
    %v7851 = vunpack.c.l.b16 %v7779
    %v7852 = vunpack.c.l.b16 %v7780
    %v7853 = vunpack.c.l.b16 %v7781
    %v7854 = vunpack.c.l.b16 %v7782
    %v7855 = vunpack.c.l.b16 %v7783
    %v7856 = vunpack.c.l.b16 %v7784
    %v7857 = vunpack.c.l.b16 %v7785
    %v7858 = vunpack.c.l.b16 %v7786
    %v7859 = vunpack.c.l.b16 %v7787
    %v7860 = vunpack.c.l.b16 %v7788
    %v7861 = vunpack.c.l.b16 %v7789
    %v7862 = vunpack.c.l.b16 %v7790
    %v7863 = vunpack.c.l.b16 %v7791
    %v7864 = vunpack.c.l.b16 %v7792
    %v7865 = vunpack.c.l.b16 %v7793
    %v7866 = vunpack.c.l.b16 %v7794
    %v7867 = vunpack.c.l.b16 %v7795
    %v7868 = vunpack.c.l.b16 %v7796
    %v7869 = vunpack.c.l.b16 %v7797
    %v7870 = vunpack.c.l.b16 %v7798
    %v7871 = vunpack.c.l.b16 %v7799
    %v7872 = vunpack.c.l.b16 %v7800
    %v7873 = vunpack.c.l.b16 %v7801
    %v7874 = vunpack.c.l.b16 %v7802
    %v7875 = vunpack.c.l.b16 %v7803
    %v7876 = vunpack.c.l.b16 %v7804
    %v7877 = vpack.c.b16 %v7842, %v7841
    %v7878 = vpack.c.b16 %v7844, %v7843
    %v7879 = vpack.c.b16 %v7846, %v7845
    %v7880 = vpack.c.b16 %v7848, %v7847
    %v7881 = vpack.c.b16 %v7850, %v7849
    %v7882 = vpack.c.b16 %v7852, %v7851
    %v7883 = vpack.c.b16 %v7854, %v7853
    %v7884 = vpack.c.b16 %v7856, %v7855
    %v7885 = vpack.c.b16 %v7858, %v7857
    %v7886 = vpack.c.b16 %v7860, %v7859
    %v7887 = vpack.c.b16 %v7862, %v7861
    %v7888 = vpack.c.b16 %v7864, %v7863
    %v7889 = vpack.c.b16 %v7866, %v7865
    %v7890 = vpack.c.b16 %v7868, %v7867
    %v7891 = vpack.c.b16 %v7870, %v7869
    %v7892 = vpack.c.b16 %v7872, %v7871
    %v7893 = vpack.c.b16 %v7874, %v7873
    %v7894 = vpack.c.b16 %v7876, %v7875
    %v7914 = vsel %vm6407, %v7767, 0
    %7916 = vmatpush.bf16.msra.mxu0 %v7884
    %7917 = vmatpush.bf16.msra.mxu0 %v7883
    %7918 = vmatpush.bf16.msra.mxu0 %v7882
    %7919 = vmatpush.bf16.msra.mxu0 %v7881
    %7920 = vmatpush.bf16.msra.mxu0 %v7880
    %7921 = vmatpush.bf16.msra.mxu0 %v7879
    %7922 = vmatpush.bf16.msra.mxu0 %v7878
    %7923 = vmatpush.bf16.msra.mxu0 %v7877
    %7924 = vmatmul.bf16.gmra.mxu0 %v7765
    %v7925 = vpop.f32.mrf.mxu0
    %v7926 = vadd.f32 0.0, %v7925
    %v7927 = vpop.f32.mrf.mxu0
    %7928 = vdwg.mxu0
    %7929 = vmatpush.bf16.msra.mxu0 %v7892
    %7930 = vmatpush.bf16.msra.mxu0 %v7891
    %7931 = vmatpush.bf16.msra.mxu0 %v7890
    %7932 = vmatpush.bf16.msra.mxu0 %v7889
    %7933 = vmatpush.bf16.msra.mxu0 %v7888
    %7934 = vmatpush.bf16.msra.mxu0 %v7887
    %7935 = vmatpush.bf16.msra.mxu0 %v7886
    %7936 = vmatpush.bf16.msra.mxu0 %v7885
    %7937 = vmatmul.bf16.gmra.mxu0 %v7766
    %v7938 = vpop.f32.mrf.mxu0
    %v7939 = vadd.f32 %v7926, %v7938
    %v7940 = vpop.f32.mrf.mxu0
    %7941 = vdwg.mxu0
    %7942 = vmatpush.bf16.msra.mxu0 0
    %7943 = vmatpush.bf16.msra.mxu0 0
    %7944 = vmatpush.bf16.msra.mxu0 0
    %7945 = vmatpush.bf16.msra.mxu0 0
    %7946 = vmatpush.bf16.msra.mxu0 0
    %7947 = vmatpush.bf16.msra.mxu0 0
    %7948 = vmatpush.bf16.msra.mxu0 %v7894
    %7949 = vmatpush.bf16.msra.mxu0 %v7893
    %7950 = vmatmul.bf16.gmra.mxu0 %v7914
    %v7951 = vpop.f32.mrf.mxu0
    %v7952 = vadd.f32 %v7939, %v7951
    %v7953 = vpop.f32.mrf.mxu0
    %7954 = vdwg.mxu0
    %v7955 = vadd.f32 %v7503, %v7952
    %v7956 = vld [vmem:[#allocation2 + $0x28] sm:$0xff]
    %v7957 = vld [vmem:[#allocation2 + $0x30] sm:$0xff]
    %v7958 = vld [vmem:[#allocation2 + $0x38] sm:$0xff]
    %v7962 = vunpack.c.l.b16 %v7956
    %v7963 = vunpack.c.h.b16 %v7956
    %v7964 = vunpack.c.l.b16 %v7957
    %v7965 = vunpack.c.h.b16 %v7957
    %v7966 = vunpack.c.l.b16 %v7958
    %v7967 = vunpack.c.h.b16 %v7958
    %v7968 = vpack.c.b16 %v7962, %v7962
    %v7969 = vpack.c.b16 %v7963, %v7963
    %v7970 = vpack.c.b16 %v7964, %v7964
    %v7971 = vpack.c.b16 %v7965, %v7965
    %v7972 = vpack.c.b16 %v7966, %v7966
    %v7973 = vpack.c.b16 %v7967, %v7967
    %7980 = vmatpush.bf16.msra.mxu0 %v5455
    %7981 = vmatpush.bf16.msra.mxu0 %v5452
    %7982 = vmatpush.bf16.msra.mxu0 %v5449
    %7983 = vmatpush.bf16.msra.mxu0 %v5446
    %7984 = vmatpush.bf16.msra.mxu0 %v5443
    %7985 = vmatpush.bf16.msra.mxu0 %v5440
    %7986 = vmatpush.bf16.msra.mxu0 %v5437
    %7987 = vmatpush.bf16.msra.mxu0 %v5434
    %7988 = vmatmul.bf16.gmra.mxu0 %v7968
    %v7989 = vpop.f32.mrf.mxu0
    %v7990 = vadd.f32 %v4927, %v7989
    %v7991 = vpop.f32.mrf.mxu0
    %7992 = vdwg.mxu0
    %7993 = vmatpush.bf16.msra.mxu0 %v5479
    %7994 = vmatpush.bf16.msra.mxu0 %v5476
    %7995 = vmatpush.bf16.msra.mxu0 %v5473
    %7996 = vmatpush.bf16.msra.mxu0 %v5470
    %7997 = vmatpush.bf16.msra.mxu0 %v5467
    %7998 = vmatpush.bf16.msra.mxu0 %v5464
    %7999 = vmatpush.bf16.msra.mxu0 %v5461
    %8000 = vmatpush.bf16.msra.mxu0 %v5458
    %8001 = vmatmul.bf16.gmra.mxu0 %v7969
    %v8002 = vpop.f32.mrf.mxu0
    %v8003 = vadd.f32 %v7990, %v8002
    %v8004 = vpop.f32.mrf.mxu0
    %8005 = vdwg.mxu0
    %8006 = vmatpush.bf16.msra.mxu0 %v5503
    %8007 = vmatpush.bf16.msra.mxu0 %v5500
    %8008 = vmatpush.bf16.msra.mxu0 %v5497
    %8009 = vmatpush.bf16.msra.mxu0 %v5494
    %8010 = vmatpush.bf16.msra.mxu0 %v5491
    %8011 = vmatpush.bf16.msra.mxu0 %v5488
    %8012 = vmatpush.bf16.msra.mxu0 %v5485
    %8013 = vmatpush.bf16.msra.mxu0 %v5482
    %8014 = vmatmul.bf16.gmra.mxu0 %v7970
    %v8015 = vpop.f32.mrf.mxu0
    %v8016 = vadd.f32 %v8003, %v8015
    %v8017 = vpop.f32.mrf.mxu0
    %8018 = vdwg.mxu0
    %8019 = vmatpush.bf16.msra.mxu0 %v5527
    %8020 = vmatpush.bf16.msra.mxu0 %v5524
    %8021 = vmatpush.bf16.msra.mxu0 %v5521
    %8022 = vmatpush.bf16.msra.mxu0 %v5518
    %8023 = vmatpush.bf16.msra.mxu0 %v5515
    %8024 = vmatpush.bf16.msra.mxu0 %v5512
    %8025 = vmatpush.bf16.msra.mxu0 %v5509
    %8026 = vmatpush.bf16.msra.mxu0 %v5506
    %8027 = vmatmul.bf16.gmra.mxu0 %v7971
    %v8028 = vpop.f32.mrf.mxu0
    %v8029 = vadd.f32 %v8016, %v8028
    %v8030 = vpop.f32.mrf.mxu0
    %8031 = vdwg.mxu0
    %8032 = vmatpush.bf16.msra.mxu0 %v5551
    %8033 = vmatpush.bf16.msra.mxu0 %v5548
    %8034 = vmatpush.bf16.msra.mxu0 %v5545
    %8035 = vmatpush.bf16.msra.mxu0 %v5542
    %8036 = vmatpush.bf16.msra.mxu0 %v5539
    %8037 = vmatpush.bf16.msra.mxu0 %v5536
    %8038 = vmatpush.bf16.msra.mxu0 %v5533
    %8039 = vmatpush.bf16.msra.mxu0 %v5530
    %8040 = vmatmul.bf16.gmra.mxu0 %v7972
    %v8041 = vpop.f32.mrf.mxu0
    %v8042 = vadd.f32 %v8029, %v8041
    %v8043 = vpop.f32.mrf.mxu0
    %8044 = vdwg.mxu0
    %8045 = vmatpush.bf16.msra.mxu0 %v5575
    %8046 = vmatpush.bf16.msra.mxu0 %v5572
    %8047 = vmatpush.bf16.msra.mxu0 %v5569
    %8048 = vmatpush.bf16.msra.mxu0 %v5566
    %8049 = vmatpush.bf16.msra.mxu0 %v5563
    %8050 = vmatpush.bf16.msra.mxu0 %v5560
    %8051 = vmatpush.bf16.msra.mxu0 %v5557
    %8052 = vmatpush.bf16.msra.mxu0 %v5554
    %8053 = vmatmul.bf16.gmra.mxu0 %v7973
    %v8054 = vpop.f32.mrf.mxu0
    %v8055 = vadd.f32 %v8042, %v8054
    %v8056 = vpop.f32.mrf.mxu0
    %8057 = vdwg.mxu0
    %8058 = vmatpush.bf16.msra.mxu0 %v5456
    %8059 = vmatpush.bf16.msra.mxu0 %v5453
    %8060 = vmatpush.bf16.msra.mxu0 %v5450
    %8061 = vmatpush.bf16.msra.mxu0 %v5447
    %8062 = vmatpush.bf16.msra.mxu0 %v5444
    %8063 = vmatpush.bf16.msra.mxu0 %v5441
    %8064 = vmatpush.bf16.msra.mxu0 %v5438
    %8065 = vmatpush.bf16.msra.mxu0 %v5435
    %8066 = vmatmul.bf16.gmra.mxu0 %v7968
    %v8067 = vpop.f32.mrf.mxu0
    %v8068 = vadd.f32 %v4928, %v8067
    %v8069 = vpop.f32.mrf.mxu0
    %8070 = vdwg.mxu0
    %8071 = vmatpush.bf16.msra.mxu0 %v5480
    %8072 = vmatpush.bf16.msra.mxu0 %v5477
    %8073 = vmatpush.bf16.msra.mxu0 %v5474
    %8074 = vmatpush.bf16.msra.mxu0 %v5471
    %8075 = vmatpush.bf16.msra.mxu0 %v5468
    %8076 = vmatpush.bf16.msra.mxu0 %v5465
    %8077 = vmatpush.bf16.msra.mxu0 %v5462
    %8078 = vmatpush.bf16.msra.mxu0 %v5459
    %8079 = vmatmul.bf16.gmra.mxu0 %v7969
    %v8080 = vpop.f32.mrf.mxu0
    %v8081 = vadd.f32 %v8068, %v8080
    %v8082 = vpop.f32.mrf.mxu0
    %8083 = vdwg.mxu0
    %8084 = vmatpush.bf16.msra.mxu0 %v5504
    %8085 = vmatpush.bf16.msra.mxu0 %v5501
    %8086 = vmatpush.bf16.msra.mxu0 %v5498
    %8087 = vmatpush.bf16.msra.mxu0 %v5495
    %8088 = vmatpush.bf16.msra.mxu0 %v5492
    %8089 = vmatpush.bf16.msra.mxu0 %v5489
    %8090 = vmatpush.bf16.msra.mxu0 %v5486
    %8091 = vmatpush.bf16.msra.mxu0 %v5483
    %8092 = vmatmul.bf16.gmra.mxu0 %v7970
    %v8093 = vpop.f32.mrf.mxu0
    %v8094 = vadd.f32 %v8081, %v8093
    %v8095 = vpop.f32.mrf.mxu0
    %8096 = vdwg.mxu0
    %8097 = vmatpush.bf16.msra.mxu0 %v5528
    %8098 = vmatpush.bf16.msra.mxu0 %v5525
    %8099 = vmatpush.bf16.msra.mxu0 %v5522
    %8100 = vmatpush.bf16.msra.mxu0 %v5519
    %8101 = vmatpush.bf16.msra.mxu0 %v5516
    %8102 = vmatpush.bf16.msra.mxu0 %v5513
    %8103 = vmatpush.bf16.msra.mxu0 %v5510
    %8104 = vmatpush.bf16.msra.mxu0 %v5507
    %8105 = vmatmul.bf16.gmra.mxu0 %v7971
    %v8106 = vpop.f32.mrf.mxu0
    %v8107 = vadd.f32 %v8094, %v8106
    %v8108 = vpop.f32.mrf.mxu0
    %8109 = vdwg.mxu0
    %8110 = vmatpush.bf16.msra.mxu0 %v5552
    %8111 = vmatpush.bf16.msra.mxu0 %v5549
    %8112 = vmatpush.bf16.msra.mxu0 %v5546
    %8113 = vmatpush.bf16.msra.mxu0 %v5543
    %8114 = vmatpush.bf16.msra.mxu0 %v5540
    %8115 = vmatpush.bf16.msra.mxu0 %v5537
    %8116 = vmatpush.bf16.msra.mxu0 %v5534
    %8117 = vmatpush.bf16.msra.mxu0 %v5531
    %8118 = vmatmul.bf16.gmra.mxu0 %v7972
    %v8119 = vpop.f32.mrf.mxu0
    %v8120 = vadd.f32 %v8107, %v8119
    %v8121 = vpop.f32.mrf.mxu0
    %8122 = vdwg.mxu0
    %8123 = vmatpush.bf16.msra.mxu0 %v5576
    %8124 = vmatpush.bf16.msra.mxu0 %v5573
    %8125 = vmatpush.bf16.msra.mxu0 %v5570
    %8126 = vmatpush.bf16.msra.mxu0 %v5567
    %8127 = vmatpush.bf16.msra.mxu0 %v5564
    %8128 = vmatpush.bf16.msra.mxu0 %v5561
    %8129 = vmatpush.bf16.msra.mxu0 %v5558
    %8130 = vmatpush.bf16.msra.mxu0 %v5555
    %8131 = vmatmul.bf16.gmra.mxu0 %v7973
    %v8132 = vpop.f32.mrf.mxu0
    %v8133 = vadd.f32 %v8120, %v8132
    %v8134 = vpop.f32.mrf.mxu0
    %8135 = vdwg.mxu0
    %8136 = vmatpush.bf16.msra.mxu0 %v5457
    %8137 = vmatpush.bf16.msra.mxu0 %v5454
    %8138 = vmatpush.bf16.msra.mxu0 %v5451
    %8139 = vmatpush.bf16.msra.mxu0 %v5448
    %8140 = vmatpush.bf16.msra.mxu0 %v5445
    %8141 = vmatpush.bf16.msra.mxu0 %v5442
    %8142 = vmatpush.bf16.msra.mxu0 %v5439
    %8143 = vmatpush.bf16.msra.mxu0 %v5436
    %8144 = vmatmul.bf16.gmra.mxu0 %v7968
    %v8145 = vpop.f32.mrf.mxu0
    %v8146 = vadd.f32 %v4929, %v8145
    %v8147 = vpop.f32.mrf.mxu0
    %8148 = vdwg.mxu0
    %8149 = vmatpush.bf16.msra.mxu0 %v5481
    %8150 = vmatpush.bf16.msra.mxu0 %v5478
    %8151 = vmatpush.bf16.msra.mxu0 %v5475
    %8152 = vmatpush.bf16.msra.mxu0 %v5472
    %8153 = vmatpush.bf16.msra.mxu0 %v5469
    %8154 = vmatpush.bf16.msra.mxu0 %v5466
    %8155 = vmatpush.bf16.msra.mxu0 %v5463
    %8156 = vmatpush.bf16.msra.mxu0 %v5460
    %8157 = vmatmul.bf16.gmra.mxu0 %v7969
    %v8158 = vpop.f32.mrf.mxu0
    %v8159 = vadd.f32 %v8146, %v8158
    %v8160 = vpop.f32.mrf.mxu0
    %8161 = vdwg.mxu0
    %8162 = vmatpush.bf16.msra.mxu0 %v5505
    %8163 = vmatpush.bf16.msra.mxu0 %v5502
    %8164 = vmatpush.bf16.msra.mxu0 %v5499
    %8165 = vmatpush.bf16.msra.mxu0 %v5496
    %8166 = vmatpush.bf16.msra.mxu0 %v5493
    %8167 = vmatpush.bf16.msra.mxu0 %v5490
    %8168 = vmatpush.bf16.msra.mxu0 %v5487
    %8169 = vmatpush.bf16.msra.mxu0 %v5484
    %8170 = vmatmul.bf16.gmra.mxu0 %v7970
    %v8171 = vpop.f32.mrf.mxu0
    %v8172 = vadd.f32 %v8159, %v8171
    %v8173 = vpop.f32.mrf.mxu0
    %8174 = vdwg.mxu0
    %8175 = vmatpush.bf16.msra.mxu0 %v5529
    %8176 = vmatpush.bf16.msra.mxu0 %v5526
    %8177 = vmatpush.bf16.msra.mxu0 %v5523
    %8178 = vmatpush.bf16.msra.mxu0 %v5520
    %8179 = vmatpush.bf16.msra.mxu0 %v5517
    %8180 = vmatpush.bf16.msra.mxu0 %v5514
    %8181 = vmatpush.bf16.msra.mxu0 %v5511
    %8182 = vmatpush.bf16.msra.mxu0 %v5508
    %8183 = vmatmul.bf16.gmra.mxu0 %v7971
    %v8184 = vpop.f32.mrf.mxu0
    %v8185 = vadd.f32 %v8172, %v8184
    %v8186 = vpop.f32.mrf.mxu0
    %8187 = vdwg.mxu0
    %8188 = vmatpush.bf16.msra.mxu0 %v5553
    %8189 = vmatpush.bf16.msra.mxu0 %v5550
    %8190 = vmatpush.bf16.msra.mxu0 %v5547
    %8191 = vmatpush.bf16.msra.mxu0 %v5544
    %8192 = vmatpush.bf16.msra.mxu0 %v5541
    %8193 = vmatpush.bf16.msra.mxu0 %v5538
    %8194 = vmatpush.bf16.msra.mxu0 %v5535
    %8195 = vmatpush.bf16.msra.mxu0 %v5532
    %8196 = vmatmul.bf16.gmra.mxu0 %v7972
    %v8197 = vpop.f32.mrf.mxu0
    %v8198 = vadd.f32 %v8185, %v8197
    %v8199 = vpop.f32.mrf.mxu0
    %8200 = vdwg.mxu0
    %8201 = vmatpush.bf16.msra.mxu0 %v5577
    %8202 = vmatpush.bf16.msra.mxu0 %v5574
    %8203 = vmatpush.bf16.msra.mxu0 %v5571
    %8204 = vmatpush.bf16.msra.mxu0 %v5568
    %8205 = vmatpush.bf16.msra.mxu0 %v5565
    %8206 = vmatpush.bf16.msra.mxu0 %v5562
    %8207 = vmatpush.bf16.msra.mxu0 %v5559
    %8208 = vmatpush.bf16.msra.mxu0 %v5556
    %8209 = vmatmul.bf16.gmra.mxu0 %v7973
    %v8210 = vpop.f32.mrf.mxu0
    %v8211 = vadd.f32 %v8198, %v8210
    %v8212 = vpop.f32.mrf.mxu0
    %8213 = vdwg.mxu0
    %v8214 = vmax.f32 %v8055, 0.0
    %v8215 = vmax.f32 %v8133, 0.0
    %v8216 = vmax.f32 %v8211, 0.0
    %v8217 = vpack.c.bf16 %v8214, %v8214
    %v8218 = vpack.c.bf16 %v8215, %v8215
    %v8219 = vpack.c.bf16 %v8216, %v8216
    %s8220 = scalar_lea.vmem %s7, 720
    %v8221 = vld [vmem:[%s8220] sm:$0xf]
    %v8222 = vld [vmem:[%s8220 + $0x4] sm:$0xf]
    %v8223 = vld [vmem:[%s8220 + $0x8] sm:$0xf]
    %v8224 = vld [vmem:[%s8220 + $0xc] sm:$0xf]
    %v8225 = vld [vmem:[%s8220 + $0x10] sm:$0xf]
    %v8226 = vld [vmem:[%s8220 + $0x14] sm:$0xf]
    %v8227 = vld [vmem:[%s8220 + $0x18] sm:$0xf]
    %v8228 = vld [vmem:[%s8220 + $0x1c] sm:$0xf]
    %v8229 = vld [vmem:[%s8220 + $0x20] sm:$0xf]
    %v8230 = vld [vmem:[%s8220 + $0x24] sm:$0xf]
    %v8231 = vld [vmem:[%s8220 + $0x28] sm:$0xf]
    %v8232 = vld [vmem:[%s8220 + $0x2c] sm:$0xf]
    %v8233 = vld [vmem:[%s8220 + $0x30] sm:$0xf]
    %v8234 = vld [vmem:[%s8220 + $0x34] sm:$0xf]
    %v8235 = vld [vmem:[%s8220 + $0x38] sm:$0xf]
    %v8236 = vld [vmem:[%s8220 + $0x3c] sm:$0xf]
    %v8237 = vld [vmem:[%s8220 + $0x40] sm:$0xf]
    %v8238 = vld [vmem:[%s8220 + $0x44] sm:$0xf]
    %v8239 = vld [vmem:[%s8220 + $0x48] sm:$0xf]
    %v8240 = vld [vmem:[%s8220 + $0x4c] sm:$0xf]
    %v8241 = vld [vmem:[%s8220 + $0x50] sm:$0xf]
    %v8242 = vld [vmem:[%s8220 + $0x54] sm:$0xf]
    %v8243 = vld [vmem:[%s8220 + $0x58] sm:$0xf]
    %v8244 = vld [vmem:[%s8220 + $0x5c] sm:$0xf]
    %v8245 = vld [vmem:[%s8220 + $0x60] sm:$0xf]
    %v8246 = vld [vmem:[%s8220 + $0x64] sm:$0xf]
    %v8247 = vld [vmem:[%s8220 + $0x68] sm:$0xf]
    %v8248 = vld [vmem:[%s8220 + $0x6c] sm:$0xf]
    %v8249 = vld [vmem:[%s8220 + $0x70] sm:$0xf]
    %v8250 = vld [vmem:[%s8220 + $0x74] sm:$0xf]
    %v8251 = vld [vmem:[%s8220 + $0x78] sm:$0xf]
    %v8252 = vld [vmem:[%s8220 + $0x7c] sm:$0xf]
    %v8253 = vld [vmem:[%s8220 + $0x80] sm:$0xf]
    %v8254 = vld [vmem:[%s8220 + $0x84] sm:$0xf]
    %v8255 = vld [vmem:[%s8220 + $0x88] sm:$0xf]
    %v8256 = vld [vmem:[%s8220 + $0x8c] sm:$0xf]
    %v8293 = vunpack.c.l.b16 %v8221
    %v8294 = vunpack.c.l.b16 %v8222
    %v8295 = vunpack.c.l.b16 %v8223
    %v8296 = vunpack.c.l.b16 %v8224
    %v8297 = vunpack.c.l.b16 %v8225
    %v8298 = vunpack.c.l.b16 %v8226
    %v8299 = vunpack.c.l.b16 %v8227
    %v8300 = vunpack.c.l.b16 %v8228
    %v8301 = vunpack.c.l.b16 %v8229
    %v8302 = vunpack.c.l.b16 %v8230
    %v8303 = vunpack.c.l.b16 %v8231
    %v8304 = vunpack.c.l.b16 %v8232
    %v8305 = vunpack.c.l.b16 %v8233
    %v8306 = vunpack.c.l.b16 %v8234
    %v8307 = vunpack.c.l.b16 %v8235
    %v8308 = vunpack.c.l.b16 %v8236
    %v8309 = vunpack.c.l.b16 %v8237
    %v8310 = vunpack.c.l.b16 %v8238
    %v8311 = vunpack.c.l.b16 %v8239
    %v8312 = vunpack.c.l.b16 %v8240
    %v8313 = vunpack.c.l.b16 %v8241
    %v8314 = vunpack.c.l.b16 %v8242
    %v8315 = vunpack.c.l.b16 %v8243
    %v8316 = vunpack.c.l.b16 %v8244
    %v8317 = vunpack.c.l.b16 %v8245
    %v8318 = vunpack.c.l.b16 %v8246
    %v8319 = vunpack.c.l.b16 %v8247
    %v8320 = vunpack.c.l.b16 %v8248
    %v8321 = vunpack.c.l.b16 %v8249
    %v8322 = vunpack.c.l.b16 %v8250
    %v8323 = vunpack.c.l.b16 %v8251
    %v8324 = vunpack.c.l.b16 %v8252
    %v8325 = vunpack.c.l.b16 %v8253
    %v8326 = vunpack.c.l.b16 %v8254
    %v8327 = vunpack.c.l.b16 %v8255
    %v8328 = vunpack.c.l.b16 %v8256
    %v8329 = vpack.c.b16 %v8294, %v8293
    %v8330 = vpack.c.b16 %v8296, %v8295
    %v8331 = vpack.c.b16 %v8298, %v8297
    %v8332 = vpack.c.b16 %v8300, %v8299
    %v8333 = vpack.c.b16 %v8302, %v8301
    %v8334 = vpack.c.b16 %v8304, %v8303
    %v8335 = vpack.c.b16 %v8306, %v8305
    %v8336 = vpack.c.b16 %v8308, %v8307
    %v8337 = vpack.c.b16 %v8310, %v8309
    %v8338 = vpack.c.b16 %v8312, %v8311
    %v8339 = vpack.c.b16 %v8314, %v8313
    %v8340 = vpack.c.b16 %v8316, %v8315
    %v8341 = vpack.c.b16 %v8318, %v8317
    %v8342 = vpack.c.b16 %v8320, %v8319
    %v8343 = vpack.c.b16 %v8322, %v8321
    %v8344 = vpack.c.b16 %v8324, %v8323
    %v8345 = vpack.c.b16 %v8326, %v8325
    %v8346 = vpack.c.b16 %v8328, %v8327
    %v8366 = vsel %vm6407, %v8219, 0
    %8368 = vmatpush.bf16.msra.mxu0 %v8336
    %8369 = vmatpush.bf16.msra.mxu0 %v8335
    %8370 = vmatpush.bf16.msra.mxu0 %v8334
    %8371 = vmatpush.bf16.msra.mxu0 %v8333
    %8372 = vmatpush.bf16.msra.mxu0 %v8332
    %8373 = vmatpush.bf16.msra.mxu0 %v8331
    %8374 = vmatpush.bf16.msra.mxu0 %v8330
    %8375 = vmatpush.bf16.msra.mxu0 %v8329
    %8376 = vmatmul.bf16.gmra.mxu0 %v8217
    %v8377 = vpop.f32.mrf.mxu0
    %v8378 = vadd.f32 0.0, %v8377
    %v8379 = vpop.f32.mrf.mxu0
    %8380 = vdwg.mxu0
    %8381 = vmatpush.bf16.msra.mxu0 %v8344
    %8382 = vmatpush.bf16.msra.mxu0 %v8343
    %8383 = vmatpush.bf16.msra.mxu0 %v8342
    %8384 = vmatpush.bf16.msra.mxu0 %v8341
    %8385 = vmatpush.bf16.msra.mxu0 %v8340
    %8386 = vmatpush.bf16.msra.mxu0 %v8339
    %8387 = vmatpush.bf16.msra.mxu0 %v8338
    %8388 = vmatpush.bf16.msra.mxu0 %v8337
    %8389 = vmatmul.bf16.gmra.mxu0 %v8218
    %v8390 = vpop.f32.mrf.mxu0
    %v8391 = vadd.f32 %v8378, %v8390
    %v8392 = vpop.f32.mrf.mxu0
    %8393 = vdwg.mxu0
    %8394 = vmatpush.bf16.msra.mxu0 0
    %8395 = vmatpush.bf16.msra.mxu0 0
    %8396 = vmatpush.bf16.msra.mxu0 0
    %8397 = vmatpush.bf16.msra.mxu0 0
    %8398 = vmatpush.bf16.msra.mxu0 0
    %8399 = vmatpush.bf16.msra.mxu0 0
    %8400 = vmatpush.bf16.msra.mxu0 %v8346
    %8401 = vmatpush.bf16.msra.mxu0 %v8345
    %8402 = vmatmul.bf16.gmra.mxu0 %v8366
    %v8403 = vpop.f32.mrf.mxu0
    %v8404 = vadd.f32 %v8391, %v8403
    %v8405 = vpop.f32.mrf.mxu0
    %8406 = vdwg.mxu0
    %v8407 = vadd.f32 %v7955, %v8404
    %v8408 = vld [vmem:[#allocation2 + $0x30] sm:$0xff]
    %v8409 = vld [vmem:[#allocation2 + $0x38] sm:$0xff]
    %v8410 = vld [vmem:[#allocation2 + $0x40] sm:$0xff]
    %v8414 = vunpack.c.l.b16 %v8408
    %v8415 = vunpack.c.h.b16 %v8408
    %v8416 = vunpack.c.l.b16 %v8409
    %v8417 = vunpack.c.h.b16 %v8409
    %v8418 = vunpack.c.l.b16 %v8410
    %v8419 = vunpack.c.h.b16 %v8410
    %v8420 = vpack.c.b16 %v8414, %v8414
    %v8421 = vpack.c.b16 %v8415, %v8415
    %v8422 = vpack.c.b16 %v8416, %v8416
    %v8423 = vpack.c.b16 %v8417, %v8417
    %v8424 = vpack.c.b16 %v8418, %v8418
    %v8425 = vpack.c.b16 %v8419, %v8419
    %8432 = vmatpush.bf16.msra.mxu0 %v5455
    %8433 = vmatpush.bf16.msra.mxu0 %v5452
    %8434 = vmatpush.bf16.msra.mxu0 %v5449
    %8435 = vmatpush.bf16.msra.mxu0 %v5446
    %8436 = vmatpush.bf16.msra.mxu0 %v5443
    %8437 = vmatpush.bf16.msra.mxu0 %v5440
    %8438 = vmatpush.bf16.msra.mxu0 %v5437
    %8439 = vmatpush.bf16.msra.mxu0 %v5434
    %8440 = vmatmul.bf16.gmra.mxu0 %v8420
    %v8441 = vpop.f32.mrf.mxu0
    %v8442 = vadd.f32 %v4927, %v8441
    %v8443 = vpop.f32.mrf.mxu0
    %8444 = vdwg.mxu0
    %8445 = vmatpush.bf16.msra.mxu0 %v5479
    %8446 = vmatpush.bf16.msra.mxu0 %v5476
    %8447 = vmatpush.bf16.msra.mxu0 %v5473
    %8448 = vmatpush.bf16.msra.mxu0 %v5470
    %8449 = vmatpush.bf16.msra.mxu0 %v5467
    %8450 = vmatpush.bf16.msra.mxu0 %v5464
    %8451 = vmatpush.bf16.msra.mxu0 %v5461
    %8452 = vmatpush.bf16.msra.mxu0 %v5458
    %8453 = vmatmul.bf16.gmra.mxu0 %v8421
    %v8454 = vpop.f32.mrf.mxu0
    %v8455 = vadd.f32 %v8442, %v8454
    %v8456 = vpop.f32.mrf.mxu0
    %8457 = vdwg.mxu0
    %8458 = vmatpush.bf16.msra.mxu0 %v5503
    %8459 = vmatpush.bf16.msra.mxu0 %v5500
    %8460 = vmatpush.bf16.msra.mxu0 %v5497
    %8461 = vmatpush.bf16.msra.mxu0 %v5494
    %8462 = vmatpush.bf16.msra.mxu0 %v5491
    %8463 = vmatpush.bf16.msra.mxu0 %v5488
    %8464 = vmatpush.bf16.msra.mxu0 %v5485
    %8465 = vmatpush.bf16.msra.mxu0 %v5482
    %8466 = vmatmul.bf16.gmra.mxu0 %v8422
    %v8467 = vpop.f32.mrf.mxu0
    %v8468 = vadd.f32 %v8455, %v8467
    %v8469 = vpop.f32.mrf.mxu0
    %8470 = vdwg.mxu0
    %8471 = vmatpush.bf16.msra.mxu0 %v5527
    %8472 = vmatpush.bf16.msra.mxu0 %v5524
    %8473 = vmatpush.bf16.msra.mxu0 %v5521
    %8474 = vmatpush.bf16.msra.mxu0 %v5518
    %8475 = vmatpush.bf16.msra.mxu0 %v5515
    %8476 = vmatpush.bf16.msra.mxu0 %v5512
    %8477 = vmatpush.bf16.msra.mxu0 %v5509
    %8478 = vmatpush.bf16.msra.mxu0 %v5506
    %8479 = vmatmul.bf16.gmra.mxu0 %v8423
    %v8480 = vpop.f32.mrf.mxu0
    %v8481 = vadd.f32 %v8468, %v8480
    %v8482 = vpop.f32.mrf.mxu0
    %8483 = vdwg.mxu0
    %8484 = vmatpush.bf16.msra.mxu0 %v5551
    %8485 = vmatpush.bf16.msra.mxu0 %v5548
    %8486 = vmatpush.bf16.msra.mxu0 %v5545
    %8487 = vmatpush.bf16.msra.mxu0 %v5542
    %8488 = vmatpush.bf16.msra.mxu0 %v5539
    %8489 = vmatpush.bf16.msra.mxu0 %v5536
    %8490 = vmatpush.bf16.msra.mxu0 %v5533
    %8491 = vmatpush.bf16.msra.mxu0 %v5530
    %8492 = vmatmul.bf16.gmra.mxu0 %v8424
    %v8493 = vpop.f32.mrf.mxu0
    %v8494 = vadd.f32 %v8481, %v8493
    %v8495 = vpop.f32.mrf.mxu0
    %8496 = vdwg.mxu0
    %8497 = vmatpush.bf16.msra.mxu0 %v5575
    %8498 = vmatpush.bf16.msra.mxu0 %v5572
    %8499 = vmatpush.bf16.msra.mxu0 %v5569
    %8500 = vmatpush.bf16.msra.mxu0 %v5566
    %8501 = vmatpush.bf16.msra.mxu0 %v5563
    %8502 = vmatpush.bf16.msra.mxu0 %v5560
    %8503 = vmatpush.bf16.msra.mxu0 %v5557
    %8504 = vmatpush.bf16.msra.mxu0 %v5554
    %8505 = vmatmul.bf16.gmra.mxu0 %v8425
    %v8506 = vpop.f32.mrf.mxu0
    %v8507 = vadd.f32 %v8494, %v8506
    %v8508 = vpop.f32.mrf.mxu0
    %8509 = vdwg.mxu0
    %8510 = vmatpush.bf16.msra.mxu0 %v5456
    %8511 = vmatpush.bf16.msra.mxu0 %v5453
    %8512 = vmatpush.bf16.msra.mxu0 %v5450
    %8513 = vmatpush.bf16.msra.mxu0 %v5447
    %8514 = vmatpush.bf16.msra.mxu0 %v5444
    %8515 = vmatpush.bf16.msra.mxu0 %v5441
    %8516 = vmatpush.bf16.msra.mxu0 %v5438
    %8517 = vmatpush.bf16.msra.mxu0 %v5435
    %8518 = vmatmul.bf16.gmra.mxu0 %v8420
    %v8519 = vpop.f32.mrf.mxu0
    %v8520 = vadd.f32 %v4928, %v8519
    %v8521 = vpop.f32.mrf.mxu0
    %8522 = vdwg.mxu0
    %8523 = vmatpush.bf16.msra.mxu0 %v5480
    %8524 = vmatpush.bf16.msra.mxu0 %v5477
    %8525 = vmatpush.bf16.msra.mxu0 %v5474
    %8526 = vmatpush.bf16.msra.mxu0 %v5471
    %8527 = vmatpush.bf16.msra.mxu0 %v5468
    %8528 = vmatpush.bf16.msra.mxu0 %v5465
    %8529 = vmatpush.bf16.msra.mxu0 %v5462
    %8530 = vmatpush.bf16.msra.mxu0 %v5459
    %8531 = vmatmul.bf16.gmra.mxu0 %v8421
    %v8532 = vpop.f32.mrf.mxu0
    %v8533 = vadd.f32 %v8520, %v8532
    %v8534 = vpop.f32.mrf.mxu0
    %8535 = vdwg.mxu0
    %8536 = vmatpush.bf16.msra.mxu0 %v5504
    %8537 = vmatpush.bf16.msra.mxu0 %v5501
    %8538 = vmatpush.bf16.msra.mxu0 %v5498
    %8539 = vmatpush.bf16.msra.mxu0 %v5495
    %8540 = vmatpush.bf16.msra.mxu0 %v5492
    %8541 = vmatpush.bf16.msra.mxu0 %v5489
    %8542 = vmatpush.bf16.msra.mxu0 %v5486
    %8543 = vmatpush.bf16.msra.mxu0 %v5483
    %8544 = vmatmul.bf16.gmra.mxu0 %v8422
    %v8545 = vpop.f32.mrf.mxu0
    %v8546 = vadd.f32 %v8533, %v8545
    %v8547 = vpop.f32.mrf.mxu0
    %8548 = vdwg.mxu0
    %8549 = vmatpush.bf16.msra.mxu0 %v5528
    %8550 = vmatpush.bf16.msra.mxu0 %v5525
    %8551 = vmatpush.bf16.msra.mxu0 %v5522
    %8552 = vmatpush.bf16.msra.mxu0 %v5519
    %8553 = vmatpush.bf16.msra.mxu0 %v5516
    %8554 = vmatpush.bf16.msra.mxu0 %v5513
    %8555 = vmatpush.bf16.msra.mxu0 %v5510
    %8556 = vmatpush.bf16.msra.mxu0 %v5507
    %8557 = vmatmul.bf16.gmra.mxu0 %v8423
    %v8558 = vpop.f32.mrf.mxu0
    %v8559 = vadd.f32 %v8546, %v8558
    %v8560 = vpop.f32.mrf.mxu0
    %8561 = vdwg.mxu0
    %8562 = vmatpush.bf16.msra.mxu0 %v5552
    %8563 = vmatpush.bf16.msra.mxu0 %v5549
    %8564 = vmatpush.bf16.msra.mxu0 %v5546
    %8565 = vmatpush.bf16.msra.mxu0 %v5543
    %8566 = vmatpush.bf16.msra.mxu0 %v5540
    %8567 = vmatpush.bf16.msra.mxu0 %v5537
    %8568 = vmatpush.bf16.msra.mxu0 %v5534
    %8569 = vmatpush.bf16.msra.mxu0 %v5531
    %8570 = vmatmul.bf16.gmra.mxu0 %v8424
    %v8571 = vpop.f32.mrf.mxu0
    %v8572 = vadd.f32 %v8559, %v8571
    %v8573 = vpop.f32.mrf.mxu0
    %8574 = vdwg.mxu0
    %8575 = vmatpush.bf16.msra.mxu0 %v5576
    %8576 = vmatpush.bf16.msra.mxu0 %v5573
    %8577 = vmatpush.bf16.msra.mxu0 %v5570
    %8578 = vmatpush.bf16.msra.mxu0 %v5567
    %8579 = vmatpush.bf16.msra.mxu0 %v5564
    %8580 = vmatpush.bf16.msra.mxu0 %v5561
    %8581 = vmatpush.bf16.msra.mxu0 %v5558
    %8582 = vmatpush.bf16.msra.mxu0 %v5555
    %8583 = vmatmul.bf16.gmra.mxu0 %v8425
    %v8584 = vpop.f32.mrf.mxu0
    %v8585 = vadd.f32 %v8572, %v8584
    %v8586 = vpop.f32.mrf.mxu0
    %8587 = vdwg.mxu0
    %8588 = vmatpush.bf16.msra.mxu0 %v5457
    %8589 = vmatpush.bf16.msra.mxu0 %v5454
    %8590 = vmatpush.bf16.msra.mxu0 %v5451
    %8591 = vmatpush.bf16.msra.mxu0 %v5448
    %8592 = vmatpush.bf16.msra.mxu0 %v5445
    %8593 = vmatpush.bf16.msra.mxu0 %v5442
    %8594 = vmatpush.bf16.msra.mxu0 %v5439
    %8595 = vmatpush.bf16.msra.mxu0 %v5436
    %8596 = vmatmul.bf16.gmra.mxu0 %v8420
    %v8597 = vpop.f32.mrf.mxu0
    %v8598 = vadd.f32 %v4929, %v8597
    %v8599 = vpop.f32.mrf.mxu0
    %8600 = vdwg.mxu0
    %8601 = vmatpush.bf16.msra.mxu0 %v5481
    %8602 = vmatpush.bf16.msra.mxu0 %v5478
    %8603 = vmatpush.bf16.msra.mxu0 %v5475
    %8604 = vmatpush.bf16.msra.mxu0 %v5472
    %8605 = vmatpush.bf16.msra.mxu0 %v5469
    %8606 = vmatpush.bf16.msra.mxu0 %v5466
    %8607 = vmatpush.bf16.msra.mxu0 %v5463
    %8608 = vmatpush.bf16.msra.mxu0 %v5460
    %8609 = vmatmul.bf16.gmra.mxu0 %v8421
    %v8610 = vpop.f32.mrf.mxu0
    %v8611 = vadd.f32 %v8598, %v8610
    %v8612 = vpop.f32.mrf.mxu0
    %8613 = vdwg.mxu0
    %8614 = vmatpush.bf16.msra.mxu0 %v5505
    %8615 = vmatpush.bf16.msra.mxu0 %v5502
    %8616 = vmatpush.bf16.msra.mxu0 %v5499
    %8617 = vmatpush.bf16.msra.mxu0 %v5496
    %8618 = vmatpush.bf16.msra.mxu0 %v5493
    %8619 = vmatpush.bf16.msra.mxu0 %v5490
    %8620 = vmatpush.bf16.msra.mxu0 %v5487
    %8621 = vmatpush.bf16.msra.mxu0 %v5484
    %8622 = vmatmul.bf16.gmra.mxu0 %v8422
    %v8623 = vpop.f32.mrf.mxu0
    %v8624 = vadd.f32 %v8611, %v8623
    %v8625 = vpop.f32.mrf.mxu0
    %8626 = vdwg.mxu0
    %8627 = vmatpush.bf16.msra.mxu0 %v5529
    %8628 = vmatpush.bf16.msra.mxu0 %v5526
    %8629 = vmatpush.bf16.msra.mxu0 %v5523
    %8630 = vmatpush.bf16.msra.mxu0 %v5520
    %8631 = vmatpush.bf16.msra.mxu0 %v5517
    %8632 = vmatpush.bf16.msra.mxu0 %v5514
    %8633 = vmatpush.bf16.msra.mxu0 %v5511
    %8634 = vmatpush.bf16.msra.mxu0 %v5508
    %8635 = vmatmul.bf16.gmra.mxu0 %v8423
    %v8636 = vpop.f32.mrf.mxu0
    %v8637 = vadd.f32 %v8624, %v8636
    %v8638 = vpop.f32.mrf.mxu0
    %8639 = vdwg.mxu0
    %8640 = vmatpush.bf16.msra.mxu0 %v5553
    %8641 = vmatpush.bf16.msra.mxu0 %v5550
    %8642 = vmatpush.bf16.msra.mxu0 %v5547
    %8643 = vmatpush.bf16.msra.mxu0 %v5544
    %8644 = vmatpush.bf16.msra.mxu0 %v5541
    %8645 = vmatpush.bf16.msra.mxu0 %v5538
    %8646 = vmatpush.bf16.msra.mxu0 %v5535
    %8647 = vmatpush.bf16.msra.mxu0 %v5532
    %8648 = vmatmul.bf16.gmra.mxu0 %v8424
    %v8649 = vpop.f32.mrf.mxu0
    %v8650 = vadd.f32 %v8637, %v8649
    %v8651 = vpop.f32.mrf.mxu0
    %8652 = vdwg.mxu0
    %8653 = vmatpush.bf16.msra.mxu0 %v5577
    %8654 = vmatpush.bf16.msra.mxu0 %v5574
    %8655 = vmatpush.bf16.msra.mxu0 %v5571
    %8656 = vmatpush.bf16.msra.mxu0 %v5568
    %8657 = vmatpush.bf16.msra.mxu0 %v5565
    %8658 = vmatpush.bf16.msra.mxu0 %v5562
    %8659 = vmatpush.bf16.msra.mxu0 %v5559
    %8660 = vmatpush.bf16.msra.mxu0 %v5556
    %8661 = vmatmul.bf16.gmra.mxu0 %v8425
    %v8662 = vpop.f32.mrf.mxu0
    %v8663 = vadd.f32 %v8650, %v8662
    %v8664 = vpop.f32.mrf.mxu0
    %8665 = vdwg.mxu0
    %v8666 = vmax.f32 %v8507, 0.0
    %v8667 = vmax.f32 %v8585, 0.0
    %v8668 = vmax.f32 %v8663, 0.0
    %v8669 = vpack.c.bf16 %v8666, %v8666
    %v8670 = vpack.c.bf16 %v8667, %v8667
    %v8671 = vpack.c.bf16 %v8668, %v8668
    %s8672 = scalar_lea.vmem %s7, 864
    %v8673 = vld [vmem:[%s8672] sm:$0xf]
    %v8674 = vld [vmem:[%s8672 + $0x4] sm:$0xf]
    %v8675 = vld [vmem:[%s8672 + $0x8] sm:$0xf]
    %v8676 = vld [vmem:[%s8672 + $0xc] sm:$0xf]
    %v8677 = vld [vmem:[%s8672 + $0x10] sm:$0xf]
    %v8678 = vld [vmem:[%s8672 + $0x14] sm:$0xf]
    %v8679 = vld [vmem:[%s8672 + $0x18] sm:$0xf]
    %v8680 = vld [vmem:[%s8672 + $0x1c] sm:$0xf]
    %v8681 = vld [vmem:[%s8672 + $0x20] sm:$0xf]
    %v8682 = vld [vmem:[%s8672 + $0x24] sm:$0xf]
    %v8683 = vld [vmem:[%s8672 + $0x28] sm:$0xf]
    %v8684 = vld [vmem:[%s8672 + $0x2c] sm:$0xf]
    %v8685 = vld [vmem:[%s8672 + $0x30] sm:$0xf]
    %v8686 = vld [vmem:[%s8672 + $0x34] sm:$0xf]
    %v8687 = vld [vmem:[%s8672 + $0x38] sm:$0xf]
    %v8688 = vld [vmem:[%s8672 + $0x3c] sm:$0xf]
    %v8689 = vld [vmem:[%s8672 + $0x40] sm:$0xf]
    %v8690 = vld [vmem:[%s8672 + $0x44] sm:$0xf]
    %v8691 = vld [vmem:[%s8672 + $0x48] sm:$0xf]
    %v8692 = vld [vmem:[%s8672 + $0x4c] sm:$0xf]
    %v8693 = vld [vmem:[%s8672 + $0x50] sm:$0xf]
    %v8694 = vld [vmem:[%s8672 + $0x54] sm:$0xf]
    %v8695 = vld [vmem:[%s8672 + $0x58] sm:$0xf]
    %v8696 = vld [vmem:[%s8672 + $0x5c] sm:$0xf]
    %v8697 = vld [vmem:[%s8672 + $0x60] sm:$0xf]
    %v8698 = vld [vmem:[%s8672 + $0x64] sm:$0xf]
    %v8699 = vld [vmem:[%s8672 + $0x68] sm:$0xf]
    %v8700 = vld [vmem:[%s8672 + $0x6c] sm:$0xf]
    %v8701 = vld [vmem:[%s8672 + $0x70] sm:$0xf]
    %v8702 = vld [vmem:[%s8672 + $0x74] sm:$0xf]
    %v8703 = vld [vmem:[%s8672 + $0x78] sm:$0xf]
    %v8704 = vld [vmem:[%s8672 + $0x7c] sm:$0xf]
    %v8705 = vld [vmem:[%s8672 + $0x80] sm:$0xf]
    %v8706 = vld [vmem:[%s8672 + $0x84] sm:$0xf]
    %v8707 = vld [vmem:[%s8672 + $0x88] sm:$0xf]
    %v8708 = vld [vmem:[%s8672 + $0x8c] sm:$0xf]
    %v8745 = vunpack.c.l.b16 %v8673
    %v8746 = vunpack.c.l.b16 %v8674
    %v8747 = vunpack.c.l.b16 %v8675
    %v8748 = vunpack.c.l.b16 %v8676
    %v8749 = vunpack.c.l.b16 %v8677
    %v8750 = vunpack.c.l.b16 %v8678
    %v8751 = vunpack.c.l.b16 %v8679
    %v8752 = vunpack.c.l.b16 %v8680
    %v8753 = vunpack.c.l.b16 %v8681
    %v8754 = vunpack.c.l.b16 %v8682
    %v8755 = vunpack.c.l.b16 %v8683
    %v8756 = vunpack.c.l.b16 %v8684
    %v8757 = vunpack.c.l.b16 %v8685
    %v8758 = vunpack.c.l.b16 %v8686
    %v8759 = vunpack.c.l.b16 %v8687
    %v8760 = vunpack.c.l.b16 %v8688
    %v8761 = vunpack.c.l.b16 %v8689
    %v8762 = vunpack.c.l.b16 %v8690
    %v8763 = vunpack.c.l.b16 %v8691
    %v8764 = vunpack.c.l.b16 %v8692
    %v8765 = vunpack.c.l.b16 %v8693
    %v8766 = vunpack.c.l.b16 %v8694
    %v8767 = vunpack.c.l.b16 %v8695
    %v8768 = vunpack.c.l.b16 %v8696
    %v8769 = vunpack.c.l.b16 %v8697
    %v8770 = vunpack.c.l.b16 %v8698
    %v8771 = vunpack.c.l.b16 %v8699
    %v8772 = vunpack.c.l.b16 %v8700
    %v8773 = vunpack.c.l.b16 %v8701
    %v8774 = vunpack.c.l.b16 %v8702
    %v8775 = vunpack.c.l.b16 %v8703
    %v8776 = vunpack.c.l.b16 %v8704
    %v8777 = vunpack.c.l.b16 %v8705
    %v8778 = vunpack.c.l.b16 %v8706
    %v8779 = vunpack.c.l.b16 %v8707
    %v8780 = vunpack.c.l.b16 %v8708
    %v8781 = vpack.c.b16 %v8746, %v8745
    %v8782 = vpack.c.b16 %v8748, %v8747
    %v8783 = vpack.c.b16 %v8750, %v8749
    %v8784 = vpack.c.b16 %v8752, %v8751
    %v8785 = vpack.c.b16 %v8754, %v8753
    %v8786 = vpack.c.b16 %v8756, %v8755
    %v8787 = vpack.c.b16 %v8758, %v8757
    %v8788 = vpack.c.b16 %v8760, %v8759
    %v8789 = vpack.c.b16 %v8762, %v8761
    %v8790 = vpack.c.b16 %v8764, %v8763
    %v8791 = vpack.c.b16 %v8766, %v8765
    %v8792 = vpack.c.b16 %v8768, %v8767
    %v8793 = vpack.c.b16 %v8770, %v8769
    %v8794 = vpack.c.b16 %v8772, %v8771
    %v8795 = vpack.c.b16 %v8774, %v8773
    %v8796 = vpack.c.b16 %v8776, %v8775
    %v8797 = vpack.c.b16 %v8778, %v8777
    %v8798 = vpack.c.b16 %v8780, %v8779
    %v8818 = vsel %vm6407, %v8671, 0
    %8820 = vmatpush.bf16.msra.mxu0 %v8788
    %8821 = vmatpush.bf16.msra.mxu0 %v8787
    %8822 = vmatpush.bf16.msra.mxu0 %v8786
    %8823 = vmatpush.bf16.msra.mxu0 %v8785
    %8824 = vmatpush.bf16.msra.mxu0 %v8784
    %8825 = vmatpush.bf16.msra.mxu0 %v8783
    %8826 = vmatpush.bf16.msra.mxu0 %v8782
    %8827 = vmatpush.bf16.msra.mxu0 %v8781
    %8828 = vmatmul.bf16.gmra.mxu0 %v8669
    %v8829 = vpop.f32.mrf.mxu0
    %v8830 = vadd.f32 0.0, %v8829
    %v8831 = vpop.f32.mrf.mxu0
    %8832 = vdwg.mxu0
    %8833 = vmatpush.bf16.msra.mxu0 %v8796
    %8834 = vmatpush.bf16.msra.mxu0 %v8795
    %8835 = vmatpush.bf16.msra.mxu0 %v8794
    %8836 = vmatpush.bf16.msra.mxu0 %v8793
    %8837 = vmatpush.bf16.msra.mxu0 %v8792
    %8838 = vmatpush.bf16.msra.mxu0 %v8791
    %8839 = vmatpush.bf16.msra.mxu0 %v8790
    %8840 = vmatpush.bf16.msra.mxu0 %v8789
    %8841 = vmatmul.bf16.gmra.mxu0 %v8670
    %v8842 = vpop.f32.mrf.mxu0
    %v8843 = vadd.f32 %v8830, %v8842
    %v8844 = vpop.f32.mrf.mxu0
    %8845 = vdwg.mxu0
    %8846 = vmatpush.bf16.msra.mxu0 0
    %8847 = vmatpush.bf16.msra.mxu0 0
    %8848 = vmatpush.bf16.msra.mxu0 0
    %8849 = vmatpush.bf16.msra.mxu0 0
    %8850 = vmatpush.bf16.msra.mxu0 0
    %8851 = vmatpush.bf16.msra.mxu0 0
    %8852 = vmatpush.bf16.msra.mxu0 %v8798
    %8853 = vmatpush.bf16.msra.mxu0 %v8797
    %8854 = vmatmul.bf16.gmra.mxu0 %v8818
    %v8855 = vpop.f32.mrf.mxu0
    %v8856 = vadd.f32 %v8843, %v8855
    %v8857 = vpop.f32.mrf.mxu0
    %8858 = vdwg.mxu0
    %v8859 = vadd.f32 %v8407, %v8856
    %v8860 = vld [vmem:[#allocation2 + $0x38] sm:$0xff]
    %v8861 = vld [vmem:[#allocation2 + $0x40] sm:$0xff]
    %v8862 = vld [vmem:[#allocation2 + $0x48] sm:$0xff]
    %v8866 = vunpack.c.l.b16 %v8860
    %v8867 = vunpack.c.h.b16 %v8860
    %v8868 = vunpack.c.l.b16 %v8861
    %v8869 = vunpack.c.h.b16 %v8861
    %v8870 = vunpack.c.l.b16 %v8862
    %v8871 = vunpack.c.h.b16 %v8862
    %v8872 = vpack.c.b16 %v8866, %v8866
    %v8873 = vpack.c.b16 %v8867, %v8867
    %v8874 = vpack.c.b16 %v8868, %v8868
    %v8875 = vpack.c.b16 %v8869, %v8869
    %v8876 = vpack.c.b16 %v8870, %v8870
    %v8877 = vpack.c.b16 %v8871, %v8871
    %8884 = vmatpush.bf16.msra.mxu0 %v5455
    %8885 = vmatpush.bf16.msra.mxu0 %v5452
    %8886 = vmatpush.bf16.msra.mxu0 %v5449
    %8887 = vmatpush.bf16.msra.mxu0 %v5446
    %8888 = vmatpush.bf16.msra.mxu0 %v5443
    %8889 = vmatpush.bf16.msra.mxu0 %v5440
    %8890 = vmatpush.bf16.msra.mxu0 %v5437
    %8891 = vmatpush.bf16.msra.mxu0 %v5434
    %8892 = vmatmul.bf16.gmra.mxu0 %v8872
    %v8893 = vpop.f32.mrf.mxu0
    %v8894 = vadd.f32 %v4927, %v8893
    %v8895 = vpop.f32.mrf.mxu0
    %8896 = vdwg.mxu0
    %8897 = vmatpush.bf16.msra.mxu0 %v5479
    %8898 = vmatpush.bf16.msra.mxu0 %v5476
    %8899 = vmatpush.bf16.msra.mxu0 %v5473
    %8900 = vmatpush.bf16.msra.mxu0 %v5470
    %8901 = vmatpush.bf16.msra.mxu0 %v5467
    %8902 = vmatpush.bf16.msra.mxu0 %v5464
    %8903 = vmatpush.bf16.msra.mxu0 %v5461
    %8904 = vmatpush.bf16.msra.mxu0 %v5458
    %8905 = vmatmul.bf16.gmra.mxu0 %v8873
    %v8906 = vpop.f32.mrf.mxu0
    %v8907 = vadd.f32 %v8894, %v8906
    %v8908 = vpop.f32.mrf.mxu0
    %8909 = vdwg.mxu0
    %8910 = vmatpush.bf16.msra.mxu0 %v5503
    %8911 = vmatpush.bf16.msra.mxu0 %v5500
    %8912 = vmatpush.bf16.msra.mxu0 %v5497
    %8913 = vmatpush.bf16.msra.mxu0 %v5494
    %8914 = vmatpush.bf16.msra.mxu0 %v5491
    %8915 = vmatpush.bf16.msra.mxu0 %v5488
    %8916 = vmatpush.bf16.msra.mxu0 %v5485
    %8917 = vmatpush.bf16.msra.mxu0 %v5482
    %8918 = vmatmul.bf16.gmra.mxu0 %v8874
    %v8919 = vpop.f32.mrf.mxu0
    %v8920 = vadd.f32 %v8907, %v8919
    %v8921 = vpop.f32.mrf.mxu0
    %8922 = vdwg.mxu0
    %8923 = vmatpush.bf16.msra.mxu0 %v5527
    %8924 = vmatpush.bf16.msra.mxu0 %v5524
    %8925 = vmatpush.bf16.msra.mxu0 %v5521
    %8926 = vmatpush.bf16.msra.mxu0 %v5518
    %8927 = vmatpush.bf16.msra.mxu0 %v5515
    %8928 = vmatpush.bf16.msra.mxu0 %v5512
    %8929 = vmatpush.bf16.msra.mxu0 %v5509
    %8930 = vmatpush.bf16.msra.mxu0 %v5506
    %8931 = vmatmul.bf16.gmra.mxu0 %v8875
    %v8932 = vpop.f32.mrf.mxu0
    %v8933 = vadd.f32 %v8920, %v8932
    %v8934 = vpop.f32.mrf.mxu0
    %8935 = vdwg.mxu0
    %8936 = vmatpush.bf16.msra.mxu0 %v5551
    %8937 = vmatpush.bf16.msra.mxu0 %v5548
    %8938 = vmatpush.bf16.msra.mxu0 %v5545
    %8939 = vmatpush.bf16.msra.mxu0 %v5542
    %8940 = vmatpush.bf16.msra.mxu0 %v5539
    %8941 = vmatpush.bf16.msra.mxu0 %v5536
    %8942 = vmatpush.bf16.msra.mxu0 %v5533
    %8943 = vmatpush.bf16.msra.mxu0 %v5530
    %8944 = vmatmul.bf16.gmra.mxu0 %v8876
    %v8945 = vpop.f32.mrf.mxu0
    %v8946 = vadd.f32 %v8933, %v8945
    %v8947 = vpop.f32.mrf.mxu0
    %8948 = vdwg.mxu0
    %8949 = vmatpush.bf16.msra.mxu0 %v5575
    %8950 = vmatpush.bf16.msra.mxu0 %v5572
    %8951 = vmatpush.bf16.msra.mxu0 %v5569
    %8952 = vmatpush.bf16.msra.mxu0 %v5566
    %8953 = vmatpush.bf16.msra.mxu0 %v5563
    %8954 = vmatpush.bf16.msra.mxu0 %v5560
    %8955 = vmatpush.bf16.msra.mxu0 %v5557
    %8956 = vmatpush.bf16.msra.mxu0 %v5554
    %8957 = vmatmul.bf16.gmra.mxu0 %v8877
    %v8958 = vpop.f32.mrf.mxu0
    %v8959 = vadd.f32 %v8946, %v8958
    %v8960 = vpop.f32.mrf.mxu0
    %8961 = vdwg.mxu0
    %8962 = vmatpush.bf16.msra.mxu0 %v5456
    %8963 = vmatpush.bf16.msra.mxu0 %v5453
    %8964 = vmatpush.bf16.msra.mxu0 %v5450
    %8965 = vmatpush.bf16.msra.mxu0 %v5447
    %8966 = vmatpush.bf16.msra.mxu0 %v5444
    %8967 = vmatpush.bf16.msra.mxu0 %v5441
    %8968 = vmatpush.bf16.msra.mxu0 %v5438
    %8969 = vmatpush.bf16.msra.mxu0 %v5435
    %8970 = vmatmul.bf16.gmra.mxu0 %v8872
    %v8971 = vpop.f32.mrf.mxu0
    %v8972 = vadd.f32 %v4928, %v8971
    %v8973 = vpop.f32.mrf.mxu0
    %8974 = vdwg.mxu0
    %8975 = vmatpush.bf16.msra.mxu0 %v5480
    %8976 = vmatpush.bf16.msra.mxu0 %v5477
    %8977 = vmatpush.bf16.msra.mxu0 %v5474
    %8978 = vmatpush.bf16.msra.mxu0 %v5471
    %8979 = vmatpush.bf16.msra.mxu0 %v5468
    %8980 = vmatpush.bf16.msra.mxu0 %v5465
    %8981 = vmatpush.bf16.msra.mxu0 %v5462
    %8982 = vmatpush.bf16.msra.mxu0 %v5459
    %8983 = vmatmul.bf16.gmra.mxu0 %v8873
    %v8984 = vpop.f32.mrf.mxu0
    %v8985 = vadd.f32 %v8972, %v8984
    %v8986 = vpop.f32.mrf.mxu0
    %8987 = vdwg.mxu0
    %8988 = vmatpush.bf16.msra.mxu0 %v5504
    %8989 = vmatpush.bf16.msra.mxu0 %v5501
    %8990 = vmatpush.bf16.msra.mxu0 %v5498
    %8991 = vmatpush.bf16.msra.mxu0 %v5495
    %8992 = vmatpush.bf16.msra.mxu0 %v5492
    %8993 = vmatpush.bf16.msra.mxu0 %v5489
    %8994 = vmatpush.bf16.msra.mxu0 %v5486
    %8995 = vmatpush.bf16.msra.mxu0 %v5483
    %8996 = vmatmul.bf16.gmra.mxu0 %v8874
    %v8997 = vpop.f32.mrf.mxu0
    %v8998 = vadd.f32 %v8985, %v8997
    %v8999 = vpop.f32.mrf.mxu0
    %9000 = vdwg.mxu0
    %9001 = vmatpush.bf16.msra.mxu0 %v5528
    %9002 = vmatpush.bf16.msra.mxu0 %v5525
    %9003 = vmatpush.bf16.msra.mxu0 %v5522
    %9004 = vmatpush.bf16.msra.mxu0 %v5519
    %9005 = vmatpush.bf16.msra.mxu0 %v5516
    %9006 = vmatpush.bf16.msra.mxu0 %v5513
    %9007 = vmatpush.bf16.msra.mxu0 %v5510
    %9008 = vmatpush.bf16.msra.mxu0 %v5507
    %9009 = vmatmul.bf16.gmra.mxu0 %v8875
    %v9010 = vpop.f32.mrf.mxu0
    %v9011 = vadd.f32 %v8998, %v9010
    %v9012 = vpop.f32.mrf.mxu0
    %9013 = vdwg.mxu0
    %9014 = vmatpush.bf16.msra.mxu0 %v5552
    %9015 = vmatpush.bf16.msra.mxu0 %v5549
    %9016 = vmatpush.bf16.msra.mxu0 %v5546
    %9017 = vmatpush.bf16.msra.mxu0 %v5543
    %9018 = vmatpush.bf16.msra.mxu0 %v5540
    %9019 = vmatpush.bf16.msra.mxu0 %v5537
    %9020 = vmatpush.bf16.msra.mxu0 %v5534
    %9021 = vmatpush.bf16.msra.mxu0 %v5531
    %9022 = vmatmul.bf16.gmra.mxu0 %v8876
    %v9023 = vpop.f32.mrf.mxu0
    %v9024 = vadd.f32 %v9011, %v9023
    %v9025 = vpop.f32.mrf.mxu0
    %9026 = vdwg.mxu0
    %9027 = vmatpush.bf16.msra.mxu0 %v5576
    %9028 = vmatpush.bf16.msra.mxu0 %v5573
    %9029 = vmatpush.bf16.msra.mxu0 %v5570
    %9030 = vmatpush.bf16.msra.mxu0 %v5567
    %9031 = vmatpush.bf16.msra.mxu0 %v5564
    %9032 = vmatpush.bf16.msra.mxu0 %v5561
    %9033 = vmatpush.bf16.msra.mxu0 %v5558
    %9034 = vmatpush.bf16.msra.mxu0 %v5555
    %9035 = vmatmul.bf16.gmra.mxu0 %v8877
    %v9036 = vpop.f32.mrf.mxu0
    %v9037 = vadd.f32 %v9024, %v9036
    %v9038 = vpop.f32.mrf.mxu0
    %9039 = vdwg.mxu0
    %9040 = vmatpush.bf16.msra.mxu0 %v5457
    %9041 = vmatpush.bf16.msra.mxu0 %v5454
    %9042 = vmatpush.bf16.msra.mxu0 %v5451
    %9043 = vmatpush.bf16.msra.mxu0 %v5448
    %9044 = vmatpush.bf16.msra.mxu0 %v5445
    %9045 = vmatpush.bf16.msra.mxu0 %v5442
    %9046 = vmatpush.bf16.msra.mxu0 %v5439
    %9047 = vmatpush.bf16.msra.mxu0 %v5436
    %9048 = vmatmul.bf16.gmra.mxu0 %v8872
    %v9049 = vpop.f32.mrf.mxu0
    %v9050 = vadd.f32 %v4929, %v9049
    %v9051 = vpop.f32.mrf.mxu0
    %9052 = vdwg.mxu0
    %9053 = vmatpush.bf16.msra.mxu0 %v5481
    %9054 = vmatpush.bf16.msra.mxu0 %v5478
    %9055 = vmatpush.bf16.msra.mxu0 %v5475
    %9056 = vmatpush.bf16.msra.mxu0 %v5472
    %9057 = vmatpush.bf16.msra.mxu0 %v5469
    %9058 = vmatpush.bf16.msra.mxu0 %v5466
    %9059 = vmatpush.bf16.msra.mxu0 %v5463
    %9060 = vmatpush.bf16.msra.mxu0 %v5460
    %9061 = vmatmul.bf16.gmra.mxu0 %v8873
    %v9062 = vpop.f32.mrf.mxu0
    %v9063 = vadd.f32 %v9050, %v9062
    %v9064 = vpop.f32.mrf.mxu0
    %9065 = vdwg.mxu0
    %9066 = vmatpush.bf16.msra.mxu0 %v5505
    %9067 = vmatpush.bf16.msra.mxu0 %v5502
    %9068 = vmatpush.bf16.msra.mxu0 %v5499
    %9069 = vmatpush.bf16.msra.mxu0 %v5496
    %9070 = vmatpush.bf16.msra.mxu0 %v5493
    %9071 = vmatpush.bf16.msra.mxu0 %v5490
    %9072 = vmatpush.bf16.msra.mxu0 %v5487
    %9073 = vmatpush.bf16.msra.mxu0 %v5484
    %9074 = vmatmul.bf16.gmra.mxu0 %v8874
    %v9075 = vpop.f32.mrf.mxu0
    %v9076 = vadd.f32 %v9063, %v9075
    %v9077 = vpop.f32.mrf.mxu0
    %9078 = vdwg.mxu0
    %9079 = vmatpush.bf16.msra.mxu0 %v5529
    %9080 = vmatpush.bf16.msra.mxu0 %v5526
    %9081 = vmatpush.bf16.msra.mxu0 %v5523
    %9082 = vmatpush.bf16.msra.mxu0 %v5520
    %9083 = vmatpush.bf16.msra.mxu0 %v5517
    %9084 = vmatpush.bf16.msra.mxu0 %v5514
    %9085 = vmatpush.bf16.msra.mxu0 %v5511
    %9086 = vmatpush.bf16.msra.mxu0 %v5508
    %9087 = vmatmul.bf16.gmra.mxu0 %v8875
    %v9088 = vpop.f32.mrf.mxu0
    %v9089 = vadd.f32 %v9076, %v9088
    %v9090 = vpop.f32.mrf.mxu0
    %9091 = vdwg.mxu0
    %9092 = vmatpush.bf16.msra.mxu0 %v5553
    %9093 = vmatpush.bf16.msra.mxu0 %v5550
    %9094 = vmatpush.bf16.msra.mxu0 %v5547
    %9095 = vmatpush.bf16.msra.mxu0 %v5544
    %9096 = vmatpush.bf16.msra.mxu0 %v5541
    %9097 = vmatpush.bf16.msra.mxu0 %v5538
    %9098 = vmatpush.bf16.msra.mxu0 %v5535
    %9099 = vmatpush.bf16.msra.mxu0 %v5532
    %9100 = vmatmul.bf16.gmra.mxu0 %v8876
    %v9101 = vpop.f32.mrf.mxu0
    %v9102 = vadd.f32 %v9089, %v9101
    %v9103 = vpop.f32.mrf.mxu0
    %9104 = vdwg.mxu0
    %9105 = vmatpush.bf16.msra.mxu0 %v5577
    %9106 = vmatpush.bf16.msra.mxu0 %v5574
    %9107 = vmatpush.bf16.msra.mxu0 %v5571
    %9108 = vmatpush.bf16.msra.mxu0 %v5568
    %9109 = vmatpush.bf16.msra.mxu0 %v5565
    %9110 = vmatpush.bf16.msra.mxu0 %v5562
    %9111 = vmatpush.bf16.msra.mxu0 %v5559
    %9112 = vmatpush.bf16.msra.mxu0 %v5556
    %9113 = vmatmul.bf16.gmra.mxu0 %v8877
    %v9114 = vpop.f32.mrf.mxu0
    %v9115 = vadd.f32 %v9102, %v9114
    %v9116 = vpop.f32.mrf.mxu0
    %9117 = vdwg.mxu0
    %v9118 = vmax.f32 %v8959, 0.0
    %v9119 = vmax.f32 %v9037, 0.0
    %v9120 = vmax.f32 %v9115, 0.0
    %v9121 = vpack.c.bf16 %v9118, %v9118
    %v9122 = vpack.c.bf16 %v9119, %v9119
    %v9123 = vpack.c.bf16 %v9120, %v9120
    %s9124 = scalar_lea.vmem %s7, 1008
    %v9125 = vld [vmem:[%s9124] sm:$0xf]
    %v9126 = vld [vmem:[%s9124 + $0x4] sm:$0xf]
    %v9127 = vld [vmem:[%s9124 + $0x8] sm:$0xf]
    %v9128 = vld [vmem:[%s9124 + $0xc] sm:$0xf]
    %v9129 = vld [vmem:[%s9124 + $0x10] sm:$0xf]
    %v9130 = vld [vmem:[%s9124 + $0x14] sm:$0xf]
    %v9131 = vld [vmem:[%s9124 + $0x18] sm:$0xf]
    %v9132 = vld [vmem:[%s9124 + $0x1c] sm:$0xf]
    %v9133 = vld [vmem:[%s9124 + $0x20] sm:$0xf]
    %v9134 = vld [vmem:[%s9124 + $0x24] sm:$0xf]
    %v9135 = vld [vmem:[%s9124 + $0x28] sm:$0xf]
    %v9136 = vld [vmem:[%s9124 + $0x2c] sm:$0xf]
    %v9137 = vld [vmem:[%s9124 + $0x30] sm:$0xf]
    %v9138 = vld [vmem:[%s9124 + $0x34] sm:$0xf]
    %v9139 = vld [vmem:[%s9124 + $0x38] sm:$0xf]
    %v9140 = vld [vmem:[%s9124 + $0x3c] sm:$0xf]
    %v9141 = vld [vmem:[%s9124 + $0x40] sm:$0xf]
    %v9142 = vld [vmem:[%s9124 + $0x44] sm:$0xf]
    %v9143 = vld [vmem:[%s9124 + $0x48] sm:$0xf]
    %v9144 = vld [vmem:[%s9124 + $0x4c] sm:$0xf]
    %v9145 = vld [vmem:[%s9124 + $0x50] sm:$0xf]
    %v9146 = vld [vmem:[%s9124 + $0x54] sm:$0xf]
    %v9147 = vld [vmem:[%s9124 + $0x58] sm:$0xf]
    %v9148 = vld [vmem:[%s9124 + $0x5c] sm:$0xf]
    %v9149 = vld [vmem:[%s9124 + $0x60] sm:$0xf]
    %v9150 = vld [vmem:[%s9124 + $0x64] sm:$0xf]
    %v9151 = vld [vmem:[%s9124 + $0x68] sm:$0xf]
    %v9152 = vld [vmem:[%s9124 + $0x6c] sm:$0xf]
    %v9153 = vld [vmem:[%s9124 + $0x70] sm:$0xf]
    %v9154 = vld [vmem:[%s9124 + $0x74] sm:$0xf]
    %v9155 = vld [vmem:[%s9124 + $0x78] sm:$0xf]
    %v9156 = vld [vmem:[%s9124 + $0x7c] sm:$0xf]
    %v9157 = vld [vmem:[%s9124 + $0x80] sm:$0xf]
    %v9158 = vld [vmem:[%s9124 + $0x84] sm:$0xf]
    %v9159 = vld [vmem:[%s9124 + $0x88] sm:$0xf]
    %v9160 = vld [vmem:[%s9124 + $0x8c] sm:$0xf]
    %v9197 = vunpack.c.l.b16 %v9125
    %v9198 = vunpack.c.l.b16 %v9126
    %v9199 = vunpack.c.l.b16 %v9127
    %v9200 = vunpack.c.l.b16 %v9128
    %v9201 = vunpack.c.l.b16 %v9129
    %v9202 = vunpack.c.l.b16 %v9130
    %v9203 = vunpack.c.l.b16 %v9131
    %v9204 = vunpack.c.l.b16 %v9132
    %v9205 = vunpack.c.l.b16 %v9133
    %v9206 = vunpack.c.l.b16 %v9134
    %v9207 = vunpack.c.l.b16 %v9135
    %v9208 = vunpack.c.l.b16 %v9136
    %v9209 = vunpack.c.l.b16 %v9137
    %v9210 = vunpack.c.l.b16 %v9138
    %v9211 = vunpack.c.l.b16 %v9139
    %v9212 = vunpack.c.l.b16 %v9140
    %v9213 = vunpack.c.l.b16 %v9141
    %v9214 = vunpack.c.l.b16 %v9142
    %v9215 = vunpack.c.l.b16 %v9143
    %v9216 = vunpack.c.l.b16 %v9144
    %v9217 = vunpack.c.l.b16 %v9145
    %v9218 = vunpack.c.l.b16 %v9146
    %v9219 = vunpack.c.l.b16 %v9147
    %v9220 = vunpack.c.l.b16 %v9148
    %v9221 = vunpack.c.l.b16 %v9149
    %v9222 = vunpack.c.l.b16 %v9150
    %v9223 = vunpack.c.l.b16 %v9151
    %v9224 = vunpack.c.l.b16 %v9152
    %v9225 = vunpack.c.l.b16 %v9153
    %v9226 = vunpack.c.l.b16 %v9154
    %v9227 = vunpack.c.l.b16 %v9155
    %v9228 = vunpack.c.l.b16 %v9156
    %v9229 = vunpack.c.l.b16 %v9157
    %v9230 = vunpack.c.l.b16 %v9158
    %v9231 = vunpack.c.l.b16 %v9159
    %v9232 = vunpack.c.l.b16 %v9160
    %v9233 = vpack.c.b16 %v9198, %v9197
    %v9234 = vpack.c.b16 %v9200, %v9199
    %v9235 = vpack.c.b16 %v9202, %v9201
    %v9236 = vpack.c.b16 %v9204, %v9203
    %v9237 = vpack.c.b16 %v9206, %v9205
    %v9238 = vpack.c.b16 %v9208, %v9207
    %v9239 = vpack.c.b16 %v9210, %v9209
    %v9240 = vpack.c.b16 %v9212, %v9211
    %v9241 = vpack.c.b16 %v9214, %v9213
    %v9242 = vpack.c.b16 %v9216, %v9215
    %v9243 = vpack.c.b16 %v9218, %v9217
    %v9244 = vpack.c.b16 %v9220, %v9219
    %v9245 = vpack.c.b16 %v9222, %v9221
    %v9246 = vpack.c.b16 %v9224, %v9223
    %v9247 = vpack.c.b16 %v9226, %v9225
    %v9248 = vpack.c.b16 %v9228, %v9227
    %v9249 = vpack.c.b16 %v9230, %v9229
    %v9250 = vpack.c.b16 %v9232, %v9231
    %v9270 = vsel %vm6407, %v9123, 0
    %9272 = vmatpush.bf16.msra.mxu0 %v9240
    %9273 = vmatpush.bf16.msra.mxu0 %v9239
    %9274 = vmatpush.bf16.msra.mxu0 %v9238
    %9275 = vmatpush.bf16.msra.mxu0 %v9237
    %9276 = vmatpush.bf16.msra.mxu0 %v9236
    %9277 = vmatpush.bf16.msra.mxu0 %v9235
    %9278 = vmatpush.bf16.msra.mxu0 %v9234
    %9279 = vmatpush.bf16.msra.mxu0 %v9233
    %9280 = vmatmul.bf16.gmra.mxu0 %v9121
    %v9281 = vpop.f32.mrf.mxu0
    %v9282 = vadd.f32 0.0, %v9281
    %v9283 = vpop.f32.mrf.mxu0
    %9284 = vdwg.mxu0
    %9285 = vmatpush.bf16.msra.mxu0 %v9248
    %9286 = vmatpush.bf16.msra.mxu0 %v9247
    %9287 = vmatpush.bf16.msra.mxu0 %v9246
    %9288 = vmatpush.bf16.msra.mxu0 %v9245
    %9289 = vmatpush.bf16.msra.mxu0 %v9244
    %9290 = vmatpush.bf16.msra.mxu0 %v9243
    %9291 = vmatpush.bf16.msra.mxu0 %v9242
    %9292 = vmatpush.bf16.msra.mxu0 %v9241
    %9293 = vmatmul.bf16.gmra.mxu0 %v9122
    %v9294 = vpop.f32.mrf.mxu0
    %v9295 = vadd.f32 %v9282, %v9294
    %v9296 = vpop.f32.mrf.mxu0
    %9297 = vdwg.mxu0
    %9298 = vmatpush.bf16.msra.mxu0 0
    %9299 = vmatpush.bf16.msra.mxu0 0
    %9300 = vmatpush.bf16.msra.mxu0 0
    %9301 = vmatpush.bf16.msra.mxu0 0
    %9302 = vmatpush.bf16.msra.mxu0 0
    %9303 = vmatpush.bf16.msra.mxu0 0
    %9304 = vmatpush.bf16.msra.mxu0 %v9250
    %9305 = vmatpush.bf16.msra.mxu0 %v9249
    %9306 = vmatmul.bf16.gmra.mxu0 %v9270
    %v9307 = vpop.f32.mrf.mxu0
    %v9308 = vadd.f32 %v9295, %v9307
    %v9309 = vpop.f32.mrf.mxu0
    %9310 = vdwg.mxu0
    %v9311 = vadd.f32 %v8859, %v9308
    %v9312 = vld [vmem:[#allocation2 + $0x40] sm:$0xff]
    %v9313 = vld [vmem:[#allocation2 + $0x48] sm:$0xff]
    %v9314 = vld [vmem:[#allocation2 + $0x50] sm:$0xff]
    %v9318 = vunpack.c.l.b16 %v9312
    %v9319 = vunpack.c.h.b16 %v9312
    %v9320 = vunpack.c.l.b16 %v9313
    %v9321 = vunpack.c.h.b16 %v9313
    %v9322 = vunpack.c.l.b16 %v9314
    %v9323 = vunpack.c.h.b16 %v9314
    %v9324 = vpack.c.b16 %v9318, %v9318
    %v9325 = vpack.c.b16 %v9319, %v9319
    %v9326 = vpack.c.b16 %v9320, %v9320
    %v9327 = vpack.c.b16 %v9321, %v9321
    %v9328 = vpack.c.b16 %v9322, %v9322
    %v9329 = vpack.c.b16 %v9323, %v9323
    %9336 = vmatpush.bf16.msra.mxu0 %v5455
    %9337 = vmatpush.bf16.msra.mxu0 %v5452
    %9338 = vmatpush.bf16.msra.mxu0 %v5449
    %9339 = vmatpush.bf16.msra.mxu0 %v5446
    %9340 = vmatpush.bf16.msra.mxu0 %v5443
    %9341 = vmatpush.bf16.msra.mxu0 %v5440
    %9342 = vmatpush.bf16.msra.mxu0 %v5437
    %9343 = vmatpush.bf16.msra.mxu0 %v5434
    %9344 = vmatmul.bf16.gmra.mxu0 %v9324
    %v9345 = vpop.f32.mrf.mxu0
    %v9346 = vadd.f32 %v4927, %v9345
    %v9347 = vpop.f32.mrf.mxu0
    %9348 = vdwg.mxu0
    %9349 = vmatpush.bf16.msra.mxu0 %v5479
    %9350 = vmatpush.bf16.msra.mxu0 %v5476
    %9351 = vmatpush.bf16.msra.mxu0 %v5473
    %9352 = vmatpush.bf16.msra.mxu0 %v5470
    %9353 = vmatpush.bf16.msra.mxu0 %v5467
    %9354 = vmatpush.bf16.msra.mxu0 %v5464
    %9355 = vmatpush.bf16.msra.mxu0 %v5461
    %9356 = vmatpush.bf16.msra.mxu0 %v5458
    %9357 = vmatmul.bf16.gmra.mxu0 %v9325
    %v9358 = vpop.f32.mrf.mxu0
    %v9359 = vadd.f32 %v9346, %v9358
    %v9360 = vpop.f32.mrf.mxu0
    %9361 = vdwg.mxu0
    %9362 = vmatpush.bf16.msra.mxu0 %v5503
    %9363 = vmatpush.bf16.msra.mxu0 %v5500
    %9364 = vmatpush.bf16.msra.mxu0 %v5497
    %9365 = vmatpush.bf16.msra.mxu0 %v5494
    %9366 = vmatpush.bf16.msra.mxu0 %v5491
    %9367 = vmatpush.bf16.msra.mxu0 %v5488
    %9368 = vmatpush.bf16.msra.mxu0 %v5485
    %9369 = vmatpush.bf16.msra.mxu0 %v5482
    %9370 = vmatmul.bf16.gmra.mxu0 %v9326
    %v9371 = vpop.f32.mrf.mxu0
    %v9372 = vadd.f32 %v9359, %v9371
    %v9373 = vpop.f32.mrf.mxu0
    %9374 = vdwg.mxu0
    %9375 = vmatpush.bf16.msra.mxu0 %v5527
    %9376 = vmatpush.bf16.msra.mxu0 %v5524
    %9377 = vmatpush.bf16.msra.mxu0 %v5521
    %9378 = vmatpush.bf16.msra.mxu0 %v5518
    %9379 = vmatpush.bf16.msra.mxu0 %v5515
    %9380 = vmatpush.bf16.msra.mxu0 %v5512
    %9381 = vmatpush.bf16.msra.mxu0 %v5509
    %9382 = vmatpush.bf16.msra.mxu0 %v5506
    %9383 = vmatmul.bf16.gmra.mxu0 %v9327
    %v9384 = vpop.f32.mrf.mxu0
    %v9385 = vadd.f32 %v9372, %v9384
    %v9386 = vpop.f32.mrf.mxu0
    %9387 = vdwg.mxu0
    %9388 = vmatpush.bf16.msra.mxu0 %v5551
    %9389 = vmatpush.bf16.msra.mxu0 %v5548
    %9390 = vmatpush.bf16.msra.mxu0 %v5545
    %9391 = vmatpush.bf16.msra.mxu0 %v5542
    %9392 = vmatpush.bf16.msra.mxu0 %v5539
    %9393 = vmatpush.bf16.msra.mxu0 %v5536
    %9394 = vmatpush.bf16.msra.mxu0 %v5533
    %9395 = vmatpush.bf16.msra.mxu0 %v5530
    %9396 = vmatmul.bf16.gmra.mxu0 %v9328
    %v9397 = vpop.f32.mrf.mxu0
    %v9398 = vadd.f32 %v9385, %v9397
    %v9399 = vpop.f32.mrf.mxu0
    %9400 = vdwg.mxu0
    %9401 = vmatpush.bf16.msra.mxu0 %v5575
    %9402 = vmatpush.bf16.msra.mxu0 %v5572
    %9403 = vmatpush.bf16.msra.mxu0 %v5569
    %9404 = vmatpush.bf16.msra.mxu0 %v5566
    %9405 = vmatpush.bf16.msra.mxu0 %v5563
    %9406 = vmatpush.bf16.msra.mxu0 %v5560
    %9407 = vmatpush.bf16.msra.mxu0 %v5557
    %9408 = vmatpush.bf16.msra.mxu0 %v5554
    %9409 = vmatmul.bf16.gmra.mxu0 %v9329
    %v9410 = vpop.f32.mrf.mxu0
    %v9411 = vadd.f32 %v9398, %v9410
    %v9412 = vpop.f32.mrf.mxu0
    %9413 = vdwg.mxu0
    %9414 = vmatpush.bf16.msra.mxu0 %v5456
    %9415 = vmatpush.bf16.msra.mxu0 %v5453
    %9416 = vmatpush.bf16.msra.mxu0 %v5450
    %9417 = vmatpush.bf16.msra.mxu0 %v5447
    %9418 = vmatpush.bf16.msra.mxu0 %v5444
    %9419 = vmatpush.bf16.msra.mxu0 %v5441
    %9420 = vmatpush.bf16.msra.mxu0 %v5438
    %9421 = vmatpush.bf16.msra.mxu0 %v5435
    %9422 = vmatmul.bf16.gmra.mxu0 %v9324
    %v9423 = vpop.f32.mrf.mxu0
    %v9424 = vadd.f32 %v4928, %v9423
    %v9425 = vpop.f32.mrf.mxu0
    %9426 = vdwg.mxu0
    %9427 = vmatpush.bf16.msra.mxu0 %v5480
    %9428 = vmatpush.bf16.msra.mxu0 %v5477
    %9429 = vmatpush.bf16.msra.mxu0 %v5474
    %9430 = vmatpush.bf16.msra.mxu0 %v5471
    %9431 = vmatpush.bf16.msra.mxu0 %v5468
    %9432 = vmatpush.bf16.msra.mxu0 %v5465
    %9433 = vmatpush.bf16.msra.mxu0 %v5462
    %9434 = vmatpush.bf16.msra.mxu0 %v5459
    %9435 = vmatmul.bf16.gmra.mxu0 %v9325
    %v9436 = vpop.f32.mrf.mxu0
    %v9437 = vadd.f32 %v9424, %v9436
    %v9438 = vpop.f32.mrf.mxu0
    %9439 = vdwg.mxu0
    %9440 = vmatpush.bf16.msra.mxu0 %v5504
    %9441 = vmatpush.bf16.msra.mxu0 %v5501
    %9442 = vmatpush.bf16.msra.mxu0 %v5498
    %9443 = vmatpush.bf16.msra.mxu0 %v5495
    %9444 = vmatpush.bf16.msra.mxu0 %v5492
    %9445 = vmatpush.bf16.msra.mxu0 %v5489
    %9446 = vmatpush.bf16.msra.mxu0 %v5486
    %9447 = vmatpush.bf16.msra.mxu0 %v5483
    %9448 = vmatmul.bf16.gmra.mxu0 %v9326
    %v9449 = vpop.f32.mrf.mxu0
    %v9450 = vadd.f32 %v9437, %v9449
    %v9451 = vpop.f32.mrf.mxu0
    %9452 = vdwg.mxu0
    %9453 = vmatpush.bf16.msra.mxu0 %v5528
    %9454 = vmatpush.bf16.msra.mxu0 %v5525
    %9455 = vmatpush.bf16.msra.mxu0 %v5522
    %9456 = vmatpush.bf16.msra.mxu0 %v5519
    %9457 = vmatpush.bf16.msra.mxu0 %v5516
    %9458 = vmatpush.bf16.msra.mxu0 %v5513
    %9459 = vmatpush.bf16.msra.mxu0 %v5510
    %9460 = vmatpush.bf16.msra.mxu0 %v5507
    %9461 = vmatmul.bf16.gmra.mxu0 %v9327
    %v9462 = vpop.f32.mrf.mxu0
    %v9463 = vadd.f32 %v9450, %v9462
    %v9464 = vpop.f32.mrf.mxu0
    %9465 = vdwg.mxu0
    %9466 = vmatpush.bf16.msra.mxu0 %v5552
    %9467 = vmatpush.bf16.msra.mxu0 %v5549
    %9468 = vmatpush.bf16.msra.mxu0 %v5546
    %9469 = vmatpush.bf16.msra.mxu0 %v5543
    %9470 = vmatpush.bf16.msra.mxu0 %v5540
    %9471 = vmatpush.bf16.msra.mxu0 %v5537
    %9472 = vmatpush.bf16.msra.mxu0 %v5534
    %9473 = vmatpush.bf16.msra.mxu0 %v5531
    %9474 = vmatmul.bf16.gmra.mxu0 %v9328
    %v9475 = vpop.f32.mrf.mxu0
    %v9476 = vadd.f32 %v9463, %v9475
    %v9477 = vpop.f32.mrf.mxu0
    %9478 = vdwg.mxu0
    %9479 = vmatpush.bf16.msra.mxu0 %v5576
    %9480 = vmatpush.bf16.msra.mxu0 %v5573
    %9481 = vmatpush.bf16.msra.mxu0 %v5570
    %9482 = vmatpush.bf16.msra.mxu0 %v5567
    %9483 = vmatpush.bf16.msra.mxu0 %v5564
    %9484 = vmatpush.bf16.msra.mxu0 %v5561
    %9485 = vmatpush.bf16.msra.mxu0 %v5558
    %9486 = vmatpush.bf16.msra.mxu0 %v5555
    %9487 = vmatmul.bf16.gmra.mxu0 %v9329
    %v9488 = vpop.f32.mrf.mxu0
    %v9489 = vadd.f32 %v9476, %v9488
    %v9490 = vpop.f32.mrf.mxu0
    %9491 = vdwg.mxu0
    %9492 = vmatpush.bf16.msra.mxu0 %v5457
    %9493 = vmatpush.bf16.msra.mxu0 %v5454
    %9494 = vmatpush.bf16.msra.mxu0 %v5451
    %9495 = vmatpush.bf16.msra.mxu0 %v5448
    %9496 = vmatpush.bf16.msra.mxu0 %v5445
    %9497 = vmatpush.bf16.msra.mxu0 %v5442
    %9498 = vmatpush.bf16.msra.mxu0 %v5439
    %9499 = vmatpush.bf16.msra.mxu0 %v5436
    %9500 = vmatmul.bf16.gmra.mxu0 %v9324
    %v9501 = vpop.f32.mrf.mxu0
    %v9502 = vadd.f32 %v4929, %v9501
    %v9503 = vpop.f32.mrf.mxu0
    %9504 = vdwg.mxu0
    %9505 = vmatpush.bf16.msra.mxu0 %v5481
    %9506 = vmatpush.bf16.msra.mxu0 %v5478
    %9507 = vmatpush.bf16.msra.mxu0 %v5475
    %9508 = vmatpush.bf16.msra.mxu0 %v5472
    %9509 = vmatpush.bf16.msra.mxu0 %v5469
    %9510 = vmatpush.bf16.msra.mxu0 %v5466
    %9511 = vmatpush.bf16.msra.mxu0 %v5463
    %9512 = vmatpush.bf16.msra.mxu0 %v5460
    %9513 = vmatmul.bf16.gmra.mxu0 %v9325
    %v9514 = vpop.f32.mrf.mxu0
    %v9515 = vadd.f32 %v9502, %v9514
    %v9516 = vpop.f32.mrf.mxu0
    %9517 = vdwg.mxu0
    %9518 = vmatpush.bf16.msra.mxu0 %v5505
    %9519 = vmatpush.bf16.msra.mxu0 %v5502
    %9520 = vmatpush.bf16.msra.mxu0 %v5499
    %9521 = vmatpush.bf16.msra.mxu0 %v5496
    %9522 = vmatpush.bf16.msra.mxu0 %v5493
    %9523 = vmatpush.bf16.msra.mxu0 %v5490
    %9524 = vmatpush.bf16.msra.mxu0 %v5487
    %9525 = vmatpush.bf16.msra.mxu0 %v5484
    %9526 = vmatmul.bf16.gmra.mxu0 %v9326
    %v9527 = vpop.f32.mrf.mxu0
    %v9528 = vadd.f32 %v9515, %v9527
    %v9529 = vpop.f32.mrf.mxu0
    %9530 = vdwg.mxu0
    %9531 = vmatpush.bf16.msra.mxu0 %v5529
    %9532 = vmatpush.bf16.msra.mxu0 %v5526
    %9533 = vmatpush.bf16.msra.mxu0 %v5523
    %9534 = vmatpush.bf16.msra.mxu0 %v5520
    %9535 = vmatpush.bf16.msra.mxu0 %v5517
    %9536 = vmatpush.bf16.msra.mxu0 %v5514
    %9537 = vmatpush.bf16.msra.mxu0 %v5511
    %9538 = vmatpush.bf16.msra.mxu0 %v5508
    %9539 = vmatmul.bf16.gmra.mxu0 %v9327
    %v9540 = vpop.f32.mrf.mxu0
    %v9541 = vadd.f32 %v9528, %v9540
    %v9542 = vpop.f32.mrf.mxu0
    %9543 = vdwg.mxu0
    %9544 = vmatpush.bf16.msra.mxu0 %v5553
    %9545 = vmatpush.bf16.msra.mxu0 %v5550
    %9546 = vmatpush.bf16.msra.mxu0 %v5547
    %9547 = vmatpush.bf16.msra.mxu0 %v5544
    %9548 = vmatpush.bf16.msra.mxu0 %v5541
    %9549 = vmatpush.bf16.msra.mxu0 %v5538
    %9550 = vmatpush.bf16.msra.mxu0 %v5535
    %9551 = vmatpush.bf16.msra.mxu0 %v5532
    %9552 = vmatmul.bf16.gmra.mxu0 %v9328
    %v9553 = vpop.f32.mrf.mxu0
    %v9554 = vadd.f32 %v9541, %v9553
    %v9555 = vpop.f32.mrf.mxu0
    %9556 = vdwg.mxu0
    %9557 = vmatpush.bf16.msra.mxu0 %v5577
    %9558 = vmatpush.bf16.msra.mxu0 %v5574
    %9559 = vmatpush.bf16.msra.mxu0 %v5571
    %9560 = vmatpush.bf16.msra.mxu0 %v5568
    %9561 = vmatpush.bf16.msra.mxu0 %v5565
    %9562 = vmatpush.bf16.msra.mxu0 %v5562
    %9563 = vmatpush.bf16.msra.mxu0 %v5559
    %9564 = vmatpush.bf16.msra.mxu0 %v5556
    %9565 = vmatmul.bf16.gmra.mxu0 %v9329
    %v9566 = vpop.f32.mrf.mxu0
    %v9567 = vadd.f32 %v9554, %v9566
    %v9568 = vpop.f32.mrf.mxu0
    %9569 = vdwg.mxu0
    %v9570 = vmax.f32 %v9411, 0.0
    %v9571 = vmax.f32 %v9489, 0.0
    %v9572 = vmax.f32 %v9567, 0.0
    %v9573 = vpack.c.bf16 %v9570, %v9570
    %v9574 = vpack.c.bf16 %v9571, %v9571
    %v9575 = vpack.c.bf16 %v9572, %v9572
    %s9576 = scalar_lea.vmem %s7, 1152
    %v9577 = vld [vmem:[%s9576] sm:$0xf]
    %v9578 = vld [vmem:[%s9576 + $0x4] sm:$0xf]
    %v9579 = vld [vmem:[%s9576 + $0x8] sm:$0xf]
    %v9580 = vld [vmem:[%s9576 + $0xc] sm:$0xf]
    %v9581 = vld [vmem:[%s9576 + $0x10] sm:$0xf]
    %v9582 = vld [vmem:[%s9576 + $0x14] sm:$0xf]
    %v9583 = vld [vmem:[%s9576 + $0x18] sm:$0xf]
    %v9584 = vld [vmem:[%s9576 + $0x1c] sm:$0xf]
    %v9585 = vld [vmem:[%s9576 + $0x20] sm:$0xf]
    %v9586 = vld [vmem:[%s9576 + $0x24] sm:$0xf]
    %v9587 = vld [vmem:[%s9576 + $0x28] sm:$0xf]
    %v9588 = vld [vmem:[%s9576 + $0x2c] sm:$0xf]
    %v9589 = vld [vmem:[%s9576 + $0x30] sm:$0xf]
    %v9590 = vld [vmem:[%s9576 + $0x34] sm:$0xf]
    %v9591 = vld [vmem:[%s9576 + $0x38] sm:$0xf]
    %v9592 = vld [vmem:[%s9576 + $0x3c] sm:$0xf]
    %v9593 = vld [vmem:[%s9576 + $0x40] sm:$0xf]
    %v9594 = vld [vmem:[%s9576 + $0x44] sm:$0xf]
    %v9595 = vld [vmem:[%s9576 + $0x48] sm:$0xf]
    %v9596 = vld [vmem:[%s9576 + $0x4c] sm:$0xf]
    %v9597 = vld [vmem:[%s9576 + $0x50] sm:$0xf]
    %v9598 = vld [vmem:[%s9576 + $0x54] sm:$0xf]
    %v9599 = vld [vmem:[%s9576 + $0x58] sm:$0xf]
    %v9600 = vld [vmem:[%s9576 + $0x5c] sm:$0xf]
    %v9601 = vld [vmem:[%s9576 + $0x60] sm:$0xf]
    %v9602 = vld [vmem:[%s9576 + $0x64] sm:$0xf]
    %v9603 = vld [vmem:[%s9576 + $0x68] sm:$0xf]
    %v9604 = vld [vmem:[%s9576 + $0x6c] sm:$0xf]
    %v9605 = vld [vmem:[%s9576 + $0x70] sm:$0xf]
    %v9606 = vld [vmem:[%s9576 + $0x74] sm:$0xf]
    %v9607 = vld [vmem:[%s9576 + $0x78] sm:$0xf]
    %v9608 = vld [vmem:[%s9576 + $0x7c] sm:$0xf]
    %v9609 = vld [vmem:[%s9576 + $0x80] sm:$0xf]
    %v9610 = vld [vmem:[%s9576 + $0x84] sm:$0xf]
    %v9611 = vld [vmem:[%s9576 + $0x88] sm:$0xf]
    %v9612 = vld [vmem:[%s9576 + $0x8c] sm:$0xf]
    %v9649 = vunpack.c.l.b16 %v9577
    %v9650 = vunpack.c.l.b16 %v9578
    %v9651 = vunpack.c.l.b16 %v9579
    %v9652 = vunpack.c.l.b16 %v9580
    %v9653 = vunpack.c.l.b16 %v9581
    %v9654 = vunpack.c.l.b16 %v9582
    %v9655 = vunpack.c.l.b16 %v9583
    %v9656 = vunpack.c.l.b16 %v9584
    %v9657 = vunpack.c.l.b16 %v9585
    %v9658 = vunpack.c.l.b16 %v9586
    %v9659 = vunpack.c.l.b16 %v9587
    %v9660 = vunpack.c.l.b16 %v9588
    %v9661 = vunpack.c.l.b16 %v9589
    %v9662 = vunpack.c.l.b16 %v9590
    %v9663 = vunpack.c.l.b16 %v9591
    %v9664 = vunpack.c.l.b16 %v9592
    %v9665 = vunpack.c.l.b16 %v9593
    %v9666 = vunpack.c.l.b16 %v9594
    %v9667 = vunpack.c.l.b16 %v9595
    %v9668 = vunpack.c.l.b16 %v9596
    %v9669 = vunpack.c.l.b16 %v9597
    %v9670 = vunpack.c.l.b16 %v9598
    %v9671 = vunpack.c.l.b16 %v9599
    %v9672 = vunpack.c.l.b16 %v9600
    %v9673 = vunpack.c.l.b16 %v9601
    %v9674 = vunpack.c.l.b16 %v9602
    %v9675 = vunpack.c.l.b16 %v9603
    %v9676 = vunpack.c.l.b16 %v9604
    %v9677 = vunpack.c.l.b16 %v9605
    %v9678 = vunpack.c.l.b16 %v9606
    %v9679 = vunpack.c.l.b16 %v9607
    %v9680 = vunpack.c.l.b16 %v9608
    %v9681 = vunpack.c.l.b16 %v9609
    %v9682 = vunpack.c.l.b16 %v9610
    %v9683 = vunpack.c.l.b16 %v9611
    %v9684 = vunpack.c.l.b16 %v9612
    %v9685 = vpack.c.b16 %v9650, %v9649
    %v9686 = vpack.c.b16 %v9652, %v9651
    %v9687 = vpack.c.b16 %v9654, %v9653
    %v9688 = vpack.c.b16 %v9656, %v9655
    %v9689 = vpack.c.b16 %v9658, %v9657
    %v9690 = vpack.c.b16 %v9660, %v9659
    %v9691 = vpack.c.b16 %v9662, %v9661
    %v9692 = vpack.c.b16 %v9664, %v9663
    %v9693 = vpack.c.b16 %v9666, %v9665
    %v9694 = vpack.c.b16 %v9668, %v9667
    %v9695 = vpack.c.b16 %v9670, %v9669
    %v9696 = vpack.c.b16 %v9672, %v9671
    %v9697 = vpack.c.b16 %v9674, %v9673
    %v9698 = vpack.c.b16 %v9676, %v9675
    %v9699 = vpack.c.b16 %v9678, %v9677
    %v9700 = vpack.c.b16 %v9680, %v9679
    %v9701 = vpack.c.b16 %v9682, %v9681
    %v9702 = vpack.c.b16 %v9684, %v9683
    %v9722 = vsel %vm6407, %v9575, 0
    %9724 = vmatpush.bf16.msra.mxu0 %v9692
    %9725 = vmatpush.bf16.msra.mxu0 %v9691
    %9726 = vmatpush.bf16.msra.mxu0 %v9690
    %9727 = vmatpush.bf16.msra.mxu0 %v9689
    %9728 = vmatpush.bf16.msra.mxu0 %v9688
    %9729 = vmatpush.bf16.msra.mxu0 %v9687
    %9730 = vmatpush.bf16.msra.mxu0 %v9686
    %9731 = vmatpush.bf16.msra.mxu0 %v9685
    %9732 = vmatmul.bf16.gmra.mxu0 %v9573
    %v9733 = vpop.f32.mrf.mxu0
    %v9734 = vadd.f32 0.0, %v9733
    %v9735 = vpop.f32.mrf.mxu0
    %9736 = vdwg.mxu0
    %9737 = vmatpush.bf16.msra.mxu0 %v9700
    %9738 = vmatpush.bf16.msra.mxu0 %v9699
    %9739 = vmatpush.bf16.msra.mxu0 %v9698
    %9740 = vmatpush.bf16.msra.mxu0 %v9697
    %9741 = vmatpush.bf16.msra.mxu0 %v9696
    %9742 = vmatpush.bf16.msra.mxu0 %v9695
    %9743 = vmatpush.bf16.msra.mxu0 %v9694
    %9744 = vmatpush.bf16.msra.mxu0 %v9693
    %9745 = vmatmul.bf16.gmra.mxu0 %v9574
    %v9746 = vpop.f32.mrf.mxu0
    %v9747 = vadd.f32 %v9734, %v9746
    %v9748 = vpop.f32.mrf.mxu0
    %9749 = vdwg.mxu0
    %9750 = vmatpush.bf16.msra.mxu0 0
    %9751 = vmatpush.bf16.msra.mxu0 0
    %9752 = vmatpush.bf16.msra.mxu0 0
    %9753 = vmatpush.bf16.msra.mxu0 0
    %9754 = vmatpush.bf16.msra.mxu0 0
    %9755 = vmatpush.bf16.msra.mxu0 0
    %9756 = vmatpush.bf16.msra.mxu0 %v9702
    %9757 = vmatpush.bf16.msra.mxu0 %v9701
    %9758 = vmatmul.bf16.gmra.mxu0 %v9722
    %v9759 = vpop.f32.mrf.mxu0
    %v9760 = vadd.f32 %v9747, %v9759
    %v9761 = vpop.f32.mrf.mxu0
    %9762 = vdwg.mxu0
    %v9763 = vadd.f32 %v9311, %v9760
    %v9764 = vld [vmem:[#allocation2 + $0x48] sm:$0xff]
    %v9765 = vld [vmem:[#allocation2 + $0x50] sm:$0xff]
    %v9766 = vld [vmem:[#allocation2 + $0x58] sm:$0xff]
    %v9770 = vunpack.c.l.b16 %v9764
    %v9771 = vunpack.c.h.b16 %v9764
    %v9772 = vunpack.c.l.b16 %v9765
    %v9773 = vunpack.c.h.b16 %v9765
    %v9774 = vunpack.c.l.b16 %v9766
    %v9775 = vunpack.c.h.b16 %v9766
    %v9776 = vpack.c.b16 %v9770, %v9770
    %v9777 = vpack.c.b16 %v9771, %v9771
    %v9778 = vpack.c.b16 %v9772, %v9772
    %v9779 = vpack.c.b16 %v9773, %v9773
    %v9780 = vpack.c.b16 %v9774, %v9774
    %v9781 = vpack.c.b16 %v9775, %v9775
    %9788 = vmatpush.bf16.msra.mxu0 %v5455
    %9789 = vmatpush.bf16.msra.mxu0 %v5452
    %9790 = vmatpush.bf16.msra.mxu0 %v5449
    %9791 = vmatpush.bf16.msra.mxu0 %v5446
    %9792 = vmatpush.bf16.msra.mxu0 %v5443
    %9793 = vmatpush.bf16.msra.mxu0 %v5440
    %9794 = vmatpush.bf16.msra.mxu0 %v5437
    %9795 = vmatpush.bf16.msra.mxu0 %v5434
    %9796 = vmatmul.bf16.gmra.mxu0 %v9776
    %v9797 = vpop.f32.mrf.mxu0
    %v9798 = vadd.f32 %v4927, %v9797
    %v9799 = vpop.f32.mrf.mxu0
    %9800 = vdwg.mxu0
    %9801 = vmatpush.bf16.msra.mxu0 %v5479
    %9802 = vmatpush.bf16.msra.mxu0 %v5476
    %9803 = vmatpush.bf16.msra.mxu0 %v5473
    %9804 = vmatpush.bf16.msra.mxu0 %v5470
    %9805 = vmatpush.bf16.msra.mxu0 %v5467
    %9806 = vmatpush.bf16.msra.mxu0 %v5464
    %9807 = vmatpush.bf16.msra.mxu0 %v5461
    %9808 = vmatpush.bf16.msra.mxu0 %v5458
    %9809 = vmatmul.bf16.gmra.mxu0 %v9777
    %v9810 = vpop.f32.mrf.mxu0
    %v9811 = vadd.f32 %v9798, %v9810
    %v9812 = vpop.f32.mrf.mxu0
    %9813 = vdwg.mxu0
    %9814 = vmatpush.bf16.msra.mxu0 %v5503
    %9815 = vmatpush.bf16.msra.mxu0 %v5500
    %9816 = vmatpush.bf16.msra.mxu0 %v5497
    %9817 = vmatpush.bf16.msra.mxu0 %v5494
    %9818 = vmatpush.bf16.msra.mxu0 %v5491
    %9819 = vmatpush.bf16.msra.mxu0 %v5488
    %9820 = vmatpush.bf16.msra.mxu0 %v5485
    %9821 = vmatpush.bf16.msra.mxu0 %v5482
    %9822 = vmatmul.bf16.gmra.mxu0 %v9778
    %v9823 = vpop.f32.mrf.mxu0
    %v9824 = vadd.f32 %v9811, %v9823
    %v9825 = vpop.f32.mrf.mxu0
    %9826 = vdwg.mxu0
    %9827 = vmatpush.bf16.msra.mxu0 %v5527
    %9828 = vmatpush.bf16.msra.mxu0 %v5524
    %9829 = vmatpush.bf16.msra.mxu0 %v5521
    %9830 = vmatpush.bf16.msra.mxu0 %v5518
    %9831 = vmatpush.bf16.msra.mxu0 %v5515
    %9832 = vmatpush.bf16.msra.mxu0 %v5512
    %9833 = vmatpush.bf16.msra.mxu0 %v5509
    %9834 = vmatpush.bf16.msra.mxu0 %v5506
    %9835 = vmatmul.bf16.gmra.mxu0 %v9779
    %v9836 = vpop.f32.mrf.mxu0
    %v9837 = vadd.f32 %v9824, %v9836
    %v9838 = vpop.f32.mrf.mxu0
    %9839 = vdwg.mxu0
    %9840 = vmatpush.bf16.msra.mxu0 %v5551
    %9841 = vmatpush.bf16.msra.mxu0 %v5548
    %9842 = vmatpush.bf16.msra.mxu0 %v5545
    %9843 = vmatpush.bf16.msra.mxu0 %v5542
    %9844 = vmatpush.bf16.msra.mxu0 %v5539
    %9845 = vmatpush.bf16.msra.mxu0 %v5536
    %9846 = vmatpush.bf16.msra.mxu0 %v5533
    %9847 = vmatpush.bf16.msra.mxu0 %v5530
    %9848 = vmatmul.bf16.gmra.mxu0 %v9780
    %v9849 = vpop.f32.mrf.mxu0
    %v9850 = vadd.f32 %v9837, %v9849
    %v9851 = vpop.f32.mrf.mxu0
    %9852 = vdwg.mxu0
    %9853 = vmatpush.bf16.msra.mxu0 %v5575
    %9854 = vmatpush.bf16.msra.mxu0 %v5572
    %9855 = vmatpush.bf16.msra.mxu0 %v5569
    %9856 = vmatpush.bf16.msra.mxu0 %v5566
    %9857 = vmatpush.bf16.msra.mxu0 %v5563
    %9858 = vmatpush.bf16.msra.mxu0 %v5560
    %9859 = vmatpush.bf16.msra.mxu0 %v5557
    %9860 = vmatpush.bf16.msra.mxu0 %v5554
    %9861 = vmatmul.bf16.gmra.mxu0 %v9781
    %v9862 = vpop.f32.mrf.mxu0
    %v9863 = vadd.f32 %v9850, %v9862
    %v9864 = vpop.f32.mrf.mxu0
    %9865 = vdwg.mxu0
    %9866 = vmatpush.bf16.msra.mxu0 %v5456
    %9867 = vmatpush.bf16.msra.mxu0 %v5453
    %9868 = vmatpush.bf16.msra.mxu0 %v5450
    %9869 = vmatpush.bf16.msra.mxu0 %v5447
    %9870 = vmatpush.bf16.msra.mxu0 %v5444
    %9871 = vmatpush.bf16.msra.mxu0 %v5441
    %9872 = vmatpush.bf16.msra.mxu0 %v5438
    %9873 = vmatpush.bf16.msra.mxu0 %v5435
    %9874 = vmatmul.bf16.gmra.mxu0 %v9776
    %v9875 = vpop.f32.mrf.mxu0
    %v9876 = vadd.f32 %v4928, %v9875
    %v9877 = vpop.f32.mrf.mxu0
    %9878 = vdwg.mxu0
    %9879 = vmatpush.bf16.msra.mxu0 %v5480
    %9880 = vmatpush.bf16.msra.mxu0 %v5477
    %9881 = vmatpush.bf16.msra.mxu0 %v5474
    %9882 = vmatpush.bf16.msra.mxu0 %v5471
    %9883 = vmatpush.bf16.msra.mxu0 %v5468
    %9884 = vmatpush.bf16.msra.mxu0 %v5465
    %9885 = vmatpush.bf16.msra.mxu0 %v5462
    %9886 = vmatpush.bf16.msra.mxu0 %v5459
    %9887 = vmatmul.bf16.gmra.mxu0 %v9777
    %v9888 = vpop.f32.mrf.mxu0
    %v9889 = vadd.f32 %v9876, %v9888
    %v9890 = vpop.f32.mrf.mxu0
    %9891 = vdwg.mxu0
    %9892 = vmatpush.bf16.msra.mxu0 %v5504
    %9893 = vmatpush.bf16.msra.mxu0 %v5501
    %9894 = vmatpush.bf16.msra.mxu0 %v5498
    %9895 = vmatpush.bf16.msra.mxu0 %v5495
    %9896 = vmatpush.bf16.msra.mxu0 %v5492
    %9897 = vmatpush.bf16.msra.mxu0 %v5489
    %9898 = vmatpush.bf16.msra.mxu0 %v5486
    %9899 = vmatpush.bf16.msra.mxu0 %v5483
    %9900 = vmatmul.bf16.gmra.mxu0 %v9778
    %v9901 = vpop.f32.mrf.mxu0
    %v9902 = vadd.f32 %v9889, %v9901
    %v9903 = vpop.f32.mrf.mxu0
    %9904 = vdwg.mxu0
    %9905 = vmatpush.bf16.msra.mxu0 %v5528
    %9906 = vmatpush.bf16.msra.mxu0 %v5525
    %9907 = vmatpush.bf16.msra.mxu0 %v5522
    %9908 = vmatpush.bf16.msra.mxu0 %v5519
    %9909 = vmatpush.bf16.msra.mxu0 %v5516
    %9910 = vmatpush.bf16.msra.mxu0 %v5513
    %9911 = vmatpush.bf16.msra.mxu0 %v5510
    %9912 = vmatpush.bf16.msra.mxu0 %v5507
    %9913 = vmatmul.bf16.gmra.mxu0 %v9779
    %v9914 = vpop.f32.mrf.mxu0
    %v9915 = vadd.f32 %v9902, %v9914
    %v9916 = vpop.f32.mrf.mxu0
    %9917 = vdwg.mxu0
    %9918 = vmatpush.bf16.msra.mxu0 %v5552
    %9919 = vmatpush.bf16.msra.mxu0 %v5549
    %9920 = vmatpush.bf16.msra.mxu0 %v5546
    %9921 = vmatpush.bf16.msra.mxu0 %v5543
    %9922 = vmatpush.bf16.msra.mxu0 %v5540
    %9923 = vmatpush.bf16.msra.mxu0 %v5537
    %9924 = vmatpush.bf16.msra.mxu0 %v5534
    %9925 = vmatpush.bf16.msra.mxu0 %v5531
    %9926 = vmatmul.bf16.gmra.mxu0 %v9780
    %v9927 = vpop.f32.mrf.mxu0
    %v9928 = vadd.f32 %v9915, %v9927
    %v9929 = vpop.f32.mrf.mxu0
    %9930 = vdwg.mxu0
    %9931 = vmatpush.bf16.msra.mxu0 %v5576
    %9932 = vmatpush.bf16.msra.mxu0 %v5573
    %9933 = vmatpush.bf16.msra.mxu0 %v5570
    %9934 = vmatpush.bf16.msra.mxu0 %v5567
    %9935 = vmatpush.bf16.msra.mxu0 %v5564
    %9936 = vmatpush.bf16.msra.mxu0 %v5561
    %9937 = vmatpush.bf16.msra.mxu0 %v5558
    %9938 = vmatpush.bf16.msra.mxu0 %v5555
    %9939 = vmatmul.bf16.gmra.mxu0 %v9781
    %v9940 = vpop.f32.mrf.mxu0
    %v9941 = vadd.f32 %v9928, %v9940
    %v9942 = vpop.f32.mrf.mxu0
    %9943 = vdwg.mxu0
    %9944 = vmatpush.bf16.msra.mxu0 %v5457
    %9945 = vmatpush.bf16.msra.mxu0 %v5454
    %9946 = vmatpush.bf16.msra.mxu0 %v5451
    %9947 = vmatpush.bf16.msra.mxu0 %v5448
    %9948 = vmatpush.bf16.msra.mxu0 %v5445
    %9949 = vmatpush.bf16.msra.mxu0 %v5442
    %9950 = vmatpush.bf16.msra.mxu0 %v5439
    %9951 = vmatpush.bf16.msra.mxu0 %v5436
    %9952 = vmatmul.bf16.gmra.mxu0 %v9776
    %v9953 = vpop.f32.mrf.mxu0
    %v9954 = vadd.f32 %v4929, %v9953
    %v9955 = vpop.f32.mrf.mxu0
    %9956 = vdwg.mxu0
    %9957 = vmatpush.bf16.msra.mxu0 %v5481
    %9958 = vmatpush.bf16.msra.mxu0 %v5478
    %9959 = vmatpush.bf16.msra.mxu0 %v5475
    %9960 = vmatpush.bf16.msra.mxu0 %v5472
    %9961 = vmatpush.bf16.msra.mxu0 %v5469
    %9962 = vmatpush.bf16.msra.mxu0 %v5466
    %9963 = vmatpush.bf16.msra.mxu0 %v5463
    %9964 = vmatpush.bf16.msra.mxu0 %v5460
    %9965 = vmatmul.bf16.gmra.mxu0 %v9777
    %v9966 = vpop.f32.mrf.mxu0
    %v9967 = vadd.f32 %v9954, %v9966
    %v9968 = vpop.f32.mrf.mxu0
    %9969 = vdwg.mxu0
    %9970 = vmatpush.bf16.msra.mxu0 %v5505
    %9971 = vmatpush.bf16.msra.mxu0 %v5502
    %9972 = vmatpush.bf16.msra.mxu0 %v5499
    %9973 = vmatpush.bf16.msra.mxu0 %v5496
    %9974 = vmatpush.bf16.msra.mxu0 %v5493
    %9975 = vmatpush.bf16.msra.mxu0 %v5490
    %9976 = vmatpush.bf16.msra.mxu0 %v5487
    %9977 = vmatpush.bf16.msra.mxu0 %v5484
    %9978 = vmatmul.bf16.gmra.mxu0 %v9778
    %v9979 = vpop.f32.mrf.mxu0
    %v9980 = vadd.f32 %v9967, %v9979
    %v9981 = vpop.f32.mrf.mxu0
    %9982 = vdwg.mxu0
    %9983 = vmatpush.bf16.msra.mxu0 %v5529
    %9984 = vmatpush.bf16.msra.mxu0 %v5526
    %9985 = vmatpush.bf16.msra.mxu0 %v5523
    %9986 = vmatpush.bf16.msra.mxu0 %v5520
    %9987 = vmatpush.bf16.msra.mxu0 %v5517
    %9988 = vmatpush.bf16.msra.mxu0 %v5514
    %9989 = vmatpush.bf16.msra.mxu0 %v5511
    %9990 = vmatpush.bf16.msra.mxu0 %v5508
    %9991 = vmatmul.bf16.gmra.mxu0 %v9779
    %v9992 = vpop.f32.mrf.mxu0
    %v9993 = vadd.f32 %v9980, %v9992
    %v9994 = vpop.f32.mrf.mxu0
    %9995 = vdwg.mxu0
    %9996 = vmatpush.bf16.msra.mxu0 %v5553
    %9997 = vmatpush.bf16.msra.mxu0 %v5550
    %9998 = vmatpush.bf16.msra.mxu0 %v5547
    %9999 = vmatpush.bf16.msra.mxu0 %v5544
    %10000 = vmatpush.bf16.msra.mxu0 %v5541
    %10001 = vmatpush.bf16.msra.mxu0 %v5538
    %10002 = vmatpush.bf16.msra.mxu0 %v5535
    %10003 = vmatpush.bf16.msra.mxu0 %v5532
    %10004 = vmatmul.bf16.gmra.mxu0 %v9780
    %v10005 = vpop.f32.mrf.mxu0
    %v10006 = vadd.f32 %v9993, %v10005
    %v10007 = vpop.f32.mrf.mxu0
    %10008 = vdwg.mxu0
    %10009 = vmatpush.bf16.msra.mxu0 %v5577
    %10010 = vmatpush.bf16.msra.mxu0 %v5574
    %10011 = vmatpush.bf16.msra.mxu0 %v5571
    %10012 = vmatpush.bf16.msra.mxu0 %v5568
    %10013 = vmatpush.bf16.msra.mxu0 %v5565
    %10014 = vmatpush.bf16.msra.mxu0 %v5562
    %10015 = vmatpush.bf16.msra.mxu0 %v5559
    %10016 = vmatpush.bf16.msra.mxu0 %v5556
    %10017 = vmatmul.bf16.gmra.mxu0 %v9781
    %v10018 = vpop.f32.mrf.mxu0
    %v10019 = vadd.f32 %v10006, %v10018
    %v10020 = vpop.f32.mrf.mxu0
    %10021 = vdwg.mxu0
    %v10022 = vmax.f32 %v9863, 0.0
    %v10023 = vmax.f32 %v9941, 0.0
    %v10024 = vmax.f32 %v10019, 0.0
    %v10025 = vpack.c.bf16 %v10022, %v10022
    %v10026 = vpack.c.bf16 %v10023, %v10023
    %v10027 = vpack.c.bf16 %v10024, %v10024
    %s10028 = scalar_lea.vmem %s7, 1296
    %v10029 = vld [vmem:[%s10028] sm:$0xf]
    %v10030 = vld [vmem:[%s10028 + $0x4] sm:$0xf]
    %v10031 = vld [vmem:[%s10028 + $0x8] sm:$0xf]
    %v10032 = vld [vmem:[%s10028 + $0xc] sm:$0xf]
    %v10033 = vld [vmem:[%s10028 + $0x10] sm:$0xf]
    %v10034 = vld [vmem:[%s10028 + $0x14] sm:$0xf]
    %v10035 = vld [vmem:[%s10028 + $0x18] sm:$0xf]
    %v10036 = vld [vmem:[%s10028 + $0x1c] sm:$0xf]
    %v10037 = vld [vmem:[%s10028 + $0x20] sm:$0xf]
    %v10038 = vld [vmem:[%s10028 + $0x24] sm:$0xf]
    %v10039 = vld [vmem:[%s10028 + $0x28] sm:$0xf]
    %v10040 = vld [vmem:[%s10028 + $0x2c] sm:$0xf]
    %v10041 = vld [vmem:[%s10028 + $0x30] sm:$0xf]
    %v10042 = vld [vmem:[%s10028 + $0x34] sm:$0xf]
    %v10043 = vld [vmem:[%s10028 + $0x38] sm:$0xf]
    %v10044 = vld [vmem:[%s10028 + $0x3c] sm:$0xf]
    %v10045 = vld [vmem:[%s10028 + $0x40] sm:$0xf]
    %v10046 = vld [vmem:[%s10028 + $0x44] sm:$0xf]
    %v10047 = vld [vmem:[%s10028 + $0x48] sm:$0xf]
    %v10048 = vld [vmem:[%s10028 + $0x4c] sm:$0xf]
    %v10049 = vld [vmem:[%s10028 + $0x50] sm:$0xf]
    %v10050 = vld [vmem:[%s10028 + $0x54] sm:$0xf]
    %v10051 = vld [vmem:[%s10028 + $0x58] sm:$0xf]
    %v10052 = vld [vmem:[%s10028 + $0x5c] sm:$0xf]
    %v10053 = vld [vmem:[%s10028 + $0x60] sm:$0xf]
    %v10054 = vld [vmem:[%s10028 + $0x64] sm:$0xf]
    %v10055 = vld [vmem:[%s10028 + $0x68] sm:$0xf]
    %v10056 = vld [vmem:[%s10028 + $0x6c] sm:$0xf]
    %v10057 = vld [vmem:[%s10028 + $0x70] sm:$0xf]
    %v10058 = vld [vmem:[%s10028 + $0x74] sm:$0xf]
    %v10059 = vld [vmem:[%s10028 + $0x78] sm:$0xf]
    %v10060 = vld [vmem:[%s10028 + $0x7c] sm:$0xf]
    %v10061 = vld [vmem:[%s10028 + $0x80] sm:$0xf]
    %v10062 = vld [vmem:[%s10028 + $0x84] sm:$0xf]
    %v10063 = vld [vmem:[%s10028 + $0x88] sm:$0xf]
    %v10064 = vld [vmem:[%s10028 + $0x8c] sm:$0xf]
    %v10101 = vunpack.c.l.b16 %v10029
    %v10102 = vunpack.c.l.b16 %v10030
    %v10103 = vunpack.c.l.b16 %v10031
    %v10104 = vunpack.c.l.b16 %v10032
    %v10105 = vunpack.c.l.b16 %v10033
    %v10106 = vunpack.c.l.b16 %v10034
    %v10107 = vunpack.c.l.b16 %v10035
    %v10108 = vunpack.c.l.b16 %v10036
    %v10109 = vunpack.c.l.b16 %v10037
    %v10110 = vunpack.c.l.b16 %v10038
    %v10111 = vunpack.c.l.b16 %v10039
    %v10112 = vunpack.c.l.b16 %v10040
    %v10113 = vunpack.c.l.b16 %v10041
    %v10114 = vunpack.c.l.b16 %v10042
    %v10115 = vunpack.c.l.b16 %v10043
    %v10116 = vunpack.c.l.b16 %v10044
    %v10117 = vunpack.c.l.b16 %v10045
    %v10118 = vunpack.c.l.b16 %v10046
    %v10119 = vunpack.c.l.b16 %v10047
    %v10120 = vunpack.c.l.b16 %v10048
    %v10121 = vunpack.c.l.b16 %v10049
    %v10122 = vunpack.c.l.b16 %v10050
    %v10123 = vunpack.c.l.b16 %v10051
    %v10124 = vunpack.c.l.b16 %v10052
    %v10125 = vunpack.c.l.b16 %v10053
    %v10126 = vunpack.c.l.b16 %v10054
    %v10127 = vunpack.c.l.b16 %v10055
    %v10128 = vunpack.c.l.b16 %v10056
    %v10129 = vunpack.c.l.b16 %v10057
    %v10130 = vunpack.c.l.b16 %v10058
    %v10131 = vunpack.c.l.b16 %v10059
    %v10132 = vunpack.c.l.b16 %v10060
    %v10133 = vunpack.c.l.b16 %v10061
    %v10134 = vunpack.c.l.b16 %v10062
    %v10135 = vunpack.c.l.b16 %v10063
    %v10136 = vunpack.c.l.b16 %v10064
    %v10137 = vpack.c.b16 %v10102, %v10101
    %v10138 = vpack.c.b16 %v10104, %v10103
    %v10139 = vpack.c.b16 %v10106, %v10105
    %v10140 = vpack.c.b16 %v10108, %v10107
    %v10141 = vpack.c.b16 %v10110, %v10109
    %v10142 = vpack.c.b16 %v10112, %v10111
    %v10143 = vpack.c.b16 %v10114, %v10113
    %v10144 = vpack.c.b16 %v10116, %v10115
    %v10145 = vpack.c.b16 %v10118, %v10117
    %v10146 = vpack.c.b16 %v10120, %v10119
    %v10147 = vpack.c.b16 %v10122, %v10121
    %v10148 = vpack.c.b16 %v10124, %v10123
    %v10149 = vpack.c.b16 %v10126, %v10125
    %v10150 = vpack.c.b16 %v10128, %v10127
    %v10151 = vpack.c.b16 %v10130, %v10129
    %v10152 = vpack.c.b16 %v10132, %v10131
    %v10153 = vpack.c.b16 %v10134, %v10133
    %v10154 = vpack.c.b16 %v10136, %v10135
    %v10174 = vsel %vm6407, %v10027, 0
    %10176 = vmatpush.bf16.msra.mxu0 %v10144
    %10177 = vmatpush.bf16.msra.mxu0 %v10143
    %10178 = vmatpush.bf16.msra.mxu0 %v10142
    %10179 = vmatpush.bf16.msra.mxu0 %v10141
    %10180 = vmatpush.bf16.msra.mxu0 %v10140
    %10181 = vmatpush.bf16.msra.mxu0 %v10139
    %10182 = vmatpush.bf16.msra.mxu0 %v10138
    %10183 = vmatpush.bf16.msra.mxu0 %v10137
    %10184 = vmatmul.bf16.gmra.mxu0 %v10025
    %v10185 = vpop.f32.mrf.mxu0
    %v10186 = vadd.f32 0.0, %v10185
    %v10187 = vpop.f32.mrf.mxu0
    %10188 = vdwg.mxu0
    %10189 = vmatpush.bf16.msra.mxu0 %v10152
    %10190 = vmatpush.bf16.msra.mxu0 %v10151
    %10191 = vmatpush.bf16.msra.mxu0 %v10150
    %10192 = vmatpush.bf16.msra.mxu0 %v10149
    %10193 = vmatpush.bf16.msra.mxu0 %v10148
    %10194 = vmatpush.bf16.msra.mxu0 %v10147
    %10195 = vmatpush.bf16.msra.mxu0 %v10146
    %10196 = vmatpush.bf16.msra.mxu0 %v10145
    %10197 = vmatmul.bf16.gmra.mxu0 %v10026
    %v10198 = vpop.f32.mrf.mxu0
    %v10199 = vadd.f32 %v10186, %v10198
    %v10200 = vpop.f32.mrf.mxu0
    %10201 = vdwg.mxu0
    %10202 = vmatpush.bf16.msra.mxu0 0
    %10203 = vmatpush.bf16.msra.mxu0 0
    %10204 = vmatpush.bf16.msra.mxu0 0
    %10205 = vmatpush.bf16.msra.mxu0 0
    %10206 = vmatpush.bf16.msra.mxu0 0
    %10207 = vmatpush.bf16.msra.mxu0 0
    %10208 = vmatpush.bf16.msra.mxu0 %v10154
    %10209 = vmatpush.bf16.msra.mxu0 %v10153
    %10210 = vmatmul.bf16.gmra.mxu0 %v10174
    %v10211 = vpop.f32.mrf.mxu0
    %v10212 = vadd.f32 %v10199, %v10211
    %v10213 = vpop.f32.mrf.mxu0
    %10214 = vdwg.mxu0
    %v10215 = vadd.f32 %v9763, %v10212
    %v10216 = vld [vmem:[#allocation2 + $0x50] sm:$0xff]
    %v10217 = vld [vmem:[#allocation2 + $0x58] sm:$0xff]
    %v10218 = vld [vmem:[#allocation2 + $0x60] sm:$0xff]
    %v10222 = vunpack.c.l.b16 %v10216
    %v10223 = vunpack.c.h.b16 %v10216
    %v10224 = vunpack.c.l.b16 %v10217
    %v10225 = vunpack.c.h.b16 %v10217
    %v10226 = vunpack.c.l.b16 %v10218
    %v10227 = vunpack.c.h.b16 %v10218
    %v10228 = vpack.c.b16 %v10222, %v10222
    %v10229 = vpack.c.b16 %v10223, %v10223
    %v10230 = vpack.c.b16 %v10224, %v10224
    %v10231 = vpack.c.b16 %v10225, %v10225
    %v10232 = vpack.c.b16 %v10226, %v10226
    %v10233 = vpack.c.b16 %v10227, %v10227
    %10240 = vmatpush.bf16.msra.mxu0 %v5455
    %10241 = vmatpush.bf16.msra.mxu0 %v5452
    %10242 = vmatpush.bf16.msra.mxu0 %v5449
    %10243 = vmatpush.bf16.msra.mxu0 %v5446
    %10244 = vmatpush.bf16.msra.mxu0 %v5443
    %10245 = vmatpush.bf16.msra.mxu0 %v5440
    %10246 = vmatpush.bf16.msra.mxu0 %v5437
    %10247 = vmatpush.bf16.msra.mxu0 %v5434
    %10248 = vmatmul.bf16.gmra.mxu0 %v10228
    %v10249 = vpop.f32.mrf.mxu0
    %v10250 = vadd.f32 %v4927, %v10249
    %v10251 = vpop.f32.mrf.mxu0
    %10252 = vdwg.mxu0
    %10253 = vmatpush.bf16.msra.mxu0 %v5479
    %10254 = vmatpush.bf16.msra.mxu0 %v5476
    %10255 = vmatpush.bf16.msra.mxu0 %v5473
    %10256 = vmatpush.bf16.msra.mxu0 %v5470
    %10257 = vmatpush.bf16.msra.mxu0 %v5467
    %10258 = vmatpush.bf16.msra.mxu0 %v5464
    %10259 = vmatpush.bf16.msra.mxu0 %v5461
    %10260 = vmatpush.bf16.msra.mxu0 %v5458
    %10261 = vmatmul.bf16.gmra.mxu0 %v10229
    %v10262 = vpop.f32.mrf.mxu0
    %v10263 = vadd.f32 %v10250, %v10262
    %v10264 = vpop.f32.mrf.mxu0
    %10265 = vdwg.mxu0
    %10266 = vmatpush.bf16.msra.mxu0 %v5503
    %10267 = vmatpush.bf16.msra.mxu0 %v5500
    %10268 = vmatpush.bf16.msra.mxu0 %v5497
    %10269 = vmatpush.bf16.msra.mxu0 %v5494
    %10270 = vmatpush.bf16.msra.mxu0 %v5491
    %10271 = vmatpush.bf16.msra.mxu0 %v5488
    %10272 = vmatpush.bf16.msra.mxu0 %v5485
    %10273 = vmatpush.bf16.msra.mxu0 %v5482
    %10274 = vmatmul.bf16.gmra.mxu0 %v10230
    %v10275 = vpop.f32.mrf.mxu0
    %v10276 = vadd.f32 %v10263, %v10275
    %v10277 = vpop.f32.mrf.mxu0
    %10278 = vdwg.mxu0
    %10279 = vmatpush.bf16.msra.mxu0 %v5527
    %10280 = vmatpush.bf16.msra.mxu0 %v5524
    %10281 = vmatpush.bf16.msra.mxu0 %v5521
    %10282 = vmatpush.bf16.msra.mxu0 %v5518
    %10283 = vmatpush.bf16.msra.mxu0 %v5515
    %10284 = vmatpush.bf16.msra.mxu0 %v5512
    %10285 = vmatpush.bf16.msra.mxu0 %v5509
    %10286 = vmatpush.bf16.msra.mxu0 %v5506
    %10287 = vmatmul.bf16.gmra.mxu0 %v10231
    %v10288 = vpop.f32.mrf.mxu0
    %v10289 = vadd.f32 %v10276, %v10288
    %v10290 = vpop.f32.mrf.mxu0
    %10291 = vdwg.mxu0
    %10292 = vmatpush.bf16.msra.mxu0 %v5551
    %10293 = vmatpush.bf16.msra.mxu0 %v5548
    %10294 = vmatpush.bf16.msra.mxu0 %v5545
    %10295 = vmatpush.bf16.msra.mxu0 %v5542
    %10296 = vmatpush.bf16.msra.mxu0 %v5539
    %10297 = vmatpush.bf16.msra.mxu0 %v5536
    %10298 = vmatpush.bf16.msra.mxu0 %v5533
    %10299 = vmatpush.bf16.msra.mxu0 %v5530
    %10300 = vmatmul.bf16.gmra.mxu0 %v10232
    %v10301 = vpop.f32.mrf.mxu0
    %v10302 = vadd.f32 %v10289, %v10301
    %v10303 = vpop.f32.mrf.mxu0
    %10304 = vdwg.mxu0
    %10305 = vmatpush.bf16.msra.mxu0 %v5575
    %10306 = vmatpush.bf16.msra.mxu0 %v5572
    %10307 = vmatpush.bf16.msra.mxu0 %v5569
    %10308 = vmatpush.bf16.msra.mxu0 %v5566
    %10309 = vmatpush.bf16.msra.mxu0 %v5563
    %10310 = vmatpush.bf16.msra.mxu0 %v5560
    %10311 = vmatpush.bf16.msra.mxu0 %v5557
    %10312 = vmatpush.bf16.msra.mxu0 %v5554
    %10313 = vmatmul.bf16.gmra.mxu0 %v10233
    %v10314 = vpop.f32.mrf.mxu0
    %v10315 = vadd.f32 %v10302, %v10314
    %v10316 = vpop.f32.mrf.mxu0
    %10317 = vdwg.mxu0
    %10318 = vmatpush.bf16.msra.mxu0 %v5456
    %10319 = vmatpush.bf16.msra.mxu0 %v5453
    %10320 = vmatpush.bf16.msra.mxu0 %v5450
    %10321 = vmatpush.bf16.msra.mxu0 %v5447
    %10322 = vmatpush.bf16.msra.mxu0 %v5444
    %10323 = vmatpush.bf16.msra.mxu0 %v5441
    %10324 = vmatpush.bf16.msra.mxu0 %v5438
    %10325 = vmatpush.bf16.msra.mxu0 %v5435
    %10326 = vmatmul.bf16.gmra.mxu0 %v10228
    %v10327 = vpop.f32.mrf.mxu0
    %v10328 = vadd.f32 %v4928, %v10327
    %v10329 = vpop.f32.mrf.mxu0
    %10330 = vdwg.mxu0
    %10331 = vmatpush.bf16.msra.mxu0 %v5480
    %10332 = vmatpush.bf16.msra.mxu0 %v5477
    %10333 = vmatpush.bf16.msra.mxu0 %v5474
    %10334 = vmatpush.bf16.msra.mxu0 %v5471
    %10335 = vmatpush.bf16.msra.mxu0 %v5468
    %10336 = vmatpush.bf16.msra.mxu0 %v5465
    %10337 = vmatpush.bf16.msra.mxu0 %v5462
    %10338 = vmatpush.bf16.msra.mxu0 %v5459
    %10339 = vmatmul.bf16.gmra.mxu0 %v10229
    %v10340 = vpop.f32.mrf.mxu0
    %v10341 = vadd.f32 %v10328, %v10340
    %v10342 = vpop.f32.mrf.mxu0
    %10343 = vdwg.mxu0
    %10344 = vmatpush.bf16.msra.mxu0 %v5504
    %10345 = vmatpush.bf16.msra.mxu0 %v5501
    %10346 = vmatpush.bf16.msra.mxu0 %v5498
    %10347 = vmatpush.bf16.msra.mxu0 %v5495
    %10348 = vmatpush.bf16.msra.mxu0 %v5492
    %10349 = vmatpush.bf16.msra.mxu0 %v5489
    %10350 = vmatpush.bf16.msra.mxu0 %v5486
    %10351 = vmatpush.bf16.msra.mxu0 %v5483
    %10352 = vmatmul.bf16.gmra.mxu0 %v10230
    %v10353 = vpop.f32.mrf.mxu0
    %v10354 = vadd.f32 %v10341, %v10353
    %v10355 = vpop.f32.mrf.mxu0
    %10356 = vdwg.mxu0
    %10357 = vmatpush.bf16.msra.mxu0 %v5528
    %10358 = vmatpush.bf16.msra.mxu0 %v5525
    %10359 = vmatpush.bf16.msra.mxu0 %v5522
    %10360 = vmatpush.bf16.msra.mxu0 %v5519
    %10361 = vmatpush.bf16.msra.mxu0 %v5516
    %10362 = vmatpush.bf16.msra.mxu0 %v5513
    %10363 = vmatpush.bf16.msra.mxu0 %v5510
    %10364 = vmatpush.bf16.msra.mxu0 %v5507
    %10365 = vmatmul.bf16.gmra.mxu0 %v10231
    %v10366 = vpop.f32.mrf.mxu0
    %v10367 = vadd.f32 %v10354, %v10366
    %v10368 = vpop.f32.mrf.mxu0
    %10369 = vdwg.mxu0
    %10370 = vmatpush.bf16.msra.mxu0 %v5552
    %10371 = vmatpush.bf16.msra.mxu0 %v5549
    %10372 = vmatpush.bf16.msra.mxu0 %v5546
    %10373 = vmatpush.bf16.msra.mxu0 %v5543
    %10374 = vmatpush.bf16.msra.mxu0 %v5540
    %10375 = vmatpush.bf16.msra.mxu0 %v5537
    %10376 = vmatpush.bf16.msra.mxu0 %v5534
    %10377 = vmatpush.bf16.msra.mxu0 %v5531
    %10378 = vmatmul.bf16.gmra.mxu0 %v10232
    %v10379 = vpop.f32.mrf.mxu0
    %v10380 = vadd.f32 %v10367, %v10379
    %v10381 = vpop.f32.mrf.mxu0
    %10382 = vdwg.mxu0
    %10383 = vmatpush.bf16.msra.mxu0 %v5576
    %10384 = vmatpush.bf16.msra.mxu0 %v5573
    %10385 = vmatpush.bf16.msra.mxu0 %v5570
    %10386 = vmatpush.bf16.msra.mxu0 %v5567
    %10387 = vmatpush.bf16.msra.mxu0 %v5564
    %10388 = vmatpush.bf16.msra.mxu0 %v5561
    %10389 = vmatpush.bf16.msra.mxu0 %v5558
    %10390 = vmatpush.bf16.msra.mxu0 %v5555
    %10391 = vmatmul.bf16.gmra.mxu0 %v10233
    %v10392 = vpop.f32.mrf.mxu0
    %v10393 = vadd.f32 %v10380, %v10392
    %v10394 = vpop.f32.mrf.mxu0
    %10395 = vdwg.mxu0
    %10396 = vmatpush.bf16.msra.mxu0 %v5457
    %10397 = vmatpush.bf16.msra.mxu0 %v5454
    %10398 = vmatpush.bf16.msra.mxu0 %v5451
    %10399 = vmatpush.bf16.msra.mxu0 %v5448
    %10400 = vmatpush.bf16.msra.mxu0 %v5445
    %10401 = vmatpush.bf16.msra.mxu0 %v5442
    %10402 = vmatpush.bf16.msra.mxu0 %v5439
    %10403 = vmatpush.bf16.msra.mxu0 %v5436
    %10404 = vmatmul.bf16.gmra.mxu0 %v10228
    %v10405 = vpop.f32.mrf.mxu0
    %v10406 = vadd.f32 %v4929, %v10405
    %v10407 = vpop.f32.mrf.mxu0
    %10408 = vdwg.mxu0
    %10409 = vmatpush.bf16.msra.mxu0 %v5481
    %10410 = vmatpush.bf16.msra.mxu0 %v5478
    %10411 = vmatpush.bf16.msra.mxu0 %v5475
    %10412 = vmatpush.bf16.msra.mxu0 %v5472
    %10413 = vmatpush.bf16.msra.mxu0 %v5469
    %10414 = vmatpush.bf16.msra.mxu0 %v5466
    %10415 = vmatpush.bf16.msra.mxu0 %v5463
    %10416 = vmatpush.bf16.msra.mxu0 %v5460
    %10417 = vmatmul.bf16.gmra.mxu0 %v10229
    %v10418 = vpop.f32.mrf.mxu0
    %v10419 = vadd.f32 %v10406, %v10418
    %v10420 = vpop.f32.mrf.mxu0
    %10421 = vdwg.mxu0
    %10422 = vmatpush.bf16.msra.mxu0 %v5505
    %10423 = vmatpush.bf16.msra.mxu0 %v5502
    %10424 = vmatpush.bf16.msra.mxu0 %v5499
    %10425 = vmatpush.bf16.msra.mxu0 %v5496
    %10426 = vmatpush.bf16.msra.mxu0 %v5493
    %10427 = vmatpush.bf16.msra.mxu0 %v5490
    %10428 = vmatpush.bf16.msra.mxu0 %v5487
    %10429 = vmatpush.bf16.msra.mxu0 %v5484
    %10430 = vmatmul.bf16.gmra.mxu0 %v10230
    %v10431 = vpop.f32.mrf.mxu0
    %v10432 = vadd.f32 %v10419, %v10431
    %v10433 = vpop.f32.mrf.mxu0
    %10434 = vdwg.mxu0
    %10435 = vmatpush.bf16.msra.mxu0 %v5529
    %10436 = vmatpush.bf16.msra.mxu0 %v5526
    %10437 = vmatpush.bf16.msra.mxu0 %v5523
    %10438 = vmatpush.bf16.msra.mxu0 %v5520
    %10439 = vmatpush.bf16.msra.mxu0 %v5517
    %10440 = vmatpush.bf16.msra.mxu0 %v5514
    %10441 = vmatpush.bf16.msra.mxu0 %v5511
    %10442 = vmatpush.bf16.msra.mxu0 %v5508
    %10443 = vmatmul.bf16.gmra.mxu0 %v10231
    %v10444 = vpop.f32.mrf.mxu0
    %v10445 = vadd.f32 %v10432, %v10444
    %v10446 = vpop.f32.mrf.mxu0
    %10447 = vdwg.mxu0
    %10448 = vmatpush.bf16.msra.mxu0 %v5553
    %10449 = vmatpush.bf16.msra.mxu0 %v5550
    %10450 = vmatpush.bf16.msra.mxu0 %v5547
    %10451 = vmatpush.bf16.msra.mxu0 %v5544
    %10452 = vmatpush.bf16.msra.mxu0 %v5541
    %10453 = vmatpush.bf16.msra.mxu0 %v5538
    %10454 = vmatpush.bf16.msra.mxu0 %v5535
    %10455 = vmatpush.bf16.msra.mxu0 %v5532
    %10456 = vmatmul.bf16.gmra.mxu0 %v10232
    %v10457 = vpop.f32.mrf.mxu0
    %v10458 = vadd.f32 %v10445, %v10457
    %v10459 = vpop.f32.mrf.mxu0
    %10460 = vdwg.mxu0
    %10461 = vmatpush.bf16.msra.mxu0 %v5577
    %10462 = vmatpush.bf16.msra.mxu0 %v5574
    %10463 = vmatpush.bf16.msra.mxu0 %v5571
    %10464 = vmatpush.bf16.msra.mxu0 %v5568
    %10465 = vmatpush.bf16.msra.mxu0 %v5565
    %10466 = vmatpush.bf16.msra.mxu0 %v5562
    %10467 = vmatpush.bf16.msra.mxu0 %v5559
    %10468 = vmatpush.bf16.msra.mxu0 %v5556
    %10469 = vmatmul.bf16.gmra.mxu0 %v10233
    %v10470 = vpop.f32.mrf.mxu0
    %v10471 = vadd.f32 %v10458, %v10470
    %v10472 = vpop.f32.mrf.mxu0
    %10473 = vdwg.mxu0
    %v10474 = vmax.f32 %v10315, 0.0
    %v10475 = vmax.f32 %v10393, 0.0
    %v10476 = vmax.f32 %v10471, 0.0
    %v10477 = vpack.c.bf16 %v10474, %v10474
    %v10478 = vpack.c.bf16 %v10475, %v10475
    %v10479 = vpack.c.bf16 %v10476, %v10476
    %s10480 = scalar_lea.vmem %s7, 1440
    %v10481 = vld [vmem:[%s10480] sm:$0xf]
    %v10482 = vld [vmem:[%s10480 + $0x4] sm:$0xf]
    %v10483 = vld [vmem:[%s10480 + $0x8] sm:$0xf]
    %v10484 = vld [vmem:[%s10480 + $0xc] sm:$0xf]
    %v10485 = vld [vmem:[%s10480 + $0x10] sm:$0xf]
    %v10486 = vld [vmem:[%s10480 + $0x14] sm:$0xf]
    %v10487 = vld [vmem:[%s10480 + $0x18] sm:$0xf]
    %v10488 = vld [vmem:[%s10480 + $0x1c] sm:$0xf]
    %v10489 = vld [vmem:[%s10480 + $0x20] sm:$0xf]
    %v10490 = vld [vmem:[%s10480 + $0x24] sm:$0xf]
    %v10491 = vld [vmem:[%s10480 + $0x28] sm:$0xf]
    %v10492 = vld [vmem:[%s10480 + $0x2c] sm:$0xf]
    %v10493 = vld [vmem:[%s10480 + $0x30] sm:$0xf]
    %v10494 = vld [vmem:[%s10480 + $0x34] sm:$0xf]
    %v10495 = vld [vmem:[%s10480 + $0x38] sm:$0xf]
    %v10496 = vld [vmem:[%s10480 + $0x3c] sm:$0xf]
    %v10497 = vld [vmem:[%s10480 + $0x40] sm:$0xf]
    %v10498 = vld [vmem:[%s10480 + $0x44] sm:$0xf]
    %v10499 = vld [vmem:[%s10480 + $0x48] sm:$0xf]
    %v10500 = vld [vmem:[%s10480 + $0x4c] sm:$0xf]
    %v10501 = vld [vmem:[%s10480 + $0x50] sm:$0xf]
    %v10502 = vld [vmem:[%s10480 + $0x54] sm:$0xf]
    %v10503 = vld [vmem:[%s10480 + $0x58] sm:$0xf]
    %v10504 = vld [vmem:[%s10480 + $0x5c] sm:$0xf]
    %v10505 = vld [vmem:[%s10480 + $0x60] sm:$0xf]
    %v10506 = vld [vmem:[%s10480 + $0x64] sm:$0xf]
    %v10507 = vld [vmem:[%s10480 + $0x68] sm:$0xf]
    %v10508 = vld [vmem:[%s10480 + $0x6c] sm:$0xf]
    %v10509 = vld [vmem:[%s10480 + $0x70] sm:$0xf]
    %v10510 = vld [vmem:[%s10480 + $0x74] sm:$0xf]
    %v10511 = vld [vmem:[%s10480 + $0x78] sm:$0xf]
    %v10512 = vld [vmem:[%s10480 + $0x7c] sm:$0xf]
    %v10513 = vld [vmem:[%s10480 + $0x80] sm:$0xf]
    %v10514 = vld [vmem:[%s10480 + $0x84] sm:$0xf]
    %v10515 = vld [vmem:[%s10480 + $0x88] sm:$0xf]
    %v10516 = vld [vmem:[%s10480 + $0x8c] sm:$0xf]
    %v10553 = vunpack.c.l.b16 %v10481
    %v10554 = vunpack.c.l.b16 %v10482
    %v10555 = vunpack.c.l.b16 %v10483
    %v10556 = vunpack.c.l.b16 %v10484
    %v10557 = vunpack.c.l.b16 %v10485
    %v10558 = vunpack.c.l.b16 %v10486
    %v10559 = vunpack.c.l.b16 %v10487
    %v10560 = vunpack.c.l.b16 %v10488
    %v10561 = vunpack.c.l.b16 %v10489
    %v10562 = vunpack.c.l.b16 %v10490
    %v10563 = vunpack.c.l.b16 %v10491
    %v10564 = vunpack.c.l.b16 %v10492
    %v10565 = vunpack.c.l.b16 %v10493
    %v10566 = vunpack.c.l.b16 %v10494
    %v10567 = vunpack.c.l.b16 %v10495
    %v10568 = vunpack.c.l.b16 %v10496
    %v10569 = vunpack.c.l.b16 %v10497
    %v10570 = vunpack.c.l.b16 %v10498
    %v10571 = vunpack.c.l.b16 %v10499
    %v10572 = vunpack.c.l.b16 %v10500
    %v10573 = vunpack.c.l.b16 %v10501
    %v10574 = vunpack.c.l.b16 %v10502
    %v10575 = vunpack.c.l.b16 %v10503
    %v10576 = vunpack.c.l.b16 %v10504
    %v10577 = vunpack.c.l.b16 %v10505
    %v10578 = vunpack.c.l.b16 %v10506
    %v10579 = vunpack.c.l.b16 %v10507
    %v10580 = vunpack.c.l.b16 %v10508
    %v10581 = vunpack.c.l.b16 %v10509
    %v10582 = vunpack.c.l.b16 %v10510
    %v10583 = vunpack.c.l.b16 %v10511
    %v10584 = vunpack.c.l.b16 %v10512
    %v10585 = vunpack.c.l.b16 %v10513
    %v10586 = vunpack.c.l.b16 %v10514
    %v10587 = vunpack.c.l.b16 %v10515
    %v10588 = vunpack.c.l.b16 %v10516
    %v10589 = vpack.c.b16 %v10554, %v10553
    %v10590 = vpack.c.b16 %v10556, %v10555
    %v10591 = vpack.c.b16 %v10558, %v10557
    %v10592 = vpack.c.b16 %v10560, %v10559
    %v10593 = vpack.c.b16 %v10562, %v10561
    %v10594 = vpack.c.b16 %v10564, %v10563
    %v10595 = vpack.c.b16 %v10566, %v10565
    %v10596 = vpack.c.b16 %v10568, %v10567
    %v10597 = vpack.c.b16 %v10570, %v10569
    %v10598 = vpack.c.b16 %v10572, %v10571
    %v10599 = vpack.c.b16 %v10574, %v10573
    %v10600 = vpack.c.b16 %v10576, %v10575
    %v10601 = vpack.c.b16 %v10578, %v10577
    %v10602 = vpack.c.b16 %v10580, %v10579
    %v10603 = vpack.c.b16 %v10582, %v10581
    %v10604 = vpack.c.b16 %v10584, %v10583
    %v10605 = vpack.c.b16 %v10586, %v10585
    %v10606 = vpack.c.b16 %v10588, %v10587
    %v10626 = vsel %vm6407, %v10479, 0
    %10628 = vmatpush.bf16.msra.mxu0 %v10596
    %10629 = vmatpush.bf16.msra.mxu0 %v10595
    %10630 = vmatpush.bf16.msra.mxu0 %v10594
    %10631 = vmatpush.bf16.msra.mxu0 %v10593
    %10632 = vmatpush.bf16.msra.mxu0 %v10592
    %10633 = vmatpush.bf16.msra.mxu0 %v10591
    %10634 = vmatpush.bf16.msra.mxu0 %v10590
    %10635 = vmatpush.bf16.msra.mxu0 %v10589
    %10636 = vmatmul.bf16.gmra.mxu0 %v10477
    %v10637 = vpop.f32.mrf.mxu0
    %v10638 = vadd.f32 0.0, %v10637
    %v10639 = vpop.f32.mrf.mxu0
    %10640 = vdwg.mxu0
    %10641 = vmatpush.bf16.msra.mxu0 %v10604
    %10642 = vmatpush.bf16.msra.mxu0 %v10603
    %10643 = vmatpush.bf16.msra.mxu0 %v10602
    %10644 = vmatpush.bf16.msra.mxu0 %v10601
    %10645 = vmatpush.bf16.msra.mxu0 %v10600
    %10646 = vmatpush.bf16.msra.mxu0 %v10599
    %10647 = vmatpush.bf16.msra.mxu0 %v10598
    %10648 = vmatpush.bf16.msra.mxu0 %v10597
    %10649 = vmatmul.bf16.gmra.mxu0 %v10478
    %v10650 = vpop.f32.mrf.mxu0
    %v10651 = vadd.f32 %v10638, %v10650
    %v10652 = vpop.f32.mrf.mxu0
    %10653 = vdwg.mxu0
    %10654 = vmatpush.bf16.msra.mxu0 0
    %10655 = vmatpush.bf16.msra.mxu0 0
    %10656 = vmatpush.bf16.msra.mxu0 0
    %10657 = vmatpush.bf16.msra.mxu0 0
    %10658 = vmatpush.bf16.msra.mxu0 0
    %10659 = vmatpush.bf16.msra.mxu0 0
    %10660 = vmatpush.bf16.msra.mxu0 %v10606
    %10661 = vmatpush.bf16.msra.mxu0 %v10605
    %10662 = vmatmul.bf16.gmra.mxu0 %v10626
    %v10663 = vpop.f32.mrf.mxu0
    %v10664 = vadd.f32 %v10651, %v10663
    %v10665 = vpop.f32.mrf.mxu0
    %10666 = vdwg.mxu0
    %v10667 = vadd.f32 %v10215, %v10664
    %v10668 = vld [vmem:[#allocation2 + $0x58] sm:$0xff]
    %v10669 = vld [vmem:[#allocation2 + $0x60] sm:$0xff]
    %v10670 = vld [vmem:[#allocation2 + $0x68] sm:$0xff]
    %v10674 = vunpack.c.l.b16 %v10668
    %v10675 = vunpack.c.h.b16 %v10668
    %v10676 = vunpack.c.l.b16 %v10669
    %v10677 = vunpack.c.h.b16 %v10669
    %v10678 = vunpack.c.l.b16 %v10670
    %v10679 = vunpack.c.h.b16 %v10670
    %v10680 = vpack.c.b16 %v10674, %v10674
    %v10681 = vpack.c.b16 %v10675, %v10675
    %v10682 = vpack.c.b16 %v10676, %v10676
    %v10683 = vpack.c.b16 %v10677, %v10677
    %v10684 = vpack.c.b16 %v10678, %v10678
    %v10685 = vpack.c.b16 %v10679, %v10679
    %10692 = vmatpush.bf16.msra.mxu0 %v5455
    %10693 = vmatpush.bf16.msra.mxu0 %v5452
    %10694 = vmatpush.bf16.msra.mxu0 %v5449
    %10695 = vmatpush.bf16.msra.mxu0 %v5446
    %10696 = vmatpush.bf16.msra.mxu0 %v5443
    %10697 = vmatpush.bf16.msra.mxu0 %v5440
    %10698 = vmatpush.bf16.msra.mxu0 %v5437
    %10699 = vmatpush.bf16.msra.mxu0 %v5434
    %10700 = vmatmul.bf16.gmra.mxu0 %v10680
    %v10701 = vpop.f32.mrf.mxu0
    %v10702 = vadd.f32 %v4927, %v10701
    %v10703 = vpop.f32.mrf.mxu0
    %10704 = vdwg.mxu0
    %10705 = vmatpush.bf16.msra.mxu0 %v5479
    %10706 = vmatpush.bf16.msra.mxu0 %v5476
    %10707 = vmatpush.bf16.msra.mxu0 %v5473
    %10708 = vmatpush.bf16.msra.mxu0 %v5470
    %10709 = vmatpush.bf16.msra.mxu0 %v5467
    %10710 = vmatpush.bf16.msra.mxu0 %v5464
    %10711 = vmatpush.bf16.msra.mxu0 %v5461
    %10712 = vmatpush.bf16.msra.mxu0 %v5458
    %10713 = vmatmul.bf16.gmra.mxu0 %v10681
    %v10714 = vpop.f32.mrf.mxu0
    %v10715 = vadd.f32 %v10702, %v10714
    %v10716 = vpop.f32.mrf.mxu0
    %10717 = vdwg.mxu0
    %10718 = vmatpush.bf16.msra.mxu0 %v5503
    %10719 = vmatpush.bf16.msra.mxu0 %v5500
    %10720 = vmatpush.bf16.msra.mxu0 %v5497
    %10721 = vmatpush.bf16.msra.mxu0 %v5494
    %10722 = vmatpush.bf16.msra.mxu0 %v5491
    %10723 = vmatpush.bf16.msra.mxu0 %v5488
    %10724 = vmatpush.bf16.msra.mxu0 %v5485
    %10725 = vmatpush.bf16.msra.mxu0 %v5482
    %10726 = vmatmul.bf16.gmra.mxu0 %v10682
    %v10727 = vpop.f32.mrf.mxu0
    %v10728 = vadd.f32 %v10715, %v10727
    %v10729 = vpop.f32.mrf.mxu0
    %10730 = vdwg.mxu0
    %10731 = vmatpush.bf16.msra.mxu0 %v5527
    %10732 = vmatpush.bf16.msra.mxu0 %v5524
    %10733 = vmatpush.bf16.msra.mxu0 %v5521
    %10734 = vmatpush.bf16.msra.mxu0 %v5518
    %10735 = vmatpush.bf16.msra.mxu0 %v5515
    %10736 = vmatpush.bf16.msra.mxu0 %v5512
    %10737 = vmatpush.bf16.msra.mxu0 %v5509
    %10738 = vmatpush.bf16.msra.mxu0 %v5506
    %10739 = vmatmul.bf16.gmra.mxu0 %v10683
    %v10740 = vpop.f32.mrf.mxu0
    %v10741 = vadd.f32 %v10728, %v10740
    %v10742 = vpop.f32.mrf.mxu0
    %10743 = vdwg.mxu0
    %10744 = vmatpush.bf16.msra.mxu0 %v5551
    %10745 = vmatpush.bf16.msra.mxu0 %v5548
    %10746 = vmatpush.bf16.msra.mxu0 %v5545
    %10747 = vmatpush.bf16.msra.mxu0 %v5542
    %10748 = vmatpush.bf16.msra.mxu0 %v5539
    %10749 = vmatpush.bf16.msra.mxu0 %v5536
    %10750 = vmatpush.bf16.msra.mxu0 %v5533
    %10751 = vmatpush.bf16.msra.mxu0 %v5530
    %10752 = vmatmul.bf16.gmra.mxu0 %v10684
    %v10753 = vpop.f32.mrf.mxu0
    %v10754 = vadd.f32 %v10741, %v10753
    %v10755 = vpop.f32.mrf.mxu0
    %10756 = vdwg.mxu0
    %10757 = vmatpush.bf16.msra.mxu0 %v5575
    %10758 = vmatpush.bf16.msra.mxu0 %v5572
    %10759 = vmatpush.bf16.msra.mxu0 %v5569
    %10760 = vmatpush.bf16.msra.mxu0 %v5566
    %10761 = vmatpush.bf16.msra.mxu0 %v5563
    %10762 = vmatpush.bf16.msra.mxu0 %v5560
    %10763 = vmatpush.bf16.msra.mxu0 %v5557
    %10764 = vmatpush.bf16.msra.mxu0 %v5554
    %10765 = vmatmul.bf16.gmra.mxu0 %v10685
    %v10766 = vpop.f32.mrf.mxu0
    %v10767 = vadd.f32 %v10754, %v10766
    %v10768 = vpop.f32.mrf.mxu0
    %10769 = vdwg.mxu0
    %10770 = vmatpush.bf16.msra.mxu0 %v5456
    %10771 = vmatpush.bf16.msra.mxu0 %v5453
    %10772 = vmatpush.bf16.msra.mxu0 %v5450
    %10773 = vmatpush.bf16.msra.mxu0 %v5447
    %10774 = vmatpush.bf16.msra.mxu0 %v5444
    %10775 = vmatpush.bf16.msra.mxu0 %v5441
    %10776 = vmatpush.bf16.msra.mxu0 %v5438
    %10777 = vmatpush.bf16.msra.mxu0 %v5435
    %10778 = vmatmul.bf16.gmra.mxu0 %v10680
    %v10779 = vpop.f32.mrf.mxu0
    %v10780 = vadd.f32 %v4928, %v10779
    %v10781 = vpop.f32.mrf.mxu0
    %10782 = vdwg.mxu0
    %10783 = vmatpush.bf16.msra.mxu0 %v5480
    %10784 = vmatpush.bf16.msra.mxu0 %v5477
    %10785 = vmatpush.bf16.msra.mxu0 %v5474
    %10786 = vmatpush.bf16.msra.mxu0 %v5471
    %10787 = vmatpush.bf16.msra.mxu0 %v5468
    %10788 = vmatpush.bf16.msra.mxu0 %v5465
    %10789 = vmatpush.bf16.msra.mxu0 %v5462
    %10790 = vmatpush.bf16.msra.mxu0 %v5459
    %10791 = vmatmul.bf16.gmra.mxu0 %v10681
    %v10792 = vpop.f32.mrf.mxu0
    %v10793 = vadd.f32 %v10780, %v10792
    %v10794 = vpop.f32.mrf.mxu0
    %10795 = vdwg.mxu0
    %10796 = vmatpush.bf16.msra.mxu0 %v5504
    %10797 = vmatpush.bf16.msra.mxu0 %v5501
    %10798 = vmatpush.bf16.msra.mxu0 %v5498
    %10799 = vmatpush.bf16.msra.mxu0 %v5495
    %10800 = vmatpush.bf16.msra.mxu0 %v5492
    %10801 = vmatpush.bf16.msra.mxu0 %v5489
    %10802 = vmatpush.bf16.msra.mxu0 %v5486
    %10803 = vmatpush.bf16.msra.mxu0 %v5483
    %10804 = vmatmul.bf16.gmra.mxu0 %v10682
    %v10805 = vpop.f32.mrf.mxu0
    %v10806 = vadd.f32 %v10793, %v10805
    %v10807 = vpop.f32.mrf.mxu0
    %10808 = vdwg.mxu0
    %10809 = vmatpush.bf16.msra.mxu0 %v5528
    %10810 = vmatpush.bf16.msra.mxu0 %v5525
    %10811 = vmatpush.bf16.msra.mxu0 %v5522
    %10812 = vmatpush.bf16.msra.mxu0 %v5519
    %10813 = vmatpush.bf16.msra.mxu0 %v5516
    %10814 = vmatpush.bf16.msra.mxu0 %v5513
    %10815 = vmatpush.bf16.msra.mxu0 %v5510
    %10816 = vmatpush.bf16.msra.mxu0 %v5507
    %10817 = vmatmul.bf16.gmra.mxu0 %v10683
    %v10818 = vpop.f32.mrf.mxu0
    %v10819 = vadd.f32 %v10806, %v10818
    %v10820 = vpop.f32.mrf.mxu0
    %10821 = vdwg.mxu0
    %10822 = vmatpush.bf16.msra.mxu0 %v5552
    %10823 = vmatpush.bf16.msra.mxu0 %v5549
    %10824 = vmatpush.bf16.msra.mxu0 %v5546
    %10825 = vmatpush.bf16.msra.mxu0 %v5543
    %10826 = vmatpush.bf16.msra.mxu0 %v5540
    %10827 = vmatpush.bf16.msra.mxu0 %v5537
    %10828 = vmatpush.bf16.msra.mxu0 %v5534
    %10829 = vmatpush.bf16.msra.mxu0 %v5531
    %10830 = vmatmul.bf16.gmra.mxu0 %v10684
    %v10831 = vpop.f32.mrf.mxu0
    %v10832 = vadd.f32 %v10819, %v10831
    %v10833 = vpop.f32.mrf.mxu0
    %10834 = vdwg.mxu0
    %10835 = vmatpush.bf16.msra.mxu0 %v5576
    %10836 = vmatpush.bf16.msra.mxu0 %v5573
    %10837 = vmatpush.bf16.msra.mxu0 %v5570
    %10838 = vmatpush.bf16.msra.mxu0 %v5567
    %10839 = vmatpush.bf16.msra.mxu0 %v5564
    %10840 = vmatpush.bf16.msra.mxu0 %v5561
    %10841 = vmatpush.bf16.msra.mxu0 %v5558
    %10842 = vmatpush.bf16.msra.mxu0 %v5555
    %10843 = vmatmul.bf16.gmra.mxu0 %v10685
    %v10844 = vpop.f32.mrf.mxu0
    %v10845 = vadd.f32 %v10832, %v10844
    %v10846 = vpop.f32.mrf.mxu0
    %10847 = vdwg.mxu0
    %10848 = vmatpush.bf16.msra.mxu0 %v5457
    %10849 = vmatpush.bf16.msra.mxu0 %v5454
    %10850 = vmatpush.bf16.msra.mxu0 %v5451
    %10851 = vmatpush.bf16.msra.mxu0 %v5448
    %10852 = vmatpush.bf16.msra.mxu0 %v5445
    %10853 = vmatpush.bf16.msra.mxu0 %v5442
    %10854 = vmatpush.bf16.msra.mxu0 %v5439
    %10855 = vmatpush.bf16.msra.mxu0 %v5436
    %10856 = vmatmul.bf16.gmra.mxu0 %v10680
    %v10857 = vpop.f32.mrf.mxu0
    %v10858 = vadd.f32 %v4929, %v10857
    %v10859 = vpop.f32.mrf.mxu0
    %10860 = vdwg.mxu0
    %10861 = vmatpush.bf16.msra.mxu0 %v5481
    %10862 = vmatpush.bf16.msra.mxu0 %v5478
    %10863 = vmatpush.bf16.msra.mxu0 %v5475
    %10864 = vmatpush.bf16.msra.mxu0 %v5472
    %10865 = vmatpush.bf16.msra.mxu0 %v5469
    %10866 = vmatpush.bf16.msra.mxu0 %v5466
    %10867 = vmatpush.bf16.msra.mxu0 %v5463
    %10868 = vmatpush.bf16.msra.mxu0 %v5460
    %10869 = vmatmul.bf16.gmra.mxu0 %v10681
    %v10870 = vpop.f32.mrf.mxu0
    %v10871 = vadd.f32 %v10858, %v10870
    %v10872 = vpop.f32.mrf.mxu0
    %10873 = vdwg.mxu0
    %10874 = vmatpush.bf16.msra.mxu0 %v5505
    %10875 = vmatpush.bf16.msra.mxu0 %v5502
    %10876 = vmatpush.bf16.msra.mxu0 %v5499
    %10877 = vmatpush.bf16.msra.mxu0 %v5496
    %10878 = vmatpush.bf16.msra.mxu0 %v5493
    %10879 = vmatpush.bf16.msra.mxu0 %v5490
    %10880 = vmatpush.bf16.msra.mxu0 %v5487
    %10881 = vmatpush.bf16.msra.mxu0 %v5484
    %10882 = vmatmul.bf16.gmra.mxu0 %v10682
    %v10883 = vpop.f32.mrf.mxu0
    %v10884 = vadd.f32 %v10871, %v10883
    %v10885 = vpop.f32.mrf.mxu0
    %10886 = vdwg.mxu0
    %10887 = vmatpush.bf16.msra.mxu0 %v5529
    %10888 = vmatpush.bf16.msra.mxu0 %v5526
    %10889 = vmatpush.bf16.msra.mxu0 %v5523
    %10890 = vmatpush.bf16.msra.mxu0 %v5520
    %10891 = vmatpush.bf16.msra.mxu0 %v5517
    %10892 = vmatpush.bf16.msra.mxu0 %v5514
    %10893 = vmatpush.bf16.msra.mxu0 %v5511
    %10894 = vmatpush.bf16.msra.mxu0 %v5508
    %10895 = vmatmul.bf16.gmra.mxu0 %v10683
    %v10896 = vpop.f32.mrf.mxu0
    %v10897 = vadd.f32 %v10884, %v10896
    %v10898 = vpop.f32.mrf.mxu0
    %10899 = vdwg.mxu0
    %10900 = vmatpush.bf16.msra.mxu0 %v5553
    %10901 = vmatpush.bf16.msra.mxu0 %v5550
    %10902 = vmatpush.bf16.msra.mxu0 %v5547
    %10903 = vmatpush.bf16.msra.mxu0 %v5544
    %10904 = vmatpush.bf16.msra.mxu0 %v5541
    %10905 = vmatpush.bf16.msra.mxu0 %v5538
    %10906 = vmatpush.bf16.msra.mxu0 %v5535
    %10907 = vmatpush.bf16.msra.mxu0 %v5532
    %10908 = vmatmul.bf16.gmra.mxu0 %v10684
    %v10909 = vpop.f32.mrf.mxu0
    %v10910 = vadd.f32 %v10897, %v10909
    %v10911 = vpop.f32.mrf.mxu0
    %10912 = vdwg.mxu0
    %10913 = vmatpush.bf16.msra.mxu0 %v5577
    %10914 = vmatpush.bf16.msra.mxu0 %v5574
    %10915 = vmatpush.bf16.msra.mxu0 %v5571
    %10916 = vmatpush.bf16.msra.mxu0 %v5568
    %10917 = vmatpush.bf16.msra.mxu0 %v5565
    %10918 = vmatpush.bf16.msra.mxu0 %v5562
    %10919 = vmatpush.bf16.msra.mxu0 %v5559
    %10920 = vmatpush.bf16.msra.mxu0 %v5556
    %10921 = vmatmul.bf16.gmra.mxu0 %v10685
    %v10922 = vpop.f32.mrf.mxu0
    %v10923 = vadd.f32 %v10910, %v10922
    %v10924 = vpop.f32.mrf.mxu0
    %10925 = vdwg.mxu0
    %v10926 = vmax.f32 %v10767, 0.0
    %v10927 = vmax.f32 %v10845, 0.0
    %v10928 = vmax.f32 %v10923, 0.0
    %v10929 = vpack.c.bf16 %v10926, %v10926
    %v10930 = vpack.c.bf16 %v10927, %v10927
    %v10931 = vpack.c.bf16 %v10928, %v10928
    %s10932 = scalar_lea.vmem %s7, 1584
    %v10933 = vld [vmem:[%s10932] sm:$0xf]
    %v10934 = vld [vmem:[%s10932 + $0x4] sm:$0xf]
    %v10935 = vld [vmem:[%s10932 + $0x8] sm:$0xf]
    %v10936 = vld [vmem:[%s10932 + $0xc] sm:$0xf]
    %v10937 = vld [vmem:[%s10932 + $0x10] sm:$0xf]
    %v10938 = vld [vmem:[%s10932 + $0x14] sm:$0xf]
    %v10939 = vld [vmem:[%s10932 + $0x18] sm:$0xf]
    %v10940 = vld [vmem:[%s10932 + $0x1c] sm:$0xf]
    %v10941 = vld [vmem:[%s10932 + $0x20] sm:$0xf]
    %v10942 = vld [vmem:[%s10932 + $0x24] sm:$0xf]
    %v10943 = vld [vmem:[%s10932 + $0x28] sm:$0xf]
    %v10944 = vld [vmem:[%s10932 + $0x2c] sm:$0xf]
    %v10945 = vld [vmem:[%s10932 + $0x30] sm:$0xf]
    %v10946 = vld [vmem:[%s10932 + $0x34] sm:$0xf]
    %v10947 = vld [vmem:[%s10932 + $0x38] sm:$0xf]
    %v10948 = vld [vmem:[%s10932 + $0x3c] sm:$0xf]
    %v10949 = vld [vmem:[%s10932 + $0x40] sm:$0xf]
    %v10950 = vld [vmem:[%s10932 + $0x44] sm:$0xf]
    %v10951 = vld [vmem:[%s10932 + $0x48] sm:$0xf]
    %v10952 = vld [vmem:[%s10932 + $0x4c] sm:$0xf]
    %v10953 = vld [vmem:[%s10932 + $0x50] sm:$0xf]
    %v10954 = vld [vmem:[%s10932 + $0x54] sm:$0xf]
    %v10955 = vld [vmem:[%s10932 + $0x58] sm:$0xf]
    %v10956 = vld [vmem:[%s10932 + $0x5c] sm:$0xf]
    %v10957 = vld [vmem:[%s10932 + $0x60] sm:$0xf]
    %v10958 = vld [vmem:[%s10932 + $0x64] sm:$0xf]
    %v10959 = vld [vmem:[%s10932 + $0x68] sm:$0xf]
    %v10960 = vld [vmem:[%s10932 + $0x6c] sm:$0xf]
    %v10961 = vld [vmem:[%s10932 + $0x70] sm:$0xf]
    %v10962 = vld [vmem:[%s10932 + $0x74] sm:$0xf]
    %v10963 = vld [vmem:[%s10932 + $0x78] sm:$0xf]
    %v10964 = vld [vmem:[%s10932 + $0x7c] sm:$0xf]
    %v10965 = vld [vmem:[%s10932 + $0x80] sm:$0xf]
    %v10966 = vld [vmem:[%s10932 + $0x84] sm:$0xf]
    %v10967 = vld [vmem:[%s10932 + $0x88] sm:$0xf]
    %v10968 = vld [vmem:[%s10932 + $0x8c] sm:$0xf]
    %v11005 = vunpack.c.l.b16 %v10933
    %v11006 = vunpack.c.l.b16 %v10934
    %v11007 = vunpack.c.l.b16 %v10935
    %v11008 = vunpack.c.l.b16 %v10936
    %v11009 = vunpack.c.l.b16 %v10937
    %v11010 = vunpack.c.l.b16 %v10938
    %v11011 = vunpack.c.l.b16 %v10939
    %v11012 = vunpack.c.l.b16 %v10940
    %v11013 = vunpack.c.l.b16 %v10941
    %v11014 = vunpack.c.l.b16 %v10942
    %v11015 = vunpack.c.l.b16 %v10943
    %v11016 = vunpack.c.l.b16 %v10944
    %v11017 = vunpack.c.l.b16 %v10945
    %v11018 = vunpack.c.l.b16 %v10946
    %v11019 = vunpack.c.l.b16 %v10947
    %v11020 = vunpack.c.l.b16 %v10948
    %v11021 = vunpack.c.l.b16 %v10949
    %v11022 = vunpack.c.l.b16 %v10950
    %v11023 = vunpack.c.l.b16 %v10951
    %v11024 = vunpack.c.l.b16 %v10952
    %v11025 = vunpack.c.l.b16 %v10953
    %v11026 = vunpack.c.l.b16 %v10954
    %v11027 = vunpack.c.l.b16 %v10955
    %v11028 = vunpack.c.l.b16 %v10956
    %v11029 = vunpack.c.l.b16 %v10957
    %v11030 = vunpack.c.l.b16 %v10958
    %v11031 = vunpack.c.l.b16 %v10959
    %v11032 = vunpack.c.l.b16 %v10960
    %v11033 = vunpack.c.l.b16 %v10961
    %v11034 = vunpack.c.l.b16 %v10962
    %v11035 = vunpack.c.l.b16 %v10963
    %v11036 = vunpack.c.l.b16 %v10964
    %v11037 = vunpack.c.l.b16 %v10965
    %v11038 = vunpack.c.l.b16 %v10966
    %v11039 = vunpack.c.l.b16 %v10967
    %v11040 = vunpack.c.l.b16 %v10968
    %v11041 = vpack.c.b16 %v11006, %v11005
    %v11042 = vpack.c.b16 %v11008, %v11007
    %v11043 = vpack.c.b16 %v11010, %v11009
    %v11044 = vpack.c.b16 %v11012, %v11011
    %v11045 = vpack.c.b16 %v11014, %v11013
    %v11046 = vpack.c.b16 %v11016, %v11015
    %v11047 = vpack.c.b16 %v11018, %v11017
    %v11048 = vpack.c.b16 %v11020, %v11019
    %v11049 = vpack.c.b16 %v11022, %v11021
    %v11050 = vpack.c.b16 %v11024, %v11023
    %v11051 = vpack.c.b16 %v11026, %v11025
    %v11052 = vpack.c.b16 %v11028, %v11027
    %v11053 = vpack.c.b16 %v11030, %v11029
    %v11054 = vpack.c.b16 %v11032, %v11031
    %v11055 = vpack.c.b16 %v11034, %v11033
    %v11056 = vpack.c.b16 %v11036, %v11035
    %v11057 = vpack.c.b16 %v11038, %v11037
    %v11058 = vpack.c.b16 %v11040, %v11039
    %v11078 = vsel %vm6407, %v10931, 0
    %11080 = vmatpush.bf16.msra.mxu0 %v11048
    %11081 = vmatpush.bf16.msra.mxu0 %v11047
    %11082 = vmatpush.bf16.msra.mxu0 %v11046
    %11083 = vmatpush.bf16.msra.mxu0 %v11045
    %11084 = vmatpush.bf16.msra.mxu0 %v11044
    %11085 = vmatpush.bf16.msra.mxu0 %v11043
    %11086 = vmatpush.bf16.msra.mxu0 %v11042
    %11087 = vmatpush.bf16.msra.mxu0 %v11041
    %11088 = vmatmul.bf16.gmra.mxu0 %v10929
    %v11089 = vpop.f32.mrf.mxu0
    %v11090 = vadd.f32 0.0, %v11089
    %v11091 = vpop.f32.mrf.mxu0
    %11092 = vdwg.mxu0
    %11093 = vmatpush.bf16.msra.mxu0 %v11056
    %11094 = vmatpush.bf16.msra.mxu0 %v11055
    %11095 = vmatpush.bf16.msra.mxu0 %v11054
    %11096 = vmatpush.bf16.msra.mxu0 %v11053
    %11097 = vmatpush.bf16.msra.mxu0 %v11052
    %11098 = vmatpush.bf16.msra.mxu0 %v11051
    %11099 = vmatpush.bf16.msra.mxu0 %v11050
    %11100 = vmatpush.bf16.msra.mxu0 %v11049
    %11101 = vmatmul.bf16.gmra.mxu0 %v10930
    %v11102 = vpop.f32.mrf.mxu0
    %v11103 = vadd.f32 %v11090, %v11102
    %v11104 = vpop.f32.mrf.mxu0
    %11105 = vdwg.mxu0
    %11106 = vmatpush.bf16.msra.mxu0 0
    %11107 = vmatpush.bf16.msra.mxu0 0
    %11108 = vmatpush.bf16.msra.mxu0 0
    %11109 = vmatpush.bf16.msra.mxu0 0
    %11110 = vmatpush.bf16.msra.mxu0 0
    %11111 = vmatpush.bf16.msra.mxu0 0
    %11112 = vmatpush.bf16.msra.mxu0 %v11058
    %11113 = vmatpush.bf16.msra.mxu0 %v11057
    %11114 = vmatmul.bf16.gmra.mxu0 %v11078
    %v11115 = vpop.f32.mrf.mxu0
    %v11116 = vadd.f32 %v11103, %v11115
    %v11117 = vpop.f32.mrf.mxu0
    %11118 = vdwg.mxu0
    %v11119 = vadd.f32 %v10667, %v11116
    %v11120 = vld [vmem:[#allocation2 + $0x60] sm:$0xff]
    %v11121 = vld [vmem:[#allocation2 + $0x68] sm:$0xff]
    %v11122 = vld [vmem:[#allocation2 + $0x70] sm:$0xff]
    %v11126 = vunpack.c.l.b16 %v11120
    %v11127 = vunpack.c.h.b16 %v11120
    %v11128 = vunpack.c.l.b16 %v11121
    %v11129 = vunpack.c.h.b16 %v11121
    %v11130 = vunpack.c.l.b16 %v11122
    %v11131 = vunpack.c.h.b16 %v11122
    %v11132 = vpack.c.b16 %v11126, %v11126
    %v11133 = vpack.c.b16 %v11127, %v11127
    %v11134 = vpack.c.b16 %v11128, %v11128
    %v11135 = vpack.c.b16 %v11129, %v11129
    %v11136 = vpack.c.b16 %v11130, %v11130
    %v11137 = vpack.c.b16 %v11131, %v11131
    %11144 = vmatpush.bf16.msra.mxu0 %v5455
    %11145 = vmatpush.bf16.msra.mxu0 %v5452
    %11146 = vmatpush.bf16.msra.mxu0 %v5449
    %11147 = vmatpush.bf16.msra.mxu0 %v5446
    %11148 = vmatpush.bf16.msra.mxu0 %v5443
    %11149 = vmatpush.bf16.msra.mxu0 %v5440
    %11150 = vmatpush.bf16.msra.mxu0 %v5437
    %11151 = vmatpush.bf16.msra.mxu0 %v5434
    %11152 = vmatmul.bf16.gmra.mxu0 %v11132
    %v11153 = vpop.f32.mrf.mxu0
    %v11154 = vadd.f32 %v4927, %v11153
    %v11155 = vpop.f32.mrf.mxu0
    %11156 = vdwg.mxu0
    %11157 = vmatpush.bf16.msra.mxu0 %v5479
    %11158 = vmatpush.bf16.msra.mxu0 %v5476
    %11159 = vmatpush.bf16.msra.mxu0 %v5473
    %11160 = vmatpush.bf16.msra.mxu0 %v5470
    %11161 = vmatpush.bf16.msra.mxu0 %v5467
    %11162 = vmatpush.bf16.msra.mxu0 %v5464
    %11163 = vmatpush.bf16.msra.mxu0 %v5461
    %11164 = vmatpush.bf16.msra.mxu0 %v5458
    %11165 = vmatmul.bf16.gmra.mxu0 %v11133
    %v11166 = vpop.f32.mrf.mxu0
    %v11167 = vadd.f32 %v11154, %v11166
    %v11168 = vpop.f32.mrf.mxu0
    %11169 = vdwg.mxu0
    %11170 = vmatpush.bf16.msra.mxu0 %v5503
    %11171 = vmatpush.bf16.msra.mxu0 %v5500
    %11172 = vmatpush.bf16.msra.mxu0 %v5497
    %11173 = vmatpush.bf16.msra.mxu0 %v5494
    %11174 = vmatpush.bf16.msra.mxu0 %v5491
    %11175 = vmatpush.bf16.msra.mxu0 %v5488
    %11176 = vmatpush.bf16.msra.mxu0 %v5485
    %11177 = vmatpush.bf16.msra.mxu0 %v5482
    %11178 = vmatmul.bf16.gmra.mxu0 %v11134
    %v11179 = vpop.f32.mrf.mxu0
    %v11180 = vadd.f32 %v11167, %v11179
    %v11181 = vpop.f32.mrf.mxu0
    %11182 = vdwg.mxu0
    %11183 = vmatpush.bf16.msra.mxu0 %v5527
    %11184 = vmatpush.bf16.msra.mxu0 %v5524
    %11185 = vmatpush.bf16.msra.mxu0 %v5521
    %11186 = vmatpush.bf16.msra.mxu0 %v5518
    %11187 = vmatpush.bf16.msra.mxu0 %v5515
    %11188 = vmatpush.bf16.msra.mxu0 %v5512
    %11189 = vmatpush.bf16.msra.mxu0 %v5509
    %11190 = vmatpush.bf16.msra.mxu0 %v5506
    %11191 = vmatmul.bf16.gmra.mxu0 %v11135
    %v11192 = vpop.f32.mrf.mxu0
    %v11193 = vadd.f32 %v11180, %v11192
    %v11194 = vpop.f32.mrf.mxu0
    %11195 = vdwg.mxu0
    %11196 = vmatpush.bf16.msra.mxu0 %v5551
    %11197 = vmatpush.bf16.msra.mxu0 %v5548
    %11198 = vmatpush.bf16.msra.mxu0 %v5545
    %11199 = vmatpush.bf16.msra.mxu0 %v5542
    %11200 = vmatpush.bf16.msra.mxu0 %v5539
    %11201 = vmatpush.bf16.msra.mxu0 %v5536
    %11202 = vmatpush.bf16.msra.mxu0 %v5533
    %11203 = vmatpush.bf16.msra.mxu0 %v5530
    %11204 = vmatmul.bf16.gmra.mxu0 %v11136
    %v11205 = vpop.f32.mrf.mxu0
    %v11206 = vadd.f32 %v11193, %v11205
    %v11207 = vpop.f32.mrf.mxu0
    %11208 = vdwg.mxu0
    %11209 = vmatpush.bf16.msra.mxu0 %v5575
    %11210 = vmatpush.bf16.msra.mxu0 %v5572
    %11211 = vmatpush.bf16.msra.mxu0 %v5569
    %11212 = vmatpush.bf16.msra.mxu0 %v5566
    %11213 = vmatpush.bf16.msra.mxu0 %v5563
    %11214 = vmatpush.bf16.msra.mxu0 %v5560
    %11215 = vmatpush.bf16.msra.mxu0 %v5557
    %11216 = vmatpush.bf16.msra.mxu0 %v5554
    %11217 = vmatmul.bf16.gmra.mxu0 %v11137
    %v11218 = vpop.f32.mrf.mxu0
    %v11219 = vadd.f32 %v11206, %v11218
    %v11220 = vpop.f32.mrf.mxu0
    %11221 = vdwg.mxu0
    %11222 = vmatpush.bf16.msra.mxu0 %v5456
    %11223 = vmatpush.bf16.msra.mxu0 %v5453
    %11224 = vmatpush.bf16.msra.mxu0 %v5450
    %11225 = vmatpush.bf16.msra.mxu0 %v5447
    %11226 = vmatpush.bf16.msra.mxu0 %v5444
    %11227 = vmatpush.bf16.msra.mxu0 %v5441
    %11228 = vmatpush.bf16.msra.mxu0 %v5438
    %11229 = vmatpush.bf16.msra.mxu0 %v5435
    %11230 = vmatmul.bf16.gmra.mxu0 %v11132
    %v11231 = vpop.f32.mrf.mxu0
    %v11232 = vadd.f32 %v4928, %v11231
    %v11233 = vpop.f32.mrf.mxu0
    %11234 = vdwg.mxu0
    %11235 = vmatpush.bf16.msra.mxu0 %v5480
    %11236 = vmatpush.bf16.msra.mxu0 %v5477
    %11237 = vmatpush.bf16.msra.mxu0 %v5474
    %11238 = vmatpush.bf16.msra.mxu0 %v5471
    %11239 = vmatpush.bf16.msra.mxu0 %v5468
    %11240 = vmatpush.bf16.msra.mxu0 %v5465
    %11241 = vmatpush.bf16.msra.mxu0 %v5462
    %11242 = vmatpush.bf16.msra.mxu0 %v5459
    %11243 = vmatmul.bf16.gmra.mxu0 %v11133
    %v11244 = vpop.f32.mrf.mxu0
    %v11245 = vadd.f32 %v11232, %v11244
    %v11246 = vpop.f32.mrf.mxu0
    %11247 = vdwg.mxu0
    %11248 = vmatpush.bf16.msra.mxu0 %v5504
    %11249 = vmatpush.bf16.msra.mxu0 %v5501
    %11250 = vmatpush.bf16.msra.mxu0 %v5498
    %11251 = vmatpush.bf16.msra.mxu0 %v5495
    %11252 = vmatpush.bf16.msra.mxu0 %v5492
    %11253 = vmatpush.bf16.msra.mxu0 %v5489
    %11254 = vmatpush.bf16.msra.mxu0 %v5486
    %11255 = vmatpush.bf16.msra.mxu0 %v5483
    %11256 = vmatmul.bf16.gmra.mxu0 %v11134
    %v11257 = vpop.f32.mrf.mxu0
    %v11258 = vadd.f32 %v11245, %v11257
    %v11259 = vpop.f32.mrf.mxu0
    %11260 = vdwg.mxu0
    %11261 = vmatpush.bf16.msra.mxu0 %v5528
    %11262 = vmatpush.bf16.msra.mxu0 %v5525
    %11263 = vmatpush.bf16.msra.mxu0 %v5522
    %11264 = vmatpush.bf16.msra.mxu0 %v5519
    %11265 = vmatpush.bf16.msra.mxu0 %v5516
    %11266 = vmatpush.bf16.msra.mxu0 %v5513
    %11267 = vmatpush.bf16.msra.mxu0 %v5510
    %11268 = vmatpush.bf16.msra.mxu0 %v5507
    %11269 = vmatmul.bf16.gmra.mxu0 %v11135
    %v11270 = vpop.f32.mrf.mxu0
    %v11271 = vadd.f32 %v11258, %v11270
    %v11272 = vpop.f32.mrf.mxu0
    %11273 = vdwg.mxu0
    %11274 = vmatpush.bf16.msra.mxu0 %v5552
    %11275 = vmatpush.bf16.msra.mxu0 %v5549
    %11276 = vmatpush.bf16.msra.mxu0 %v5546
    %11277 = vmatpush.bf16.msra.mxu0 %v5543
    %11278 = vmatpush.bf16.msra.mxu0 %v5540
    %11279 = vmatpush.bf16.msra.mxu0 %v5537
    %11280 = vmatpush.bf16.msra.mxu0 %v5534
    %11281 = vmatpush.bf16.msra.mxu0 %v5531
    %11282 = vmatmul.bf16.gmra.mxu0 %v11136
    %v11283 = vpop.f32.mrf.mxu0
    %v11284 = vadd.f32 %v11271, %v11283
    %v11285 = vpop.f32.mrf.mxu0
    %11286 = vdwg.mxu0
    %11287 = vmatpush.bf16.msra.mxu0 %v5576
    %11288 = vmatpush.bf16.msra.mxu0 %v5573
    %11289 = vmatpush.bf16.msra.mxu0 %v5570
    %11290 = vmatpush.bf16.msra.mxu0 %v5567
    %11291 = vmatpush.bf16.msra.mxu0 %v5564
    %11292 = vmatpush.bf16.msra.mxu0 %v5561
    %11293 = vmatpush.bf16.msra.mxu0 %v5558
    %11294 = vmatpush.bf16.msra.mxu0 %v5555
    %11295 = vmatmul.bf16.gmra.mxu0 %v11137
    %v11296 = vpop.f32.mrf.mxu0
    %v11297 = vadd.f32 %v11284, %v11296
    %v11298 = vpop.f32.mrf.mxu0
    %11299 = vdwg.mxu0
    %11300 = vmatpush.bf16.msra.mxu0 %v5457
    %11301 = vmatpush.bf16.msra.mxu0 %v5454
    %11302 = vmatpush.bf16.msra.mxu0 %v5451
    %11303 = vmatpush.bf16.msra.mxu0 %v5448
    %11304 = vmatpush.bf16.msra.mxu0 %v5445
    %11305 = vmatpush.bf16.msra.mxu0 %v5442
    %11306 = vmatpush.bf16.msra.mxu0 %v5439
    %11307 = vmatpush.bf16.msra.mxu0 %v5436
    %11308 = vmatmul.bf16.gmra.mxu0 %v11132
    %v11309 = vpop.f32.mrf.mxu0
    %v11310 = vadd.f32 %v4929, %v11309
    %v11311 = vpop.f32.mrf.mxu0
    %11312 = vdwg.mxu0
    %11313 = vmatpush.bf16.msra.mxu0 %v5481
    %11314 = vmatpush.bf16.msra.mxu0 %v5478
    %11315 = vmatpush.bf16.msra.mxu0 %v5475
    %11316 = vmatpush.bf16.msra.mxu0 %v5472
    %11317 = vmatpush.bf16.msra.mxu0 %v5469
    %11318 = vmatpush.bf16.msra.mxu0 %v5466
    %11319 = vmatpush.bf16.msra.mxu0 %v5463
    %11320 = vmatpush.bf16.msra.mxu0 %v5460
    %11321 = vmatmul.bf16.gmra.mxu0 %v11133
    %v11322 = vpop.f32.mrf.mxu0
    %v11323 = vadd.f32 %v11310, %v11322
    %v11324 = vpop.f32.mrf.mxu0
    %11325 = vdwg.mxu0
    %11326 = vmatpush.bf16.msra.mxu0 %v5505
    %11327 = vmatpush.bf16.msra.mxu0 %v5502
    %11328 = vmatpush.bf16.msra.mxu0 %v5499
    %11329 = vmatpush.bf16.msra.mxu0 %v5496
    %11330 = vmatpush.bf16.msra.mxu0 %v5493
    %11331 = vmatpush.bf16.msra.mxu0 %v5490
    %11332 = vmatpush.bf16.msra.mxu0 %v5487
    %11333 = vmatpush.bf16.msra.mxu0 %v5484
    %11334 = vmatmul.bf16.gmra.mxu0 %v11134
    %v11335 = vpop.f32.mrf.mxu0
    %v11336 = vadd.f32 %v11323, %v11335
    %v11337 = vpop.f32.mrf.mxu0
    %11338 = vdwg.mxu0
    %11339 = vmatpush.bf16.msra.mxu0 %v5529
    %11340 = vmatpush.bf16.msra.mxu0 %v5526
    %11341 = vmatpush.bf16.msra.mxu0 %v5523
    %11342 = vmatpush.bf16.msra.mxu0 %v5520
    %11343 = vmatpush.bf16.msra.mxu0 %v5517
    %11344 = vmatpush.bf16.msra.mxu0 %v5514
    %11345 = vmatpush.bf16.msra.mxu0 %v5511
    %11346 = vmatpush.bf16.msra.mxu0 %v5508
    %11347 = vmatmul.bf16.gmra.mxu0 %v11135
    %v11348 = vpop.f32.mrf.mxu0
    %v11349 = vadd.f32 %v11336, %v11348
    %v11350 = vpop.f32.mrf.mxu0
    %11351 = vdwg.mxu0
    %11352 = vmatpush.bf16.msra.mxu0 %v5553
    %11353 = vmatpush.bf16.msra.mxu0 %v5550
    %11354 = vmatpush.bf16.msra.mxu0 %v5547
    %11355 = vmatpush.bf16.msra.mxu0 %v5544
    %11356 = vmatpush.bf16.msra.mxu0 %v5541
    %11357 = vmatpush.bf16.msra.mxu0 %v5538
    %11358 = vmatpush.bf16.msra.mxu0 %v5535
    %11359 = vmatpush.bf16.msra.mxu0 %v5532
    %11360 = vmatmul.bf16.gmra.mxu0 %v11136
    %v11361 = vpop.f32.mrf.mxu0
    %v11362 = vadd.f32 %v11349, %v11361
    %v11363 = vpop.f32.mrf.mxu0
    %11364 = vdwg.mxu0
    %11365 = vmatpush.bf16.msra.mxu0 %v5577
    %11366 = vmatpush.bf16.msra.mxu0 %v5574
    %11367 = vmatpush.bf16.msra.mxu0 %v5571
    %11368 = vmatpush.bf16.msra.mxu0 %v5568
    %11369 = vmatpush.bf16.msra.mxu0 %v5565
    %11370 = vmatpush.bf16.msra.mxu0 %v5562
    %11371 = vmatpush.bf16.msra.mxu0 %v5559
    %11372 = vmatpush.bf16.msra.mxu0 %v5556
    %11373 = vmatmul.bf16.gmra.mxu0 %v11137
    %v11374 = vpop.f32.mrf.mxu0
    %v11375 = vadd.f32 %v11362, %v11374
    %v11376 = vpop.f32.mrf.mxu0
    %11377 = vdwg.mxu0
    %v11378 = vmax.f32 %v11219, 0.0
    %v11379 = vmax.f32 %v11297, 0.0
    %v11380 = vmax.f32 %v11375, 0.0
    %v11381 = vpack.c.bf16 %v11378, %v11378
    %v11382 = vpack.c.bf16 %v11379, %v11379
    %v11383 = vpack.c.bf16 %v11380, %v11380
    %s11384 = scalar_lea.vmem %s7, 1728
    %v11385 = vld [vmem:[%s11384] sm:$0xf]
    %v11386 = vld [vmem:[%s11384 + $0x4] sm:$0xf]
    %v11387 = vld [vmem:[%s11384 + $0x8] sm:$0xf]
    %v11388 = vld [vmem:[%s11384 + $0xc] sm:$0xf]
    %v11389 = vld [vmem:[%s11384 + $0x10] sm:$0xf]
    %v11390 = vld [vmem:[%s11384 + $0x14] sm:$0xf]
    %v11391 = vld [vmem:[%s11384 + $0x18] sm:$0xf]
    %v11392 = vld [vmem:[%s11384 + $0x1c] sm:$0xf]
    %v11393 = vld [vmem:[%s11384 + $0x20] sm:$0xf]
    %v11394 = vld [vmem:[%s11384 + $0x24] sm:$0xf]
    %v11395 = vld [vmem:[%s11384 + $0x28] sm:$0xf]
    %v11396 = vld [vmem:[%s11384 + $0x2c] sm:$0xf]
    %v11397 = vld [vmem:[%s11384 + $0x30] sm:$0xf]
    %v11398 = vld [vmem:[%s11384 + $0x34] sm:$0xf]
    %v11399 = vld [vmem:[%s11384 + $0x38] sm:$0xf]
    %v11400 = vld [vmem:[%s11384 + $0x3c] sm:$0xf]
    %v11401 = vld [vmem:[%s11384 + $0x40] sm:$0xf]
    %v11402 = vld [vmem:[%s11384 + $0x44] sm:$0xf]
    %v11403 = vld [vmem:[%s11384 + $0x48] sm:$0xf]
    %v11404 = vld [vmem:[%s11384 + $0x4c] sm:$0xf]
    %v11405 = vld [vmem:[%s11384 + $0x50] sm:$0xf]
    %v11406 = vld [vmem:[%s11384 + $0x54] sm:$0xf]
    %v11407 = vld [vmem:[%s11384 + $0x58] sm:$0xf]
    %v11408 = vld [vmem:[%s11384 + $0x5c] sm:$0xf]
    %v11409 = vld [vmem:[%s11384 + $0x60] sm:$0xf]
    %v11410 = vld [vmem:[%s11384 + $0x64] sm:$0xf]
    %v11411 = vld [vmem:[%s11384 + $0x68] sm:$0xf]
    %v11412 = vld [vmem:[%s11384 + $0x6c] sm:$0xf]
    %v11413 = vld [vmem:[%s11384 + $0x70] sm:$0xf]
    %v11414 = vld [vmem:[%s11384 + $0x74] sm:$0xf]
    %v11415 = vld [vmem:[%s11384 + $0x78] sm:$0xf]
    %v11416 = vld [vmem:[%s11384 + $0x7c] sm:$0xf]
    %v11417 = vld [vmem:[%s11384 + $0x80] sm:$0xf]
    %v11418 = vld [vmem:[%s11384 + $0x84] sm:$0xf]
    %v11419 = vld [vmem:[%s11384 + $0x88] sm:$0xf]
    %v11420 = vld [vmem:[%s11384 + $0x8c] sm:$0xf]
    %v11457 = vunpack.c.l.b16 %v11385
    %v11458 = vunpack.c.l.b16 %v11386
    %v11459 = vunpack.c.l.b16 %v11387
    %v11460 = vunpack.c.l.b16 %v11388
    %v11461 = vunpack.c.l.b16 %v11389
    %v11462 = vunpack.c.l.b16 %v11390
    %v11463 = vunpack.c.l.b16 %v11391
    %v11464 = vunpack.c.l.b16 %v11392
    %v11465 = vunpack.c.l.b16 %v11393
    %v11466 = vunpack.c.l.b16 %v11394
    %v11467 = vunpack.c.l.b16 %v11395
    %v11468 = vunpack.c.l.b16 %v11396
    %v11469 = vunpack.c.l.b16 %v11397
    %v11470 = vunpack.c.l.b16 %v11398
    %v11471 = vunpack.c.l.b16 %v11399
    %v11472 = vunpack.c.l.b16 %v11400
    %v11473 = vunpack.c.l.b16 %v11401
    %v11474 = vunpack.c.l.b16 %v11402
    %v11475 = vunpack.c.l.b16 %v11403
    %v11476 = vunpack.c.l.b16 %v11404
    %v11477 = vunpack.c.l.b16 %v11405
    %v11478 = vunpack.c.l.b16 %v11406
    %v11479 = vunpack.c.l.b16 %v11407
    %v11480 = vunpack.c.l.b16 %v11408
    %v11481 = vunpack.c.l.b16 %v11409
    %v11482 = vunpack.c.l.b16 %v11410
    %v11483 = vunpack.c.l.b16 %v11411
    %v11484 = vunpack.c.l.b16 %v11412
    %v11485 = vunpack.c.l.b16 %v11413
    %v11486 = vunpack.c.l.b16 %v11414
    %v11487 = vunpack.c.l.b16 %v11415
    %v11488 = vunpack.c.l.b16 %v11416
    %v11489 = vunpack.c.l.b16 %v11417
    %v11490 = vunpack.c.l.b16 %v11418
    %v11491 = vunpack.c.l.b16 %v11419
    %v11492 = vunpack.c.l.b16 %v11420
    %v11493 = vpack.c.b16 %v11458, %v11457
    %v11494 = vpack.c.b16 %v11460, %v11459
    %v11495 = vpack.c.b16 %v11462, %v11461
    %v11496 = vpack.c.b16 %v11464, %v11463
    %v11497 = vpack.c.b16 %v11466, %v11465
    %v11498 = vpack.c.b16 %v11468, %v11467
    %v11499 = vpack.c.b16 %v11470, %v11469
    %v11500 = vpack.c.b16 %v11472, %v11471
    %v11501 = vpack.c.b16 %v11474, %v11473
    %v11502 = vpack.c.b16 %v11476, %v11475
    %v11503 = vpack.c.b16 %v11478, %v11477
    %v11504 = vpack.c.b16 %v11480, %v11479
    %v11505 = vpack.c.b16 %v11482, %v11481
    %v11506 = vpack.c.b16 %v11484, %v11483
    %v11507 = vpack.c.b16 %v11486, %v11485
    %v11508 = vpack.c.b16 %v11488, %v11487
    %v11509 = vpack.c.b16 %v11490, %v11489
    %v11510 = vpack.c.b16 %v11492, %v11491
    %v11530 = vsel %vm6407, %v11383, 0
    %11532 = vmatpush.bf16.msra.mxu0 %v11500
    %11533 = vmatpush.bf16.msra.mxu0 %v11499
    %11534 = vmatpush.bf16.msra.mxu0 %v11498
    %11535 = vmatpush.bf16.msra.mxu0 %v11497
    %11536 = vmatpush.bf16.msra.mxu0 %v11496
    %11537 = vmatpush.bf16.msra.mxu0 %v11495
    %11538 = vmatpush.bf16.msra.mxu0 %v11494
    %11539 = vmatpush.bf16.msra.mxu0 %v11493
    %11540 = vmatmul.bf16.gmra.mxu0 %v11381
    %v11541 = vpop.f32.mrf.mxu0
    %v11542 = vadd.f32 0.0, %v11541
    %v11543 = vpop.f32.mrf.mxu0
    %11544 = vdwg.mxu0
    %11545 = vmatpush.bf16.msra.mxu0 %v11508
    %11546 = vmatpush.bf16.msra.mxu0 %v11507
    %11547 = vmatpush.bf16.msra.mxu0 %v11506
    %11548 = vmatpush.bf16.msra.mxu0 %v11505
    %11549 = vmatpush.bf16.msra.mxu0 %v11504
    %11550 = vmatpush.bf16.msra.mxu0 %v11503
    %11551 = vmatpush.bf16.msra.mxu0 %v11502
    %11552 = vmatpush.bf16.msra.mxu0 %v11501
    %11553 = vmatmul.bf16.gmra.mxu0 %v11382
    %v11554 = vpop.f32.mrf.mxu0
    %v11555 = vadd.f32 %v11542, %v11554
    %v11556 = vpop.f32.mrf.mxu0
    %11557 = vdwg.mxu0
    %11558 = vmatpush.bf16.msra.mxu0 0
    %11559 = vmatpush.bf16.msra.mxu0 0
    %11560 = vmatpush.bf16.msra.mxu0 0
    %11561 = vmatpush.bf16.msra.mxu0 0
    %11562 = vmatpush.bf16.msra.mxu0 0
    %11563 = vmatpush.bf16.msra.mxu0 0
    %11564 = vmatpush.bf16.msra.mxu0 %v11510
    %11565 = vmatpush.bf16.msra.mxu0 %v11509
    %11566 = vmatmul.bf16.gmra.mxu0 %v11530
    %v11567 = vpop.f32.mrf.mxu0
    %v11568 = vadd.f32 %v11555, %v11567
    %v11569 = vpop.f32.mrf.mxu0
    %11570 = vdwg.mxu0
    %v11571 = vadd.f32 %v11119, %v11568
    %v11572 = vld [vmem:[#allocation2 + $0x68] sm:$0xff]
    %v11573 = vld [vmem:[#allocation2 + $0x70] sm:$0xff]
    %v11574 = vld [vmem:[#allocation2 + $0x78] sm:$0xff]
    %v11578 = vunpack.c.l.b16 %v11572
    %v11579 = vunpack.c.h.b16 %v11572
    %v11580 = vunpack.c.l.b16 %v11573
    %v11581 = vunpack.c.h.b16 %v11573
    %v11582 = vunpack.c.l.b16 %v11574
    %v11583 = vunpack.c.h.b16 %v11574
    %v11584 = vpack.c.b16 %v11578, %v11578
    %v11585 = vpack.c.b16 %v11579, %v11579
    %v11586 = vpack.c.b16 %v11580, %v11580
    %v11587 = vpack.c.b16 %v11581, %v11581
    %v11588 = vpack.c.b16 %v11582, %v11582
    %v11589 = vpack.c.b16 %v11583, %v11583
    %11596 = vmatpush.bf16.msra.mxu0 %v5455
    %11597 = vmatpush.bf16.msra.mxu0 %v5452
    %11598 = vmatpush.bf16.msra.mxu0 %v5449
    %11599 = vmatpush.bf16.msra.mxu0 %v5446
    %11600 = vmatpush.bf16.msra.mxu0 %v5443
    %11601 = vmatpush.bf16.msra.mxu0 %v5440
    %11602 = vmatpush.bf16.msra.mxu0 %v5437
    %11603 = vmatpush.bf16.msra.mxu0 %v5434
    %11604 = vmatmul.bf16.gmra.mxu0 %v11584
    %v11605 = vpop.f32.mrf.mxu0
    %v11606 = vadd.f32 %v4927, %v11605
    %v11607 = vpop.f32.mrf.mxu0
    %11608 = vdwg.mxu0
    %11609 = vmatpush.bf16.msra.mxu0 %v5479
    %11610 = vmatpush.bf16.msra.mxu0 %v5476
    %11611 = vmatpush.bf16.msra.mxu0 %v5473
    %11612 = vmatpush.bf16.msra.mxu0 %v5470
    %11613 = vmatpush.bf16.msra.mxu0 %v5467
    %11614 = vmatpush.bf16.msra.mxu0 %v5464
    %11615 = vmatpush.bf16.msra.mxu0 %v5461
    %11616 = vmatpush.bf16.msra.mxu0 %v5458
    %11617 = vmatmul.bf16.gmra.mxu0 %v11585
    %v11618 = vpop.f32.mrf.mxu0
    %v11619 = vadd.f32 %v11606, %v11618
    %v11620 = vpop.f32.mrf.mxu0
    %11621 = vdwg.mxu0
    %11622 = vmatpush.bf16.msra.mxu0 %v5503
    %11623 = vmatpush.bf16.msra.mxu0 %v5500
    %11624 = vmatpush.bf16.msra.mxu0 %v5497
    %11625 = vmatpush.bf16.msra.mxu0 %v5494
    %11626 = vmatpush.bf16.msra.mxu0 %v5491
    %11627 = vmatpush.bf16.msra.mxu0 %v5488
    %11628 = vmatpush.bf16.msra.mxu0 %v5485
    %11629 = vmatpush.bf16.msra.mxu0 %v5482
    %11630 = vmatmul.bf16.gmra.mxu0 %v11586
    %v11631 = vpop.f32.mrf.mxu0
    %v11632 = vadd.f32 %v11619, %v11631
    %v11633 = vpop.f32.mrf.mxu0
    %11634 = vdwg.mxu0
    %11635 = vmatpush.bf16.msra.mxu0 %v5527
    %11636 = vmatpush.bf16.msra.mxu0 %v5524
    %11637 = vmatpush.bf16.msra.mxu0 %v5521
    %11638 = vmatpush.bf16.msra.mxu0 %v5518
    %11639 = vmatpush.bf16.msra.mxu0 %v5515
    %11640 = vmatpush.bf16.msra.mxu0 %v5512
    %11641 = vmatpush.bf16.msra.mxu0 %v5509
    %11642 = vmatpush.bf16.msra.mxu0 %v5506
    %11643 = vmatmul.bf16.gmra.mxu0 %v11587
    %v11644 = vpop.f32.mrf.mxu0
    %v11645 = vadd.f32 %v11632, %v11644
    %v11646 = vpop.f32.mrf.mxu0
    %11647 = vdwg.mxu0
    %11648 = vmatpush.bf16.msra.mxu0 %v5551
    %11649 = vmatpush.bf16.msra.mxu0 %v5548
    %11650 = vmatpush.bf16.msra.mxu0 %v5545
    %11651 = vmatpush.bf16.msra.mxu0 %v5542
    %11652 = vmatpush.bf16.msra.mxu0 %v5539
    %11653 = vmatpush.bf16.msra.mxu0 %v5536
    %11654 = vmatpush.bf16.msra.mxu0 %v5533
    %11655 = vmatpush.bf16.msra.mxu0 %v5530
    %11656 = vmatmul.bf16.gmra.mxu0 %v11588
    %v11657 = vpop.f32.mrf.mxu0
    %v11658 = vadd.f32 %v11645, %v11657
    %v11659 = vpop.f32.mrf.mxu0
    %11660 = vdwg.mxu0
    %11661 = vmatpush.bf16.msra.mxu0 %v5575
    %11662 = vmatpush.bf16.msra.mxu0 %v5572
    %11663 = vmatpush.bf16.msra.mxu0 %v5569
    %11664 = vmatpush.bf16.msra.mxu0 %v5566
    %11665 = vmatpush.bf16.msra.mxu0 %v5563
    %11666 = vmatpush.bf16.msra.mxu0 %v5560
    %11667 = vmatpush.bf16.msra.mxu0 %v5557
    %11668 = vmatpush.bf16.msra.mxu0 %v5554
    %11669 = vmatmul.bf16.gmra.mxu0 %v11589
    %v11670 = vpop.f32.mrf.mxu0
    %v11671 = vadd.f32 %v11658, %v11670
    %v11672 = vpop.f32.mrf.mxu0
    %11673 = vdwg.mxu0
    %11674 = vmatpush.bf16.msra.mxu0 %v5456
    %11675 = vmatpush.bf16.msra.mxu0 %v5453
    %11676 = vmatpush.bf16.msra.mxu0 %v5450
    %11677 = vmatpush.bf16.msra.mxu0 %v5447
    %11678 = vmatpush.bf16.msra.mxu0 %v5444
    %11679 = vmatpush.bf16.msra.mxu0 %v5441
    %11680 = vmatpush.bf16.msra.mxu0 %v5438
    %11681 = vmatpush.bf16.msra.mxu0 %v5435
    %11682 = vmatmul.bf16.gmra.mxu0 %v11584
    %v11683 = vpop.f32.mrf.mxu0
    %v11684 = vadd.f32 %v4928, %v11683
    %v11685 = vpop.f32.mrf.mxu0
    %11686 = vdwg.mxu0
    %11687 = vmatpush.bf16.msra.mxu0 %v5480
    %11688 = vmatpush.bf16.msra.mxu0 %v5477
    %11689 = vmatpush.bf16.msra.mxu0 %v5474
    %11690 = vmatpush.bf16.msra.mxu0 %v5471
    %11691 = vmatpush.bf16.msra.mxu0 %v5468
    %11692 = vmatpush.bf16.msra.mxu0 %v5465
    %11693 = vmatpush.bf16.msra.mxu0 %v5462
    %11694 = vmatpush.bf16.msra.mxu0 %v5459
    %11695 = vmatmul.bf16.gmra.mxu0 %v11585
    %v11696 = vpop.f32.mrf.mxu0
    %v11697 = vadd.f32 %v11684, %v11696
    %v11698 = vpop.f32.mrf.mxu0
    %11699 = vdwg.mxu0
    %11700 = vmatpush.bf16.msra.mxu0 %v5504
    %11701 = vmatpush.bf16.msra.mxu0 %v5501
    %11702 = vmatpush.bf16.msra.mxu0 %v5498
    %11703 = vmatpush.bf16.msra.mxu0 %v5495
    %11704 = vmatpush.bf16.msra.mxu0 %v5492
    %11705 = vmatpush.bf16.msra.mxu0 %v5489
    %11706 = vmatpush.bf16.msra.mxu0 %v5486
    %11707 = vmatpush.bf16.msra.mxu0 %v5483
    %11708 = vmatmul.bf16.gmra.mxu0 %v11586
    %v11709 = vpop.f32.mrf.mxu0
    %v11710 = vadd.f32 %v11697, %v11709
    %v11711 = vpop.f32.mrf.mxu0
    %11712 = vdwg.mxu0
    %11713 = vmatpush.bf16.msra.mxu0 %v5528
    %11714 = vmatpush.bf16.msra.mxu0 %v5525
    %11715 = vmatpush.bf16.msra.mxu0 %v5522
    %11716 = vmatpush.bf16.msra.mxu0 %v5519
    %11717 = vmatpush.bf16.msra.mxu0 %v5516
    %11718 = vmatpush.bf16.msra.mxu0 %v5513
    %11719 = vmatpush.bf16.msra.mxu0 %v5510
    %11720 = vmatpush.bf16.msra.mxu0 %v5507
    %11721 = vmatmul.bf16.gmra.mxu0 %v11587
    %v11722 = vpop.f32.mrf.mxu0
    %v11723 = vadd.f32 %v11710, %v11722
    %v11724 = vpop.f32.mrf.mxu0
    %11725 = vdwg.mxu0
    %11726 = vmatpush.bf16.msra.mxu0 %v5552
    %11727 = vmatpush.bf16.msra.mxu0 %v5549
    %11728 = vmatpush.bf16.msra.mxu0 %v5546
    %11729 = vmatpush.bf16.msra.mxu0 %v5543
    %11730 = vmatpush.bf16.msra.mxu0 %v5540
    %11731 = vmatpush.bf16.msra.mxu0 %v5537
    %11732 = vmatpush.bf16.msra.mxu0 %v5534
    %11733 = vmatpush.bf16.msra.mxu0 %v5531
    %11734 = vmatmul.bf16.gmra.mxu0 %v11588
    %v11735 = vpop.f32.mrf.mxu0
    %v11736 = vadd.f32 %v11723, %v11735
    %v11737 = vpop.f32.mrf.mxu0
    %11738 = vdwg.mxu0
    %11739 = vmatpush.bf16.msra.mxu0 %v5576
    %11740 = vmatpush.bf16.msra.mxu0 %v5573
    %11741 = vmatpush.bf16.msra.mxu0 %v5570
    %11742 = vmatpush.bf16.msra.mxu0 %v5567
    %11743 = vmatpush.bf16.msra.mxu0 %v5564
    %11744 = vmatpush.bf16.msra.mxu0 %v5561
    %11745 = vmatpush.bf16.msra.mxu0 %v5558
    %11746 = vmatpush.bf16.msra.mxu0 %v5555
    %11747 = vmatmul.bf16.gmra.mxu0 %v11589
    %v11748 = vpop.f32.mrf.mxu0
    %v11749 = vadd.f32 %v11736, %v11748
    %v11750 = vpop.f32.mrf.mxu0
    %11751 = vdwg.mxu0
    %11752 = vmatpush.bf16.msra.mxu0 %v5457
    %11753 = vmatpush.bf16.msra.mxu0 %v5454
    %11754 = vmatpush.bf16.msra.mxu0 %v5451
    %11755 = vmatpush.bf16.msra.mxu0 %v5448
    %11756 = vmatpush.bf16.msra.mxu0 %v5445
    %11757 = vmatpush.bf16.msra.mxu0 %v5442
    %11758 = vmatpush.bf16.msra.mxu0 %v5439
    %11759 = vmatpush.bf16.msra.mxu0 %v5436
    %11760 = vmatmul.bf16.gmra.mxu0 %v11584
    %v11761 = vpop.f32.mrf.mxu0
    %v11762 = vadd.f32 %v4929, %v11761
    %v11763 = vpop.f32.mrf.mxu0
    %11764 = vdwg.mxu0
    %11765 = vmatpush.bf16.msra.mxu0 %v5481
    %11766 = vmatpush.bf16.msra.mxu0 %v5478
    %11767 = vmatpush.bf16.msra.mxu0 %v5475
    %11768 = vmatpush.bf16.msra.mxu0 %v5472
    %11769 = vmatpush.bf16.msra.mxu0 %v5469
    %11770 = vmatpush.bf16.msra.mxu0 %v5466
    %11771 = vmatpush.bf16.msra.mxu0 %v5463
    %11772 = vmatpush.bf16.msra.mxu0 %v5460
    %11773 = vmatmul.bf16.gmra.mxu0 %v11585
    %v11774 = vpop.f32.mrf.mxu0
    %v11775 = vadd.f32 %v11762, %v11774
    %v11776 = vpop.f32.mrf.mxu0
    %11777 = vdwg.mxu0
    %11778 = vmatpush.bf16.msra.mxu0 %v5505
    %11779 = vmatpush.bf16.msra.mxu0 %v5502
    %11780 = vmatpush.bf16.msra.mxu0 %v5499
    %11781 = vmatpush.bf16.msra.mxu0 %v5496
    %11782 = vmatpush.bf16.msra.mxu0 %v5493
    %11783 = vmatpush.bf16.msra.mxu0 %v5490
    %11784 = vmatpush.bf16.msra.mxu0 %v5487
    %11785 = vmatpush.bf16.msra.mxu0 %v5484
    %11786 = vmatmul.bf16.gmra.mxu0 %v11586
    %v11787 = vpop.f32.mrf.mxu0
    %v11788 = vadd.f32 %v11775, %v11787
    %v11789 = vpop.f32.mrf.mxu0
    %11790 = vdwg.mxu0
    %11791 = vmatpush.bf16.msra.mxu0 %v5529
    %11792 = vmatpush.bf16.msra.mxu0 %v5526
    %11793 = vmatpush.bf16.msra.mxu0 %v5523
    %11794 = vmatpush.bf16.msra.mxu0 %v5520
    %11795 = vmatpush.bf16.msra.mxu0 %v5517
    %11796 = vmatpush.bf16.msra.mxu0 %v5514
    %11797 = vmatpush.bf16.msra.mxu0 %v5511
    %11798 = vmatpush.bf16.msra.mxu0 %v5508
    %11799 = vmatmul.bf16.gmra.mxu0 %v11587
    %v11800 = vpop.f32.mrf.mxu0
    %v11801 = vadd.f32 %v11788, %v11800
    %v11802 = vpop.f32.mrf.mxu0
    %11803 = vdwg.mxu0
    %11804 = vmatpush.bf16.msra.mxu0 %v5553
    %11805 = vmatpush.bf16.msra.mxu0 %v5550
    %11806 = vmatpush.bf16.msra.mxu0 %v5547
    %11807 = vmatpush.bf16.msra.mxu0 %v5544
    %11808 = vmatpush.bf16.msra.mxu0 %v5541
    %11809 = vmatpush.bf16.msra.mxu0 %v5538
    %11810 = vmatpush.bf16.msra.mxu0 %v5535
    %11811 = vmatpush.bf16.msra.mxu0 %v5532
    %11812 = vmatmul.bf16.gmra.mxu0 %v11588
    %v11813 = vpop.f32.mrf.mxu0
    %v11814 = vadd.f32 %v11801, %v11813
    %v11815 = vpop.f32.mrf.mxu0
    %11816 = vdwg.mxu0
    %11817 = vmatpush.bf16.msra.mxu0 %v5577
    %11818 = vmatpush.bf16.msra.mxu0 %v5574
    %11819 = vmatpush.bf16.msra.mxu0 %v5571
    %11820 = vmatpush.bf16.msra.mxu0 %v5568
    %11821 = vmatpush.bf16.msra.mxu0 %v5565
    %11822 = vmatpush.bf16.msra.mxu0 %v5562
    %11823 = vmatpush.bf16.msra.mxu0 %v5559
    %11824 = vmatpush.bf16.msra.mxu0 %v5556
    %11825 = vmatmul.bf16.gmra.mxu0 %v11589
    %v11826 = vpop.f32.mrf.mxu0
    %v11827 = vadd.f32 %v11814, %v11826
    %v11828 = vpop.f32.mrf.mxu0
    %11829 = vdwg.mxu0
    %v11830 = vmax.f32 %v11671, 0.0
    %v11831 = vmax.f32 %v11749, 0.0
    %v11832 = vmax.f32 %v11827, 0.0
    %v11833 = vpack.c.bf16 %v11830, %v11830
    %v11834 = vpack.c.bf16 %v11831, %v11831
    %v11835 = vpack.c.bf16 %v11832, %v11832
    %s11836 = scalar_lea.vmem %s7, 1872
    %v11837 = vld [vmem:[%s11836] sm:$0xf]
    %v11838 = vld [vmem:[%s11836 + $0x4] sm:$0xf]
    %v11839 = vld [vmem:[%s11836 + $0x8] sm:$0xf]
    %v11840 = vld [vmem:[%s11836 + $0xc] sm:$0xf]
    %v11841 = vld [vmem:[%s11836 + $0x10] sm:$0xf]
    %v11842 = vld [vmem:[%s11836 + $0x14] sm:$0xf]
    %v11843 = vld [vmem:[%s11836 + $0x18] sm:$0xf]
    %v11844 = vld [vmem:[%s11836 + $0x1c] sm:$0xf]
    %v11845 = vld [vmem:[%s11836 + $0x20] sm:$0xf]
    %v11846 = vld [vmem:[%s11836 + $0x24] sm:$0xf]
    %v11847 = vld [vmem:[%s11836 + $0x28] sm:$0xf]
    %v11848 = vld [vmem:[%s11836 + $0x2c] sm:$0xf]
    %v11849 = vld [vmem:[%s11836 + $0x30] sm:$0xf]
    %v11850 = vld [vmem:[%s11836 + $0x34] sm:$0xf]
    %v11851 = vld [vmem:[%s11836 + $0x38] sm:$0xf]
    %v11852 = vld [vmem:[%s11836 + $0x3c] sm:$0xf]
    %v11853 = vld [vmem:[%s11836 + $0x40] sm:$0xf]
    %v11854 = vld [vmem:[%s11836 + $0x44] sm:$0xf]
    %v11855 = vld [vmem:[%s11836 + $0x48] sm:$0xf]
    %v11856 = vld [vmem:[%s11836 + $0x4c] sm:$0xf]
    %v11857 = vld [vmem:[%s11836 + $0x50] sm:$0xf]
    %v11858 = vld [vmem:[%s11836 + $0x54] sm:$0xf]
    %v11859 = vld [vmem:[%s11836 + $0x58] sm:$0xf]
    %v11860 = vld [vmem:[%s11836 + $0x5c] sm:$0xf]
    %v11861 = vld [vmem:[%s11836 + $0x60] sm:$0xf]
    %v11862 = vld [vmem:[%s11836 + $0x64] sm:$0xf]
    %v11863 = vld [vmem:[%s11836 + $0x68] sm:$0xf]
    %v11864 = vld [vmem:[%s11836 + $0x6c] sm:$0xf]
    %v11865 = vld [vmem:[%s11836 + $0x70] sm:$0xf]
    %v11866 = vld [vmem:[%s11836 + $0x74] sm:$0xf]
    %v11867 = vld [vmem:[%s11836 + $0x78] sm:$0xf]
    %v11868 = vld [vmem:[%s11836 + $0x7c] sm:$0xf]
    %v11869 = vld [vmem:[%s11836 + $0x80] sm:$0xf]
    %v11870 = vld [vmem:[%s11836 + $0x84] sm:$0xf]
    %v11871 = vld [vmem:[%s11836 + $0x88] sm:$0xf]
    %v11872 = vld [vmem:[%s11836 + $0x8c] sm:$0xf]
    %v11909 = vunpack.c.l.b16 %v11837
    %v11910 = vunpack.c.l.b16 %v11838
    %v11911 = vunpack.c.l.b16 %v11839
    %v11912 = vunpack.c.l.b16 %v11840
    %v11913 = vunpack.c.l.b16 %v11841
    %v11914 = vunpack.c.l.b16 %v11842
    %v11915 = vunpack.c.l.b16 %v11843
    %v11916 = vunpack.c.l.b16 %v11844
    %v11917 = vunpack.c.l.b16 %v11845
    %v11918 = vunpack.c.l.b16 %v11846
    %v11919 = vunpack.c.l.b16 %v11847
    %v11920 = vunpack.c.l.b16 %v11848
    %v11921 = vunpack.c.l.b16 %v11849
    %v11922 = vunpack.c.l.b16 %v11850
    %v11923 = vunpack.c.l.b16 %v11851
    %v11924 = vunpack.c.l.b16 %v11852
    %v11925 = vunpack.c.l.b16 %v11853
    %v11926 = vunpack.c.l.b16 %v11854
    %v11927 = vunpack.c.l.b16 %v11855
    %v11928 = vunpack.c.l.b16 %v11856
    %v11929 = vunpack.c.l.b16 %v11857
    %v11930 = vunpack.c.l.b16 %v11858
    %v11931 = vunpack.c.l.b16 %v11859
    %v11932 = vunpack.c.l.b16 %v11860
    %v11933 = vunpack.c.l.b16 %v11861
    %v11934 = vunpack.c.l.b16 %v11862
    %v11935 = vunpack.c.l.b16 %v11863
    %v11936 = vunpack.c.l.b16 %v11864
    %v11937 = vunpack.c.l.b16 %v11865
    %v11938 = vunpack.c.l.b16 %v11866
    %v11939 = vunpack.c.l.b16 %v11867
    %v11940 = vunpack.c.l.b16 %v11868
    %v11941 = vunpack.c.l.b16 %v11869
    %v11942 = vunpack.c.l.b16 %v11870
    %v11943 = vunpack.c.l.b16 %v11871
    %v11944 = vunpack.c.l.b16 %v11872
    %v11945 = vpack.c.b16 %v11910, %v11909
    %v11946 = vpack.c.b16 %v11912, %v11911
    %v11947 = vpack.c.b16 %v11914, %v11913
    %v11948 = vpack.c.b16 %v11916, %v11915
    %v11949 = vpack.c.b16 %v11918, %v11917
    %v11950 = vpack.c.b16 %v11920, %v11919
    %v11951 = vpack.c.b16 %v11922, %v11921
    %v11952 = vpack.c.b16 %v11924, %v11923
    %v11953 = vpack.c.b16 %v11926, %v11925
    %v11954 = vpack.c.b16 %v11928, %v11927
    %v11955 = vpack.c.b16 %v11930, %v11929
    %v11956 = vpack.c.b16 %v11932, %v11931
    %v11957 = vpack.c.b16 %v11934, %v11933
    %v11958 = vpack.c.b16 %v11936, %v11935
    %v11959 = vpack.c.b16 %v11938, %v11937
    %v11960 = vpack.c.b16 %v11940, %v11939
    %v11961 = vpack.c.b16 %v11942, %v11941
    %v11962 = vpack.c.b16 %v11944, %v11943
    %v11982 = vsel %vm6407, %v11835, 0
    %11984 = vmatpush.bf16.msra.mxu0 %v11952
    %11985 = vmatpush.bf16.msra.mxu0 %v11951
    %11986 = vmatpush.bf16.msra.mxu0 %v11950
    %11987 = vmatpush.bf16.msra.mxu0 %v11949
    %11988 = vmatpush.bf16.msra.mxu0 %v11948
    %11989 = vmatpush.bf16.msra.mxu0 %v11947
    %11990 = vmatpush.bf16.msra.mxu0 %v11946
    %11991 = vmatpush.bf16.msra.mxu0 %v11945
    %11992 = vmatmul.bf16.gmra.mxu0 %v11833
    %v11993 = vpop.f32.mrf.mxu0
    %v11994 = vadd.f32 0.0, %v11993
    %v11995 = vpop.f32.mrf.mxu0
    %11996 = vdwg.mxu0
    %11997 = vmatpush.bf16.msra.mxu0 %v11960
    %11998 = vmatpush.bf16.msra.mxu0 %v11959
    %11999 = vmatpush.bf16.msra.mxu0 %v11958
    %12000 = vmatpush.bf16.msra.mxu0 %v11957
    %12001 = vmatpush.bf16.msra.mxu0 %v11956
    %12002 = vmatpush.bf16.msra.mxu0 %v11955
    %12003 = vmatpush.bf16.msra.mxu0 %v11954
    %12004 = vmatpush.bf16.msra.mxu0 %v11953
    %12005 = vmatmul.bf16.gmra.mxu0 %v11834
    %v12006 = vpop.f32.mrf.mxu0
    %v12007 = vadd.f32 %v11994, %v12006
    %v12008 = vpop.f32.mrf.mxu0
    %12009 = vdwg.mxu0
    %12010 = vmatpush.bf16.msra.mxu0 0
    %12011 = vmatpush.bf16.msra.mxu0 0
    %12012 = vmatpush.bf16.msra.mxu0 0
    %12013 = vmatpush.bf16.msra.mxu0 0
    %12014 = vmatpush.bf16.msra.mxu0 0
    %12015 = vmatpush.bf16.msra.mxu0 0
    %12016 = vmatpush.bf16.msra.mxu0 %v11962
    %12017 = vmatpush.bf16.msra.mxu0 %v11961
    %12018 = vmatmul.bf16.gmra.mxu0 %v11982
    %v12019 = vpop.f32.mrf.mxu0
    %v12020 = vadd.f32 %v12007, %v12019
    %v12021 = vpop.f32.mrf.mxu0
    %12022 = vdwg.mxu0
    %v12023 = vadd.f32 %v11571, %v12020
    %v12024 = vld [vmem:[%s8] sm:$0x1]
    %v12026 = vperm.slane %v12024, 0
    %v12028 = vadd.f32 %v12023, %v12026
    %v12029 = vmax.f32 %v12028, 0.0
    %v12030 = vld [vmem:[%s2] sm:$0xff]
    %v12031 = vpack.c.bf16 %v12029, %v12029
    %v12032 = vld [vmem:[%s9] sm:$0xff]
    %v12033 = vld [vmem:[%s9 + $0x8] sm:$0xf]
    %v12034 = vld [vmem:[%s9 + $0xc] sm:$0xff]
    %v12035 = vld [vmem:[%s9 + $0x14] sm:$0xf]
    %v12036 = vld [vmem:[%s9 + $0x18] sm:$0xff]
    %v12037 = vld [vmem:[%s9 + $0x20] sm:$0xf]
    %v12038 = vld [vmem:[%s9 + $0x24] sm:$0xff]
    %v12039 = vld [vmem:[%s9 + $0x2c] sm:$0xf]
    %v12040 = vld [vmem:[%s9 + $0x30] sm:$0xff]
    %v12041 = vld [vmem:[%s9 + $0x38] sm:$0xf]
    %v12042 = vld [vmem:[%s9 + $0x3c] sm:$0xff]
    %v12043 = vld [vmem:[%s9 + $0x44] sm:$0xf]
    %v12044 = vld [vmem:[%s9 + $0x48] sm:$0xff]
    %v12045 = vld [vmem:[%s9 + $0x50] sm:$0xf]
    %v12046 = vld [vmem:[%s9 + $0x54] sm:$0xff]
    %v12047 = vld [vmem:[%s9 + $0x5c] sm:$0xf]
    %v12048 = vld [vmem:[%s1] sm:$0xff]
    %v12049 = vpack.c.bf16 %v12048, %v12048
    %v12050 = vld [vmem:[%s10] sm:$0xff]
    %v12051 = vld [vmem:[%s10 + $0x8] sm:$0xf]
    %v12052 = vld [vmem:[%s10 + $0xc] sm:$0xff]
    %v12053 = vld [vmem:[%s10 + $0x14] sm:$0xf]
    %v12058 = vunpack.c.l.b16 %v12050
    %v12059 = vunpack.c.h.b16 %v12050
    %v12060 = vunpack.c.l.b16 %v12051
    %v12061 = vunpack.c.l.b16 %v12052
    %v12062 = vunpack.c.h.b16 %v12052
    %v12063 = vunpack.c.l.b16 %v12053
    %v12064 = vpack.c.b16 %v12061, %v12058
    %v12065 = vpack.c.b16 %v12062, %v12059
    %v12066 = vpack.c.b16 %v12063, %v12060
    %vm12070 = vcmask 130048
    %v12072 = vsel %vm12070, %v12049, 0
    %12074 = vmatpush.bf16.msra.mxu0 0
    %12075 = vmatpush.bf16.msra.mxu0 0
    %12076 = vmatpush.bf16.msra.mxu0 0
    %12077 = vmatpush.bf16.msra.mxu0 0
    %12078 = vmatpush.bf16.msra.mxu0 0
    %12079 = vmatpush.bf16.msra.mxu0 0
    %12080 = vmatpush.bf16.msra.mxu0 0
    %12081 = vmatpush.bf16.msra.mxu0 %v12064
    %12082 = vmatmul.bf16.gmra.mxu0 %v12072
    %v12083 = vpop.f32.mrf.mxu0
    %v12084 = vadd.f32 0.0, %v12083
    %v12085 = vpop.f32.mrf.mxu0
    %12086 = vdwg.mxu0
    %12087 = vmatpush.bf16.msra.mxu0 0
    %12088 = vmatpush.bf16.msra.mxu0 0
    %12089 = vmatpush.bf16.msra.mxu0 0
    %12090 = vmatpush.bf16.msra.mxu0 0
    %12091 = vmatpush.bf16.msra.mxu0 0
    %12092 = vmatpush.bf16.msra.mxu0 0
    %12093 = vmatpush.bf16.msra.mxu0 0
    %12094 = vmatpush.bf16.msra.mxu0 %v12065
    %12095 = vmatmul.bf16.gmra.mxu0 %v12072
    %v12096 = vpop.f32.mrf.mxu0
    %v12097 = vadd.f32 0.0, %v12096
    %v12098 = vpop.f32.mrf.mxu0
    %12099 = vdwg.mxu0
    %12100 = vmatpush.bf16.msra.mxu0 0
    %12101 = vmatpush.bf16.msra.mxu0 0
    %12102 = vmatpush.bf16.msra.mxu0 0
    %12103 = vmatpush.bf16.msra.mxu0 0
    %12104 = vmatpush.bf16.msra.mxu0 0
    %12105 = vmatpush.bf16.msra.mxu0 0
    %12106 = vmatpush.bf16.msra.mxu0 0
    %12107 = vmatpush.bf16.msra.mxu0 %v12066
    %12108 = vmatmul.bf16.gmra.mxu0 %v12072
    %v12109 = vpop.f32.mrf.mxu0
    %v12110 = vadd.f32 0.0, %v12109
    %v12111 = vpop.f32.mrf.mxu0
    %12112 = vdwg.mxu0
    %v12129 = vunpack.c.l.b16 %v12032
    %v12130 = vunpack.c.h.b16 %v12032
    %v12131 = vunpack.c.l.b16 %v12033
    %v12132 = vunpack.c.l.b16 %v12034
    %v12133 = vunpack.c.h.b16 %v12034
    %v12134 = vunpack.c.l.b16 %v12035
    %v12135 = vunpack.c.l.b16 %v12036
    %v12136 = vunpack.c.h.b16 %v12036
    %v12137 = vunpack.c.l.b16 %v12037
    %v12138 = vunpack.c.l.b16 %v12038
    %v12139 = vunpack.c.h.b16 %v12038
    %v12140 = vunpack.c.l.b16 %v12039
    %v12141 = vunpack.c.l.b16 %v12040
    %v12142 = vunpack.c.h.b16 %v12040
    %v12143 = vunpack.c.l.b16 %v12041
    %v12144 = vunpack.c.l.b16 %v12042
    %v12145 = vunpack.c.h.b16 %v12042
    %v12146 = vunpack.c.l.b16 %v12043
    %v12147 = vunpack.c.l.b16 %v12044
    %v12148 = vunpack.c.h.b16 %v12044
    %v12149 = vunpack.c.l.b16 %v12045
    %v12150 = vunpack.c.l.b16 %v12046
    %v12151 = vunpack.c.h.b16 %v12046
    %v12152 = vunpack.c.l.b16 %v12047
    %v12153 = vpack.c.b16 %v12132, %v12129
    %v12154 = vpack.c.b16 %v12133, %v12130
    %v12155 = vpack.c.b16 %v12134, %v12131
    %v12156 = vpack.c.b16 %v12138, %v12135
    %v12157 = vpack.c.b16 %v12139, %v12136
    %v12158 = vpack.c.b16 %v12140, %v12137
    %v12159 = vpack.c.b16 %v12144, %v12141
    %v12160 = vpack.c.b16 %v12145, %v12142
    %v12161 = vpack.c.b16 %v12146, %v12143
    %v12162 = vpack.c.b16 %v12150, %v12147
    %v12163 = vpack.c.b16 %v12151, %v12148
    %v12164 = vpack.c.b16 %v12152, %v12149
    %vm12177 = vcmask 523264
    %v12179 = vsel %vm12177, %v12031, 0
    %12181 = vmatpush.bf16.msra.mxu0 0
    %12182 = vmatpush.bf16.msra.mxu0 0
    %12183 = vmatpush.bf16.msra.mxu0 0
    %12184 = vmatpush.bf16.msra.mxu0 0
    %12185 = vmatpush.bf16.msra.mxu0 %v12162
    %12186 = vmatpush.bf16.msra.mxu0 %v12159
    %12187 = vmatpush.bf16.msra.mxu0 %v12156
    %12188 = vmatpush.bf16.msra.mxu0 %v12153
    %12189 = vmatmul.bf16.gmra.mxu0 %v12179
    %v12190 = vpop.f32.mrf.mxu0
    %v12191 = vadd.f32 %v12084, %v12190
    %v12192 = vpop.f32.mrf.mxu0
    %12193 = vdwg.mxu0
    %12194 = vmatpush.bf16.msra.mxu0 0
    %12195 = vmatpush.bf16.msra.mxu0 0
    %12196 = vmatpush.bf16.msra.mxu0 0
    %12197 = vmatpush.bf16.msra.mxu0 0
    %12198 = vmatpush.bf16.msra.mxu0 %v12163
    %12199 = vmatpush.bf16.msra.mxu0 %v12160
    %12200 = vmatpush.bf16.msra.mxu0 %v12157
    %12201 = vmatpush.bf16.msra.mxu0 %v12154
    %12202 = vmatmul.bf16.gmra.mxu0 %v12179
    %v12203 = vpop.f32.mrf.mxu0
    %v12204 = vadd.f32 %v12097, %v12203
    %v12205 = vpop.f32.mrf.mxu0
    %12206 = vdwg.mxu0
    %12207 = vmatpush.bf16.msra.mxu0 0
    %12208 = vmatpush.bf16.msra.mxu0 0
    %12209 = vmatpush.bf16.msra.mxu0 0
    %12210 = vmatpush.bf16.msra.mxu0 0
    %12211 = vmatpush.bf16.msra.mxu0 %v12164
    %12212 = vmatpush.bf16.msra.mxu0 %v12161
    %12213 = vmatpush.bf16.msra.mxu0 %v12158
    %12214 = vmatpush.bf16.msra.mxu0 %v12155
    %12215 = vmatmul.bf16.gmra.mxu0 %v12179
    %v12216 = vpop.f32.mrf.mxu0
    %v12217 = vadd.f32 %v12110, %v12216
    %v12218 = vpop.f32.mrf.mxu0
    %12219 = vdwg.mxu0
    %v12220 = vld [vmem:[%s11] sm:$0x7]
    %v12222 = vperm.slane %v12220, 0
    %v12223 = vperm.slane %v12220, 1
    %v12224 = vperm.slane %v12220, 2
    %v12228 = vadd.f32 %v12191, %v12222
    %v12229 = vadd.f32 %v12204, %v12223
    %v12230 = vadd.f32 %v12217, %v12224
    %v12231 = vpack.c.bf16 %v12030, %v12030
    %v12232 = vld [vmem:[%s12] sm:$0xff]
    %v12233 = vld [vmem:[%s12 + $0x8] sm:$0xf]
    %v12234 = vld [vmem:[%s12 + $0xc] sm:$0xff]
    %v12235 = vld [vmem:[%s12 + $0x14] sm:$0xf]
    %v12236 = vld [vmem:[%s12 + $0x18] sm:$0xff]
    %v12237 = vld [vmem:[%s12 + $0x20] sm:$0xf]
    %v12238 = vld [vmem:[%s12 + $0x24] sm:$0xff]
    %v12239 = vld [vmem:[%s12 + $0x2c] sm:$0xf]
    %v12240 = vld [vmem:[%s12 + $0x30] sm:$0xff]
    %v12241 = vld [vmem:[%s12 + $0x38] sm:$0xf]
    %v12242 = vld [vmem:[%s12 + $0x3c] sm:$0xff]
    %v12243 = vld [vmem:[%s12 + $0x44] sm:$0xf]
    %v12244 = vld [vmem:[%s12 + $0x48] sm:$0xff]
    %v12245 = vld [vmem:[%s12 + $0x50] sm:$0xf]
    %v12246 = vld [vmem:[%s12 + $0x54] sm:$0xff]
    %v12247 = vld [vmem:[%s12 + $0x5c] sm:$0xf]
    %v12248 = vld [vmem:[%s12 + $0x60] sm:$0xff]
    %v12249 = vld [vmem:[%s12 + $0x68] sm:$0xf]
    %v12250 = vld [vmem:[%s12 + $0x6c] sm:$0xff]
    %v12251 = vld [vmem:[%s12 + $0x74] sm:$0xf]
    %v12252 = vld [vmem:[%s12 + $0x78] sm:$0xff]
    %v12253 = vld [vmem:[%s12 + $0x80] sm:$0xf]
    %v12254 = vld [vmem:[%s12 + $0x84] sm:$0xff]
    %v12255 = vld [vmem:[%s12 + $0x8c] sm:$0xf]
    %v12256 = vld [vmem:[%s12 + $0x90] sm:$0xff]
    %v12257 = vld [vmem:[%s12 + $0x98] sm:$0xf]
    %v12258 = vld [vmem:[%s12 + $0x9c] sm:$0xff]
    %v12259 = vld [vmem:[%s12 + $0xa4] sm:$0xf]
    %v12260 = vld [vmem:[%s12 + $0xa8] sm:$0xff]
    %v12261 = vld [vmem:[%s12 + $0xb0] sm:$0xf]
    %v12262 = vld [vmem:[%s12 + $0xb4] sm:$0xff]
    %v12263 = vld [vmem:[%s12 + $0xbc] sm:$0xf]
    %v12264 = vld [vmem:[%s13] sm:$0x7]
    %v12266 = vperm.slane %v12264, 0
    %v12267 = vperm.slane %v12264, 1
    %v12268 = vperm.slane %v12264, 2
    %v12304 = vunpack.c.l.b16 %v12232
    %v12305 = vunpack.c.h.b16 %v12232
    %v12306 = vunpack.c.l.b16 %v12233
    %v12307 = vunpack.c.l.b16 %v12234
    %v12308 = vunpack.c.h.b16 %v12234
    %v12309 = vunpack.c.l.b16 %v12235
    %v12310 = vunpack.c.l.b16 %v12236
    %v12311 = vunpack.c.h.b16 %v12236
    %v12312 = vunpack.c.l.b16 %v12237
    %v12313 = vunpack.c.l.b16 %v12238
    %v12314 = vunpack.c.h.b16 %v12238
    %v12315 = vunpack.c.l.b16 %v12239
    %v12316 = vunpack.c.l.b16 %v12240
    %v12317 = vunpack.c.h.b16 %v12240
    %v12318 = vunpack.c.l.b16 %v12241
    %v12319 = vunpack.c.l.b16 %v12242
    %v12320 = vunpack.c.h.b16 %v12242
    %v12321 = vunpack.c.l.b16 %v12243
    %v12322 = vunpack.c.l.b16 %v12244
    %v12323 = vunpack.c.h.b16 %v12244
    %v12324 = vunpack.c.l.b16 %v12245
    %v12325 = vunpack.c.l.b16 %v12246
    %v12326 = vunpack.c.h.b16 %v12246
    %v12327 = vunpack.c.l.b16 %v12247
    %v12328 = vunpack.c.l.b16 %v12248
    %v12329 = vunpack.c.h.b16 %v12248
    %v12330 = vunpack.c.l.b16 %v12249
    %v12331 = vunpack.c.l.b16 %v12250
    %v12332 = vunpack.c.h.b16 %v12250
    %v12333 = vunpack.c.l.b16 %v12251
    %v12334 = vunpack.c.l.b16 %v12252
    %v12335 = vunpack.c.h.b16 %v12252
    %v12336 = vunpack.c.l.b16 %v12253
    %v12337 = vunpack.c.l.b16 %v12254
    %v12338 = vunpack.c.h.b16 %v12254
    %v12339 = vunpack.c.l.b16 %v12255
    %v12340 = vunpack.c.l.b16 %v12256
    %v12341 = vunpack.c.h.b16 %v12256
    %v12342 = vunpack.c.l.b16 %v12257
    %v12343 = vunpack.c.l.b16 %v12258
    %v12344 = vunpack.c.h.b16 %v12258
    %v12345 = vunpack.c.l.b16 %v12259
    %v12346 = vunpack.c.l.b16 %v12260
    %v12347 = vunpack.c.h.b16 %v12260
    %v12348 = vunpack.c.l.b16 %v12261
    %v12349 = vunpack.c.l.b16 %v12262
    %v12350 = vunpack.c.h.b16 %v12262
    %v12351 = vunpack.c.l.b16 %v12263
    %v12352 = vpack.c.b16 %v12307, %v12304
    %v12353 = vpack.c.b16 %v12308, %v12305
    %v12354 = vpack.c.b16 %v12309, %v12306
    %v12355 = vpack.c.b16 %v12313, %v12310
    %v12356 = vpack.c.b16 %v12314, %v12311
    %v12357 = vpack.c.b16 %v12315, %v12312
    %v12358 = vpack.c.b16 %v12319, %v12316
    %v12359 = vpack.c.b16 %v12320, %v12317
    %v12360 = vpack.c.b16 %v12321, %v12318
    %v12361 = vpack.c.b16 %v12325, %v12322
    %v12362 = vpack.c.b16 %v12326, %v12323
    %v12363 = vpack.c.b16 %v12327, %v12324
    %v12364 = vpack.c.b16 %v12331, %v12328
    %v12365 = vpack.c.b16 %v12332, %v12329
    %v12366 = vpack.c.b16 %v12333, %v12330
    %v12367 = vpack.c.b16 %v12337, %v12334
    %v12368 = vpack.c.b16 %v12338, %v12335
    %v12369 = vpack.c.b16 %v12339, %v12336
    %v12370 = vpack.c.b16 %v12343, %v12340
    %v12371 = vpack.c.b16 %v12344, %v12341
    %v12372 = vpack.c.b16 %v12345, %v12342
    %v12373 = vpack.c.b16 %v12349, %v12346
    %v12374 = vpack.c.b16 %v12350, %v12347
    %v12375 = vpack.c.b16 %v12351, %v12348
    %12400 = vmatpush.bf16.msra.mxu0 %v12373
    %12401 = vmatpush.bf16.msra.mxu0 %v12370
    %12402 = vmatpush.bf16.msra.mxu0 %v12367
    %12403 = vmatpush.bf16.msra.mxu0 %v12364
    %12404 = vmatpush.bf16.msra.mxu0 %v12361
    %12405 = vmatpush.bf16.msra.mxu0 %v12358
    %12406 = vmatpush.bf16.msra.mxu0 %v12355
    %12407 = vmatpush.bf16.msra.mxu0 %v12352
    %12408 = vmatmul.bf16.gmra.mxu0 %v12231
    %v12409 = vpop.f32.mrf.mxu0
    %v12410 = vadd.f32 %v12266, %v12409
    %v12411 = vpop.f32.mrf.mxu0
    %12412 = vdwg.mxu0
    %12413 = vmatpush.bf16.msra.mxu0 %v12374
    %12414 = vmatpush.bf16.msra.mxu0 %v12371
    %12415 = vmatpush.bf16.msra.mxu0 %v12368
    %12416 = vmatpush.bf16.msra.mxu0 %v12365
    %12417 = vmatpush.bf16.msra.mxu0 %v12362
    %12418 = vmatpush.bf16.msra.mxu0 %v12359
    %12419 = vmatpush.bf16.msra.mxu0 %v12356
    %12420 = vmatpush.bf16.msra.mxu0 %v12353
    %12421 = vmatmul.bf16.gmra.mxu0 %v12231
    %v12422 = vpop.f32.mrf.mxu0
    %v12423 = vadd.f32 %v12267, %v12422
    %v12424 = vpop.f32.mrf.mxu0
    %12425 = vdwg.mxu0
    %12426 = vmatpush.bf16.msra.mxu0 %v12375
    %12427 = vmatpush.bf16.msra.mxu0 %v12372
    %12428 = vmatpush.bf16.msra.mxu0 %v12369
    %12429 = vmatpush.bf16.msra.mxu0 %v12366
    %12430 = vmatpush.bf16.msra.mxu0 %v12363
    %12431 = vmatpush.bf16.msra.mxu0 %v12360
    %12432 = vmatpush.bf16.msra.mxu0 %v12357
    %12433 = vmatpush.bf16.msra.mxu0 %v12354
    %12434 = vmatmul.bf16.gmra.mxu0 %v12231
    %v12435 = vpop.f32.mrf.mxu0
    %v12436 = vadd.f32 %v12268, %v12435
    %v12437 = vpop.f32.mrf.mxu0
    %12438 = vdwg.mxu0
    %v12439 = vadd.f32 %v12228, %v12410
    %v12440 = vxor.u32 %v12439, 2147483648
    %v12441 = vmul.f32 %v12440, 1.442695
    %v12442 = vpow.pop %v12441
    %v12443 = vadd.f32 %v12442, 1.0
    %v12444 = vrcp.pop %v12443
    %v12445 = vmul.f32 %v12443, %v12444
    %v12446 = vsub.f32 1.0, %v12445
    %v12447 = vmul.f32 %v12444, %v12446
    %v12448 = vadd.f32 %v12444, %v12447
    %vm12449 = vweird.f32 %v12443
    %vm12450 = vweird.f32 %v12444
    %vm12451 = vmor %vm12449, %vm12450
    %v12452 = vsel %vm12451, %v12444, %v12448
    %v12453 = vand.u32 2147483647, %v12443
    %vm12454 = vcmp.eq.f32.partialorder %v12453, 8.507059e+37
    %v12455 = vand.u32 %v12443, 2147483648
    %v12456 = vor.u32 1.1754944e-38, %v12455
    %v12457 = vsel %vm12454, %v12456, %v12452
    %v12458 = vmul.f32 1.0, %v12457
    %v12459 = vadd.f32 %v12229, %v12423
    %v12460 = vxor.u32 %v12459, 2147483648
    %v12461 = vmul.f32 %v12460, 1.442695
    %v12462 = vpow.pop %v12461
    %v12463 = vadd.f32 %v12462, 1.0
    %v12464 = vrcp.pop %v12463
    %v12465 = vmul.f32 %v12463, %v12464
    %v12466 = vsub.f32 1.0, %v12465
    %v12467 = vmul.f32 %v12464, %v12466
    %v12468 = vadd.f32 %v12464, %v12467
    %vm12469 = vweird.f32 %v12463
    %vm12470 = vweird.f32 %v12464
    %vm12471 = vmor %vm12469, %vm12470
    %v12472 = vsel %vm12471, %v12464, %v12468
    %v12473 = vand.u32 2147483647, %v12463
    %vm12474 = vcmp.eq.f32.partialorder %v12473, 8.507059e+37
    %v12475 = vand.u32 %v12463, 2147483648
    %v12476 = vor.u32 1.1754944e-38, %v12475
    %v12477 = vsel %vm12474, %v12476, %v12472
    %v12478 = vmul.f32 1.0, %v12477
    %v12479 = vmul.f32 %v12458, %v12436
    %v12480 = vadd.f32 %v12230, %v12479
    %v12481 = vtanh.pop %v12480
    %v12482 = vsub.f32 1.0, %v12478
    %v12483 = vmul.f32 %v12482, %v12481
    %v12484 = vmul.f32 %v12478, %v12030
    %v12485 = vadd.f32 %v12483, %v12484
    %12486 = vst [vmem:[#allocation5] sm:$0xff] %v12485
    %v12487 = vpack.c.bf16 %v12485, %v12485
    %v12488 = vld [vmem:[%s14] sm:$0xf]
    %v12489 = vld [vmem:[%s14 + $0x4] sm:$0xf]
    %v12490 = vld [vmem:[%s14 + $0x8] sm:$0xf]
    %v12491 = vld [vmem:[%s14 + $0xc] sm:$0xf]
    %v12492 = vld [vmem:[%s14 + $0x10] sm:$0xf]
    %v12493 = vld [vmem:[%s14 + $0x14] sm:$0xf]
    %v12494 = vld [vmem:[%s14 + $0x18] sm:$0xf]
    %v12495 = vld [vmem:[%s14 + $0x1c] sm:$0xf]
    %v12496 = vld [vmem:[%s14 + $0x20] sm:$0xf]
    %v12497 = vld [vmem:[%s14 + $0x24] sm:$0xf]
    %v12498 = vld [vmem:[%s14 + $0x28] sm:$0xf]
    %v12499 = vld [vmem:[%s14 + $0x2c] sm:$0xf]
    %v12500 = vld [vmem:[%s14 + $0x30] sm:$0xf]
    %v12501 = vld [vmem:[%s14 + $0x34] sm:$0xf]
    %v12502 = vld [vmem:[%s14 + $0x38] sm:$0xf]
    %v12503 = vld [vmem:[%s14 + $0x3c] sm:$0xf]
    %v12504 = vld [vmem:[%s15] sm:$0x1]
    %v12506 = vperm.slane %v12504, 0
    %v12524 = vunpack.c.l.b16 %v12488
    %v12525 = vunpack.c.l.b16 %v12489
    %v12526 = vunpack.c.l.b16 %v12490
    %v12527 = vunpack.c.l.b16 %v12491
    %v12528 = vunpack.c.l.b16 %v12492
    %v12529 = vunpack.c.l.b16 %v12493
    %v12530 = vunpack.c.l.b16 %v12494
    %v12531 = vunpack.c.l.b16 %v12495
    %v12532 = vunpack.c.l.b16 %v12496
    %v12533 = vunpack.c.l.b16 %v12497
    %v12534 = vunpack.c.l.b16 %v12498
    %v12535 = vunpack.c.l.b16 %v12499
    %v12536 = vunpack.c.l.b16 %v12500
    %v12537 = vunpack.c.l.b16 %v12501
    %v12538 = vunpack.c.l.b16 %v12502
    %v12539 = vunpack.c.l.b16 %v12503
    %v12540 = vpack.c.b16 %v12525, %v12524
    %v12541 = vpack.c.b16 %v12527, %v12526
    %v12542 = vpack.c.b16 %v12529, %v12528
    %v12543 = vpack.c.b16 %v12531, %v12530
    %v12544 = vpack.c.b16 %v12533, %v12532
    %v12545 = vpack.c.b16 %v12535, %v12534
    %v12546 = vpack.c.b16 %v12537, %v12536
    %v12547 = vpack.c.b16 %v12539, %v12538
    %12556 = vmatpush.bf16.msra.mxu0 %v12547
    %12557 = vmatpush.bf16.msra.mxu0 %v12546
    %12558 = vmatpush.bf16.msra.mxu0 %v12545
    %12559 = vmatpush.bf16.msra.mxu0 %v12544
    %12560 = vmatpush.bf16.msra.mxu0 %v12543
    %12561 = vmatpush.bf16.msra.mxu0 %v12542
    %12562 = vmatpush.bf16.msra.mxu0 %v12541
    %12563 = vmatpush.bf16.msra.mxu0 %v12540
    %12564 = vmatmul.bf16.gmra.mxu0 %v12487
    %v12565 = vpop.f32.mrf.mxu0
    %v12566 = vadd.f32 %v12506, %v12565
    %v12567 = vpop.f32.mrf.mxu0
    %12568 = vdwg.mxu0
    %12569 = vst [vmem:[#allocation3] sm:$0xff] %v12566
    // Predicated region
    $region66: #{convnet_rnn_forward.1} parent=1 // pred_check
      _
    $region67: #{convnet_rnn_forward.1} parent=1 // pred_check_branch
      %12571 = sbr.rel (0) target = $region69
    $region68: #{convnet_rnn_forward.1} parent=1 // pred_region
      %12573 = vsyncadd [#allocation4], 0
      %s12575 = sshll.u32 [#allocation3], 4
      %s12576 = int_to_ptr.vmem [resolvable:$true] %s12575
      %s12577 = sshll.u32 %s16, 4
      %s12578 = int_to_ptr.hbm [resolvable:$true] %s12577
      %12580 = dma.vmem_to_hbm [thread:$0]  %s12576, 128, %s12578, [#allocation4]
    $region69: #{convnet_rnn_forward.1} parent=1 // pred_fallthru
      _
    // Predicated region
    $region70: #{convnet_rnn_forward.1} parent=1 // pred_check
      _
    $region71: #{convnet_rnn_forward.1} parent=1 // pred_check_branch
      %12582 = sbr.rel (0) target = $region73
    $region72: #{convnet_rnn_forward.1} parent=1 // pred_region
      %12584 = vsyncadd [#allocation6], 0
      %s12586 = sshll.u32 [#allocation5], 4
      %s12587 = int_to_ptr.vmem [resolvable:$true] %s12586
      %s12588 = sshll.u32 %s17, 4
      %s12589 = int_to_ptr.hbm [resolvable:$true] %s12588
      %12591 = dma.vmem_to_hbm [thread:$0]  %s12587, 128, %s12589, [#allocation6]
    $region73: #{convnet_rnn_forward.1} parent=1 // pred_fallthru
      _
    // Predicated region
    $region74: #{convnet_rnn_forward.1} parent=1 // pred_check
      _
    $region75: #{convnet_rnn_forward.1} parent=1 // pred_check_branch
      %12593 = sbr.rel (0) target = $region77
    $region76: #{convnet_rnn_forward.1} parent=1 // pred_region
      %12595 = dma.done [#allocation4], 128
    $region77: #{convnet_rnn_forward.1} parent=1 // pred_fallthru
      _
    // Predicated region
    $region78: #{convnet_rnn_forward.1} parent=1 // pred_check
      _
    $region79: #{convnet_rnn_forward.1} parent=1 // pred_check_branch
      %12597 = sbr.rel (0) target = $region81
    $region80: #{convnet_rnn_forward.1} parent=1 // pred_region
      %12599 = dma.done [#allocation6], 128
    $region81: #{convnet_rnn_forward.1} parent=1 // pred_fallthru
      _
    %12600 = vsyncpa [#allocation4], 1
    %12601 = vsyncpa [#allocation6], 1

</llo_original>
